<compile_context>
chip_gen: v7x
topology: tpu7x:2x2x1
jax: 0.10.0
libtpu: 0.0.40
codegen_flags: <defaults>
</compile_context>

<pallas_src>
import functools
import math

import jax
import jax.numpy as jnp
from jax.experimental import pallas as pl
from jax.experimental.pallas import tpu as pltpu


def _round_up(n, m):
    return ((n + m - 1) // m) * m


def _fused_lstm_kernel(*refs, n_layer, T, BP, H, GP):
    """Fused multi-layer LSTM over a full (padded) sequence.

    refs layout:
      refs[0]                  x_ref   (T, BP, DP)
      refs[1+3l : 4+3l]        w_ih_l (DP|GP, GP), w_hh_l (GP, GP), b_l (1, GP)
                               (gate columns packed [i|f|g|o], zero-padded)
      refs[1+3n]               out_ref (T, BP, GP)
      refs[2+3n]               gx_sc   (T, BP, GP) scratch (hoisted layer-0 proj.)
    """
    x_ref = refs[0]
    w_refs = refs[1:1 + 3 * n_layer]
    out_ref = refs[1 + 3 * n_layer]
    gx_sc = refs[2 + 3 * n_layer]

    DP = x_ref.shape[-1]

    # ---- Hoisted layer-0 input projection: one big MXU matmul over all steps.
    x_all = x_ref[...].reshape(T * BP, DP)
    gx = jnp.dot(x_all, w_refs[0][...], preferred_element_type=jnp.float32)
    gx_sc[...] = (gx + w_refs[2][...]).reshape(T, BP, GP)

    # ---- Hold the recurrent weights (and broadcast biases) across the loop.
    whh = [w_refs[3 * l + 1][...] for l in range(n_layer)]
    bias = [None] + [jnp.broadcast_to(w_refs[3 * l + 2][...], (BP, GP))
                     for l in range(1, n_layer)]

    # Lane-roll shifts (jnp.roll convention) bringing gate group k -> lanes [0,H).
    shift = [(GP - k * H) % GP for k in range(4)]

    def cell(gates, c_prev):
        s = jax.nn.sigmoid(gates)                  # i/f/o lanes useful (1 EUP pass)
        tg = jnp.tanh(gates)                       # g lanes useful     (1 EUP pass)
        f_al = pltpu.roll(s, shift[1], axis=1)     # f -> lanes [0, H)   (XLU)
        g_al = pltpu.roll(tg, shift[2], axis=1)    # g -> lanes [0, H)   (XLU)
        o_al = pltpu.roll(s, shift[3], axis=1)     # o -> lanes [0, H)   (XLU)
        c_new = f_al * c_prev + s * g_al           # i already sits in lanes [0, H)
        h_new = o_al * jnp.tanh(c_new)             # (1 EUP pass)
        return h_new, c_new                        # lanes [H:GP) = bounded garbage

    h = [jnp.zeros((BP, GP), jnp.float32) for _ in range(n_layer)]
    c = [jnp.zeros((BP, GP), jnp.float32) for _ in range(n_layer)]

    # ---- Wavefront over time: at iteration t, layer l advances to step t - l.
    # Layers are visited in decreasing order so layer l consumes layer l-1's
    # state from the previous wavefront iteration; within one iteration the
    # layer steps are independent and overlap on MXU / EUP / VPU.
    for t in range(T + n_layer - 1):
        for l in range(n_layer - 1, -1, -1):
            tl = t - l
            if tl < 0 or tl >= T:
                continue
            if l == 0:
                gates = gx_sc[tl] + jnp.dot(
                    h[0], whh[0], preferred_element_type=jnp.float32)
            else:
                # Garbage lanes [H:GP) of h[l-1]/h[l] hit zero-padded weight rows.
                gates = (jnp.dot(h[l - 1], w_refs[3 * l][...],
                                 preferred_element_type=jnp.float32)
                         + jnp.dot(h[l], whh[l],
                                   preferred_element_type=jnp.float32)
                         + bias[l])
            h[l], c[l] = cell(gates, c[l])
            if l == n_layer - 1:
                out_ref[tl] = h[l]   # lane-dense (BP, GP) unmasked store


def prepare_rnn_params(params):
    """One-time weight packing (hoisted out of the per-call path).

    PyTorch layout (4H, d_in) is transposed to (d_in, 4H) so the gate blocks
    [i|f|g|o] are already contiguous along lanes; rows are zero-padded to the
    padded input width and columns to GP = round_up(4H, 128)."""
    lstm = params["lstm"]
    n_layer = len(lstm)
    H = lstm[0][1].shape[1]
    GP = _round_up(4 * H, 128)
    flat = []
    for layer, (w_ih, w_hh, b) in enumerate(lstm):
        d_in = w_ih.shape[1]
        rows = _round_up(d_in, 128) if layer == 0 else GP
        flat.append(jnp.pad(w_ih.T, ((0, rows - d_in), (0, GP - 4 * H))))
        flat.append(jnp.pad(w_hh.T, ((0, GP - H), (0, GP - 4 * H))))
        flat.append(jnp.pad(b, ((0, 0), (0, GP - 4 * H))))
    return tuple(flat), H, n_layer


def init_rnn_params(key, in_dim, hidden_dim, n_layer, n_class=10):
    """Deterministic init, same shapes / uniform(-1/sqrt(H), 1/sqrt(H)) as PyTorch."""
    bound = 1.0 / math.sqrt(hidden_dim)
    params = {"lstm": []}
    for layer in range(n_layer):
        d_in = in_dim if layer == 0 else hidden_dim
        key, k1, k2, k3, k4 = jax.random.split(key, 5)
        w_ih = jax.random.uniform(k1, (4 * hidden_dim, d_in), jnp.float32, -bound, bound)
        w_hh = jax.random.uniform(k2, (4 * hidden_dim, hidden_dim), jnp.float32, -bound, bound)
        b_ih = jax.random.uniform(k3, (4 * hidden_dim,), jnp.float32, -bound, bound)
        b_hh = jax.random.uniform(k4, (4 * hidden_dim,), jnp.float32, -bound, bound)
        params["lstm"].append((w_ih, w_hh, (b_ih + b_hh).reshape(1, -1)))
    # TODO(synk): self.classifier (nn.Linear) is defined in __init__ but unused
    # in forward(); parameters are initialized here for parity but never applied.
    kb = 1.0 / math.sqrt(hidden_dim)
    key, k5, k6 = jax.random.split(key, 3)
    params["classifier"] = (
        jax.random.uniform(k5, (n_class, hidden_dim), jnp.float32, -kb, kb),
        jax.random.uniform(k6, (n_class,), jnp.float32, -kb, kb),
    )
    return params


@functools.partial(jax.jit, static_argnames=("H", "n_layer"))
def _rnn_forward_impl(flat_w, x, *, H, n_layer):
    B, T, D = x.shape
    DP = flat_w[0].shape[0]        # padded input width of layer 0
    GP = flat_w[1].shape[-1]       # packed/padded gate width (= 4H rounded to 128)
    BP = _round_up(B, 8)

    # time-major + zero-pad to TPU-friendly shapes (math-preserving).
    xt = jnp.transpose(x, (1, 0, 2))
    xt = jnp.pad(xt, ((0, 0), (0, BP - B), (0, DP - D)))

    kernel = functools.partial(_fused_lstm_kernel,
                               n_layer=n_layer, T=T, BP=BP, H=H, GP=GP)
    out_p = pl.pallas_call(
        kernel,
        out_shape=jax.ShapeDtypeStruct((T, BP, GP), jnp.float32),
        scratch_shapes=[pltpu.VMEM((T, BP, GP), jnp.float32)],
    )(xt, *flat_w)

    return jnp.transpose(out_p[:, :B, :H], (1, 0, 2))   # (B, T, H)


def rnn_forward(prepared, x):
    """Equivalent of `out, _ = self.lstm(x)` with x batch-first (B, T, D)."""
    flat_w, H, n_layer = prepared
    return _rnn_forward_impl(flat_w, x, H=H, n_layer=n_layer)


def _lstm_ref(params, x):
    """Pure-JAX reference (lax.scan) for correctness checking."""
    h_in = jnp.transpose(x, (1, 0, 2))
    B = x.shape[0]
    for (w_ih, w_hh, b) in params["lstm"]:
        H = w_hh.shape[1]

        def step(carry, x_t, w_ih=w_ih, w_hh=w_hh, b=b, H=H):
            h, c = carry
            gates = x_t @ w_ih.T + h @ w_hh.T + b
            i = jax.nn.sigmoid(gates[:, 0 * H:1 * H])
            f = jax.nn.sigmoid(gates[:, 1 * H:2 * H])
            g = jnp.tanh(gates[:, 2 * H:3 * H])
            o = jax.nn.sigmoid(gates[:, 3 * H:4 * H])
            c = f * c + i * g
            h = o * jnp.tanh(c)
            return (h, c), h

        init = (jnp.zeros((B, H), jnp.float32), jnp.zeros((B, H), jnp.float32))
        _, h_in = jax.lax.scan(step, init, h_in)
    return jnp.transpose(h_in, (1, 0, 2))


if __name__ == "__main__":
    in_dim, hidden_dim, n_layer = 28, 32, 2

    key = jax.random.PRNGKey(0)
    kx1, kx2, kp = jax.random.split(key, 3)
    x1 = jax.random.uniform(kx1, (3, 24, 28), jnp.float32)  # torch.rand((3, 24, 28))
    x2 = jax.random.uniform(kx2, (3, 12, 28), jnp.float32)  # torch.rand((3, 12, 28))

    params = init_rnn_params(kp, in_dim, hidden_dim, n_layer)
    prepared = prepare_rnn_params(params)   # weight pack/pad done once, not per call

    out1 = jax.block_until_ready(rnn_forward(prepared, x1))  # (3, 24, 32)
    out2 = jax.block_until_ready(rnn_forward(prepared, x2))  # (3, 12, 32)

    assert out1.shape == (3, 24, hidden_dim)
    assert out2.shape == (3, 12, hidden_dim)

    ref1 = _lstm_ref(params, x1)
    ref2 = _lstm_ref(params, x2)
    assert jnp.max(jnp.abs(out1 - ref1)) < 1e-4
    assert jnp.max(jnp.abs(out2 - ref2)) < 1e-4

    print("KERNEL_OK")
</pallas_src>

<mosaic_0001>
module attributes {stable_mosaic.version = 11 : i64} {
  func.func @_fused_lstm_kernel(%arg0: memref<24x8x128xf32, #tpu.memory_space<vmem>>, %arg1: memref<128x128xf32, #tpu.memory_space<vmem>>, %arg2: memref<128x128xf32, #tpu.memory_space<vmem>>, %arg3: memref<1x128xf32, #tpu.memory_space<vmem>>, %arg4: memref<128x128xf32, #tpu.memory_space<vmem>>, %arg5: memref<128x128xf32, #tpu.memory_space<vmem>>, %arg6: memref<1x128xf32, #tpu.memory_space<vmem>>, %arg7: memref<24x8x128xf32, #tpu.memory_space<vmem>>, %arg8: memref<24x8x128xf32, #tpu.memory_space<vmem>>) attributes {dimension_semantics = [], scalar_prefetch = 0 : i64, scratch_operands = 1 : i64, tpu.core_type = #tpu.core_type<tc>} {
    %c0 = arith.constant 0 : index
    %c0_0 = arith.constant 0 : index
    %c0_1 = arith.constant 0 : index
    %0 = vector.load %arg0[%c0, %c0_0, %c0_1] : memref<24x8x128xf32, #tpu.memory_space<vmem>>, vector<24x8x128xf32>
    %1 = vector.shape_cast %0 : vector<24x8x128xf32> to vector<192x128xf32>
    %c0_2 = arith.constant 0 : index
    %c0_3 = arith.constant 0 : index
    %2 = vector.load %arg1[%c0_2, %c0_3] : memref<128x128xf32, #tpu.memory_space<vmem>>, vector<128x128xf32>
    %cst = arith.constant dense<0.000000e+00> : vector<192x128xf32>
    %3 = tpu.matmul %1, %2, %cst {dimension_numbers = #tpu.dot_dimension_numbers<[1], [0], [0], [1], [0, 0, 1, 1], [], []>} : vector<192x128xf32>, vector<128x128xf32>, vector<192x128xf32> -> vector<192x128xf32>
    %c0_4 = arith.constant 0 : index
    %c0_5 = arith.constant 0 : index
    %4 = vector.load %arg3[%c0_4, %c0_5] : memref<1x128xf32, #tpu.memory_space<vmem>>, vector<1x128xf32>
    %5 = vector.broadcast %4 : vector<1x128xf32> to vector<192x128xf32>
    %6 = arith.addf %3, %5 : vector<192x128xf32>
    %7 = vector.shape_cast %6 : vector<192x128xf32> to vector<24x8x128xf32>
    %c0_6 = arith.constant 0 : index
    %c0_7 = arith.constant 0 : index
    %c0_8 = arith.constant 0 : index
    %8 = vector.load %arg8[%c0_6, %c0_7, %c0_8] : memref<24x8x128xf32, #tpu.memory_space<vmem>>, vector<24x8x128xf32>
    tpu.vector_store %arg8[%c0_6, %c0_7, %c0_8], %7 {strides = array<i32>} : memref<24x8x128xf32, #tpu.memory_space<vmem>>, vector<24x8x128xf32>,
    %c0_9 = arith.constant 0 : index
    %c0_10 = arith.constant 0 : index
    %9 = vector.load %arg2[%c0_9, %c0_10] : memref<128x128xf32, #tpu.memory_space<vmem>>, vector<128x128xf32>
    %c0_11 = arith.constant 0 : index
    %c0_12 = arith.constant 0 : index
    %10 = vector.load %arg5[%c0_11, %c0_12] : memref<128x128xf32, #tpu.memory_space<vmem>>, vector<128x128xf32>
    %c0_13 = arith.constant 0 : index
    %c0_14 = arith.constant 0 : index
    %11 = vector.load %arg6[%c0_13, %c0_14] : memref<1x128xf32, #tpu.memory_space<vmem>>, vector<1x128xf32>
    %12 = vector.shape_cast %11 : vector<1x128xf32> to vector<1x128xf32>
    %13 = vector.broadcast %12 : vector<1x128xf32> to vector<8x128xf32>
    %cst_15 = arith.constant 0.000000e+00 : f32
    %14 = vector.broadcast %cst_15 : f32 to vector<8x128xf32>
    %cst_16 = arith.constant 0.000000e+00 : f32
    %15 = vector.broadcast %cst_16 : f32 to vector<8x128xf32>
    %cst_17 = arith.constant 0.000000e+00 : f32
    %16 = vector.broadcast %cst_17 : f32 to vector<8x128xf32>
    %cst_18 = arith.constant 0.000000e+00 : f32
    %17 = vector.broadcast %cst_18 : f32 to vector<8x128xf32>
    %c0_19 = arith.constant 0 : index
    %c0_20 = arith.constant 0 : index
    %c0_21 = arith.constant 0 : index
    %18 = vector.load %arg8[%c0_19, %c0_20, %c0_21] : memref<24x8x128xf32, #tpu.memory_space<vmem>>, vector<1x8x128xf32>
    %19 = vector.shape_cast %18 : vector<1x8x128xf32> to vector<8x128xf32>
    %cst_22 = arith.constant dense<0.000000e+00> : vector<8x128xf32>
    %20 = tpu.matmul %14, %9, %cst_22 {dimension_numbers = #tpu.dot_dimension_numbers<[1], [0], [0], [1], [0, 0, 1, 1], [], []>} : vector<8x128xf32>, vector<128x128xf32>, vector<8x128xf32> -> vector<8x128xf32>
    %21 = arith.addf %19, %20 : vector<8x128xf32>
    %22 = arith.negf %21 : vector<8x128xf32>
    %23 = math.exp %22 : vector<8x128xf32>
    %cst_23 = arith.constant 1.000000e+00 : f32
    %24 = vector.broadcast %cst_23 : f32 to vector<8x128xf32>
    %25 = arith.addf %24, %23 : vector<8x128xf32>
    %26 = arith.divf %24, %25 : vector<8x128xf32>
    %27 = math.tanh %21 : vector<8x128xf32>
    %c96_i32 = arith.constant 96 : i32
    %28 = tpu.dynamic_rotate %26 by %c96_i32 dim 1 : vector<8x128xf32>, i32 -> vector<8x128xf32>
    %c64_i32 = arith.constant 64 : i32
    %29 = tpu.dynamic_rotate %27 by %c64_i32 dim 1 : vector<8x128xf32>, i32 -> vector<8x128xf32>
    %c32_i32 = arith.constant 32 : i32
    %30 = tpu.dynamic_rotate %26 by %c32_i32 dim 1 : vector<8x128xf32>, i32 -> vector<8x128xf32>
    %31 = arith.mulf %28, %16 : vector<8x128xf32>
    %32 = arith.mulf %26, %29 : vector<8x128xf32>
    %33 = arith.addf %31, %32 : vector<8x128xf32>
    %34 = math.tanh %33 : vector<8x128xf32>
    %35 = arith.mulf %30, %34 : vector<8x128xf32>
    %c0_24 = arith.constant 0 : index
    %c0_25 = arith.constant 0 : index
    %36 = vector.load %arg4[%c0_24, %c0_25] : memref<128x128xf32, #tpu.memory_space<vmem>>, vector<128x128xf32>
    %cst_26 = arith.constant dense<0.000000e+00> : vector<8x128xf32>
    %37 = tpu.matmul %35, %36, %cst_26 {dimension_numbers = #tpu.dot_dimension_numbers<[1], [0], [0], [1], [0, 0, 1, 1], [], []>} : vector<8x128xf32>, vector<128x128xf32>, vector<8x128xf32> -> vector<8x128xf32>
    %cst_27 = arith.constant dense<0.000000e+00> : vector<8x128xf32>
    %38 = tpu.matmul %15, %10, %cst_27 {dimension_numbers = #tpu.dot_dimension_numbers<[1], [0], [0], [1], [0, 0, 1, 1], [], []>} : vector<8x128xf32>, vector<128x128xf32>, vector<8x128xf32> -> vector<8x128xf32>
    %39 = arith.addf %37, %38 : vector<8x128xf32>
    %40 = arith.addf %39, %13 : vector<8x128xf32>
    %41 = arith.negf %40 : vector<8x128xf32>
    %42 = math.exp %41 : vector<8x128xf32>
    %cst_28 = arith.constant 1.000000e+00 : f32
    %43 = vector.broadcast %cst_28 : f32 to vector<8x128xf32>
    %44 = arith.addf %43, %42 : vector<8x128xf32>
    %45 = arith.divf %43, %44 : vector<8x128xf32>
    %46 = math.tanh %40 : vector<8x128xf32>
    %c96_i32_29 = arith.constant 96 : i32
    %47 = tpu.dynamic_rotate %45 by %c96_i32_29 dim 1 : vector<8x128xf32>, i32 -> vector<8x128xf32>
    %c64_i32_30 = arith.constant 64 : i32
    %48 = tpu.dynamic_rotate %46 by %c64_i32_30 dim 1 : vector<8x128xf32>, i32 -> vector<8x128xf32>
    %c32_i32_31 = arith.constant 32 : i32
    %49 = tpu.dynamic_rotate %45 by %c32_i32_31 dim 1 : vector<8x128xf32>, i32 -> vector<8x128xf32>
    %50 = arith.mulf %47, %17 : vector<8x128xf32>
    %51 = arith.mulf %45, %48 : vector<8x128xf32>
    %52 = arith.addf %50, %51 : vector<8x128xf32>
    %53 = math.tanh %52 : vector<8x128xf32>
    %54 = arith.mulf %49, %53 : vector<8x128xf32>
    %c0_32 = arith.constant 0 : index
    %c0_33 = arith.constant 0 : index
    %c0_34 = arith.constant 0 : index
    %55 = vector.load %arg7[%c0_32, %c0_33, %c0_34] : memref<24x8x128xf32, #tpu.memory_space<vmem>>, vector<1x8x128xf32>
    %56 = vector.shape_cast %55 : vector<1x8x128xf32> to vector<8x128xf32>
    %57 = vector.shape_cast %54 : vector<8x128xf32> to vector<1x8x128xf32>
    tpu.vector_store %arg7[%c0_32, %c0_33, %c0_34], %57 {strides = array<i32>} : memref<24x8x128xf32, #tpu.memory_space<vmem>>, vector<1x8x128xf32>,
    %c1 = arith.constant 1 : index
    %c0_35 = arith.constant 0 : index
    %c0_36 = arith.constant 0 : index
    %58 = vector.load %arg8[%c1, %c0_35, %c0_36] : memref<24x8x128xf32, #tpu.memory_space<vmem>>, vector<1x8x128xf32>
    %59 = vector.shape_cast %58 : vector<1x8x128xf32> to vector<8x128xf32>
    %cst_37 = arith.constant dense<0.000000e+00> : vector<8x128xf32>
    %60 = tpu.matmul %35, %9, %cst_37 {dimension_numbers = #tpu.dot_dimension_numbers<[1], [0], [0], [1], [0, 0, 1, 1], [], []>} : vector<8x128xf32>, vector<128x128xf32>, vector<8x128xf32> -> vector<8x128xf32>
    %61 = arith.addf %59, %60 : vector<8x128xf32>
    %62 = arith.negf %61 : vector<8x128xf32>
    %63 = math.exp %62 : vector<8x128xf32>
    %cst_38 = arith.constant 1.000000e+00 : f32
    %64 = vector.broadcast %cst_38 : f32 to vector<8x128xf32>
    %65 = arith.addf %64, %63 : vector<8x128xf32>
    %66 = arith.divf %64, %65 : vector<8x128xf32>
    %67 = math.tanh %61 : vector<8x128xf32>
    %c96_i32_39 = arith.constant 96 : i32
    %68 = tpu.dynamic_rotate %66 by %c96_i32_39 dim 1 : vector<8x128xf32>, i32 -> vector<8x128xf32>
    %c64_i32_40 = arith.constant 64 : i32
    %69 = tpu.dynamic_rotate %67 by %c64_i32_40 dim 1 : vector<8x128xf32>, i32 -> vector<8x128xf32>
    %c32_i32_41 = arith.constant 32 : i32
    %70 = tpu.dynamic_rotate %66 by %c32_i32_41 dim 1 : vector<8x128xf32>, i32 -> vector<8x128xf32>
    %71 = arith.mulf %68, %33 : vector<8x128xf32>
    %72 = arith.mulf %66, %69 : vector<8x128xf32>
    %73 = arith.addf %71, %72 : vector<8x128xf32>
    %74 = math.tanh %73 : vector<8x128xf32>
    %75 = arith.mulf %70, %74 : vector<8x128xf32>
    %c0_42 = arith.constant 0 : index
    %c0_43 = arith.constant 0 : index
    %76 = vector.load %arg4[%c0_42, %c0_43] : memref<128x128xf32, #tpu.memory_space<vmem>>, vector<128x128xf32>
    %cst_44 = arith.constant dense<0.000000e+00> : vector<8x128xf32>
    %77 = tpu.matmul %75, %76, %cst_44 {dimension_numbers = #tpu.dot_dimension_numbers<[1], [0], [0], [1], [0, 0, 1, 1], [], []>} : vector<8x128xf32>, vector<128x128xf32>, vector<8x128xf32> -> vector<8x128xf32>
    %cst_45 = arith.constant dense<0.000000e+00> : vector<8x128xf32>
    %78 = tpu.matmul %54, %10, %cst_45 {dimension_numbers = #tpu.dot_dimension_numbers<[1], [0], [0], [1], [0, 0, 1, 1], [], []>} : vector<8x128xf32>, vector<128x128xf32>, vector<8x128xf32> -> vector<8x128xf32>
    %79 = arith.addf %77, %78 : vector<8x128xf32>
    %80 = arith.addf %79, %13 : vector<8x128xf32>
    %81 = arith.negf %80 : vector<8x128xf32>
    %82 = math.exp %81 : vector<8x128xf32>
    %cst_46 = arith.constant 1.000000e+00 : f32
    %83 = vector.broadcast %cst_46 : f32 to vector<8x128xf32>
    %84 = arith.addf %83, %82 : vector<8x128xf32>
    %85 = arith.divf %83, %84 : vector<8x128xf32>
    %86 = math.tanh %80 : vector<8x128xf32>
    %c96_i32_47 = arith.constant 96 : i32
    %87 = tpu.dynamic_rotate %85 by %c96_i32_47 dim 1 : vector<8x128xf32>, i32 -> vector<8x128xf32>
    %c64_i32_48 = arith.constant 64 : i32
    %88 = tpu.dynamic_rotate %86 by %c64_i32_48 dim 1 : vector<8x128xf32>, i32 -> vector<8x128xf32>
    %c32_i32_49 = arith.constant 32 : i32
    %89 = tpu.dynamic_rotate %85 by %c32_i32_49 dim 1 : vector<8x128xf32>, i32 -> vector<8x128xf32>
    %90 = arith.mulf %87, %52 : vector<8x128xf32>
    %91 = arith.mulf %85, %88 : vector<8x128xf32>
    %92 = arith.addf %90, %91 : vector<8x128xf32>
    %93 = math.tanh %92 : vector<8x128xf32>
    %94 = arith.mulf %89, %93 : vector<8x128xf32>
    %c1_50 = arith.constant 1 : index
    %c0_51 = arith.constant 0 : index
    %c0_52 = arith.constant 0 : index
    %95 = vector.load %arg7[%c1_50, %c0_51, %c0_52] : memref<24x8x128xf32, #tpu.memory_space<vmem>>, vector<1x8x128xf32>
    %96 = vector.shape_cast %95 : vector<1x8x128xf32> to vector<8x128xf32>
    %97 = vector.shape_cast %94 : vector<8x128xf32> to vector<1x8x128xf32>
    tpu.vector_store %arg7[%c1_50, %c0_51, %c0_52], %97 {strides = array<i32>} : memref<24x8x128xf32, #tpu.memory_space<vmem>>, vector<1x8x128xf32>,
    %c2 = arith.constant 2 : index
    %c0_53 = arith.constant 0 : index
    %c0_54 = arith.constant 0 : index
    %98 = vector.load %arg8[%c2, %c0_53, %c0_54] : memref<24x8x128xf32, #tpu.memory_space<vmem>>, vector<1x8x128xf32>
    %99 = vector.shape_cast %98 : vector<1x8x128xf32> to vector<8x128xf32>
    %cst_55 = arith.constant dense<0.000000e+00> : vector<8x128xf32>
    %100 = tpu.matmul %75, %9, %cst_55 {dimension_numbers = #tpu.dot_dimension_numbers<[1], [0], [0], [1], [0, 0, 1, 1], [], []>} : vector<8x128xf32>, vector<128x128xf32>, vector<8x128xf32> -> vector<8x128xf32>
    %101 = arith.addf %99, %100 : vector<8x128xf32>
    %102 = arith.negf %101 : vector<8x128xf32>
    %103 = math.exp %102 : vector<8x128xf32>
    %cst_56 = arith.constant 1.000000e+00 : f32
    %104 = vector.broadcast %cst_56 : f32 to vector<8x128xf32>
    %105 = arith.addf %104, %103 : vector<8x128xf32>
    %106 = arith.divf %104, %105 : vector<8x128xf32>
    %107 = math.tanh %101 : vector<8x128xf32>
    %c96_i32_57 = arith.constant 96 : i32
    %108 = tpu.dynamic_rotate %106 by %c96_i32_57 dim 1 : vector<8x128xf32>, i32 -> vector<8x128xf32>
    %c64_i32_58 = arith.constant 64 : i32
    %109 = tpu.dynamic_rotate %107 by %c64_i32_58 dim 1 : vector<8x128xf32>, i32 -> vector<8x128xf32>
    %c32_i32_59 = arith.constant 32 : i32
    %110 = tpu.dynamic_rotate %106 by %c32_i32_59 dim 1 : vector<8x128xf32>, i32 -> vector<8x128xf32>
    %111 = arith.mulf %108, %73 : vector<8x128xf32>
    %112 = arith.mulf %106, %109 : vector<8x128xf32>
    %113 = arith.addf %111, %112 : vector<8x128xf32>
    %114 = math.tanh %113 : vector<8x128xf32>
    %115 = arith.mulf %110, %114 : vector<8x128xf32>
    %c0_60 = arith.constant 0 : index
    %c0_61 = arith.constant 0 : index
    %116 = vector.load %arg4[%c0_60, %c0_61] : memref<128x128xf32, #tpu.memory_space<vmem>>, vector<128x128xf32>
    %cst_62 = arith.constant dense<0.000000e+00> : vector<8x128xf32>
    %117 = tpu.matmul %115, %116, %cst_62 {dimension_numbers = #tpu.dot_dimension_numbers<[1], [0], [0], [1], [0, 0, 1, 1], [], []>} : vector<8x128xf32>, vector<128x128xf32>, vector<8x128xf32> -> vector<8x128xf32>
    %cst_63 = arith.constant dense<0.000000e+00> : vector<8x128xf32>
    %118 = tpu.matmul %94, %10, %cst_63 {dimension_numbers = #tpu.dot_dimension_numbers<[1], [0], [0], [1], [0, 0, 1, 1], [], []>} : vector<8x128xf32>, vector<128x128xf32>, vector<8x128xf32> -> vector<8x128xf32>
    %119 = arith.addf %117, %118 : vector<8x128xf32>
    %120 = arith.addf %119, %13 : vector<8x128xf32>
    %121 = arith.negf %120 : vector<8x128xf32>
    %122 = math.exp %121 : vector<8x128xf32>
    %cst_64 = arith.constant 1.000000e+00 : f32
    %123 = vector.broadcast %cst_64 : f32 to vector<8x128xf32>
    %124 = arith.addf %123, %122 : vector<8x128xf32>
    %125 = arith.divf %123, %124 : vector<8x128xf32>
    %126 = math.tanh %120 : vector<8x128xf32>
    %c96_i32_65 = arith.constant 96 : i32
    %127 = tpu.dynamic_rotate %125 by %c96_i32_65 dim 1 : vector<8x128xf32>, i32 -> vector<8x128xf32>
    %c64_i32_66 = arith.constant 64 : i32
    %128 = tpu.dynamic_rotate %126 by %c64_i32_66 dim 1 : vector<8x128xf32>, i32 -> vector<8x128xf32>
    %c32_i32_67 = arith.constant 32 : i32
    %129 = tpu.dynamic_rotate %125 by %c32_i32_67 dim 1 : vector<8x128xf32>, i32 -> vector<8x128xf32>
    %130 = arith.mulf %127, %92 : vector<8x128xf32>
    %131 = arith.mulf %125, %128 : vector<8x128xf32>
    %132 = arith.addf %130, %131 : vector<8x128xf32>
    %133 = math.tanh %132 : vector<8x128xf32>
    %134 = arith.mulf %129, %133 : vector<8x128xf32>
    %c2_68 = arith.constant 2 : index
    %c0_69 = arith.constant 0 : index
    %c0_70 = arith.constant 0 : index
    %135 = vector.load %arg7[%c2_68, %c0_69, %c0_70] : memref<24x8x128xf32, #tpu.memory_space<vmem>>, vector<1x8x128xf32>
    %136 = vector.shape_cast %135 : vector<1x8x128xf32> to vector<8x128xf32>
    %137 = vector.shape_cast %134 : vector<8x128xf32> to vector<1x8x128xf32>
    tpu.vector_store %arg7[%c2_68, %c0_69, %c0_70], %137 {strides = array<i32>} : memref<24x8x128xf32, #tpu.memory_space<vmem>>, vector<1x8x128xf32>,
    %c3 = arith.constant 3 : index
    %c0_71 = arith.constant 0 : index
    %c0_72 = arith.constant 0 : index
    %138 = vector.load %arg8[%c3, %c0_71, %c0_72] : memref<24x8x128xf32, #tpu.memory_space<vmem>>, vector<1x8x128xf32>
    %139 = vector.shape_cast %138 : vector<1x8x128xf32> to vector<8x128xf32>
    %cst_73 = arith.constant dense<0.000000e+00> : vector<8x128xf32>
    %140 = tpu.matmul %115, %9, %cst_73 {dimension_numbers = #tpu.dot_dimension_numbers<[1], [0], [0], [1], [0, 0, 1, 1], [], []>} : vector<8x128xf32>, vector<128x128xf32>, vector<8x128xf32> -> vector<8x128xf32>
    %141 = arith.addf %139, %140 : vector<8x128xf32>
    %142 = arith.negf %141 : vector<8x128xf32>
    %143 = math.exp %142 : vector<8x128xf32>
    %cst_74 = arith.constant 1.000000e+00 : f32
    %144 = vector.broadcast %cst_74 : f32 to vector<8x128xf32>
    %145 = arith.addf %144, %143 : vector<8x128xf32>
    %146 = arith.divf %144, %145 : vector<8x128xf32>
    %147 = math.tanh %141 : vector<8x128xf32>
    %c96_i32_75 = arith.constant 96 : i32
    %148 = tpu.dynamic_rotate %146 by %c96_i32_75 dim 1 : vector<8x128xf32>, i32 -> vector<8x128xf32>
    %c64_i32_76 = arith.constant 64 : i32
    %149 = tpu.dynamic_rotate %147 by %c64_i32_76 dim 1 : vector<8x128xf32>, i32 -> vector<8x128xf32>
    %c32_i32_77 = arith.constant 32 : i32
    %150 = tpu.dynamic_rotate %146 by %c32_i32_77 dim 1 : vector<8x128xf32>, i32 -> vector<8x128xf32>
    %151 = arith.mulf %148, %113 : vector<8x128xf32>
    %152 = arith.mulf %146, %149 : vector<8x128xf32>
    %153 = arith.addf %151, %152 : vector<8x128xf32>
    %154 = math.tanh %153 : vector<8x128xf32>
    %155 = arith.mulf %150, %154 : vector<8x128xf32>
    %c0_78 = arith.constant 0 : index
    %c0_79 = arith.constant 0 : index
    %156 = vector.load %arg4[%c0_78, %c0_79] : memref<128x128xf32, #tpu.memory_space<vmem>>, vector<128x128xf32>
    %cst_80 = arith.constant dense<0.000000e+00> : vector<8x128xf32>
    %157 = tpu.matmul %155, %156, %cst_80 {dimension_numbers = #tpu.dot_dimension_numbers<[1], [0], [0], [1], [0, 0, 1, 1], [], []>} : vector<8x128xf32>, vector<128x128xf32>, vector<8x128xf32> -> vector<8x128xf32>
    %cst_81 = arith.constant dense<0.000000e+00> : vector<8x128xf32>
    %158 = tpu.matmul %134, %10, %cst_81 {dimension_numbers = #tpu.dot_dimension_numbers<[1], [0], [0], [1], [0, 0, 1, 1], [], []>} : vector<8x128xf32>, vector<128x128xf32>, vector<8x128xf32> -> vector<8x128xf32>
    %159 = arith.addf %157, %158 : vector<8x128xf32>
    %160 = arith.addf %159, %13 : vector<8x128xf32>
    %161 = arith.negf %160 : vector<8x128xf32>
    %162 = math.exp %161 : vector<8x128xf32>
    %cst_82 = arith.constant 1.000000e+00 : f32
    %163 = vector.broadcast %cst_82 : f32 to vector<8x128xf32>
    %164 = arith.addf %163, %162 : vector<8x128xf32>
    %165 = arith.divf %163, %164 : vector<8x128xf32>
    %166 = math.tanh %160 : vector<8x128xf32>
    %c96_i32_83 = arith.constant 96 : i32
    %167 = tpu.dynamic_rotate %165 by %c96_i32_83 dim 1 : vector<8x128xf32>, i32 -> vector<8x128xf32>
    %c64_i32_84 = arith.constant 64 : i32
    %168 = tpu.dynamic_rotate %166 by %c64_i32_84 dim 1 : vector<8x128xf32>, i32 -> vector<8x128xf32>
    %c32_i32_85 = arith.constant 32 : i32
    %169 = tpu.dynamic_rotate %165 by %c32_i32_85 dim 1 : vector<8x128xf32>, i32 -> vector<8x128xf32>
    %170 = arith.mulf %167, %132 : vector<8x128xf32>
    %171 = arith.mulf %165, %168 : vector<8x128xf32>
    %172 = arith.addf %170, %171 : vector<8x128xf32>
    %173 = math.tanh %172 : vector<8x128xf32>
    %174 = arith.mulf %169, %173 : vector<8x128xf32>
    %c3_86 = arith.constant 3 : index
    %c0_87 = arith.constant 0 : index
    %c0_88 = arith.constant 0 : index
    %175 = vector.load %arg7[%c3_86, %c0_87, %c0_88] : memref<24x8x128xf32, #tpu.memory_space<vmem>>, vector<1x8x128xf32>
    %176 = vector.shape_cast %175 : vector<1x8x128xf32> to vector<8x128xf32>
    %177 = vector.shape_cast %174 : vector<8x128xf32> to vector<1x8x128xf32>
    tpu.vector_store %arg7[%c3_86, %c0_87, %c0_88], %177 {strides = array<i32>} : memref<24x8x128xf32, #tpu.memory_space<vmem>>, vector<1x8x128xf32>,
    %c4 = arith.constant 4 : index
    %c0_89 = arith.constant 0 : index
    %c0_90 = arith.constant 0 : index
    %178 = vector.load %arg8[%c4, %c0_89, %c0_90] : memref<24x8x128xf32, #tpu.memory_space<vmem>>, vector<1x8x128xf32>
    %179 = vector.shape_cast %178 : vector<1x8x128xf32> to vector<8x128xf32>
    %cst_91 = arith.constant dense<0.000000e+00> : vector<8x128xf32>
    %180 = tpu.matmul %155, %9, %cst_91 {dimension_numbers = #tpu.dot_dimension_numbers<[1], [0], [0], [1], [0, 0, 1, 1], [], []>} : vector<8x128xf32>, vector<128x128xf32>, vector<8x128xf32> -> vector<8x128xf32>
    %181 = arith.addf %179, %180 : vector<8x128xf32>
    %182 = arith.negf %181 : vector<8x128xf32>
    %183 = math.exp %182 : vector<8x128xf32>
    %cst_92 = arith.constant 1.000000e+00 : f32
    %184 = vector.broadcast %cst_92 : f32 to vector<8x128xf32>
    %185 = arith.addf %184, %183 : vector<8x128xf32>
    %186 = arith.divf %184, %185 : vector<8x128xf32>
    %187 = math.tanh %181 : vector<8x128xf32>
    %c96_i32_93 = arith.constant 96 : i32
    %188 = tpu.dynamic_rotate %186 by %c96_i32_93 dim 1 : vector<8x128xf32>, i32 -> vector<8x128xf32>
    %c64_i32_94 = arith.constant 64 : i32
    %189 = tpu.dynamic_rotate %187 by %c64_i32_94 dim 1 : vector<8x128xf32>, i32 -> vector<8x128xf32>
    %c32_i32_95 = arith.constant 32 : i32
    %190 = tpu.dynamic_rotate %186 by %c32_i32_95 dim 1 : vector<8x128xf32>, i32 -> vector<8x128xf32>
    %191 = arith.mulf %188, %153 : vector<8x128xf32>
    %192 = arith.mulf %186, %189 : vector<8x128xf32>
    %193 = arith.addf %191, %192 : vector<8x128xf32>
    %194 = math.tanh %193 : vector<8x128xf32>
    %195 = arith.mulf %190, %194 : vector<8x128xf32>
    %c0_96 = arith.constant 0 : index
    %c0_97 = arith.constant 0 : index
    %196 = vector.load %arg4[%c0_96, %c0_97] : memref<128x128xf32, #tpu.memory_space<vmem>>, vector<128x128xf32>
    %cst_98 = arith.constant dense<0.000000e+00> : vector<8x128xf32>
    %197 = tpu.matmul %195, %196, %cst_98 {dimension_numbers = #tpu.dot_dimension_numbers<[1], [0], [0], [1], [0, 0, 1, 1], [], []>} : vector<8x128xf32>, vector<128x128xf32>, vector<8x128xf32> -> vector<8x128xf32>
    %cst_99 = arith.constant dense<0.000000e+00> : vector<8x128xf32>
    %198 = tpu.matmul %174, %10, %cst_99 {dimension_numbers = #tpu.dot_dimension_numbers<[1], [0], [0], [1], [0, 0, 1, 1], [], []>} : vector<8x128xf32>, vector<128x128xf32>, vector<8x128xf32> -> vector<8x128xf32>
    %199 = arith.addf %197, %198 : vector<8x128xf32>
    %200 = arith.addf %199, %13 : vector<8x128xf32>
    %201 = arith.negf %200 : vector<8x128xf32>
    %202 = math.exp %201 : vector<8x128xf32>
    %cst_100 = arith.constant 1.000000e+00 : f32
    %203 = vector.broadcast %cst_100 : f32 to vector<8x128xf32>
    %204 = arith.addf %203, %202 : vector<8x128xf32>
    %205 = arith.divf %203, %204 : vector<8x128xf32>
    %206 = math.tanh %200 : vector<8x128xf32>
    %c96_i32_101 = arith.constant 96 : i32
    %207 = tpu.dynamic_rotate %205 by %c96_i32_101 dim 1 : vector<8x128xf32>, i32 -> vector<8x128xf32>
    %c64_i32_102 = arith.constant 64 : i32
    %208 = tpu.dynamic_rotate %206 by %c64_i32_102 dim 1 : vector<8x128xf32>, i32 -> vector<8x128xf32>
    %c32_i32_103 = arith.constant 32 : i32
    %209 = tpu.dynamic_rotate %205 by %c32_i32_103 dim 1 : vector<8x128xf32>, i32 -> vector<8x128xf32>
    %210 = arith.mulf %207, %172 : vector<8x128xf32>
    %211 = arith.mulf %205, %208 : vector<8x128xf32>
    %212 = arith.addf %210, %211 : vector<8x128xf32>
    %213 = math.tanh %212 : vector<8x128xf32>
    %214 = arith.mulf %209, %213 : vector<8x128xf32>
    %c4_104 = arith.constant 4 : index
    %c0_105 = arith.constant 0 : index
    %c0_106 = arith.constant 0 : index
    %215 = vector.load %arg7[%c4_104, %c0_105, %c0_106] : memref<24x8x128xf32, #tpu.memory_space<vmem>>, vector<1x8x128xf32>
    %216 = vector.shape_cast %215 : vector<1x8x128xf32> to vector<8x128xf32>
    %217 = vector.shape_cast %214 : vector<8x128xf32> to vector<1x8x128xf32>
    tpu.vector_store %arg7[%c4_104, %c0_105, %c0_106], %217 {strides = array<i32>} : memref<24x8x128xf32, #tpu.memory_space<vmem>>, vector<1x8x128xf32>,
    %c5 = arith.constant 5 : index
    %c0_107 = arith.constant 0 : index
    %c0_108 = arith.constant 0 : index
    %218 = vector.load %arg8[%c5, %c0_107, %c0_108] : memref<24x8x128xf32, #tpu.memory_space<vmem>>, vector<1x8x128xf32>
    %219 = vector.shape_cast %218 : vector<1x8x128xf32> to vector<8x128xf32>
    %cst_109 = arith.constant dense<0.000000e+00> : vector<8x128xf32>
    %220 = tpu.matmul %195, %9, %cst_109 {dimension_numbers = #tpu.dot_dimension_numbers<[1], [0], [0], [1], [0, 0, 1, 1], [], []>} : vector<8x128xf32>, vector<128x128xf32>, vector<8x128xf32> -> vector<8x128xf32>
    %221 = arith.addf %219, %220 : vector<8x128xf32>
    %222 = arith.negf %221 : vector<8x128xf32>
    %223 = math.exp %222 : vector<8x128xf32>
    %cst_110 = arith.constant 1.000000e+00 : f32
    %224 = vector.broadcast %cst_110 : f32 to vector<8x128xf32>
    %225 = arith.addf %224, %223 : vector<8x128xf32>
    %226 = arith.divf %224, %225 : vector<8x128xf32>
    %227 = math.tanh %221 : vector<8x128xf32>
    %c96_i32_111 = arith.constant 96 : i32
    %228 = tpu.dynamic_rotate %226 by %c96_i32_111 dim 1 : vector<8x128xf32>, i32 -> vector<8x128xf32>
    %c64_i32_112 = arith.constant 64 : i32
    %229 = tpu.dynamic_rotate %227 by %c64_i32_112 dim 1 : vector<8x128xf32>, i32 -> vector<8x128xf32>
    %c32_i32_113 = arith.constant 32 : i32
    %230 = tpu.dynamic_rotate %226 by %c32_i32_113 dim 1 : vector<8x128xf32>, i32 -> vector<8x128xf32>
    %231 = arith.mulf %228, %193 : vector<8x128xf32>
    %232 = arith.mulf %226, %229 : vector<8x128xf32>
    %233 = arith.addf %231, %232 : vector<8x128xf32>
    %234 = math.tanh %233 : vector<8x128xf32>
    %235 = arith.mulf %230, %234 : vector<8x128xf32>
    %c0_114 = arith.constant 0 : index
    %c0_115 = arith.constant 0 : index
    %236 = vector.load %arg4[%c0_114, %c0_115] : memref<128x128xf32, #tpu.memory_space<vmem>>, vector<128x128xf32>
    %cst_116 = arith.constant dense<0.000000e+00> : vector<8x128xf32>
    %237 = tpu.matmul %235, %236, %cst_116 {dimension_numbers = #tpu.dot_dimension_numbers<[1], [0], [0], [1], [0, 0, 1, 1], [], []>} : vector<8x128xf32>, vector<128x128xf32>, vector<8x128xf32> -> vector<8x128xf32>
    %cst_117 = arith.constant dense<0.000000e+00> : vector<8x128xf32>
    %238 = tpu.matmul %214, %10, %cst_117 {dimension_numbers = #tpu.dot_dimension_numbers<[1], [0], [0], [1], [0, 0, 1, 1], [], []>} : vector<8x128xf32>, vector<128x128xf32>, vector<8x128xf32> -> vector<8x128xf32>
    %239 = arith.addf %237, %238 : vector<8x128xf32>
    %240 = arith.addf %239, %13 : vector<8x128xf32>
    %241 = arith.negf %240 : vector<8x128xf32>
    %242 = math.exp %241 : vector<8x128xf32>
    %cst_118 = arith.constant 1.000000e+00 : f32
    %243 = vector.broadcast %cst_118 : f32 to vector<8x128xf32>
    %244 = arith.addf %243, %242 : vector<8x128xf32>
    %245 = arith.divf %243, %244 : vector<8x128xf32>
    %246 = math.tanh %240 : vector<8x128xf32>
    %c96_i32_119 = arith.constant 96 : i32
    %247 = tpu.dynamic_rotate %245 by %c96_i32_119 dim 1 : vector<8x128xf32>, i32 -> vector<8x128xf32>
    %c64_i32_120 = arith.constant 64 : i32
    %248 = tpu.dynamic_rotate %246 by %c64_i32_120 dim 1 : vector<8x128xf32>, i32 -> vector<8x128xf32>
    %c32_i32_121 = arith.constant 32 : i32
    %249 = tpu.dynamic_rotate %245 by %c32_i32_121 dim 1 : vector<8x128xf32>, i32 -> vector<8x128xf32>
    %250 = arith.mulf %247, %212 : vector<8x128xf32>
    %251 = arith.mulf %245, %248 : vector<8x128xf32>
    %252 = arith.addf %250, %251 : vector<8x128xf32>
    %253 = math.tanh %252 : vector<8x128xf32>
    %254 = arith.mulf %249, %253 : vector<8x128xf32>
    %c5_122 = arith.constant 5 : index
    %c0_123 = arith.constant 0 : index
    %c0_124 = arith.constant 0 : index
    %255 = vector.load %arg7[%c5_122, %c0_123, %c0_124] : memref<24x8x128xf32, #tpu.memory_space<vmem>>, vector<1x8x128xf32>
    %256 = vector.shape_cast %255 : vector<1x8x128xf32> to vector<8x128xf32>
    %257 = vector.shape_cast %254 : vector<8x128xf32> to vector<1x8x128xf32>
    tpu.vector_store %arg7[%c5_122, %c0_123, %c0_124], %257 {strides = array<i32>} : memref<24x8x128xf32, #tpu.memory_space<vmem>>, vector<1x8x128xf32>,
    %c6 = arith.constant 6 : index
    %c0_125 = arith.constant 0 : index
    %c0_126 = arith.constant 0 : index
    %258 = vector.load %arg8[%c6, %c0_125, %c0_126] : memref<24x8x128xf32, #tpu.memory_space<vmem>>, vector<1x8x128xf32>
    %259 = vector.shape_cast %258 : vector<1x8x128xf32> to vector<8x128xf32>
    %cst_127 = arith.constant dense<0.000000e+00> : vector<8x128xf32>
    %260 = tpu.matmul %235, %9, %cst_127 {dimension_numbers = #tpu.dot_dimension_numbers<[1], [0], [0], [1], [0, 0, 1, 1], [], []>} : vector<8x128xf32>, vector<128x128xf32>, vector<8x128xf32> -> vector<8x128xf32>
    %261 = arith.addf %259, %260 : vector<8x128xf32>
    %262 = arith.negf %261 : vector<8x128xf32>
    %263 = math.exp %262 : vector<8x128xf32>
    %cst_128 = arith.constant 1.000000e+00 : f32
    %264 = vector.broadcast %cst_128 : f32 to vector<8x128xf32>
    %265 = arith.addf %264, %263 : vector<8x128xf32>
    %266 = arith.divf %264, %265 : vector<8x128xf32>
    %267 = math.tanh %261 : vector<8x128xf32>
    %c96_i32_129 = arith.constant 96 : i32
    %268 = tpu.dynamic_rotate %266 by %c96_i32_129 dim 1 : vector<8x128xf32>, i32 -> vector<8x128xf32>
    %c64_i32_130 = arith.constant 64 : i32
    %269 = tpu.dynamic_rotate %267 by %c64_i32_130 dim 1 : vector<8x128xf32>, i32 -> vector<8x128xf32>
    %c32_i32_131 = arith.constant 32 : i32
    %270 = tpu.dynamic_rotate %266 by %c32_i32_131 dim 1 : vector<8x128xf32>, i32 -> vector<8x128xf32>
    %271 = arith.mulf %268, %233 : vector<8x128xf32>
    %272 = arith.mulf %266, %269 : vector<8x128xf32>
    %273 = arith.addf %271, %272 : vector<8x128xf32>
    %274 = math.tanh %273 : vector<8x128xf32>
    %275 = arith.mulf %270, %274 : vector<8x128xf32>
    %c0_132 = arith.constant 0 : index
    %c0_133 = arith.constant 0 : index
    %276 = vector.load %arg4[%c0_132, %c0_133] : memref<128x128xf32, #tpu.memory_space<vmem>>, vector<128x128xf32>
    %cst_134 = arith.constant dense<0.000000e+00> : vector<8x128xf32>
    %277 = tpu.matmul %275, %276, %cst_134 {dimension_numbers = #tpu.dot_dimension_numbers<[1], [0], [0], [1], [0, 0, 1, 1], [], []>} : vector<8x128xf32>, vector<128x128xf32>, vector<8x128xf32> -> vector<8x128xf32>
    %cst_135 = arith.constant dense<0.000000e+00> : vector<8x128xf32>
    %278 = tpu.matmul %254, %10, %cst_135 {dimension_numbers = #tpu.dot_dimension_numbers<[1], [0], [0], [1], [0, 0, 1, 1], [], []>} : vector<8x128xf32>, vector<128x128xf32>, vector<8x128xf32> -> vector<8x128xf32>
    %279 = arith.addf %277, %278 : vector<8x128xf32>
    %280 = arith.addf %279, %13 : vector<8x128xf32>
    %281 = arith.negf %280 : vector<8x128xf32>
    %282 = math.exp %281 : vector<8x128xf32>
    %cst_136 = arith.constant 1.000000e+00 : f32
    %283 = vector.broadcast %cst_136 : f32 to vector<8x128xf32>
    %284 = arith.addf %283, %282 : vector<8x128xf32>
    %285 = arith.divf %283, %284 : vector<8x128xf32>
    %286 = math.tanh %280 : vector<8x128xf32>
    %c96_i32_137 = arith.constant 96 : i32
    %287 = tpu.dynamic_rotate %285 by %c96_i32_137 dim 1 : vector<8x128xf32>, i32 -> vector<8x128xf32>
    %c64_i32_138 = arith.constant 64 : i32
    %288 = tpu.dynamic_rotate %286 by %c64_i32_138 dim 1 : vector<8x128xf32>, i32 -> vector<8x128xf32>
    %c32_i32_139 = arith.constant 32 : i32
    %289 = tpu.dynamic_rotate %285 by %c32_i32_139 dim 1 : vector<8x128xf32>, i32 -> vector<8x128xf32>
    %290 = arith.mulf %287, %252 : vector<8x128xf32>
    %291 = arith.mulf %285, %288 : vector<8x128xf32>
    %292 = arith.addf %290, %291 : vector<8x128xf32>
    %293 = math.tanh %292 : vector<8x128xf32>
    %294 = arith.mulf %289, %293 : vector<8x128xf32>
    %c6_140 = arith.constant 6 : index
    %c0_141 = arith.constant 0 : index
    %c0_142 = arith.constant 0 : index
    %295 = vector.load %arg7[%c6_140, %c0_141, %c0_142] : memref<24x8x128xf32, #tpu.memory_space<vmem>>, vector<1x8x128xf32>
    %296 = vector.shape_cast %295 : vector<1x8x128xf32> to vector<8x128xf32>
    %297 = vector.shape_cast %294 : vector<8x128xf32> to vector<1x8x128xf32>
    tpu.vector_store %arg7[%c6_140, %c0_141, %c0_142], %297 {strides = array<i32>} : memref<24x8x128xf32, #tpu.memory_space<vmem>>, vector<1x8x128xf32>,
    %c7 = arith.constant 7 : index
    %c0_143 = arith.constant 0 : index
    %c0_144 = arith.constant 0 : index
    %298 = vector.load %arg8[%c7, %c0_143, %c0_144] : memref<24x8x128xf32, #tpu.memory_space<vmem>>, vector<1x8x128xf32>
    %299 = vector.shape_cast %298 : vector<1x8x128xf32> to vector<8x128xf32>
    %cst_145 = arith.constant dense<0.000000e+00> : vector<8x128xf32>
    %300 = tpu.matmul %275, %9, %cst_145 {dimension_numbers = #tpu.dot_dimension_numbers<[1], [0], [0], [1], [0, 0, 1, 1], [], []>} : vector<8x128xf32>, vector<128x128xf32>, vector<8x128xf32> -> vector<8x128xf32>
    %301 = arith.addf %299, %300 : vector<8x128xf32>
    %302 = arith.negf %301 : vector<8x128xf32>
    %303 = math.exp %302 : vector<8x128xf32>
    %cst_146 = arith.constant 1.000000e+00 : f32
    %304 = vector.broadcast %cst_146 : f32 to vector<8x128xf32>
    %305 = arith.addf %304, %303 : vector<8x128xf32>
    %306 = arith.divf %304, %305 : vector<8x128xf32>
    %307 = math.tanh %301 : vector<8x128xf32>
    %c96_i32_147 = arith.constant 96 : i32
    %308 = tpu.dynamic_rotate %306 by %c96_i32_147 dim 1 : vector<8x128xf32>, i32 -> vector<8x128xf32>
    %c64_i32_148 = arith.constant 64 : i32
    %309 = tpu.dynamic_rotate %307 by %c64_i32_148 dim 1 : vector<8x128xf32>, i32 -> vector<8x128xf32>
    %c32_i32_149 = arith.constant 32 : i32
    %310 = tpu.dynamic_rotate %306 by %c32_i32_149 dim 1 : vector<8x128xf32>, i32 -> vector<8x128xf32>
    %311 = arith.mulf %308, %273 : vector<8x128xf32>
    %312 = arith.mulf %306, %309 : vector<8x128xf32>
    %313 = arith.addf %311, %312 : vector<8x128xf32>
    %314 = math.tanh %313 : vector<8x128xf32>
    %315 = arith.mulf %310, %314 : vector<8x128xf32>
    %c0_150 = arith.constant 0 : index
    %c0_151 = arith.constant 0 : index
    %316 = vector.load %arg4[%c0_150, %c0_151] : memref<128x128xf32, #tpu.memory_space<vmem>>, vector<128x128xf32>
    %cst_152 = arith.constant dense<0.000000e+00> : vector<8x128xf32>
    %317 = tpu.matmul %315, %316, %cst_152 {dimension_numbers = #tpu.dot_dimension_numbers<[1], [0], [0], [1], [0, 0, 1, 1], [], []>} : vector<8x128xf32>, vector<128x128xf32>, vector<8x128xf32> -> vector<8x128xf32>
    %cst_153 = arith.constant dense<0.000000e+00> : vector<8x128xf32>
    %318 = tpu.matmul %294, %10, %cst_153 {dimension_numbers = #tpu.dot_dimension_numbers<[1], [0], [0], [1], [0, 0, 1, 1], [], []>} : vector<8x128xf32>, vector<128x128xf32>, vector<8x128xf32> -> vector<8x128xf32>
    %319 = arith.addf %317, %318 : vector<8x128xf32>
    %320 = arith.addf %319, %13 : vector<8x128xf32>
    %321 = arith.negf %320 : vector<8x128xf32>
    %322 = math.exp %321 : vector<8x128xf32>
    %cst_154 = arith.constant 1.000000e+00 : f32
    %323 = vector.broadcast %cst_154 : f32 to vector<8x128xf32>
    %324 = arith.addf %323, %322 : vector<8x128xf32>
    %325 = arith.divf %323, %324 : vector<8x128xf32>
    %326 = math.tanh %320 : vector<8x128xf32>
    %c96_i32_155 = arith.constant 96 : i32
    %327 = tpu.dynamic_rotate %325 by %c96_i32_155 dim 1 : vector<8x128xf32>, i32 -> vector<8x128xf32>
    %c64_i32_156 = arith.constant 64 : i32
    %328 = tpu.dynamic_rotate %326 by %c64_i32_156 dim 1 : vector<8x128xf32>, i32 -> vector<8x128xf32>
    %c32_i32_157 = arith.constant 32 : i32
    %329 = tpu.dynamic_rotate %325 by %c32_i32_157 dim 1 : vector<8x128xf32>, i32 -> vector<8x128xf32>
    %330 = arith.mulf %327, %292 : vector<8x128xf32>
    %331 = arith.mulf %325, %328 : vector<8x128xf32>
    %332 = arith.addf %330, %331 : vector<8x128xf32>
    %333 = math.tanh %332 : vector<8x128xf32>
    %334 = arith.mulf %329, %333 : vector<8x128xf32>
    %c7_158 = arith.constant 7 : index
    %c0_159 = arith.constant 0 : index
    %c0_160 = arith.constant 0 : index
    %335 = vector.load %arg7[%c7_158, %c0_159, %c0_160] : memref<24x8x128xf32, #tpu.memory_space<vmem>>, vector<1x8x128xf32>
    %336 = vector.shape_cast %335 : vector<1x8x128xf32> to vector<8x128xf32>
    %337 = vector.shape_cast %334 : vector<8x128xf32> to vector<1x8x128xf32>
    tpu.vector_store %arg7[%c7_158, %c0_159, %c0_160], %337 {strides = array<i32>} : memref<24x8x128xf32, #tpu.memory_space<vmem>>, vector<1x8x128xf32>,
    %c8 = arith.constant 8 : index
    %c0_161 = arith.constant 0 : index
    %c0_162 = arith.constant 0 : index
    %338 = vector.load %arg8[%c8, %c0_161, %c0_162] : memref<24x8x128xf32, #tpu.memory_space<vmem>>, vector<1x8x128xf32>
    %339 = vector.shape_cast %338 : vector<1x8x128xf32> to vector<8x128xf32>
    %cst_163 = arith.constant dense<0.000000e+00> : vector<8x128xf32>
    %340 = tpu.matmul %315, %9, %cst_163 {dimension_numbers = #tpu.dot_dimension_numbers<[1], [0], [0], [1], [0, 0, 1, 1], [], []>} : vector<8x128xf32>, vector<128x128xf32>, vector<8x128xf32> -> vector<8x128xf32>
    %341 = arith.addf %339, %340 : vector<8x128xf32>
    %342 = arith.negf %341 : vector<8x128xf32>
    %343 = math.exp %342 : vector<8x128xf32>
    %cst_164 = arith.constant 1.000000e+00 : f32
    %344 = vector.broadcast %cst_164 : f32 to vector<8x128xf32>
    %345 = arith.addf %344, %343 : vector<8x128xf32>
    %346 = arith.divf %344, %345 : vector<8x128xf32>
    %347 = math.tanh %341 : vector<8x128xf32>
    %c96_i32_165 = arith.constant 96 : i32
    %348 = tpu.dynamic_rotate %346 by %c96_i32_165 dim 1 : vector<8x128xf32>, i32 -> vector<8x128xf32>
    %c64_i32_166 = arith.constant 64 : i32
    %349 = tpu.dynamic_rotate %347 by %c64_i32_166 dim 1 : vector<8x128xf32>, i32 -> vector<8x128xf32>
    %c32_i32_167 = arith.constant 32 : i32
    %350 = tpu.dynamic_rotate %346 by %c32_i32_167 dim 1 : vector<8x128xf32>, i32 -> vector<8x128xf32>
    %351 = arith.mulf %348, %313 : vector<8x128xf32>
    %352 = arith.mulf %346, %349 : vector<8x128xf32>
    %353 = arith.addf %351, %352 : vector<8x128xf32>
    %354 = math.tanh %353 : vector<8x128xf32>
    %355 = arith.mulf %350, %354 : vector<8x128xf32>
    %c0_168 = arith.constant 0 : index
    %c0_169 = arith.constant 0 : index
    %356 = vector.load %arg4[%c0_168, %c0_169] : memref<128x128xf32, #tpu.memory_space<vmem>>, vector<128x128xf32>
    %cst_170 = arith.constant dense<0.000000e+00> : vector<8x128xf32>
    %357 = tpu.matmul %355, %356, %cst_170 {dimension_numbers = #tpu.dot_dimension_numbers<[1], [0], [0], [1], [0, 0, 1, 1], [], []>} : vector<8x128xf32>, vector<128x128xf32>, vector<8x128xf32> -> vector<8x128xf32>
    %cst_171 = arith.constant dense<0.000000e+00> : vector<8x128xf32>
    %358 = tpu.matmul %334, %10, %cst_171 {dimension_numbers = #tpu.dot_dimension_numbers<[1], [0], [0], [1], [0, 0, 1, 1], [], []>} : vector<8x128xf32>, vector<128x128xf32>, vector<8x128xf32> -> vector<8x128xf32>
    %359 = arith.addf %357, %358 : vector<8x128xf32>
    %360 = arith.addf %359, %13 : vector<8x128xf32>
    %361 = arith.negf %360 : vector<8x128xf32>
    %362 = math.exp %361 : vector<8x128xf32>
    %cst_172 = arith.constant 1.000000e+00 : f32
    %363 = vector.broadcast %cst_172 : f32 to vector<8x128xf32>
    %364 = arith.addf %363, %362 : vector<8x128xf32>
    %365 = arith.divf %363, %364 : vector<8x128xf32>
    %366 = math.tanh %360 : vector<8x128xf32>
    %c96_i32_173 = arith.constant 96 : i32
    %367 = tpu.dynamic_rotate %365 by %c96_i32_173 dim 1 : vector<8x128xf32>, i32 -> vector<8x128xf32>
    %c64_i32_174 = arith.constant 64 : i32
    %368 = tpu.dynamic_rotate %366 by %c64_i32_174 dim 1 : vector<8x128xf32>, i32 -> vector<8x128xf32>
    %c32_i32_175 = arith.constant 32 : i32
    %369 = tpu.dynamic_rotate %365 by %c32_i32_175 dim 1 : vector<8x128xf32>, i32 -> vector<8x128xf32>
    %370 = arith.mulf %367, %332 : vector<8x128xf32>
    %371 = arith.mulf %365, %368 : vector<8x128xf32>
    %372 = arith.addf %370, %371 : vector<8x128xf32>
    %373 = math.tanh %372 : vector<8x128xf32>
    %374 = arith.mulf %369, %373 : vector<8x128xf32>
    %c8_176 = arith.constant 8 : index
    %c0_177 = arith.constant 0 : index
    %c0_178 = arith.constant 0 : index
    %375 = vector.load %arg7[%c8_176, %c0_177, %c0_178] : memref<24x8x128xf32, #tpu.memory_space<vmem>>, vector<1x8x128xf32>
    %376 = vector.shape_cast %375 : vector<1x8x128xf32> to vector<8x128xf32>
    %377 = vector.shape_cast %374 : vector<8x128xf32> to vector<1x8x128xf32>
    tpu.vector_store %arg7[%c8_176, %c0_177, %c0_178], %377 {strides = array<i32>} : memref<24x8x128xf32, #tpu.memory_space<vmem>>, vector<1x8x128xf32>,
    %c9 = arith.constant 9 : index
    %c0_179 = arith.constant 0 : index
    %c0_180 = arith.constant 0 : index
    %378 = vector.load %arg8[%c9, %c0_179, %c0_180] : memref<24x8x128xf32, #tpu.memory_space<vmem>>, vector<1x8x128xf32>
    %379 = vector.shape_cast %378 : vector<1x8x128xf32> to vector<8x128xf32>
    %cst_181 = arith.constant dense<0.000000e+00> : vector<8x128xf32>
    %380 = tpu.matmul %355, %9, %cst_181 {dimension_numbers = #tpu.dot_dimension_numbers<[1], [0], [0], [1], [0, 0, 1, 1], [], []>} : vector<8x128xf32>, vector<128x128xf32>, vector<8x128xf32> -> vector<8x128xf32>
    %381 = arith.addf %379, %380 : vector<8x128xf32>
    %382 = arith.negf %381 : vector<8x128xf32>
    %383 = math.exp %382 : vector<8x128xf32>
    %cst_182 = arith.constant 1.000000e+00 : f32
    %384 = vector.broadcast %cst_182 : f32 to vector<8x128xf32>
    %385 = arith.addf %384, %383 : vector<8x128xf32>
    %386 = arith.divf %384, %385 : vector<8x128xf32>
    %387 = math.tanh %381 : vector<8x128xf32>
    %c96_i32_183 = arith.constant 96 : i32
    %388 = tpu.dynamic_rotate %386 by %c96_i32_183 dim 1 : vector<8x128xf32>, i32 -> vector<8x128xf32>
    %c64_i32_184 = arith.constant 64 : i32
    %389 = tpu.dynamic_rotate %387 by %c64_i32_184 dim 1 : vector<8x128xf32>, i32 -> vector<8x128xf32>
    %c32_i32_185 = arith.constant 32 : i32
    %390 = tpu.dynamic_rotate %386 by %c32_i32_185 dim 1 : vector<8x128xf32>, i32 -> vector<8x128xf32>
    %391 = arith.mulf %388, %353 : vector<8x128xf32>
    %392 = arith.mulf %386, %389 : vector<8x128xf32>
    %393 = arith.addf %391, %392 : vector<8x128xf32>
    %394 = math.tanh %393 : vector<8x128xf32>
    %395 = arith.mulf %390, %394 : vector<8x128xf32>
    %c0_186 = arith.constant 0 : index
    %c0_187 = arith.constant 0 : index
    %396 = vector.load %arg4[%c0_186, %c0_187] : memref<128x128xf32, #tpu.memory_space<vmem>>, vector<128x128xf32>
    %cst_188 = arith.constant dense<0.000000e+00> : vector<8x128xf32>
    %397 = tpu.matmul %395, %396, %cst_188 {dimension_numbers = #tpu.dot_dimension_numbers<[1], [0], [0], [1], [0, 0, 1, 1], [], []>} : vector<8x128xf32>, vector<128x128xf32>, vector<8x128xf32> -> vector<8x128xf32>
    %cst_189 = arith.constant dense<0.000000e+00> : vector<8x128xf32>
    %398 = tpu.matmul %374, %10, %cst_189 {dimension_numbers = #tpu.dot_dimension_numbers<[1], [0], [0], [1], [0, 0, 1, 1], [], []>} : vector<8x128xf32>, vector<128x128xf32>, vector<8x128xf32> -> vector<8x128xf32>
    %399 = arith.addf %397, %398 : vector<8x128xf32>
    %400 = arith.addf %399, %13 : vector<8x128xf32>
    %401 = arith.negf %400 : vector<8x128xf32>
    %402 = math.exp %401 : vector<8x128xf32>
    %cst_190 = arith.constant 1.000000e+00 : f32
    %403 = vector.broadcast %cst_190 : f32 to vector<8x128xf32>
    %404 = arith.addf %403, %402 : vector<8x128xf32>
    %405 = arith.divf %403, %404 : vector<8x128xf32>
    %406 = math.tanh %400 : vector<8x128xf32>
    %c96_i32_191 = arith.constant 96 : i32
    %407 = tpu.dynamic_rotate %405 by %c96_i32_191 dim 1 : vector<8x128xf32>, i32 -> vector<8x128xf32>
    %c64_i32_192 = arith.constant 64 : i32
    %408 = tpu.dynamic_rotate %406 by %c64_i32_192 dim 1 : vector<8x128xf32>, i32 -> vector<8x128xf32>
    %c32_i32_193 = arith.constant 32 : i32
    %409 = tpu.dynamic_rotate %405 by %c32_i32_193 dim 1 : vector<8x128xf32>, i32 -> vector<8x128xf32>
    %410 = arith.mulf %407, %372 : vector<8x128xf32>
    %411 = arith.mulf %405, %408 : vector<8x128xf32>
    %412 = arith.addf %410, %411 : vector<8x128xf32>
    %413 = math.tanh %412 : vector<8x128xf32>
    %414 = arith.mulf %409, %413 : vector<8x128xf32>
    %c9_194 = arith.constant 9 : index
    %c0_195 = arith.constant 0 : index
    %c0_196 = arith.constant 0 : index
    %415 = vector.load %arg7[%c9_194, %c0_195, %c0_196] : memref<24x8x128xf32, #tpu.memory_space<vmem>>, vector<1x8x128xf32>
    %416 = vector.shape_cast %415 : vector<1x8x128xf32> to vector<8x128xf32>
    %417 = vector.shape_cast %414 : vector<8x128xf32> to vector<1x8x128xf32>
    tpu.vector_store %arg7[%c9_194, %c0_195, %c0_196], %417 {strides = array<i32>} : memref<24x8x128xf32, #tpu.memory_space<vmem>>, vector<1x8x128xf32>,
    %c10 = arith.constant 10 : index
    %c0_197 = arith.constant 0 : index
    %c0_198 = arith.constant 0 : index
    %418 = vector.load %arg8[%c10, %c0_197, %c0_198] : memref<24x8x128xf32, #tpu.memory_space<vmem>>, vector<1x8x128xf32>
    %419 = vector.shape_cast %418 : vector<1x8x128xf32> to vector<8x128xf32>
    %cst_199 = arith.constant dense<0.000000e+00> : vector<8x128xf32>
    %420 = tpu.matmul %395, %9, %cst_199 {dimension_numbers = #tpu.dot_dimension_numbers<[1], [0], [0], [1], [0, 0, 1, 1], [], []>} : vector<8x128xf32>, vector<128x128xf32>, vector<8x128xf32> -> vector<8x128xf32>
    %421 = arith.addf %419, %420 : vector<8x128xf32>
    %422 = arith.negf %421 : vector<8x128xf32>
    %423 = math.exp %422 : vector<8x128xf32>
    %cst_200 = arith.constant 1.000000e+00 : f32
    %424 = vector.broadcast %cst_200 : f32 to vector<8x128xf32>
    %425 = arith.addf %424, %423 : vector<8x128xf32>
    %426 = arith.divf %424, %425 : vector<8x128xf32>
    %427 = math.tanh %421 : vector<8x128xf32>
    %c96_i32_201 = arith.constant 96 : i32
    %428 = tpu.dynamic_rotate %426 by %c96_i32_201 dim 1 : vector<8x128xf32>, i32 -> vector<8x128xf32>
    %c64_i32_202 = arith.constant 64 : i32
    %429 = tpu.dynamic_rotate %427 by %c64_i32_202 dim 1 : vector<8x128xf32>, i32 -> vector<8x128xf32>
    %c32_i32_203 = arith.constant 32 : i32
    %430 = tpu.dynamic_rotate %426 by %c32_i32_203 dim 1 : vector<8x128xf32>, i32 -> vector<8x128xf32>
    %431 = arith.mulf %428, %393 : vector<8x128xf32>
    %432 = arith.mulf %426, %429 : vector<8x128xf32>
    %433 = arith.addf %431, %432 : vector<8x128xf32>
    %434 = math.tanh %433 : vector<8x128xf32>
    %435 = arith.mulf %430, %434 : vector<8x128xf32>
    %c0_204 = arith.constant 0 : index
    %c0_205 = arith.constant 0 : index
    %436 = vector.load %arg4[%c0_204, %c0_205] : memref<128x128xf32, #tpu.memory_space<vmem>>, vector<128x128xf32>
    %cst_206 = arith.constant dense<0.000000e+00> : vector<8x128xf32>
    %437 = tpu.matmul %435, %436, %cst_206 {dimension_numbers = #tpu.dot_dimension_numbers<[1], [0], [0], [1], [0, 0, 1, 1], [], []>} : vector<8x128xf32>, vector<128x128xf32>, vector<8x128xf32> -> vector<8x128xf32>
    %cst_207 = arith.constant dense<0.000000e+00> : vector<8x128xf32>
    %438 = tpu.matmul %414, %10, %cst_207 {dimension_numbers = #tpu.dot_dimension_numbers<[1], [0], [0], [1], [0, 0, 1, 1], [], []>} : vector<8x128xf32>, vector<128x128xf32>, vector<8x128xf32> -> vector<8x128xf32>
    %439 = arith.addf %437, %438 : vector<8x128xf32>
    %440 = arith.addf %439, %13 : vector<8x128xf32>
    %441 = arith.negf %440 : vector<8x128xf32>
    %442 = math.exp %441 : vector<8x128xf32>
    %cst_208 = arith.constant 1.000000e+00 : f32
    %443 = vector.broadcast %cst_208 : f32 to vector<8x128xf32>
    %444 = arith.addf %443, %442 : vector<8x128xf32>
    %445 = arith.divf %443, %444 : vector<8x128xf32>
    %446 = math.tanh %440 : vector<8x128xf32>
    %c96_i32_209 = arith.constant 96 : i32
    %447 = tpu.dynamic_rotate %445 by %c96_i32_209 dim 1 : vector<8x128xf32>, i32 -> vector<8x128xf32>
    %c64_i32_210 = arith.constant 64 : i32
    %448 = tpu.dynamic_rotate %446 by %c64_i32_210 dim 1 : vector<8x128xf32>, i32 -> vector<8x128xf32>
    %c32_i32_211 = arith.constant 32 : i32
    %449 = tpu.dynamic_rotate %445 by %c32_i32_211 dim 1 : vector<8x128xf32>, i32 -> vector<8x128xf32>
    %450 = arith.mulf %447, %412 : vector<8x128xf32>
    %451 = arith.mulf %445, %448 : vector<8x128xf32>
    %452 = arith.addf %450, %451 : vector<8x128xf32>
    %453 = math.tanh %452 : vector<8x128xf32>
    %454 = arith.mulf %449, %453 : vector<8x128xf32>
    %c10_212 = arith.constant 10 : index
    %c0_213 = arith.constant 0 : index
    %c0_214 = arith.constant 0 : index
    %455 = vector.load %arg7[%c10_212, %c0_213, %c0_214] : memref<24x8x128xf32, #tpu.memory_space<vmem>>, vector<1x8x128xf32>
    %456 = vector.shape_cast %455 : vector<1x8x128xf32> to vector<8x128xf32>
    %457 = vector.shape_cast %454 : vector<8x128xf32> to vector<1x8x128xf32>
    tpu.vector_store %arg7[%c10_212, %c0_213, %c0_214], %457 {strides = array<i32>} : memref<24x8x128xf32, #tpu.memory_space<vmem>>, vector<1x8x128xf32>,
    %c11 = arith.constant 11 : index
    %c0_215 = arith.constant 0 : index
    %c0_216 = arith.constant 0 : index
    %458 = vector.load %arg8[%c11, %c0_215, %c0_216] : memref<24x8x128xf32, #tpu.memory_space<vmem>>, vector<1x8x128xf32>
    %459 = vector.shape_cast %458 : vector<1x8x128xf32> to vector<8x128xf32>
    %cst_217 = arith.constant dense<0.000000e+00> : vector<8x128xf32>
    %460 = tpu.matmul %435, %9, %cst_217 {dimension_numbers = #tpu.dot_dimension_numbers<[1], [0], [0], [1], [0, 0, 1, 1], [], []>} : vector<8x128xf32>, vector<128x128xf32>, vector<8x128xf32> -> vector<8x128xf32>
    %461 = arith.addf %459, %460 : vector<8x128xf32>
    %462 = arith.negf %461 : vector<8x128xf32>
    %463 = math.exp %462 : vector<8x128xf32>
    %cst_218 = arith.constant 1.000000e+00 : f32
    %464 = vector.broadcast %cst_218 : f32 to vector<8x128xf32>
    %465 = arith.addf %464, %463 : vector<8x128xf32>
    %466 = arith.divf %464, %465 : vector<8x128xf32>
    %467 = math.tanh %461 : vector<8x128xf32>
    %c96_i32_219 = arith.constant 96 : i32
    %468 = tpu.dynamic_rotate %466 by %c96_i32_219 dim 1 : vector<8x128xf32>, i32 -> vector<8x128xf32>
    %c64_i32_220 = arith.constant 64 : i32
    %469 = tpu.dynamic_rotate %467 by %c64_i32_220 dim 1 : vector<8x128xf32>, i32 -> vector<8x128xf32>
    %c32_i32_221 = arith.constant 32 : i32
    %470 = tpu.dynamic_rotate %466 by %c32_i32_221 dim 1 : vector<8x128xf32>, i32 -> vector<8x128xf32>
    %471 = arith.mulf %468, %433 : vector<8x128xf32>
    %472 = arith.mulf %466, %469 : vector<8x128xf32>
    %473 = arith.addf %471, %472 : vector<8x128xf32>
    %474 = math.tanh %473 : vector<8x128xf32>
    %475 = arith.mulf %470, %474 : vector<8x128xf32>
    %c0_222 = arith.constant 0 : index
    %c0_223 = arith.constant 0 : index
    %476 = vector.load %arg4[%c0_222, %c0_223] : memref<128x128xf32, #tpu.memory_space<vmem>>, vector<128x128xf32>
    %cst_224 = arith.constant dense<0.000000e+00> : vector<8x128xf32>
    %477 = tpu.matmul %475, %476, %cst_224 {dimension_numbers = #tpu.dot_dimension_numbers<[1], [0], [0], [1], [0, 0, 1, 1], [], []>} : vector<8x128xf32>, vector<128x128xf32>, vector<8x128xf32> -> vector<8x128xf32>
    %cst_225 = arith.constant dense<0.000000e+00> : vector<8x128xf32>
    %478 = tpu.matmul %454, %10, %cst_225 {dimension_numbers = #tpu.dot_dimension_numbers<[1], [0], [0], [1], [0, 0, 1, 1], [], []>} : vector<8x128xf32>, vector<128x128xf32>, vector<8x128xf32> -> vector<8x128xf32>
    %479 = arith.addf %477, %478 : vector<8x128xf32>
    %480 = arith.addf %479, %13 : vector<8x128xf32>
    %481 = arith.negf %480 : vector<8x128xf32>
    %482 = math.exp %481 : vector<8x128xf32>
    %cst_226 = arith.constant 1.000000e+00 : f32
    %483 = vector.broadcast %cst_226 : f32 to vector<8x128xf32>
    %484 = arith.addf %483, %482 : vector<8x128xf32>
    %485 = arith.divf %483, %484 : vector<8x128xf32>
    %486 = math.tanh %480 : vector<8x128xf32>
    %c96_i32_227 = arith.constant 96 : i32
    %487 = tpu.dynamic_rotate %485 by %c96_i32_227 dim 1 : vector<8x128xf32>, i32 -> vector<8x128xf32>
    %c64_i32_228 = arith.constant 64 : i32
    %488 = tpu.dynamic_rotate %486 by %c64_i32_228 dim 1 : vector<8x128xf32>, i32 -> vector<8x128xf32>
    %c32_i32_229 = arith.constant 32 : i32
    %489 = tpu.dynamic_rotate %485 by %c32_i32_229 dim 1 : vector<8x128xf32>, i32 -> vector<8x128xf32>
    %490 = arith.mulf %487, %452 : vector<8x128xf32>
    %491 = arith.mulf %485, %488 : vector<8x128xf32>
    %492 = arith.addf %490, %491 : vector<8x128xf32>
    %493 = math.tanh %492 : vector<8x128xf32>
    %494 = arith.mulf %489, %493 : vector<8x128xf32>
    %c11_230 = arith.constant 11 : index
    %c0_231 = arith.constant 0 : index
    %c0_232 = arith.constant 0 : index
    %495 = vector.load %arg7[%c11_230, %c0_231, %c0_232] : memref<24x8x128xf32, #tpu.memory_space<vmem>>, vector<1x8x128xf32>
    %496 = vector.shape_cast %495 : vector<1x8x128xf32> to vector<8x128xf32>
    %497 = vector.shape_cast %494 : vector<8x128xf32> to vector<1x8x128xf32>
    tpu.vector_store %arg7[%c11_230, %c0_231, %c0_232], %497 {strides = array<i32>} : memref<24x8x128xf32, #tpu.memory_space<vmem>>, vector<1x8x128xf32>,
    %c12 = arith.constant 12 : index
    %c0_233 = arith.constant 0 : index
    %c0_234 = arith.constant 0 : index
    %498 = vector.load %arg8[%c12, %c0_233, %c0_234] : memref<24x8x128xf32, #tpu.memory_space<vmem>>, vector<1x8x128xf32>
    %499 = vector.shape_cast %498 : vector<1x8x128xf32> to vector<8x128xf32>
    %cst_235 = arith.constant dense<0.000000e+00> : vector<8x128xf32>
    %500 = tpu.matmul %475, %9, %cst_235 {dimension_numbers = #tpu.dot_dimension_numbers<[1], [0], [0], [1], [0, 0, 1, 1], [], []>} : vector<8x128xf32>, vector<128x128xf32>, vector<8x128xf32> -> vector<8x128xf32>
    %501 = arith.addf %499, %500 : vector<8x128xf32>
    %502 = arith.negf %501 : vector<8x128xf32>
    %503 = math.exp %502 : vector<8x128xf32>
    %cst_236 = arith.constant 1.000000e+00 : f32
    %504 = vector.broadcast %cst_236 : f32 to vector<8x128xf32>
    %505 = arith.addf %504, %503 : vector<8x128xf32>
    %506 = arith.divf %504, %505 : vector<8x128xf32>
    %507 = math.tanh %501 : vector<8x128xf32>
    %c96_i32_237 = arith.constant 96 : i32
    %508 = tpu.dynamic_rotate %506 by %c96_i32_237 dim 1 : vector<8x128xf32>, i32 -> vector<8x128xf32>
    %c64_i32_238 = arith.constant 64 : i32
    %509 = tpu.dynamic_rotate %507 by %c64_i32_238 dim 1 : vector<8x128xf32>, i32 -> vector<8x128xf32>
    %c32_i32_239 = arith.constant 32 : i32
    %510 = tpu.dynamic_rotate %506 by %c32_i32_239 dim 1 : vector<8x128xf32>, i32 -> vector<8x128xf32>
    %511 = arith.mulf %508, %473 : vector<8x128xf32>
    %512 = arith.mulf %506, %509 : vector<8x128xf32>
    %513 = arith.addf %511, %512 : vector<8x128xf32>
    %514 = math.tanh %513 : vector<8x128xf32>
    %515 = arith.mulf %510, %514 : vector<8x128xf32>
    %c0_240 = arith.constant 0 : index
    %c0_241 = arith.constant 0 : index
    %516 = vector.load %arg4[%c0_240, %c0_241] : memref<128x128xf32, #tpu.memory_space<vmem>>, vector<128x128xf32>
    %cst_242 = arith.constant dense<0.000000e+00> : vector<8x128xf32>
    %517 = tpu.matmul %515, %516, %cst_242 {dimension_numbers = #tpu.dot_dimension_numbers<[1], [0], [0], [1], [0, 0, 1, 1], [], []>} : vector<8x128xf32>, vector<128x128xf32>, vector<8x128xf32> -> vector<8x128xf32>
    %cst_243 = arith.constant dense<0.000000e+00> : vector<8x128xf32>
    %518 = tpu.matmul %494, %10, %cst_243 {dimension_numbers = #tpu.dot_dimension_numbers<[1], [0], [0], [1], [0, 0, 1, 1], [], []>} : vector<8x128xf32>, vector<128x128xf32>, vector<8x128xf32> -> vector<8x128xf32>
    %519 = arith.addf %517, %518 : vector<8x128xf32>
    %520 = arith.addf %519, %13 : vector<8x128xf32>
    %521 = arith.negf %520 : vector<8x128xf32>
    %522 = math.exp %521 : vector<8x128xf32>
    %cst_244 = arith.constant 1.000000e+00 : f32
    %523 = vector.broadcast %cst_244 : f32 to vector<8x128xf32>
    %524 = arith.addf %523, %522 : vector<8x128xf32>
    %525 = arith.divf %523, %524 : vector<8x128xf32>
    %526 = math.tanh %520 : vector<8x128xf32>
    %c96_i32_245 = arith.constant 96 : i32
    %527 = tpu.dynamic_rotate %525 by %c96_i32_245 dim 1 : vector<8x128xf32>, i32 -> vector<8x128xf32>
    %c64_i32_246 = arith.constant 64 : i32
    %528 = tpu.dynamic_rotate %526 by %c64_i32_246 dim 1 : vector<8x128xf32>, i32 -> vector<8x128xf32>
    %c32_i32_247 = arith.constant 32 : i32
    %529 = tpu.dynamic_rotate %525 by %c32_i32_247 dim 1 : vector<8x128xf32>, i32 -> vector<8x128xf32>
    %530 = arith.mulf %527, %492 : vector<8x128xf32>
    %531 = arith.mulf %525, %528 : vector<8x128xf32>
    %532 = arith.addf %530, %531 : vector<8x128xf32>
    %533 = math.tanh %532 : vector<8x128xf32>
    %534 = arith.mulf %529, %533 : vector<8x128xf32>
    %c12_248 = arith.constant 12 : index
    %c0_249 = arith.constant 0 : index
    %c0_250 = arith.constant 0 : index
    %535 = vector.load %arg7[%c12_248, %c0_249, %c0_250] : memref<24x8x128xf32, #tpu.memory_space<vmem>>, vector<1x8x128xf32>
    %536 = vector.shape_cast %535 : vector<1x8x128xf32> to vector<8x128xf32>
    %537 = vector.shape_cast %534 : vector<8x128xf32> to vector<1x8x128xf32>
    tpu.vector_store %arg7[%c12_248, %c0_249, %c0_250], %537 {strides = array<i32>} : memref<24x8x128xf32, #tpu.memory_space<vmem>>, vector<1x8x128xf32>,
    %c13 = arith.constant 13 : index
    %c0_251 = arith.constant 0 : index
    %c0_252 = arith.constant 0 : index
    %538 = vector.load %arg8[%c13, %c0_251, %c0_252] : memref<24x8x128xf32, #tpu.memory_space<vmem>>, vector<1x8x128xf32>
    %539 = vector.shape_cast %538 : vector<1x8x128xf32> to vector<8x128xf32>
    %cst_253 = arith.constant dense<0.000000e+00> : vector<8x128xf32>
    %540 = tpu.matmul %515, %9, %cst_253 {dimension_numbers = #tpu.dot_dimension_numbers<[1], [0], [0], [1], [0, 0, 1, 1], [], []>} : vector<8x128xf32>, vector<128x128xf32>, vector<8x128xf32> -> vector<8x128xf32>
    %541 = arith.addf %539, %540 : vector<8x128xf32>
    %542 = arith.negf %541 : vector<8x128xf32>
    %543 = math.exp %542 : vector<8x128xf32>
    %cst_254 = arith.constant 1.000000e+00 : f32
    %544 = vector.broadcast %cst_254 : f32 to vector<8x128xf32>
    %545 = arith.addf %544, %543 : vector<8x128xf32>
    %546 = arith.divf %544, %545 : vector<8x128xf32>
    %547 = math.tanh %541 : vector<8x128xf32>
    %c96_i32_255 = arith.constant 96 : i32
    %548 = tpu.dynamic_rotate %546 by %c96_i32_255 dim 1 : vector<8x128xf32>, i32 -> vector<8x128xf32>
    %c64_i32_256 = arith.constant 64 : i32
    %549 = tpu.dynamic_rotate %547 by %c64_i32_256 dim 1 : vector<8x128xf32>, i32 -> vector<8x128xf32>
    %c32_i32_257 = arith.constant 32 : i32
    %550 = tpu.dynamic_rotate %546 by %c32_i32_257 dim 1 : vector<8x128xf32>, i32 -> vector<8x128xf32>
    %551 = arith.mulf %548, %513 : vector<8x128xf32>
    %552 = arith.mulf %546, %549 : vector<8x128xf32>
    %553 = arith.addf %551, %552 : vector<8x128xf32>
    %554 = math.tanh %553 : vector<8x128xf32>
    %555 = arith.mulf %550, %554 : vector<8x128xf32>
    %c0_258 = arith.constant 0 : index
    %c0_259 = arith.constant 0 : index
    %556 = vector.load %arg4[%c0_258, %c0_259] : memref<128x128xf32, #tpu.memory_space<vmem>>, vector<128x128xf32>
    %cst_260 = arith.constant dense<0.000000e+00> : vector<8x128xf32>
    %557 = tpu.matmul %555, %556, %cst_260 {dimension_numbers = #tpu.dot_dimension_numbers<[1], [0], [0], [1], [0, 0, 1, 1], [], []>} : vector<8x128xf32>, vector<128x128xf32>, vector<8x128xf32> -> vector<8x128xf32>
    %cst_261 = arith.constant dense<0.000000e+00> : vector<8x128xf32>
    %558 = tpu.matmul %534, %10, %cst_261 {dimension_numbers = #tpu.dot_dimension_numbers<[1], [0], [0], [1], [0, 0, 1, 1], [], []>} : vector<8x128xf32>, vector<128x128xf32>, vector<8x128xf32> -> vector<8x128xf32>
    %559 = arith.addf %557, %558 : vector<8x128xf32>
    %560 = arith.addf %559, %13 : vector<8x128xf32>
    %561 = arith.negf %560 : vector<8x128xf32>
    %562 = math.exp %561 : vector<8x128xf32>
    %cst_262 = arith.constant 1.000000e+00 : f32
    %563 = vector.broadcast %cst_262 : f32 to vector<8x128xf32>
    %564 = arith.addf %563, %562 : vector<8x128xf32>
    %565 = arith.divf %563, %564 : vector<8x128xf32>
    %566 = math.tanh %560 : vector<8x128xf32>
    %c96_i32_263 = arith.constant 96 : i32
    %567 = tpu.dynamic_rotate %565 by %c96_i32_263 dim 1 : vector<8x128xf32>, i32 -> vector<8x128xf32>
    %c64_i32_264 = arith.constant 64 : i32
    %568 = tpu.dynamic_rotate %566 by %c64_i32_264 dim 1 : vector<8x128xf32>, i32 -> vector<8x128xf32>
    %c32_i32_265 = arith.constant 32 : i32
    %569 = tpu.dynamic_rotate %565 by %c32_i32_265 dim 1 : vector<8x128xf32>, i32 -> vector<8x128xf32>
    %570 = arith.mulf %567, %532 : vector<8x128xf32>
    %571 = arith.mulf %565, %568 : vector<8x128xf32>
    %572 = arith.addf %570, %571 : vector<8x128xf32>
    %573 = math.tanh %572 : vector<8x128xf32>
    %574 = arith.mulf %569, %573 : vector<8x128xf32>
    %c13_266 = arith.constant 13 : index
    %c0_267 = arith.constant 0 : index
    %c0_268 = arith.constant 0 : index
    %575 = vector.load %arg7[%c13_266, %c0_267, %c0_268] : memref<24x8x128xf32, #tpu.memory_space<vmem>>, vector<1x8x128xf32>
    %576 = vector.shape_cast %575 : vector<1x8x128xf32> to vector<8x128xf32>
    %577 = vector.shape_cast %574 : vector<8x128xf32> to vector<1x8x128xf32>
    tpu.vector_store %arg7[%c13_266, %c0_267, %c0_268], %577 {strides = array<i32>} : memref<24x8x128xf32, #tpu.memory_space<vmem>>, vector<1x8x128xf32>,
    %c14 = arith.constant 14 : index
    %c0_269 = arith.constant 0 : index
    %c0_270 = arith.constant 0 : index
    %578 = vector.load %arg8[%c14, %c0_269, %c0_270] : memref<24x8x128xf32, #tpu.memory_space<vmem>>, vector<1x8x128xf32>
    %579 = vector.shape_cast %578 : vector<1x8x128xf32> to vector<8x128xf32>
    %cst_271 = arith.constant dense<0.000000e+00> : vector<8x128xf32>
    %580 = tpu.matmul %555, %9, %cst_271 {dimension_numbers = #tpu.dot_dimension_numbers<[1], [0], [0], [1], [0, 0, 1, 1], [], []>} : vector<8x128xf32>, vector<128x128xf32>, vector<8x128xf32> -> vector<8x128xf32>
    %581 = arith.addf %579, %580 : vector<8x128xf32>
    %582 = arith.negf %581 : vector<8x128xf32>
    %583 = math.exp %582 : vector<8x128xf32>
    %cst_272 = arith.constant 1.000000e+00 : f32
    %584 = vector.broadcast %cst_272 : f32 to vector<8x128xf32>
    %585 = arith.addf %584, %583 : vector<8x128xf32>
    %586 = arith.divf %584, %585 : vector<8x128xf32>
    %587 = math.tanh %581 : vector<8x128xf32>
    %c96_i32_273 = arith.constant 96 : i32
    %588 = tpu.dynamic_rotate %586 by %c96_i32_273 dim 1 : vector<8x128xf32>, i32 -> vector<8x128xf32>
    %c64_i32_274 = arith.constant 64 : i32
    %589 = tpu.dynamic_rotate %587 by %c64_i32_274 dim 1 : vector<8x128xf32>, i32 -> vector<8x128xf32>
    %c32_i32_275 = arith.constant 32 : i32
    %590 = tpu.dynamic_rotate %586 by %c32_i32_275 dim 1 : vector<8x128xf32>, i32 -> vector<8x128xf32>
    %591 = arith.mulf %588, %553 : vector<8x128xf32>
    %592 = arith.mulf %586, %589 : vector<8x128xf32>
    %593 = arith.addf %591, %592 : vector<8x128xf32>
    %594 = math.tanh %593 : vector<8x128xf32>
    %595 = arith.mulf %590, %594 : vector<8x128xf32>
    %c0_276 = arith.constant 0 : index
    %c0_277 = arith.constant 0 : index
    %596 = vector.load %arg4[%c0_276, %c0_277] : memref<128x128xf32, #tpu.memory_space<vmem>>, vector<128x128xf32>
    %cst_278 = arith.constant dense<0.000000e+00> : vector<8x128xf32>
    %597 = tpu.matmul %595, %596, %cst_278 {dimension_numbers = #tpu.dot_dimension_numbers<[1], [0], [0], [1], [0, 0, 1, 1], [], []>} : vector<8x128xf32>, vector<128x128xf32>, vector<8x128xf32> -> vector<8x128xf32>
    %cst_279 = arith.constant dense<0.000000e+00> : vector<8x128xf32>
    %598 = tpu.matmul %574, %10, %cst_279 {dimension_numbers = #tpu.dot_dimension_numbers<[1], [0], [0], [1], [0, 0, 1, 1], [], []>} : vector<8x128xf32>, vector<128x128xf32>, vector<8x128xf32> -> vector<8x128xf32>
    %599 = arith.addf %597, %598 : vector<8x128xf32>
    %600 = arith.addf %599, %13 : vector<8x128xf32>
    %601 = arith.negf %600 : vector<8x128xf32>
    %602 = math.exp %601 : vector<8x128xf32>
    %cst_280 = arith.constant 1.000000e+00 : f32
    %603 = vector.broadcast %cst_280 : f32 to vector<8x128xf32>
    %604 = arith.addf %603, %602 : vector<8x128xf32>
    %605 = arith.divf %603, %604 : vector<8x128xf32>
    %606 = math.tanh %600 : vector<8x128xf32>
    %c96_i32_281 = arith.constant 96 : i32
    %607 = tpu.dynamic_rotate %605 by %c96_i32_281 dim 1 : vector<8x128xf32>, i32 -> vector<8x128xf32>
    %c64_i32_282 = arith.constant 64 : i32
    %608 = tpu.dynamic_rotate %606 by %c64_i32_282 dim 1 : vector<8x128xf32>, i32 -> vector<8x128xf32>
    %c32_i32_283 = arith.constant 32 : i32
    %609 = tpu.dynamic_rotate %605 by %c32_i32_283 dim 1 : vector<8x128xf32>, i32 -> vector<8x128xf32>
    %610 = arith.mulf %607, %572 : vector<8x128xf32>
    %611 = arith.mulf %605, %608 : vector<8x128xf32>
    %612 = arith.addf %610, %611 : vector<8x128xf32>
    %613 = math.tanh %612 : vector<8x128xf32>
    %614 = arith.mulf %609, %613 : vector<8x128xf32>
    %c14_284 = arith.constant 14 : index
    %c0_285 = arith.constant 0 : index
    %c0_286 = arith.constant 0 : index
    %615 = vector.load %arg7[%c14_284, %c0_285, %c0_286] : memref<24x8x128xf32, #tpu.memory_space<vmem>>, vector<1x8x128xf32>
    %616 = vector.shape_cast %615 : vector<1x8x128xf32> to vector<8x128xf32>
    %617 = vector.shape_cast %614 : vector<8x128xf32> to vector<1x8x128xf32>
    tpu.vector_store %arg7[%c14_284, %c0_285, %c0_286], %617 {strides = array<i32>} : memref<24x8x128xf32, #tpu.memory_space<vmem>>, vector<1x8x128xf32>,
    %c15 = arith.constant 15 : index
    %c0_287 = arith.constant 0 : index
    %c0_288 = arith.constant 0 : index
    %618 = vector.load %arg8[%c15, %c0_287, %c0_288] : memref<24x8x128xf32, #tpu.memory_space<vmem>>, vector<1x8x128xf32>
    %619 = vector.shape_cast %618 : vector<1x8x128xf32> to vector<8x128xf32>
    %cst_289 = arith.constant dense<0.000000e+00> : vector<8x128xf32>
    %620 = tpu.matmul %595, %9, %cst_289 {dimension_numbers = #tpu.dot_dimension_numbers<[1], [0], [0], [1], [0, 0, 1, 1], [], []>} : vector<8x128xf32>, vector<128x128xf32>, vector<8x128xf32> -> vector<8x128xf32>
    %621 = arith.addf %619, %620 : vector<8x128xf32>
    %622 = arith.negf %621 : vector<8x128xf32>
    %623 = math.exp %622 : vector<8x128xf32>
    %cst_290 = arith.constant 1.000000e+00 : f32
    %624 = vector.broadcast %cst_290 : f32 to vector<8x128xf32>
    %625 = arith.addf %624, %623 : vector<8x128xf32>
    %626 = arith.divf %624, %625 : vector<8x128xf32>
    %627 = math.tanh %621 : vector<8x128xf32>
    %c96_i32_291 = arith.constant 96 : i32
    %628 = tpu.dynamic_rotate %626 by %c96_i32_291 dim 1 : vector<8x128xf32>, i32 -> vector<8x128xf32>
    %c64_i32_292 = arith.constant 64 : i32
    %629 = tpu.dynamic_rotate %627 by %c64_i32_292 dim 1 : vector<8x128xf32>, i32 -> vector<8x128xf32>
    %c32_i32_293 = arith.constant 32 : i32
    %630 = tpu.dynamic_rotate %626 by %c32_i32_293 dim 1 : vector<8x128xf32>, i32 -> vector<8x128xf32>
    %631 = arith.mulf %628, %593 : vector<8x128xf32>
    %632 = arith.mulf %626, %629 : vector<8x128xf32>
    %633 = arith.addf %631, %632 : vector<8x128xf32>
    %634 = math.tanh %633 : vector<8x128xf32>
    %635 = arith.mulf %630, %634 : vector<8x128xf32>
    %c0_294 = arith.constant 0 : index
    %c0_295 = arith.constant 0 : index
    %636 = vector.load %arg4[%c0_294, %c0_295] : memref<128x128xf32, #tpu.memory_space<vmem>>, vector<128x128xf32>
    %cst_296 = arith.constant dense<0.000000e+00> : vector<8x128xf32>
    %637 = tpu.matmul %635, %636, %cst_296 {dimension_numbers = #tpu.dot_dimension_numbers<[1], [0], [0], [1], [0, 0, 1, 1], [], []>} : vector<8x128xf32>, vector<128x128xf32>, vector<8x128xf32> -> vector<8x128xf32>
    %cst_297 = arith.constant dense<0.000000e+00> : vector<8x128xf32>
    %638 = tpu.matmul %614, %10, %cst_297 {dimension_numbers = #tpu.dot_dimension_numbers<[1], [0], [0], [1], [0, 0, 1, 1], [], []>} : vector<8x128xf32>, vector<128x128xf32>, vector<8x128xf32> -> vector<8x128xf32>
    %639 = arith.addf %637, %638 : vector<8x128xf32>
    %640 = arith.addf %639, %13 : vector<8x128xf32>
    %641 = arith.negf %640 : vector<8x128xf32>
    %642 = math.exp %641 : vector<8x128xf32>
    %cst_298 = arith.constant 1.000000e+00 : f32
    %643 = vector.broadcast %cst_298 : f32 to vector<8x128xf32>
    %644 = arith.addf %643, %642 : vector<8x128xf32>
    %645 = arith.divf %643, %644 : vector<8x128xf32>
    %646 = math.tanh %640 : vector<8x128xf32>
    %c96_i32_299 = arith.constant 96 : i32
    %647 = tpu.dynamic_rotate %645 by %c96_i32_299 dim 1 : vector<8x128xf32>, i32 -> vector<8x128xf32>
    %c64_i32_300 = arith.constant 64 : i32
    %648 = tpu.dynamic_rotate %646 by %c64_i32_300 dim 1 : vector<8x128xf32>, i32 -> vector<8x128xf32>
    %c32_i32_301 = arith.constant 32 : i32
    %649 = tpu.dynamic_rotate %645 by %c32_i32_301 dim 1 : vector<8x128xf32>, i32 -> vector<8x128xf32>
    %650 = arith.mulf %647, %612 : vector<8x128xf32>
    %651 = arith.mulf %645, %648 : vector<8x128xf32>
    %652 = arith.addf %650, %651 : vector<8x128xf32>
    %653 = math.tanh %652 : vector<8x128xf32>
    %654 = arith.mulf %649, %653 : vector<8x128xf32>
    %c15_302 = arith.constant 15 : index
    %c0_303 = arith.constant 0 : index
    %c0_304 = arith.constant 0 : index
    %655 = vector.load %arg7[%c15_302, %c0_303, %c0_304] : memref<24x8x128xf32, #tpu.memory_space<vmem>>, vector<1x8x128xf32>
    %656 = vector.shape_cast %655 : vector<1x8x128xf32> to vector<8x128xf32>
    %657 = vector.shape_cast %654 : vector<8x128xf32> to vector<1x8x128xf32>
    tpu.vector_store %arg7[%c15_302, %c0_303, %c0_304], %657 {strides = array<i32>} : memref<24x8x128xf32, #tpu.memory_space<vmem>>, vector<1x8x128xf32>,
    %c16 = arith.constant 16 : index
    %c0_305 = arith.constant 0 : index
    %c0_306 = arith.constant 0 : index
    %658 = vector.load %arg8[%c16, %c0_305, %c0_306] : memref<24x8x128xf32, #tpu.memory_space<vmem>>, vector<1x8x128xf32>
    %659 = vector.shape_cast %658 : vector<1x8x128xf32> to vector<8x128xf32>
    %cst_307 = arith.constant dense<0.000000e+00> : vector<8x128xf32>
    %660 = tpu.matmul %635, %9, %cst_307 {dimension_numbers = #tpu.dot_dimension_numbers<[1], [0], [0], [1], [0, 0, 1, 1], [], []>} : vector<8x128xf32>, vector<128x128xf32>, vector<8x128xf32> -> vector<8x128xf32>
    %661 = arith.addf %659, %660 : vector<8x128xf32>
    %662 = arith.negf %661 : vector<8x128xf32>
    %663 = math.exp %662 : vector<8x128xf32>
    %cst_308 = arith.constant 1.000000e+00 : f32
    %664 = vector.broadcast %cst_308 : f32 to vector<8x128xf32>
    %665 = arith.addf %664, %663 : vector<8x128xf32>
    %666 = arith.divf %664, %665 : vector<8x128xf32>
    %667 = math.tanh %661 : vector<8x128xf32>
    %c96_i32_309 = arith.constant 96 : i32
    %668 = tpu.dynamic_rotate %666 by %c96_i32_309 dim 1 : vector<8x128xf32>, i32 -> vector<8x128xf32>
    %c64_i32_310 = arith.constant 64 : i32
    %669 = tpu.dynamic_rotate %667 by %c64_i32_310 dim 1 : vector<8x128xf32>, i32 -> vector<8x128xf32>
    %c32_i32_311 = arith.constant 32 : i32
    %670 = tpu.dynamic_rotate %666 by %c32_i32_311 dim 1 : vector<8x128xf32>, i32 -> vector<8x128xf32>
    %671 = arith.mulf %668, %633 : vector<8x128xf32>
    %672 = arith.mulf %666, %669 : vector<8x128xf32>
    %673 = arith.addf %671, %672 : vector<8x128xf32>
    %674 = math.tanh %673 : vector<8x128xf32>
    %675 = arith.mulf %670, %674 : vector<8x128xf32>
    %c0_312 = arith.constant 0 : index
    %c0_313 = arith.constant 0 : index
    %676 = vector.load %arg4[%c0_312, %c0_313] : memref<128x128xf32, #tpu.memory_space<vmem>>, vector<128x128xf32>
    %cst_314 = arith.constant dense<0.000000e+00> : vector<8x128xf32>
    %677 = tpu.matmul %675, %676, %cst_314 {dimension_numbers = #tpu.dot_dimension_numbers<[1], [0], [0], [1], [0, 0, 1, 1], [], []>} : vector<8x128xf32>, vector<128x128xf32>, vector<8x128xf32> -> vector<8x128xf32>
    %cst_315 = arith.constant dense<0.000000e+00> : vector<8x128xf32>
    %678 = tpu.matmul %654, %10, %cst_315 {dimension_numbers = #tpu.dot_dimension_numbers<[1], [0], [0], [1], [0, 0, 1, 1], [], []>} : vector<8x128xf32>, vector<128x128xf32>, vector<8x128xf32> -> vector<8x128xf32>
    %679 = arith.addf %677, %678 : vector<8x128xf32>
    %680 = arith.addf %679, %13 : vector<8x128xf32>
    %681 = arith.negf %680 : vector<8x128xf32>
    %682 = math.exp %681 : vector<8x128xf32>
    %cst_316 = arith.constant 1.000000e+00 : f32
    %683 = vector.broadcast %cst_316 : f32 to vector<8x128xf32>
    %684 = arith.addf %683, %682 : vector<8x128xf32>
    %685 = arith.divf %683, %684 : vector<8x128xf32>
    %686 = math.tanh %680 : vector<8x128xf32>
    %c96_i32_317 = arith.constant 96 : i32
    %687 = tpu.dynamic_rotate %685 by %c96_i32_317 dim 1 : vector<8x128xf32>, i32 -> vector<8x128xf32>
    %c64_i32_318 = arith.constant 64 : i32
    %688 = tpu.dynamic_rotate %686 by %c64_i32_318 dim 1 : vector<8x128xf32>, i32 -> vector<8x128xf32>
    %c32_i32_319 = arith.constant 32 : i32
    %689 = tpu.dynamic_rotate %685 by %c32_i32_319 dim 1 : vector<8x128xf32>, i32 -> vector<8x128xf32>
    %690 = arith.mulf %687, %652 : vector<8x128xf32>
    %691 = arith.mulf %685, %688 : vector<8x128xf32>
    %692 = arith.addf %690, %691 : vector<8x128xf32>
    %693 = math.tanh %692 : vector<8x128xf32>
    %694 = arith.mulf %689, %693 : vector<8x128xf32>
    %c16_320 = arith.constant 16 : index
    %c0_321 = arith.constant 0 : index
    %c0_322 = arith.constant 0 : index
    %695 = vector.load %arg7[%c16_320, %c0_321, %c0_322] : memref<24x8x128xf32, #tpu.memory_space<vmem>>, vector<1x8x128xf32>
    %696 = vector.shape_cast %695 : vector<1x8x128xf32> to vector<8x128xf32>
    %697 = vector.shape_cast %694 : vector<8x128xf32> to vector<1x8x128xf32>
    tpu.vector_store %arg7[%c16_320, %c0_321, %c0_322], %697 {strides = array<i32>} : memref<24x8x128xf32, #tpu.memory_space<vmem>>, vector<1x8x128xf32>,
    %c17 = arith.constant 17 : index
    %c0_323 = arith.constant 0 : index
    %c0_324 = arith.constant 0 : index
    %698 = vector.load %arg8[%c17, %c0_323, %c0_324] : memref<24x8x128xf32, #tpu.memory_space<vmem>>, vector<1x8x128xf32>
    %699 = vector.shape_cast %698 : vector<1x8x128xf32> to vector<8x128xf32>
    %cst_325 = arith.constant dense<0.000000e+00> : vector<8x128xf32>
    %700 = tpu.matmul %675, %9, %cst_325 {dimension_numbers = #tpu.dot_dimension_numbers<[1], [0], [0], [1], [0, 0, 1, 1], [], []>} : vector<8x128xf32>, vector<128x128xf32>, vector<8x128xf32> -> vector<8x128xf32>
    %701 = arith.addf %699, %700 : vector<8x128xf32>
    %702 = arith.negf %701 : vector<8x128xf32>
    %703 = math.exp %702 : vector<8x128xf32>
    %cst_326 = arith.constant 1.000000e+00 : f32
    %704 = vector.broadcast %cst_326 : f32 to vector<8x128xf32>
    %705 = arith.addf %704, %703 : vector<8x128xf32>
    %706 = arith.divf %704, %705 : vector<8x128xf32>
    %707 = math.tanh %701 : vector<8x128xf32>
    %c96_i32_327 = arith.constant 96 : i32
    %708 = tpu.dynamic_rotate %706 by %c96_i32_327 dim 1 : vector<8x128xf32>, i32 -> vector<8x128xf32>
    %c64_i32_328 = arith.constant 64 : i32
    %709 = tpu.dynamic_rotate %707 by %c64_i32_328 dim 1 : vector<8x128xf32>, i32 -> vector<8x128xf32>
    %c32_i32_329 = arith.constant 32 : i32
    %710 = tpu.dynamic_rotate %706 by %c32_i32_329 dim 1 : vector<8x128xf32>, i32 -> vector<8x128xf32>
    %711 = arith.mulf %708, %673 : vector<8x128xf32>
    %712 = arith.mulf %706, %709 : vector<8x128xf32>
    %713 = arith.addf %711, %712 : vector<8x128xf32>
    %714 = math.tanh %713 : vector<8x128xf32>
    %715 = arith.mulf %710, %714 : vector<8x128xf32>
    %c0_330 = arith.constant 0 : index
    %c0_331 = arith.constant 0 : index
    %716 = vector.load %arg4[%c0_330, %c0_331] : memref<128x128xf32, #tpu.memory_space<vmem>>, vector<128x128xf32>
    %cst_332 = arith.constant dense<0.000000e+00> : vector<8x128xf32>
    %717 = tpu.matmul %715, %716, %cst_332 {dimension_numbers = #tpu.dot_dimension_numbers<[1], [0], [0], [1], [0, 0, 1, 1], [], []>} : vector<8x128xf32>, vector<128x128xf32>, vector<8x128xf32> -> vector<8x128xf32>
    %cst_333 = arith.constant dense<0.000000e+00> : vector<8x128xf32>
    %718 = tpu.matmul %694, %10, %cst_333 {dimension_numbers = #tpu.dot_dimension_numbers<[1], [0], [0], [1], [0, 0, 1, 1], [], []>} : vector<8x128xf32>, vector<128x128xf32>, vector<8x128xf32> -> vector<8x128xf32>
    %719 = arith.addf %717, %718 : vector<8x128xf32>
    %720 = arith.addf %719, %13 : vector<8x128xf32>
    %721 = arith.negf %720 : vector<8x128xf32>
    %722 = math.exp %721 : vector<8x128xf32>
    %cst_334 = arith.constant 1.000000e+00 : f32
    %723 = vector.broadcast %cst_334 : f32 to vector<8x128xf32>
    %724 = arith.addf %723, %722 : vector<8x128xf32>
    %725 = arith.divf %723, %724 : vector<8x128xf32>
    %726 = math.tanh %720 : vector<8x128xf32>
    %c96_i32_335 = arith.constant 96 : i32
    %727 = tpu.dynamic_rotate %725 by %c96_i32_335 dim 1 : vector<8x128xf32>, i32 -> vector<8x128xf32>
    %c64_i32_336 = arith.constant 64 : i32
    %728 = tpu.dynamic_rotate %726 by %c64_i32_336 dim 1 : vector<8x128xf32>, i32 -> vector<8x128xf32>
    %c32_i32_337 = arith.constant 32 : i32
    %729 = tpu.dynamic_rotate %725 by %c32_i32_337 dim 1 : vector<8x128xf32>, i32 -> vector<8x128xf32>
    %730 = arith.mulf %727, %692 : vector<8x128xf32>
    %731 = arith.mulf %725, %728 : vector<8x128xf32>
    %732 = arith.addf %730, %731 : vector<8x128xf32>
    %733 = math.tanh %732 : vector<8x128xf32>
    %734 = arith.mulf %729, %733 : vector<8x128xf32>
    %c17_338 = arith.constant 17 : index
    %c0_339 = arith.constant 0 : index
    %c0_340 = arith.constant 0 : index
    %735 = vector.load %arg7[%c17_338, %c0_339, %c0_340] : memref<24x8x128xf32, #tpu.memory_space<vmem>>, vector<1x8x128xf32>
    %736 = vector.shape_cast %735 : vector<1x8x128xf32> to vector<8x128xf32>
    %737 = vector.shape_cast %734 : vector<8x128xf32> to vector<1x8x128xf32>
    tpu.vector_store %arg7[%c17_338, %c0_339, %c0_340], %737 {strides = array<i32>} : memref<24x8x128xf32, #tpu.memory_space<vmem>>, vector<1x8x128xf32>,
    %c18 = arith.constant 18 : index
    %c0_341 = arith.constant 0 : index
    %c0_342 = arith.constant 0 : index
    %738 = vector.load %arg8[%c18, %c0_341, %c0_342] : memref<24x8x128xf32, #tpu.memory_space<vmem>>, vector<1x8x128xf32>
    %739 = vector.shape_cast %738 : vector<1x8x128xf32> to vector<8x128xf32>
    %cst_343 = arith.constant dense<0.000000e+00> : vector<8x128xf32>
    %740 = tpu.matmul %715, %9, %cst_343 {dimension_numbers = #tpu.dot_dimension_numbers<[1], [0], [0], [1], [0, 0, 1, 1], [], []>} : vector<8x128xf32>, vector<128x128xf32>, vector<8x128xf32> -> vector<8x128xf32>
    %741 = arith.addf %739, %740 : vector<8x128xf32>
    %742 = arith.negf %741 : vector<8x128xf32>
    %743 = math.exp %742 : vector<8x128xf32>
    %cst_344 = arith.constant 1.000000e+00 : f32
    %744 = vector.broadcast %cst_344 : f32 to vector<8x128xf32>
    %745 = arith.addf %744, %743 : vector<8x128xf32>
    %746 = arith.divf %744, %745 : vector<8x128xf32>
    %747 = math.tanh %741 : vector<8x128xf32>
    %c96_i32_345 = arith.constant 96 : i32
    %748 = tpu.dynamic_rotate %746 by %c96_i32_345 dim 1 : vector<8x128xf32>, i32 -> vector<8x128xf32>
    %c64_i32_346 = arith.constant 64 : i32
    %749 = tpu.dynamic_rotate %747 by %c64_i32_346 dim 1 : vector<8x128xf32>, i32 -> vector<8x128xf32>
    %c32_i32_347 = arith.constant 32 : i32
    %750 = tpu.dynamic_rotate %746 by %c32_i32_347 dim 1 : vector<8x128xf32>, i32 -> vector<8x128xf32>
    %751 = arith.mulf %748, %713 : vector<8x128xf32>
    %752 = arith.mulf %746, %749 : vector<8x128xf32>
    %753 = arith.addf %751, %752 : vector<8x128xf32>
    %754 = math.tanh %753 : vector<8x128xf32>
    %755 = arith.mulf %750, %754 : vector<8x128xf32>
    %c0_348 = arith.constant 0 : index
    %c0_349 = arith.constant 0 : index
    %756 = vector.load %arg4[%c0_348, %c0_349] : memref<128x128xf32, #tpu.memory_space<vmem>>, vector<128x128xf32>
    %cst_350 = arith.constant dense<0.000000e+00> : vector<8x128xf32>
    %757 = tpu.matmul %755, %756, %cst_350 {dimension_numbers = #tpu.dot_dimension_numbers<[1], [0], [0], [1], [0, 0, 1, 1], [], []>} : vector<8x128xf32>, vector<128x128xf32>, vector<8x128xf32> -> vector<8x128xf32>
    %cst_351 = arith.constant dense<0.000000e+00> : vector<8x128xf32>
    %758 = tpu.matmul %734, %10, %cst_351 {dimension_numbers = #tpu.dot_dimension_numbers<[1], [0], [0], [1], [0, 0, 1, 1], [], []>} : vector<8x128xf32>, vector<128x128xf32>, vector<8x128xf32> -> vector<8x128xf32>
    %759 = arith.addf %757, %758 : vector<8x128xf32>
    %760 = arith.addf %759, %13 : vector<8x128xf32>
    %761 = arith.negf %760 : vector<8x128xf32>
    %762 = math.exp %761 : vector<8x128xf32>
    %cst_352 = arith.constant 1.000000e+00 : f32
    %763 = vector.broadcast %cst_352 : f32 to vector<8x128xf32>
    %764 = arith.addf %763, %762 : vector<8x128xf32>
    %765 = arith.divf %763, %764 : vector<8x128xf32>
    %766 = math.tanh %760 : vector<8x128xf32>
    %c96_i32_353 = arith.constant 96 : i32
    %767 = tpu.dynamic_rotate %765 by %c96_i32_353 dim 1 : vector<8x128xf32>, i32 -> vector<8x128xf32>
    %c64_i32_354 = arith.constant 64 : i32
    %768 = tpu.dynamic_rotate %766 by %c64_i32_354 dim 1 : vector<8x128xf32>, i32 -> vector<8x128xf32>
    %c32_i32_355 = arith.constant 32 : i32
    %769 = tpu.dynamic_rotate %765 by %c32_i32_355 dim 1 : vector<8x128xf32>, i32 -> vector<8x128xf32>
    %770 = arith.mulf %767, %732 : vector<8x128xf32>
    %771 = arith.mulf %765, %768 : vector<8x128xf32>
    %772 = arith.addf %770, %771 : vector<8x128xf32>
    %773 = math.tanh %772 : vector<8x128xf32>
    %774 = arith.mulf %769, %773 : vector<8x128xf32>
    %c18_356 = arith.constant 18 : index
    %c0_357 = arith.constant 0 : index
    %c0_358 = arith.constant 0 : index
    %775 = vector.load %arg7[%c18_356, %c0_357, %c0_358] : memref<24x8x128xf32, #tpu.memory_space<vmem>>, vector<1x8x128xf32>
    %776 = vector.shape_cast %775 : vector<1x8x128xf32> to vector<8x128xf32>
    %777 = vector.shape_cast %774 : vector<8x128xf32> to vector<1x8x128xf32>
    tpu.vector_store %arg7[%c18_356, %c0_357, %c0_358], %777 {strides = array<i32>} : memref<24x8x128xf32, #tpu.memory_space<vmem>>, vector<1x8x128xf32>,
    %c19 = arith.constant 19 : index
    %c0_359 = arith.constant 0 : index
    %c0_360 = arith.constant 0 : index
    %778 = vector.load %arg8[%c19, %c0_359, %c0_360] : memref<24x8x128xf32, #tpu.memory_space<vmem>>, vector<1x8x128xf32>
    %779 = vector.shape_cast %778 : vector<1x8x128xf32> to vector<8x128xf32>
    %cst_361 = arith.constant dense<0.000000e+00> : vector<8x128xf32>
    %780 = tpu.matmul %755, %9, %cst_361 {dimension_numbers = #tpu.dot_dimension_numbers<[1], [0], [0], [1], [0, 0, 1, 1], [], []>} : vector<8x128xf32>, vector<128x128xf32>, vector<8x128xf32> -> vector<8x128xf32>
    %781 = arith.addf %779, %780 : vector<8x128xf32>
    %782 = arith.negf %781 : vector<8x128xf32>
    %783 = math.exp %782 : vector<8x128xf32>
    %cst_362 = arith.constant 1.000000e+00 : f32
    %784 = vector.broadcast %cst_362 : f32 to vector<8x128xf32>
    %785 = arith.addf %784, %783 : vector<8x128xf32>
    %786 = arith.divf %784, %785 : vector<8x128xf32>
    %787 = math.tanh %781 : vector<8x128xf32>
    %c96_i32_363 = arith.constant 96 : i32
    %788 = tpu.dynamic_rotate %786 by %c96_i32_363 dim 1 : vector<8x128xf32>, i32 -> vector<8x128xf32>
    %c64_i32_364 = arith.constant 64 : i32
    %789 = tpu.dynamic_rotate %787 by %c64_i32_364 dim 1 : vector<8x128xf32>, i32 -> vector<8x128xf32>
    %c32_i32_365 = arith.constant 32 : i32
    %790 = tpu.dynamic_rotate %786 by %c32_i32_365 dim 1 : vector<8x128xf32>, i32 -> vector<8x128xf32>
    %791 = arith.mulf %788, %753 : vector<8x128xf32>
    %792 = arith.mulf %786, %789 : vector<8x128xf32>
    %793 = arith.addf %791, %792 : vector<8x128xf32>
    %794 = math.tanh %793 : vector<8x128xf32>
    %795 = arith.mulf %790, %794 : vector<8x128xf32>
    %c0_366 = arith.constant 0 : index
    %c0_367 = arith.constant 0 : index
    %796 = vector.load %arg4[%c0_366, %c0_367] : memref<128x128xf32, #tpu.memory_space<vmem>>, vector<128x128xf32>
    %cst_368 = arith.constant dense<0.000000e+00> : vector<8x128xf32>
    %797 = tpu.matmul %795, %796, %cst_368 {dimension_numbers = #tpu.dot_dimension_numbers<[1], [0], [0], [1], [0, 0, 1, 1], [], []>} : vector<8x128xf32>, vector<128x128xf32>, vector<8x128xf32> -> vector<8x128xf32>
    %cst_369 = arith.constant dense<0.000000e+00> : vector<8x128xf32>
    %798 = tpu.matmul %774, %10, %cst_369 {dimension_numbers = #tpu.dot_dimension_numbers<[1], [0], [0], [1], [0, 0, 1, 1], [], []>} : vector<8x128xf32>, vector<128x128xf32>, vector<8x128xf32> -> vector<8x128xf32>
    %799 = arith.addf %797, %798 : vector<8x128xf32>
    %800 = arith.addf %799, %13 : vector<8x128xf32>
    %801 = arith.negf %800 : vector<8x128xf32>
    %802 = math.exp %801 : vector<8x128xf32>
    %cst_370 = arith.constant 1.000000e+00 : f32
    %803 = vector.broadcast %cst_370 : f32 to vector<8x128xf32>
    %804 = arith.addf %803, %802 : vector<8x128xf32>
    %805 = arith.divf %803, %804 : vector<8x128xf32>
    %806 = math.tanh %800 : vector<8x128xf32>
    %c96_i32_371 = arith.constant 96 : i32
    %807 = tpu.dynamic_rotate %805 by %c96_i32_371 dim 1 : vector<8x128xf32>, i32 -> vector<8x128xf32>
    %c64_i32_372 = arith.constant 64 : i32
    %808 = tpu.dynamic_rotate %806 by %c64_i32_372 dim 1 : vector<8x128xf32>, i32 -> vector<8x128xf32>
    %c32_i32_373 = arith.constant 32 : i32
    %809 = tpu.dynamic_rotate %805 by %c32_i32_373 dim 1 : vector<8x128xf32>, i32 -> vector<8x128xf32>
    %810 = arith.mulf %807, %772 : vector<8x128xf32>
    %811 = arith.mulf %805, %808 : vector<8x128xf32>
    %812 = arith.addf %810, %811 : vector<8x128xf32>
    %813 = math.tanh %812 : vector<8x128xf32>
    %814 = arith.mulf %809, %813 : vector<8x128xf32>
    %c19_374 = arith.constant 19 : index
    %c0_375 = arith.constant 0 : index
    %c0_376 = arith.constant 0 : index
    %815 = vector.load %arg7[%c19_374, %c0_375, %c0_376] : memref<24x8x128xf32, #tpu.memory_space<vmem>>, vector<1x8x128xf32>
    %816 = vector.shape_cast %815 : vector<1x8x128xf32> to vector<8x128xf32>
    %817 = vector.shape_cast %814 : vector<8x128xf32> to vector<1x8x128xf32>
    tpu.vector_store %arg7[%c19_374, %c0_375, %c0_376], %817 {strides = array<i32>} : memref<24x8x128xf32, #tpu.memory_space<vmem>>, vector<1x8x128xf32>,
    %c20 = arith.constant 20 : index
    %c0_377 = arith.constant 0 : index
    %c0_378 = arith.constant 0 : index
    %818 = vector.load %arg8[%c20, %c0_377, %c0_378] : memref<24x8x128xf32, #tpu.memory_space<vmem>>, vector<1x8x128xf32>
    %819 = vector.shape_cast %818 : vector<1x8x128xf32> to vector<8x128xf32>
    %cst_379 = arith.constant dense<0.000000e+00> : vector<8x128xf32>
    %820 = tpu.matmul %795, %9, %cst_379 {dimension_numbers = #tpu.dot_dimension_numbers<[1], [0], [0], [1], [0, 0, 1, 1], [], []>} : vector<8x128xf32>, vector<128x128xf32>, vector<8x128xf32> -> vector<8x128xf32>
    %821 = arith.addf %819, %820 : vector<8x128xf32>
    %822 = arith.negf %821 : vector<8x128xf32>
    %823 = math.exp %822 : vector<8x128xf32>
    %cst_380 = arith.constant 1.000000e+00 : f32
    %824 = vector.broadcast %cst_380 : f32 to vector<8x128xf32>
    %825 = arith.addf %824, %823 : vector<8x128xf32>
    %826 = arith.divf %824, %825 : vector<8x128xf32>
    %827 = math.tanh %821 : vector<8x128xf32>
    %c96_i32_381 = arith.constant 96 : i32
    %828 = tpu.dynamic_rotate %826 by %c96_i32_381 dim 1 : vector<8x128xf32>, i32 -> vector<8x128xf32>
    %c64_i32_382 = arith.constant 64 : i32
    %829 = tpu.dynamic_rotate %827 by %c64_i32_382 dim 1 : vector<8x128xf32>, i32 -> vector<8x128xf32>
    %c32_i32_383 = arith.constant 32 : i32
    %830 = tpu.dynamic_rotate %826 by %c32_i32_383 dim 1 : vector<8x128xf32>, i32 -> vector<8x128xf32>
    %831 = arith.mulf %828, %793 : vector<8x128xf32>
    %832 = arith.mulf %826, %829 : vector<8x128xf32>
    %833 = arith.addf %831, %832 : vector<8x128xf32>
    %834 = math.tanh %833 : vector<8x128xf32>
    %835 = arith.mulf %830, %834 : vector<8x128xf32>
    %c0_384 = arith.constant 0 : index
    %c0_385 = arith.constant 0 : index
    %836 = vector.load %arg4[%c0_384, %c0_385] : memref<128x128xf32, #tpu.memory_space<vmem>>, vector<128x128xf32>
    %cst_386 = arith.constant dense<0.000000e+00> : vector<8x128xf32>
    %837 = tpu.matmul %835, %836, %cst_386 {dimension_numbers = #tpu.dot_dimension_numbers<[1], [0], [0], [1], [0, 0, 1, 1], [], []>} : vector<8x128xf32>, vector<128x128xf32>, vector<8x128xf32> -> vector<8x128xf32>
    %cst_387 = arith.constant dense<0.000000e+00> : vector<8x128xf32>
    %838 = tpu.matmul %814, %10, %cst_387 {dimension_numbers = #tpu.dot_dimension_numbers<[1], [0], [0], [1], [0, 0, 1, 1], [], []>} : vector<8x128xf32>, vector<128x128xf32>, vector<8x128xf32> -> vector<8x128xf32>
    %839 = arith.addf %837, %838 : vector<8x128xf32>
    %840 = arith.addf %839, %13 : vector<8x128xf32>
    %841 = arith.negf %840 : vector<8x128xf32>
    %842 = math.exp %841 : vector<8x128xf32>
    %cst_388 = arith.constant 1.000000e+00 : f32
    %843 = vector.broadcast %cst_388 : f32 to vector<8x128xf32>
    %844 = arith.addf %843, %842 : vector<8x128xf32>
    %845 = arith.divf %843, %844 : vector<8x128xf32>
    %846 = math.tanh %840 : vector<8x128xf32>
    %c96_i32_389 = arith.constant 96 : i32
    %847 = tpu.dynamic_rotate %845 by %c96_i32_389 dim 1 : vector<8x128xf32>, i32 -> vector<8x128xf32>
    %c64_i32_390 = arith.constant 64 : i32
    %848 = tpu.dynamic_rotate %846 by %c64_i32_390 dim 1 : vector<8x128xf32>, i32 -> vector<8x128xf32>
    %c32_i32_391 = arith.constant 32 : i32
    %849 = tpu.dynamic_rotate %845 by %c32_i32_391 dim 1 : vector<8x128xf32>, i32 -> vector<8x128xf32>
    %850 = arith.mulf %847, %812 : vector<8x128xf32>
    %851 = arith.mulf %845, %848 : vector<8x128xf32>
    %852 = arith.addf %850, %851 : vector<8x128xf32>
    %853 = math.tanh %852 : vector<8x128xf32>
    %854 = arith.mulf %849, %853 : vector<8x128xf32>
    %c20_392 = arith.constant 20 : index
    %c0_393 = arith.constant 0 : index
    %c0_394 = arith.constant 0 : index
    %855 = vector.load %arg7[%c20_392, %c0_393, %c0_394] : memref<24x8x128xf32, #tpu.memory_space<vmem>>, vector<1x8x128xf32>
    %856 = vector.shape_cast %855 : vector<1x8x128xf32> to vector<8x128xf32>
    %857 = vector.shape_cast %854 : vector<8x128xf32> to vector<1x8x128xf32>
    tpu.vector_store %arg7[%c20_392, %c0_393, %c0_394], %857 {strides = array<i32>} : memref<24x8x128xf32, #tpu.memory_space<vmem>>, vector<1x8x128xf32>,
    %c21 = arith.constant 21 : index
    %c0_395 = arith.constant 0 : index
    %c0_396 = arith.constant 0 : index
    %858 = vector.load %arg8[%c21, %c0_395, %c0_396] : memref<24x8x128xf32, #tpu.memory_space<vmem>>, vector<1x8x128xf32>
    %859 = vector.shape_cast %858 : vector<1x8x128xf32> to vector<8x128xf32>
    %cst_397 = arith.constant dense<0.000000e+00> : vector<8x128xf32>
    %860 = tpu.matmul %835, %9, %cst_397 {dimension_numbers = #tpu.dot_dimension_numbers<[1], [0], [0], [1], [0, 0, 1, 1], [], []>} : vector<8x128xf32>, vector<128x128xf32>, vector<8x128xf32> -> vector<8x128xf32>
    %861 = arith.addf %859, %860 : vector<8x128xf32>
    %862 = arith.negf %861 : vector<8x128xf32>
    %863 = math.exp %862 : vector<8x128xf32>
    %cst_398 = arith.constant 1.000000e+00 : f32
    %864 = vector.broadcast %cst_398 : f32 to vector<8x128xf32>
    %865 = arith.addf %864, %863 : vector<8x128xf32>
    %866 = arith.divf %864, %865 : vector<8x128xf32>
    %867 = math.tanh %861 : vector<8x128xf32>
    %c96_i32_399 = arith.constant 96 : i32
    %868 = tpu.dynamic_rotate %866 by %c96_i32_399 dim 1 : vector<8x128xf32>, i32 -> vector<8x128xf32>
    %c64_i32_400 = arith.constant 64 : i32
    %869 = tpu.dynamic_rotate %867 by %c64_i32_400 dim 1 : vector<8x128xf32>, i32 -> vector<8x128xf32>
    %c32_i32_401 = arith.constant 32 : i32
    %870 = tpu.dynamic_rotate %866 by %c32_i32_401 dim 1 : vector<8x128xf32>, i32 -> vector<8x128xf32>
    %871 = arith.mulf %868, %833 : vector<8x128xf32>
    %872 = arith.mulf %866, %869 : vector<8x128xf32>
    %873 = arith.addf %871, %872 : vector<8x128xf32>
    %874 = math.tanh %873 : vector<8x128xf32>
    %875 = arith.mulf %870, %874 : vector<8x128xf32>
    %c0_402 = arith.constant 0 : index
    %c0_403 = arith.constant 0 : index
    %876 = vector.load %arg4[%c0_402, %c0_403] : memref<128x128xf32, #tpu.memory_space<vmem>>, vector<128x128xf32>
    %cst_404 = arith.constant dense<0.000000e+00> : vector<8x128xf32>
    %877 = tpu.matmul %875, %876, %cst_404 {dimension_numbers = #tpu.dot_dimension_numbers<[1], [0], [0], [1], [0, 0, 1, 1], [], []>} : vector<8x128xf32>, vector<128x128xf32>, vector<8x128xf32> -> vector<8x128xf32>
    %cst_405 = arith.constant dense<0.000000e+00> : vector<8x128xf32>
    %878 = tpu.matmul %854, %10, %cst_405 {dimension_numbers = #tpu.dot_dimension_numbers<[1], [0], [0], [1], [0, 0, 1, 1], [], []>} : vector<8x128xf32>, vector<128x128xf32>, vector<8x128xf32> -> vector<8x128xf32>
    %879 = arith.addf %877, %878 : vector<8x128xf32>
    %880 = arith.addf %879, %13 : vector<8x128xf32>
    %881 = arith.negf %880 : vector<8x128xf32>
    %882 = math.exp %881 : vector<8x128xf32>
    %cst_406 = arith.constant 1.000000e+00 : f32
    %883 = vector.broadcast %cst_406 : f32 to vector<8x128xf32>
    %884 = arith.addf %883, %882 : vector<8x128xf32>
    %885 = arith.divf %883, %884 : vector<8x128xf32>
    %886 = math.tanh %880 : vector<8x128xf32>
    %c96_i32_407 = arith.constant 96 : i32
    %887 = tpu.dynamic_rotate %885 by %c96_i32_407 dim 1 : vector<8x128xf32>, i32 -> vector<8x128xf32>
    %c64_i32_408 = arith.constant 64 : i32
    %888 = tpu.dynamic_rotate %886 by %c64_i32_408 dim 1 : vector<8x128xf32>, i32 -> vector<8x128xf32>
    %c32_i32_409 = arith.constant 32 : i32
    %889 = tpu.dynamic_rotate %885 by %c32_i32_409 dim 1 : vector<8x128xf32>, i32 -> vector<8x128xf32>
    %890 = arith.mulf %887, %852 : vector<8x128xf32>
    %891 = arith.mulf %885, %888 : vector<8x128xf32>
    %892 = arith.addf %890, %891 : vector<8x128xf32>
    %893 = math.tanh %892 : vector<8x128xf32>
    %894 = arith.mulf %889, %893 : vector<8x128xf32>
    %c21_410 = arith.constant 21 : index
    %c0_411 = arith.constant 0 : index
    %c0_412 = arith.constant 0 : index
    %895 = vector.load %arg7[%c21_410, %c0_411, %c0_412] : memref<24x8x128xf32, #tpu.memory_space<vmem>>, vector<1x8x128xf32>
    %896 = vector.shape_cast %895 : vector<1x8x128xf32> to vector<8x128xf32>
    %897 = vector.shape_cast %894 : vector<8x128xf32> to vector<1x8x128xf32>
    tpu.vector_store %arg7[%c21_410, %c0_411, %c0_412], %897 {strides = array<i32>} : memref<24x8x128xf32, #tpu.memory_space<vmem>>, vector<1x8x128xf32>,
    %c22 = arith.constant 22 : index
    %c0_413 = arith.constant 0 : index
    %c0_414 = arith.constant 0 : index
    %898 = vector.load %arg8[%c22, %c0_413, %c0_414] : memref<24x8x128xf32, #tpu.memory_space<vmem>>, vector<1x8x128xf32>
    %899 = vector.shape_cast %898 : vector<1x8x128xf32> to vector<8x128xf32>
    %cst_415 = arith.constant dense<0.000000e+00> : vector<8x128xf32>
    %900 = tpu.matmul %875, %9, %cst_415 {dimension_numbers = #tpu.dot_dimension_numbers<[1], [0], [0], [1], [0, 0, 1, 1], [], []>} : vector<8x128xf32>, vector<128x128xf32>, vector<8x128xf32> -> vector<8x128xf32>
    %901 = arith.addf %899, %900 : vector<8x128xf32>
    %902 = arith.negf %901 : vector<8x128xf32>
    %903 = math.exp %902 : vector<8x128xf32>
    %cst_416 = arith.constant 1.000000e+00 : f32
    %904 = vector.broadcast %cst_416 : f32 to vector<8x128xf32>
    %905 = arith.addf %904, %903 : vector<8x128xf32>
    %906 = arith.divf %904, %905 : vector<8x128xf32>
    %907 = math.tanh %901 : vector<8x128xf32>
    %c96_i32_417 = arith.constant 96 : i32
    %908 = tpu.dynamic_rotate %906 by %c96_i32_417 dim 1 : vector<8x128xf32>, i32 -> vector<8x128xf32>
    %c64_i32_418 = arith.constant 64 : i32
    %909 = tpu.dynamic_rotate %907 by %c64_i32_418 dim 1 : vector<8x128xf32>, i32 -> vector<8x128xf32>
    %c32_i32_419 = arith.constant 32 : i32
    %910 = tpu.dynamic_rotate %906 by %c32_i32_419 dim 1 : vector<8x128xf32>, i32 -> vector<8x128xf32>
    %911 = arith.mulf %908, %873 : vector<8x128xf32>
    %912 = arith.mulf %906, %909 : vector<8x128xf32>
    %913 = arith.addf %911, %912 : vector<8x128xf32>
    %914 = math.tanh %913 : vector<8x128xf32>
    %915 = arith.mulf %910, %914 : vector<8x128xf32>
    %c0_420 = arith.constant 0 : index
    %c0_421 = arith.constant 0 : index
    %916 = vector.load %arg4[%c0_420, %c0_421] : memref<128x128xf32, #tpu.memory_space<vmem>>, vector<128x128xf32>
    %cst_422 = arith.constant dense<0.000000e+00> : vector<8x128xf32>
    %917 = tpu.matmul %915, %916, %cst_422 {dimension_numbers = #tpu.dot_dimension_numbers<[1], [0], [0], [1], [0, 0, 1, 1], [], []>} : vector<8x128xf32>, vector<128x128xf32>, vector<8x128xf32> -> vector<8x128xf32>
    %cst_423 = arith.constant dense<0.000000e+00> : vector<8x128xf32>
    %918 = tpu.matmul %894, %10, %cst_423 {dimension_numbers = #tpu.dot_dimension_numbers<[1], [0], [0], [1], [0, 0, 1, 1], [], []>} : vector<8x128xf32>, vector<128x128xf32>, vector<8x128xf32> -> vector<8x128xf32>
    %919 = arith.addf %917, %918 : vector<8x128xf32>
    %920 = arith.addf %919, %13 : vector<8x128xf32>
    %921 = arith.negf %920 : vector<8x128xf32>
    %922 = math.exp %921 : vector<8x128xf32>
    %cst_424 = arith.constant 1.000000e+00 : f32
    %923 = vector.broadcast %cst_424 : f32 to vector<8x128xf32>
    %924 = arith.addf %923, %922 : vector<8x128xf32>
    %925 = arith.divf %923, %924 : vector<8x128xf32>
    %926 = math.tanh %920 : vector<8x128xf32>
    %c96_i32_425 = arith.constant 96 : i32
    %927 = tpu.dynamic_rotate %925 by %c96_i32_425 dim 1 : vector<8x128xf32>, i32 -> vector<8x128xf32>
    %c64_i32_426 = arith.constant 64 : i32
    %928 = tpu.dynamic_rotate %926 by %c64_i32_426 dim 1 : vector<8x128xf32>, i32 -> vector<8x128xf32>
    %c32_i32_427 = arith.constant 32 : i32
    %929 = tpu.dynamic_rotate %925 by %c32_i32_427 dim 1 : vector<8x128xf32>, i32 -> vector<8x128xf32>
    %930 = arith.mulf %927, %892 : vector<8x128xf32>
    %931 = arith.mulf %925, %928 : vector<8x128xf32>
    %932 = arith.addf %930, %931 : vector<8x128xf32>
    %933 = math.tanh %932 : vector<8x128xf32>
    %934 = arith.mulf %929, %933 : vector<8x128xf32>
    %c22_428 = arith.constant 22 : index
    %c0_429 = arith.constant 0 : index
    %c0_430 = arith.constant 0 : index
    %935 = vector.load %arg7[%c22_428, %c0_429, %c0_430] : memref<24x8x128xf32, #tpu.memory_space<vmem>>, vector<1x8x128xf32>
    %936 = vector.shape_cast %935 : vector<1x8x128xf32> to vector<8x128xf32>
    %937 = vector.shape_cast %934 : vector<8x128xf32> to vector<1x8x128xf32>
    tpu.vector_store %arg7[%c22_428, %c0_429, %c0_430], %937 {strides = array<i32>} : memref<24x8x128xf32, #tpu.memory_space<vmem>>, vector<1x8x128xf32>,
    %c23 = arith.constant 23 : index
    %c0_431 = arith.constant 0 : index
    %c0_432 = arith.constant 0 : index
    %938 = vector.load %arg8[%c23, %c0_431, %c0_432] : memref<24x8x128xf32, #tpu.memory_space<vmem>>, vector<1x8x128xf32>
    %939 = vector.shape_cast %938 : vector<1x8x128xf32> to vector<8x128xf32>
    %cst_433 = arith.constant dense<0.000000e+00> : vector<8x128xf32>
    %940 = tpu.matmul %915, %9, %cst_433 {dimension_numbers = #tpu.dot_dimension_numbers<[1], [0], [0], [1], [0, 0, 1, 1], [], []>} : vector<8x128xf32>, vector<128x128xf32>, vector<8x128xf32> -> vector<8x128xf32>
    %941 = arith.addf %939, %940 : vector<8x128xf32>
    %942 = arith.negf %941 : vector<8x128xf32>
    %943 = math.exp %942 : vector<8x128xf32>
    %cst_434 = arith.constant 1.000000e+00 : f32
    %944 = vector.broadcast %cst_434 : f32 to vector<8x128xf32>
    %945 = arith.addf %944, %943 : vector<8x128xf32>
    %946 = arith.divf %944, %945 : vector<8x128xf32>
    %947 = math.tanh %941 : vector<8x128xf32>
    %c96_i32_435 = arith.constant 96 : i32
    %948 = tpu.dynamic_rotate %946 by %c96_i32_435 dim 1 : vector<8x128xf32>, i32 -> vector<8x128xf32>
    %c64_i32_436 = arith.constant 64 : i32
    %949 = tpu.dynamic_rotate %947 by %c64_i32_436 dim 1 : vector<8x128xf32>, i32 -> vector<8x128xf32>
    %c32_i32_437 = arith.constant 32 : i32
    %950 = tpu.dynamic_rotate %946 by %c32_i32_437 dim 1 : vector<8x128xf32>, i32 -> vector<8x128xf32>
    %951 = arith.mulf %948, %913 : vector<8x128xf32>
    %952 = arith.mulf %946, %949 : vector<8x128xf32>
    %953 = arith.addf %951, %952 : vector<8x128xf32>
    %954 = math.tanh %953 : vector<8x128xf32>
    %955 = arith.mulf %950, %954 : vector<8x128xf32>
    %c0_438 = arith.constant 0 : index
    %c0_439 = arith.constant 0 : index
    %956 = vector.load %arg4[%c0_438, %c0_439] : memref<128x128xf32, #tpu.memory_space<vmem>>, vector<128x128xf32>
    %cst_440 = arith.constant dense<0.000000e+00> : vector<8x128xf32>
    %957 = tpu.matmul %955, %956, %cst_440 {dimension_numbers = #tpu.dot_dimension_numbers<[1], [0], [0], [1], [0, 0, 1, 1], [], []>} : vector<8x128xf32>, vector<128x128xf32>, vector<8x128xf32> -> vector<8x128xf32>
    %cst_441 = arith.constant dense<0.000000e+00> : vector<8x128xf32>
    %958 = tpu.matmul %934, %10, %cst_441 {dimension_numbers = #tpu.dot_dimension_numbers<[1], [0], [0], [1], [0, 0, 1, 1], [], []>} : vector<8x128xf32>, vector<128x128xf32>, vector<8x128xf32> -> vector<8x128xf32>
    %959 = arith.addf %957, %958 : vector<8x128xf32>
    %960 = arith.addf %959, %13 : vector<8x128xf32>
    %961 = arith.negf %960 : vector<8x128xf32>
    %962 = math.exp %961 : vector<8x128xf32>
    %cst_442 = arith.constant 1.000000e+00 : f32
    %963 = vector.broadcast %cst_442 : f32 to vector<8x128xf32>
    %964 = arith.addf %963, %962 : vector<8x128xf32>
    %965 = arith.divf %963, %964 : vector<8x128xf32>
    %966 = math.tanh %960 : vector<8x128xf32>
    %c96_i32_443 = arith.constant 96 : i32
    %967 = tpu.dynamic_rotate %965 by %c96_i32_443 dim 1 : vector<8x128xf32>, i32 -> vector<8x128xf32>
    %c64_i32_444 = arith.constant 64 : i32
    %968 = tpu.dynamic_rotate %966 by %c64_i32_444 dim 1 : vector<8x128xf32>, i32 -> vector<8x128xf32>
    %c32_i32_445 = arith.constant 32 : i32
    %969 = tpu.dynamic_rotate %965 by %c32_i32_445 dim 1 : vector<8x128xf32>, i32 -> vector<8x128xf32>
    %970 = arith.mulf %967, %932 : vector<8x128xf32>
    %971 = arith.mulf %965, %968 : vector<8x128xf32>
    %972 = arith.addf %970, %971 : vector<8x128xf32>
    %973 = math.tanh %972 : vector<8x128xf32>
    %974 = arith.mulf %969, %973 : vector<8x128xf32>
    %c23_446 = arith.constant 23 : index
    %c0_447 = arith.constant 0 : index
    %c0_448 = arith.constant 0 : index
    %975 = vector.load %arg7[%c23_446, %c0_447, %c0_448] : memref<24x8x128xf32, #tpu.memory_space<vmem>>, vector<1x8x128xf32>
    %976 = vector.shape_cast %975 : vector<1x8x128xf32> to vector<8x128xf32>
    %977 = vector.shape_cast %974 : vector<8x128xf32> to vector<1x8x128xf32>
    tpu.vector_store %arg7[%c23_446, %c0_447, %c0_448], %977 {strides = array<i32>} : memref<24x8x128xf32, #tpu.memory_space<vmem>>, vector<1x8x128xf32>,
    return
  }
}

</mosaic_0001>

<llo_original>
// kernel: _rnn_forward_impl.1
$region0: #{_rnn_forward_impl.1}
  #allocation0 [shape = 'u32[]', space=smem, size = 0x4, offset = 0x4, fixed_abs, tag = 'smem constant byte address 0x4 - core index']
  #allocation1 [shape = 'u32[144,128]{1,0:T(1,128)}', space=vmem, size = 0x12000, scoped, tag = 'internal scratch']
  #allocation2 [shape = 'f32[24,8,128]{2,1,0:T(8,128)}', space=vmem, size = 0x18000, scoped, tag = 'scratch operand']
  %s0 = inlined_call_operand.vmem [shape: f32[24,8,128], index: 0, kind: input, shape index: {}]
  %s1 = inlined_call_operand.vmem [shape: f32[128,128], index: 1, kind: input, shape index: {}]
  %s2 = inlined_call_operand.vmem [shape: f32[128,128], index: 2, kind: input, shape index: {}]
  %s3 = inlined_call_operand.vmem [shape: f32[1,128], index: 3, kind: input, shape index: {}]
  %s4 = inlined_call_operand.vmem [shape: f32[128,128], index: 4, kind: input, shape index: {}]
  %s5 = inlined_call_operand.hbm [shape: f32[128,128], index: 5, kind: input, shape index: {}]
  %s6 = inlined_call_operand.vmem [shape: f32[1,128], index: 6, kind: input, shape index: {}]
  %s7 = inlined_call_operand.vmem [shape: f32[24,8,128], index: 7, kind: output, shape index: {}]
  %s8 = sld [smem:[#allocation0]]
  $region42: #{_rnn_forward_impl.1} parent=0
    _
  %s10 = ssub.s32 1, %s8
  %s11 = scalar_select 0, %s10, %s8
  $region1: #{_rnn_forward_impl.1} parent=0
    #allocation3 [shape = 'u8[65536]{0}', space=vmem, size = 0x10000, scoped, tag = 'input window, operand 5, single buffered']
    #allocation4 [shape = 's32[1]{0}', space=sflag, size = 0x4, scoped, tag = 'scoped memory for _rnn_forward_impl.1']
    %12 = vsyncpa [#allocation4], 0
    // Predicated region
    $region2: #{_rnn_forward_impl.1} parent=1 // pred_check
      _
    $region3: #{_rnn_forward_impl.1} parent=1 // pred_check_branch
      %14 = sbr.rel (0) target = $region5
    $region4: #{_rnn_forward_impl.1} parent=1 // pred_region
      _
    $region5: #{_rnn_forward_impl.1} parent=1 // pred_fallthru
      _
    // Predicated region
    $region6: #{_rnn_forward_impl.1} parent=1 // pred_check
      _
    $region7: #{_rnn_forward_impl.1} parent=1 // pred_check_branch
      %16 = sbr.rel (0) target = $region9
    $region8: #{_rnn_forward_impl.1} parent=1 // pred_region
      _
    $region9: #{_rnn_forward_impl.1} parent=1 // pred_fallthru
      _
    // Predicated region
    $region10: #{_rnn_forward_impl.1} parent=1 // pred_check
      _
    $region11: #{_rnn_forward_impl.1} parent=1 // pred_check_branch
      %18 = sbr.rel (0) target = $region13
    $region12: #{_rnn_forward_impl.1} parent=1 // pred_region
      _
    $region13: #{_rnn_forward_impl.1} parent=1 // pred_fallthru
      _
    // Predicated region
    $region14: #{_rnn_forward_impl.1} parent=1 // pred_check
      _
    $region15: #{_rnn_forward_impl.1} parent=1 // pred_check_branch
      %20 = sbr.rel (0) target = $region17
    $region16: #{_rnn_forward_impl.1} parent=1 // pred_region
      _
    $region17: #{_rnn_forward_impl.1} parent=1 // pred_fallthru
      _
    // Predicated region
    $region18: #{_rnn_forward_impl.1} parent=1 // pred_check
      _
    $region19: #{_rnn_forward_impl.1} parent=1 // pred_check_branch
      %22 = sbr.rel (0) target = $region21
    $region20: #{_rnn_forward_impl.1} parent=1 // pred_region
      _
    $region21: #{_rnn_forward_impl.1} parent=1 // pred_fallthru
      _
    // Predicated region
    $region22: #{_rnn_forward_impl.1} parent=1 // pred_check
      _
    $region23: #{_rnn_forward_impl.1} parent=1 // pred_check_branch
      %24 = sbr.rel (0) target = $region25
    $region24: #{_rnn_forward_impl.1} parent=1 // pred_region
      %s26 = ssub.s32 2048, 2048
      %27 = vsyncadd [#allocation4], %s26
      %s28 = sshll.u32 [#allocation3], 4
      %s29 = int_to_ptr.vmem [resolvable:$true] %s28
      %34 = dma.hbm_to_vmem [thread:$0]  %s5, 2048, %s29, [#allocation4], 128, 128, 8
    $region25: #{_rnn_forward_impl.1} parent=1 // pred_fallthru
      _
    // Predicated region
    $region26: #{_rnn_forward_impl.1} parent=1 // pred_check
      _
    $region27: #{_rnn_forward_impl.1} parent=1 // pred_check_branch
      %36 = sbr.rel (0) target = $region29
    $region28: #{_rnn_forward_impl.1} parent=1 // pred_region
      _
    $region29: #{_rnn_forward_impl.1} parent=1 // pred_fallthru
      _
    // Predicated region
    $region30: #{_rnn_forward_impl.1} parent=1 // pred_check
      _
    $region31: #{_rnn_forward_impl.1} parent=1 // pred_check_branch
      %38 = sbr.rel (0) target = $region33
    $region32: #{_rnn_forward_impl.1} parent=1 // pred_region
      %39 = dma.done [#allocation4], 2048
    $region33: #{_rnn_forward_impl.1} parent=1 // pred_fallthru
      _
    %v40 = vld [vmem:[%s0] sm:$0xff]
    %v41 = vld [vmem:[%s0 + $0x8] sm:$0xff]
    %v42 = vld [vmem:[%s0 + $0x10] sm:$0xff]
    %v43 = vld [vmem:[%s0 + $0x18] sm:$0xff]
    %v44 = vld [vmem:[%s0 + $0x20] sm:$0xff]
    %v45 = vld [vmem:[%s0 + $0x28] sm:$0xff]
    %v46 = vld [vmem:[%s0 + $0x30] sm:$0xff]
    %v47 = vld [vmem:[%s0 + $0x38] sm:$0xff]
    %v48 = vld [vmem:[%s0 + $0x40] sm:$0xff]
    %v49 = vld [vmem:[%s0 + $0x48] sm:$0xff]
    %v50 = vld [vmem:[%s0 + $0x50] sm:$0xff]
    %v51 = vld [vmem:[%s0 + $0x58] sm:$0xff]
    %v52 = vld [vmem:[%s0 + $0x60] sm:$0xff]
    %v53 = vld [vmem:[%s0 + $0x68] sm:$0xff]
    %v54 = vld [vmem:[%s0 + $0x70] sm:$0xff]
    %v55 = vld [vmem:[%s0 + $0x78] sm:$0xff]
    %v56 = vld [vmem:[%s0 + $0x80] sm:$0xff]
    %v57 = vld [vmem:[%s0 + $0x88] sm:$0xff]
    %v58 = vld [vmem:[%s0 + $0x90] sm:$0xff]
    %v59 = vld [vmem:[%s0 + $0x98] sm:$0xff]
    %v60 = vld [vmem:[%s0 + $0xa0] sm:$0xff]
    %v61 = vld [vmem:[%s0 + $0xa8] sm:$0xff]
    %v62 = vld [vmem:[%s0 + $0xb0] sm:$0xff]
    %v63 = vld [vmem:[%s0 + $0xb8] sm:$0xff]
    %v64 = vld [vmem:[%s1] sm:$0xff]
    %v65 = vld [vmem:[%s1 + $0x8] sm:$0xff]
    %v66 = vld [vmem:[%s1 + $0x10] sm:$0xff]
    %v67 = vld [vmem:[%s1 + $0x18] sm:$0xff]
    %v68 = vld [vmem:[%s1 + $0x20] sm:$0xff]
    %v69 = vld [vmem:[%s1 + $0x28] sm:$0xff]
    %v70 = vld [vmem:[%s1 + $0x30] sm:$0xff]
    %v71 = vld [vmem:[%s1 + $0x38] sm:$0xff]
    %v72 = vld [vmem:[%s1 + $0x40] sm:$0xff]
    %v73 = vld [vmem:[%s1 + $0x48] sm:$0xff]
    %v74 = vld [vmem:[%s1 + $0x50] sm:$0xff]
    %v75 = vld [vmem:[%s1 + $0x58] sm:$0xff]
    %v76 = vld [vmem:[%s1 + $0x60] sm:$0xff]
    %v77 = vld [vmem:[%s1 + $0x68] sm:$0xff]
    %v78 = vld [vmem:[%s1 + $0x70] sm:$0xff]
    %v79 = vld [vmem:[%s1 + $0x78] sm:$0xff]
    %v80 = vld [vmem:[%s3] sm:$0x1]
    %v82 = vlaneseq
    %v83 = vshrl.u32 %v82, 7
    %v84 = vsub.s32 0, %v83
    %v85 = vrot.slane %v80, %v84
    %87 = vmatprep.subr.mxu0 0.0
    %88 = vmatpush1.msra.mxu0 %v64
    %89 = vmatprep.subr.mxu0 0.0
    %90 = vmatpush1.msra.mxu0 %v65
    %91 = vmatprep.subr.mxu0 0.0
    %92 = vmatpush1.msra.mxu0 %v66
    %93 = vmatprep.subr.mxu0 0.0
    %94 = vmatpush1.msra.mxu0 %v67
    %95 = vmatprep.subr.mxu0 0.0
    %96 = vmatpush1.msra.mxu0 %v68
    %97 = vmatprep.subr.mxu0 0.0
    %98 = vmatpush1.msra.mxu0 %v69
    %99 = vmatprep.subr.mxu0 0.0
    %100 = vmatpush1.msra.mxu0 %v70
    %101 = vmatprep.subr.mxu0 0.0
    %102 = vmatpush1.msra.mxu0 %v71
    %103 = vmatprep.subr.mxu0 0.0
    %104 = vmatpush1.msra.mxu0 %v72
    %105 = vmatprep.subr.mxu0 0.0
    %106 = vmatpush1.msra.mxu0 %v73
    %107 = vmatprep.subr.mxu0 0.0
    %108 = vmatpush1.msra.mxu0 %v74
    %109 = vmatprep.subr.mxu0 0.0
    %110 = vmatpush1.msra.mxu0 %v75
    %111 = vmatprep.subr.mxu0 0.0
    %112 = vmatpush1.msra.mxu0 %v76
    %113 = vmatprep.subr.mxu0 0.0
    %114 = vmatpush1.msra.mxu0 %v77
    %115 = vmatprep.subr.mxu0 0.0
    %116 = vmatpush1.msra.mxu0 %v78
    %117 = vmatprep.subr.mxu0 0.0
    %118 = vmatpush1.msra.mxu0 %v79
    %119 = vmatprep.subr.mxu0 0.0
    %120 = vmatpush1.msra.mxu0 0.0
    %121 = vmatprep.subr.mxu0 0.0
    %122 = vmatpush1.msra.mxu0 0.0
    %123 = vmatprep.subr.mxu0 0.0
    %124 = vmatpush1.msra.mxu0 0.0
    %125 = vmatprep.subr.mxu0 0.0
    %126 = vmatpush1.msra.mxu0 0.0
    %127 = vmatprep.subr.mxu0 0.0
    %128 = vmatpush1.msra.mxu0 0.0
    %129 = vmatprep.subr.mxu0 0.0
    %130 = vmatpush1.msra.mxu0 0.0
    %131 = vmatprep.subr.mxu0 0.0
    %132 = vmatpush1.msra.mxu0 0.0
    %133 = vmatprep.subr.mxu0 0.0
    %134 = vmatpush1.msra.mxu0 0.0
    %135 = vmatprep.subr.mxu0 0.0
    %136 = vmatpush1.msra.mxu0 0.0
    %137 = vmatprep.subr.mxu0 0.0
    %138 = vmatpush1.msra.mxu0 0.0
    %139 = vmatprep.subr.mxu0 0.0
    %140 = vmatpush1.msra.mxu0 0.0
    %141 = vmatprep.subr.mxu0 0.0
    %142 = vmatpush1.msra.mxu0 0.0
    %143 = vmatprep.subr.mxu0 0.0
    %144 = vmatpush1.msra.mxu0 0.0
    %145 = vmatprep.subr.mxu0 0.0
    %146 = vmatpush1.msra.mxu0 0.0
    %147 = vmatprep.subr.mxu0 0.0
    %148 = vmatpush1.msra.mxu0 0.0
    %149 = vmatprep.subr.mxu0 0.0
    %150 = vmatpush1.msra.mxu0 0.0
    %151 = vmatprep.mubr.f32.mxu0 0.0
    %152 = vmatmul.mubr.f32.gmra.mrb[0].mxu0 %v40
    %v153 = vpop.f32.mrb[0].mxu0
    %v154 = vadd.f32 %v85, %v153
    %v155 = vpop.f32.mrb[0].mxu0
    %156 = vmatprep.mubr.f32.mxu0 0.0
    %157 = vmatmul.mubr.f32.gmra.mrb[0].mxu0 %v41
    %v158 = vpop.f32.mrb[0].mxu0
    %v159 = vadd.f32 %v85, %v158
    %v160 = vpop.f32.mrb[0].mxu0
    %161 = vmatprep.mubr.f32.mxu0 0.0
    %162 = vmatmul.mubr.f32.gmra.mrb[0].mxu0 %v42
    %v163 = vpop.f32.mrb[0].mxu0
    %v164 = vadd.f32 %v85, %v163
    %v165 = vpop.f32.mrb[0].mxu0
    %166 = vmatprep.mubr.f32.mxu0 0.0
    %167 = vmatmul.mubr.f32.gmra.mrb[0].mxu0 %v43
    %v168 = vpop.f32.mrb[0].mxu0
    %v169 = vadd.f32 %v85, %v168
    %v170 = vpop.f32.mrb[0].mxu0
    %171 = vmatprep.mubr.f32.mxu0 0.0
    %172 = vmatmul.mubr.f32.gmra.mrb[0].mxu0 %v44
    %v173 = vpop.f32.mrb[0].mxu0
    %v174 = vadd.f32 %v85, %v173
    %v175 = vpop.f32.mrb[0].mxu0
    %176 = vmatprep.mubr.f32.mxu0 0.0
    %177 = vmatmul.mubr.f32.gmra.mrb[0].mxu0 %v45
    %v178 = vpop.f32.mrb[0].mxu0
    %v179 = vadd.f32 %v85, %v178
    %v180 = vpop.f32.mrb[0].mxu0
    %181 = vmatprep.mubr.f32.mxu0 0.0
    %182 = vmatmul.mubr.f32.gmra.mrb[0].mxu0 %v46
    %v183 = vpop.f32.mrb[0].mxu0
    %v184 = vadd.f32 %v85, %v183
    %v185 = vpop.f32.mrb[0].mxu0
    %186 = vmatprep.mubr.f32.mxu0 0.0
    %187 = vmatmul.mubr.f32.gmra.mrb[0].mxu0 %v47
    %v188 = vpop.f32.mrb[0].mxu0
    %v189 = vadd.f32 %v85, %v188
    %v190 = vpop.f32.mrb[0].mxu0
    %191 = vmatprep.mubr.f32.mxu0 0.0
    %192 = vmatmul.mubr.f32.gmra.mrb[0].mxu0 %v48
    %v193 = vpop.f32.mrb[0].mxu0
    %v194 = vadd.f32 %v85, %v193
    %v195 = vpop.f32.mrb[0].mxu0
    %196 = vmatprep.mubr.f32.mxu0 0.0
    %197 = vmatmul.mubr.f32.gmra.mrb[0].mxu0 %v49
    %v198 = vpop.f32.mrb[0].mxu0
    %v199 = vadd.f32 %v85, %v198
    %v200 = vpop.f32.mrb[0].mxu0
    %201 = vmatprep.mubr.f32.mxu0 0.0
    %202 = vmatmul.mubr.f32.gmra.mrb[0].mxu0 %v50
    %v203 = vpop.f32.mrb[0].mxu0
    %v204 = vadd.f32 %v85, %v203
    %v205 = vpop.f32.mrb[0].mxu0
    %206 = vmatprep.mubr.f32.mxu0 0.0
    %207 = vmatmul.mubr.f32.gmra.mrb[0].mxu0 %v51
    %v208 = vpop.f32.mrb[0].mxu0
    %v209 = vadd.f32 %v85, %v208
    %v210 = vpop.f32.mrb[0].mxu0
    %211 = vmatprep.mubr.f32.mxu0 0.0
    %212 = vmatmul.mubr.f32.gmra.mrb[0].mxu0 %v52
    %v213 = vpop.f32.mrb[0].mxu0
    %v214 = vadd.f32 %v85, %v213
    %v215 = vpop.f32.mrb[0].mxu0
    %216 = vmatprep.mubr.f32.mxu0 0.0
    %217 = vmatmul.mubr.f32.gmra.mrb[0].mxu0 %v53
    %v218 = vpop.f32.mrb[0].mxu0
    %v219 = vadd.f32 %v85, %v218
    %v220 = vpop.f32.mrb[0].mxu0
    %221 = vmatprep.mubr.f32.mxu0 0.0
    %222 = vmatmul.mubr.f32.gmra.mrb[0].mxu0 %v54
    %v223 = vpop.f32.mrb[0].mxu0
    %v224 = vadd.f32 %v85, %v223
    %v225 = vpop.f32.mrb[0].mxu0
    %226 = vmatprep.mubr.f32.mxu0 0.0
    %227 = vmatmul.mubr.f32.gmra.mrb[0].mxu0 %v55
    %v228 = vpop.f32.mrb[0].mxu0
    %v229 = vadd.f32 %v85, %v228
    %v230 = vpop.f32.mrb[0].mxu0
    %231 = vmatprep.mubr.f32.mxu0 0.0
    %232 = vmatmul.mubr.f32.gmra.mrb[0].mxu0 %v56
    %v233 = vpop.f32.mrb[0].mxu0
    %v234 = vadd.f32 %v85, %v233
    %v235 = vpop.f32.mrb[0].mxu0
    %236 = vmatprep.mubr.f32.mxu0 0.0
    %237 = vmatmul.mubr.f32.gmra.mrb[0].mxu0 %v57
    %v238 = vpop.f32.mrb[0].mxu0
    %v239 = vadd.f32 %v85, %v238
    %v240 = vpop.f32.mrb[0].mxu0
    %241 = vmatprep.mubr.f32.mxu0 0.0
    %242 = vmatmul.mubr.f32.gmra.mrb[0].mxu0 %v58
    %v243 = vpop.f32.mrb[0].mxu0
    %v244 = vadd.f32 %v85, %v243
    %v245 = vpop.f32.mrb[0].mxu0
    %246 = vmatprep.mubr.f32.mxu0 0.0
    %247 = vmatmul.mubr.f32.gmra.mrb[0].mxu0 %v59
    %v248 = vpop.f32.mrb[0].mxu0
    %v249 = vadd.f32 %v85, %v248
    %v250 = vpop.f32.mrb[0].mxu0
    %251 = vmatprep.mubr.f32.mxu0 0.0
    %252 = vmatmul.mubr.f32.gmra.mrb[0].mxu0 %v60
    %v253 = vpop.f32.mrb[0].mxu0
    %v254 = vadd.f32 %v85, %v253
    %v255 = vpop.f32.mrb[0].mxu0
    %256 = vmatprep.mubr.f32.mxu0 0.0
    %257 = vmatmul.mubr.f32.gmra.mrb[0].mxu0 %v61
    %v258 = vpop.f32.mrb[0].mxu0
    %v259 = vadd.f32 %v85, %v258
    %v260 = vpop.f32.mrb[0].mxu0
    %261 = vmatprep.mubr.f32.mxu0 0.0
    %262 = vmatmul.mubr.f32.gmra.mrb[0].mxu0 %v62
    %v263 = vpop.f32.mrb[0].mxu0
    %v264 = vadd.f32 %v85, %v263
    %v265 = vpop.f32.mrb[0].mxu0
    %266 = vmatprep.mubr.f32.mxu0 0.0
    %267 = vmatmul.mubr.f32.gmra.mrb[0].mxu0 %v63
    %v268 = vpop.f32.mrb[0].mxu0
    %v269 = vadd.f32 %v85, %v268
    %v270 = vpop.f32.mrb[0].mxu0
    %271 = vdwg.mxu0
    %272 = vst [vmem:[#allocation2] sm:$0xff] %v154
    %273 = vst [vmem:[#allocation2 + $0x8] sm:$0xff] %v159
    %274 = vst [vmem:[#allocation2 + $0x10] sm:$0xff] %v164
    %275 = vst [vmem:[#allocation2 + $0x18] sm:$0xff] %v169
    %276 = vst [vmem:[#allocation2 + $0x20] sm:$0xff] %v174
    %277 = vst [vmem:[#allocation2 + $0x28] sm:$0xff] %v179
    %278 = vst [vmem:[#allocation2 + $0x30] sm:$0xff] %v184
    %279 = vst [vmem:[#allocation2 + $0x38] sm:$0xff] %v189
    %280 = vst [vmem:[#allocation2 + $0x40] sm:$0xff] %v194
    %281 = vst [vmem:[#allocation2 + $0x48] sm:$0xff] %v199
    %282 = vst [vmem:[#allocation2 + $0x50] sm:$0xff] %v204
    %283 = vst [vmem:[#allocation2 + $0x58] sm:$0xff] %v209
    %284 = vst [vmem:[#allocation2 + $0x60] sm:$0xff] %v214
    %285 = vst [vmem:[#allocation2 + $0x68] sm:$0xff] %v219
    %286 = vst [vmem:[#allocation2 + $0x70] sm:$0xff] %v224
    %287 = vst [vmem:[#allocation2 + $0x78] sm:$0xff] %v229
    %288 = vst [vmem:[#allocation2 + $0x80] sm:$0xff] %v234
    %289 = vst [vmem:[#allocation2 + $0x88] sm:$0xff] %v239
    %290 = vst [vmem:[#allocation2 + $0x90] sm:$0xff] %v244
    %291 = vst [vmem:[#allocation2 + $0x98] sm:$0xff] %v249
    %292 = vst [vmem:[#allocation2 + $0xa0] sm:$0xff] %v254
    %293 = vst [vmem:[#allocation2 + $0xa8] sm:$0xff] %v259
    %294 = vst [vmem:[#allocation2 + $0xb0] sm:$0xff] %v264
    %295 = vst [vmem:[#allocation2 + $0xb8] sm:$0xff] %v269
    %v296 = vld [vmem:[%s2] sm:$0xff]
    %v297 = vld [vmem:[%s2 + $0x8] sm:$0xff]
    %v298 = vld [vmem:[%s2 + $0x10] sm:$0xff]
    %v299 = vld [vmem:[%s2 + $0x18] sm:$0xff]
    %v300 = vld [vmem:[%s2 + $0x20] sm:$0xff]
    %v301 = vld [vmem:[%s2 + $0x28] sm:$0xff]
    %v302 = vld [vmem:[%s2 + $0x30] sm:$0xff]
    %v303 = vld [vmem:[%s2 + $0x38] sm:$0xff]
    %v304 = vld [vmem:[%s2 + $0x40] sm:$0xff]
    %v305 = vld [vmem:[%s2 + $0x48] sm:$0xff]
    %v306 = vld [vmem:[%s2 + $0x50] sm:$0xff]
    %v307 = vld [vmem:[%s2 + $0x58] sm:$0xff]
    %v308 = vld [vmem:[%s2 + $0x60] sm:$0xff]
    %v309 = vld [vmem:[%s2 + $0x68] sm:$0xff]
    %v310 = vld [vmem:[%s2 + $0x70] sm:$0xff]
    %v311 = vld [vmem:[%s2 + $0x78] sm:$0xff]
    %v312 = vld [vmem:[#allocation3] sm:$0xff]
    %v313 = vld [vmem:[#allocation3 + $0x8] sm:$0xff]
    %v314 = vld [vmem:[#allocation3 + $0x10] sm:$0xff]
    %v315 = vld [vmem:[#allocation3 + $0x18] sm:$0xff]
    %v316 = vld [vmem:[#allocation3 + $0x20] sm:$0xff]
    %v317 = vld [vmem:[#allocation3 + $0x28] sm:$0xff]
    %v318 = vld [vmem:[#allocation3 + $0x30] sm:$0xff]
    %v319 = vld [vmem:[#allocation3 + $0x38] sm:$0xff]
    %v320 = vld [vmem:[#allocation3 + $0x40] sm:$0xff]
    %v321 = vld [vmem:[#allocation3 + $0x48] sm:$0xff]
    %v322 = vld [vmem:[#allocation3 + $0x50] sm:$0xff]
    %v323 = vld [vmem:[#allocation3 + $0x58] sm:$0xff]
    %v324 = vld [vmem:[#allocation3 + $0x60] sm:$0xff]
    %v325 = vld [vmem:[#allocation3 + $0x68] sm:$0xff]
    %v326 = vld [vmem:[#allocation3 + $0x70] sm:$0xff]
    %v327 = vld [vmem:[#allocation3 + $0x78] sm:$0xff]
    %v328 = vld [vmem:[%s6] sm:$0x1]
    %v330 = vlaneseq
    %v331 = vshrl.u32 %v330, 7
    %v332 = vsub.s32 0, %v331
    %v333 = vrot.slane %v328, %v332
    %v335 = vld [vmem:[#allocation2] sm:$0xff]
    %336 = vmatprep.subr.mxu0 0.0
    %337 = vmatpush1.msra.mxu0 %v296
    %338 = vmatprep.subr.mxu0 0.0
    %339 = vmatpush1.msra.mxu0 %v297
    %340 = vmatprep.subr.mxu0 0.0
    %341 = vmatpush1.msra.mxu0 %v298
    %342 = vmatprep.subr.mxu0 0.0
    %343 = vmatpush1.msra.mxu0 %v299
    %344 = vmatprep.subr.mxu0 0.0
    %345 = vmatpush1.msra.mxu0 %v300
    %346 = vmatprep.subr.mxu0 0.0
    %347 = vmatpush1.msra.mxu0 %v301
    %348 = vmatprep.subr.mxu0 0.0
    %349 = vmatpush1.msra.mxu0 %v302
    %350 = vmatprep.subr.mxu0 0.0
    %351 = vmatpush1.msra.mxu0 %v303
    %352 = vmatprep.subr.mxu0 0.0
    %353 = vmatpush1.msra.mxu0 %v304
    %354 = vmatprep.subr.mxu0 0.0
    %355 = vmatpush1.msra.mxu0 %v305
    %356 = vmatprep.subr.mxu0 0.0
    %357 = vmatpush1.msra.mxu0 %v306
    %358 = vmatprep.subr.mxu0 0.0
    %359 = vmatpush1.msra.mxu0 %v307
    %360 = vmatprep.subr.mxu0 0.0
    %361 = vmatpush1.msra.mxu0 %v308
    %362 = vmatprep.subr.mxu0 0.0
    %363 = vmatpush1.msra.mxu0 %v309
    %364 = vmatprep.subr.mxu0 0.0
    %365 = vmatpush1.msra.mxu0 %v310
    %366 = vmatprep.subr.mxu0 0.0
    %367 = vmatpush1.msra.mxu0 %v311
    %368 = vmatprep.subr.mxu0 0.0
    %369 = vmatpush1.msra.mxu0 0.0
    %370 = vmatprep.subr.mxu0 0.0
    %371 = vmatpush1.msra.mxu0 0.0
    %372 = vmatprep.subr.mxu0 0.0
    %373 = vmatpush1.msra.mxu0 0.0
    %374 = vmatprep.subr.mxu0 0.0
    %375 = vmatpush1.msra.mxu0 0.0
    %376 = vmatprep.subr.mxu0 0.0
    %377 = vmatpush1.msra.mxu0 0.0
    %378 = vmatprep.subr.mxu0 0.0
    %379 = vmatpush1.msra.mxu0 0.0
    %380 = vmatprep.subr.mxu0 0.0
    %381 = vmatpush1.msra.mxu0 0.0
    %382 = vmatprep.subr.mxu0 0.0
    %383 = vmatpush1.msra.mxu0 0.0
    %384 = vmatprep.subr.mxu0 0.0
    %385 = vmatpush1.msra.mxu0 0.0
    %386 = vmatprep.subr.mxu0 0.0
    %387 = vmatpush1.msra.mxu0 0.0
    %388 = vmatprep.subr.mxu0 0.0
    %389 = vmatpush1.msra.mxu0 0.0
    %390 = vmatprep.subr.mxu0 0.0
    %391 = vmatpush1.msra.mxu0 0.0
    %392 = vmatprep.subr.mxu0 0.0
    %393 = vmatpush1.msra.mxu0 0.0
    %394 = vmatprep.subr.mxu0 0.0
    %395 = vmatpush1.msra.mxu0 0.0
    %396 = vmatprep.subr.mxu0 0.0
    %397 = vmatpush1.msra.mxu0 0.0
    %398 = vmatprep.subr.mxu0 0.0
    %399 = vmatpush1.msra.mxu0 0.0
    %400 = vmatprep.mubr.f32.mxu0 0.0
    %401 = vmatmul.mubr.f32.gmra.mrb[0].mxu0 0.0
    %v402 = vpop.f32.mrb[0].mxu0
    %v403 = vadd.f32 0.0, %v402
    %v404 = vpop.f32.mrb[0].mxu0
    %405 = vdwg.mxu0
    %v406 = vadd.f32 %v335, %v403
    %v407 = vxor.u32 %v406, 2147483648
    %v408 = vmul.f32 %v407, 1.442695
    %v409 = vpow.pop %v408
    %v410 = vadd.f32 %v409, 1.0
    %v411 = vrcp.pop %v410
    %v412 = vmul.f32 1.0, %v411
    %v413 = vtanh.pop %v406
    %414 = vrot.lane.b32.xlu0 %v412, 96
    %v415 = vpop.permute.xlu0 %414
    %416 = vrot.lane.b32.xlu0 %v413, 64
    %v417 = vpop.permute.xlu0 %416
    %418 = vrot.lane.b32.xlu0 %v412, 32
    %v419 = vpop.permute.xlu0 %418
    %v420 = vmul.f32 %v415, 0.0
    %v421 = vmul.f32 %v412, %v417
    %v422 = vadd.f32 %v420, %v421
    %v423 = vtanh.pop %v422
    %v424 = vmul.f32 %v419, %v423
    %v425 = vld [vmem:[%s4] sm:$0xff]
    %v426 = vld [vmem:[%s4 + $0x8] sm:$0xff]
    %v427 = vld [vmem:[%s4 + $0x10] sm:$0xff]
    %v428 = vld [vmem:[%s4 + $0x18] sm:$0xff]
    %v429 = vld [vmem:[%s4 + $0x20] sm:$0xff]
    %v430 = vld [vmem:[%s4 + $0x28] sm:$0xff]
    %v431 = vld [vmem:[%s4 + $0x30] sm:$0xff]
    %v432 = vld [vmem:[%s4 + $0x38] sm:$0xff]
    %v433 = vld [vmem:[%s4 + $0x40] sm:$0xff]
    %v434 = vld [vmem:[%s4 + $0x48] sm:$0xff]
    %v435 = vld [vmem:[%s4 + $0x50] sm:$0xff]
    %v436 = vld [vmem:[%s4 + $0x58] sm:$0xff]
    %v437 = vld [vmem:[%s4 + $0x60] sm:$0xff]
    %v438 = vld [vmem:[%s4 + $0x68] sm:$0xff]
    %v439 = vld [vmem:[%s4 + $0x70] sm:$0xff]
    %v440 = vld [vmem:[%s4 + $0x78] sm:$0xff]
    %441 = vmatprep.subr.mxu0 0.0
    %442 = vmatpush1.msra.mxu0 %v312
    %443 = vmatprep.subr.mxu0 0.0
    %444 = vmatpush1.msra.mxu0 %v313
    %445 = vmatprep.subr.mxu0 0.0
    %446 = vmatpush1.msra.mxu0 %v314
    %447 = vmatprep.subr.mxu0 0.0
    %448 = vmatpush1.msra.mxu0 %v315
    %449 = vmatprep.subr.mxu0 0.0
    %450 = vmatpush1.msra.mxu0 %v316
    %451 = vmatprep.subr.mxu0 0.0
    %452 = vmatpush1.msra.mxu0 %v317
    %453 = vmatprep.subr.mxu0 0.0
    %454 = vmatpush1.msra.mxu0 %v318
    %455 = vmatprep.subr.mxu0 0.0
    %456 = vmatpush1.msra.mxu0 %v319
    %457 = vmatprep.subr.mxu0 0.0
    %458 = vmatpush1.msra.mxu0 %v320
    %459 = vmatprep.subr.mxu0 0.0
    %460 = vmatpush1.msra.mxu0 %v321
    %461 = vmatprep.subr.mxu0 0.0
    %462 = vmatpush1.msra.mxu0 %v322
    %463 = vmatprep.subr.mxu0 0.0
    %464 = vmatpush1.msra.mxu0 %v323
    %465 = vmatprep.subr.mxu0 0.0
    %466 = vmatpush1.msra.mxu0 %v324
    %467 = vmatprep.subr.mxu0 0.0
    %468 = vmatpush1.msra.mxu0 %v325
    %469 = vmatprep.subr.mxu0 0.0
    %470 = vmatpush1.msra.mxu0 %v326
    %471 = vmatprep.subr.mxu0 0.0
    %472 = vmatpush1.msra.mxu0 %v327
    %473 = vmatprep.subr.mxu0 0.0
    %474 = vmatpush1.msra.mxu0 0.0
    %475 = vmatprep.subr.mxu0 0.0
    %476 = vmatpush1.msra.mxu0 0.0
    %477 = vmatprep.subr.mxu0 0.0
    %478 = vmatpush1.msra.mxu0 0.0
    %479 = vmatprep.subr.mxu0 0.0
    %480 = vmatpush1.msra.mxu0 0.0
    %481 = vmatprep.subr.mxu0 0.0
    %482 = vmatpush1.msra.mxu0 0.0
    %483 = vmatprep.subr.mxu0 0.0
    %484 = vmatpush1.msra.mxu0 0.0
    %485 = vmatprep.subr.mxu0 0.0
    %486 = vmatpush1.msra.mxu0 0.0
    %487 = vmatprep.subr.mxu0 0.0
    %488 = vmatpush1.msra.mxu0 0.0
    %489 = vmatprep.subr.mxu0 0.0
    %490 = vmatpush1.msra.mxu0 0.0
    %491 = vmatprep.subr.mxu0 0.0
    %492 = vmatpush1.msra.mxu0 0.0
    %493 = vmatprep.subr.mxu0 0.0
    %494 = vmatpush1.msra.mxu0 0.0
    %495 = vmatprep.subr.mxu0 0.0
    %496 = vmatpush1.msra.mxu0 0.0
    %497 = vmatprep.subr.mxu0 0.0
    %498 = vmatpush1.msra.mxu0 0.0
    %499 = vmatprep.subr.mxu0 0.0
    %500 = vmatpush1.msra.mxu0 0.0
    %501 = vmatprep.subr.mxu0 0.0
    %502 = vmatpush1.msra.mxu0 0.0
    %503 = vmatprep.subr.mxu0 0.0
    %504 = vmatpush1.msra.mxu0 0.0
    %505 = vmatprep.mubr.f32.mxu0 0.0
    %506 = vmatmul.mubr.f32.gmra.mrb[0].mxu0 0.0
    %v507 = vpop.f32.mrb[0].mxu0
    %v508 = vadd.f32 0.0, %v507
    %v509 = vpop.f32.mrb[0].mxu0
    %510 = vdwg.mxu0
    %511 = vmatprep.subr.mxu0 0.0
    %512 = vmatpush1.msra.mxu0 %v425
    %513 = vmatprep.subr.mxu0 0.0
    %514 = vmatpush1.msra.mxu0 %v426
    %515 = vmatprep.subr.mxu0 0.0
    %516 = vmatpush1.msra.mxu0 %v427
    %517 = vmatprep.subr.mxu0 0.0
    %518 = vmatpush1.msra.mxu0 %v428
    %519 = vmatprep.subr.mxu0 0.0
    %520 = vmatpush1.msra.mxu0 %v429
    %521 = vmatprep.subr.mxu0 0.0
    %522 = vmatpush1.msra.mxu0 %v430
    %523 = vmatprep.subr.mxu0 0.0
    %524 = vmatpush1.msra.mxu0 %v431
    %525 = vmatprep.subr.mxu0 0.0
    %526 = vmatpush1.msra.mxu0 %v432
    %527 = vmatprep.subr.mxu0 0.0
    %528 = vmatpush1.msra.mxu0 %v433
    %529 = vmatprep.subr.mxu0 0.0
    %530 = vmatpush1.msra.mxu0 %v434
    %531 = vmatprep.subr.mxu0 0.0
    %532 = vmatpush1.msra.mxu0 %v435
    %533 = vmatprep.subr.mxu0 0.0
    %534 = vmatpush1.msra.mxu0 %v436
    %535 = vmatprep.subr.mxu0 0.0
    %536 = vmatpush1.msra.mxu0 %v437
    %537 = vmatprep.subr.mxu0 0.0
    %538 = vmatpush1.msra.mxu0 %v438
    %539 = vmatprep.subr.mxu0 0.0
    %540 = vmatpush1.msra.mxu0 %v439
    %541 = vmatprep.subr.mxu0 0.0
    %542 = vmatpush1.msra.mxu0 %v440
    %543 = vmatprep.subr.mxu0 0.0
    %544 = vmatpush1.msra.mxu0 0.0
    %545 = vmatprep.subr.mxu0 0.0
    %546 = vmatpush1.msra.mxu0 0.0
    %547 = vmatprep.subr.mxu0 0.0
    %548 = vmatpush1.msra.mxu0 0.0
    %549 = vmatprep.subr.mxu0 0.0
    %550 = vmatpush1.msra.mxu0 0.0
    %551 = vmatprep.subr.mxu0 0.0
    %552 = vmatpush1.msra.mxu0 0.0
    %553 = vmatprep.subr.mxu0 0.0
    %554 = vmatpush1.msra.mxu0 0.0
    %555 = vmatprep.subr.mxu0 0.0
    %556 = vmatpush1.msra.mxu0 0.0
    %557 = vmatprep.subr.mxu0 0.0
    %558 = vmatpush1.msra.mxu0 0.0
    %559 = vmatprep.subr.mxu0 0.0
    %560 = vmatpush1.msra.mxu0 0.0
    %561 = vmatprep.subr.mxu0 0.0
    %562 = vmatpush1.msra.mxu0 0.0
    %563 = vmatprep.subr.mxu0 0.0
    %564 = vmatpush1.msra.mxu0 0.0
    %565 = vmatprep.subr.mxu0 0.0
    %566 = vmatpush1.msra.mxu0 0.0
    %567 = vmatprep.subr.mxu0 0.0
    %568 = vmatpush1.msra.mxu0 0.0
    %569 = vmatprep.subr.mxu0 0.0
    %570 = vmatpush1.msra.mxu0 0.0
    %571 = vmatprep.subr.mxu0 0.0
    %572 = vmatpush1.msra.mxu0 0.0
    %573 = vmatprep.subr.mxu0 0.0
    %574 = vmatpush1.msra.mxu0 0.0
    %575 = vmatprep.mubr.f32.mxu0 0.0
    %576 = vmatmul.mubr.f32.gmra.mrb[0].mxu0 %v424
    %v577 = vpop.f32.mrb[0].mxu0
    %v578 = vadd.f32 %v508, %v577
    %v579 = vpop.f32.mrb[0].mxu0
    %580 = vdwg.mxu0
    %v581 = vadd.f32 %v578, %v333
    %v582 = vxor.u32 %v581, 2147483648
    %v583 = vmul.f32 %v582, 1.442695
    %v584 = vpow.pop %v583
    %v585 = vadd.f32 %v584, 1.0
    %v586 = vrcp.pop %v585
    %v587 = vmul.f32 1.0, %v586
    %v588 = vtanh.pop %v581
    %589 = vrot.lane.b32.xlu0 %v587, 96
    %v590 = vpop.permute.xlu0 %589
    %591 = vrot.lane.b32.xlu0 %v588, 64
    %v592 = vpop.permute.xlu0 %591
    %593 = vrot.lane.b32.xlu0 %v587, 32
    %v594 = vpop.permute.xlu0 %593
    %v595 = vmul.f32 %v590, 0.0
    %v596 = vmul.f32 %v587, %v592
    %v597 = vadd.f32 %v595, %v596
    %v598 = vtanh.pop %v597
    %v599 = vmul.f32 %v594, %v598
    %600 = vst [vmem:[%s7] sm:$0xff] %v599
    %s601 = scalar_lea.vmem [#allocation2], 8
    %v602 = vld [vmem:[%s601] sm:$0xff]
    %603 = vmatprep.subr.mxu0 0.0
    %604 = vmatpush1.msra.mxu0 %v296
    %605 = vmatprep.subr.mxu0 0.0
    %606 = vmatpush1.msra.mxu0 %v297
    %607 = vmatprep.subr.mxu0 0.0
    %608 = vmatpush1.msra.mxu0 %v298
    %609 = vmatprep.subr.mxu0 0.0
    %610 = vmatpush1.msra.mxu0 %v299
    %611 = vmatprep.subr.mxu0 0.0
    %612 = vmatpush1.msra.mxu0 %v300
    %613 = vmatprep.subr.mxu0 0.0
    %614 = vmatpush1.msra.mxu0 %v301
    %615 = vmatprep.subr.mxu0 0.0
    %616 = vmatpush1.msra.mxu0 %v302
    %617 = vmatprep.subr.mxu0 0.0
    %618 = vmatpush1.msra.mxu0 %v303
    %619 = vmatprep.subr.mxu0 0.0
    %620 = vmatpush1.msra.mxu0 %v304
    %621 = vmatprep.subr.mxu0 0.0
    %622 = vmatpush1.msra.mxu0 %v305
    %623 = vmatprep.subr.mxu0 0.0
    %624 = vmatpush1.msra.mxu0 %v306
    %625 = vmatprep.subr.mxu0 0.0
    %626 = vmatpush1.msra.mxu0 %v307
    %627 = vmatprep.subr.mxu0 0.0
    %628 = vmatpush1.msra.mxu0 %v308
    %629 = vmatprep.subr.mxu0 0.0
    %630 = vmatpush1.msra.mxu0 %v309
    %631 = vmatprep.subr.mxu0 0.0
    %632 = vmatpush1.msra.mxu0 %v310
    %633 = vmatprep.subr.mxu0 0.0
    %634 = vmatpush1.msra.mxu0 %v311
    %635 = vmatprep.subr.mxu0 0.0
    %636 = vmatpush1.msra.mxu0 0.0
    %637 = vmatprep.subr.mxu0 0.0
    %638 = vmatpush1.msra.mxu0 0.0
    %639 = vmatprep.subr.mxu0 0.0
    %640 = vmatpush1.msra.mxu0 0.0
    %641 = vmatprep.subr.mxu0 0.0
    %642 = vmatpush1.msra.mxu0 0.0
    %643 = vmatprep.subr.mxu0 0.0
    %644 = vmatpush1.msra.mxu0 0.0
    %645 = vmatprep.subr.mxu0 0.0
    %646 = vmatpush1.msra.mxu0 0.0
    %647 = vmatprep.subr.mxu0 0.0
    %648 = vmatpush1.msra.mxu0 0.0
    %649 = vmatprep.subr.mxu0 0.0
    %650 = vmatpush1.msra.mxu0 0.0
    %651 = vmatprep.subr.mxu0 0.0
    %652 = vmatpush1.msra.mxu0 0.0
    %653 = vmatprep.subr.mxu0 0.0
    %654 = vmatpush1.msra.mxu0 0.0
    %655 = vmatprep.subr.mxu0 0.0
    %656 = vmatpush1.msra.mxu0 0.0
    %657 = vmatprep.subr.mxu0 0.0
    %658 = vmatpush1.msra.mxu0 0.0
    %659 = vmatprep.subr.mxu0 0.0
    %660 = vmatpush1.msra.mxu0 0.0
    %661 = vmatprep.subr.mxu0 0.0
    %662 = vmatpush1.msra.mxu0 0.0
    %663 = vmatprep.subr.mxu0 0.0
    %664 = vmatpush1.msra.mxu0 0.0
    %665 = vmatprep.subr.mxu0 0.0
    %666 = vmatpush1.msra.mxu0 0.0
    %667 = vmatprep.mubr.f32.mxu0 0.0
    %668 = vmatmul.mubr.f32.gmra.mrb[0].mxu0 %v424
    %v669 = vpop.f32.mrb[0].mxu0
    %v670 = vadd.f32 0.0, %v669
    %v671 = vpop.f32.mrb[0].mxu0
    %672 = vdwg.mxu0
    %v673 = vadd.f32 %v602, %v670
    %v674 = vxor.u32 %v673, 2147483648
    %v675 = vmul.f32 %v674, 1.442695
    %v676 = vpow.pop %v675
    %v677 = vadd.f32 %v676, 1.0
    %v678 = vrcp.pop %v677
    %v679 = vmul.f32 1.0, %v678
    %v680 = vtanh.pop %v673
    %681 = vrot.lane.b32.xlu0 %v679, 96
    %v682 = vpop.permute.xlu0 %681
    %683 = vrot.lane.b32.xlu0 %v680, 64
    %v684 = vpop.permute.xlu0 %683
    %685 = vrot.lane.b32.xlu0 %v679, 32
    %v686 = vpop.permute.xlu0 %685
    %v687 = vmul.f32 %v682, %v422
    %v688 = vmul.f32 %v679, %v684
    %v689 = vadd.f32 %v687, %v688
    %v690 = vtanh.pop %v689
    %v691 = vmul.f32 %v686, %v690
    %v692 = vld [vmem:[%s4] sm:$0xff]
    %v693 = vld [vmem:[%s4 + $0x8] sm:$0xff]
    %v694 = vld [vmem:[%s4 + $0x10] sm:$0xff]
    %v695 = vld [vmem:[%s4 + $0x18] sm:$0xff]
    %v696 = vld [vmem:[%s4 + $0x20] sm:$0xff]
    %v697 = vld [vmem:[%s4 + $0x28] sm:$0xff]
    %v698 = vld [vmem:[%s4 + $0x30] sm:$0xff]
    %v699 = vld [vmem:[%s4 + $0x38] sm:$0xff]
    %v700 = vld [vmem:[%s4 + $0x40] sm:$0xff]
    %v701 = vld [vmem:[%s4 + $0x48] sm:$0xff]
    %v702 = vld [vmem:[%s4 + $0x50] sm:$0xff]
    %v703 = vld [vmem:[%s4 + $0x58] sm:$0xff]
    %v704 = vld [vmem:[%s4 + $0x60] sm:$0xff]
    %v705 = vld [vmem:[%s4 + $0x68] sm:$0xff]
    %v706 = vld [vmem:[%s4 + $0x70] sm:$0xff]
    %v707 = vld [vmem:[%s4 + $0x78] sm:$0xff]
    %708 = vmatprep.subr.mxu0 0.0
    %709 = vmatpush1.msra.mxu0 %v312
    %710 = vmatprep.subr.mxu0 0.0
    %711 = vmatpush1.msra.mxu0 %v313
    %712 = vmatprep.subr.mxu0 0.0
    %713 = vmatpush1.msra.mxu0 %v314
    %714 = vmatprep.subr.mxu0 0.0
    %715 = vmatpush1.msra.mxu0 %v315
    %716 = vmatprep.subr.mxu0 0.0
    %717 = vmatpush1.msra.mxu0 %v316
    %718 = vmatprep.subr.mxu0 0.0
    %719 = vmatpush1.msra.mxu0 %v317
    %720 = vmatprep.subr.mxu0 0.0
    %721 = vmatpush1.msra.mxu0 %v318
    %722 = vmatprep.subr.mxu0 0.0
    %723 = vmatpush1.msra.mxu0 %v319
    %724 = vmatprep.subr.mxu0 0.0
    %725 = vmatpush1.msra.mxu0 %v320
    %726 = vmatprep.subr.mxu0 0.0
    %727 = vmatpush1.msra.mxu0 %v321
    %728 = vmatprep.subr.mxu0 0.0
    %729 = vmatpush1.msra.mxu0 %v322
    %730 = vmatprep.subr.mxu0 0.0
    %731 = vmatpush1.msra.mxu0 %v323
    %732 = vmatprep.subr.mxu0 0.0
    %733 = vmatpush1.msra.mxu0 %v324
    %734 = vmatprep.subr.mxu0 0.0
    %735 = vmatpush1.msra.mxu0 %v325
    %736 = vmatprep.subr.mxu0 0.0
    %737 = vmatpush1.msra.mxu0 %v326
    %738 = vmatprep.subr.mxu0 0.0
    %739 = vmatpush1.msra.mxu0 %v327
    %740 = vmatprep.subr.mxu0 0.0
    %741 = vmatpush1.msra.mxu0 0.0
    %742 = vmatprep.subr.mxu0 0.0
    %743 = vmatpush1.msra.mxu0 0.0
    %744 = vmatprep.subr.mxu0 0.0
    %745 = vmatpush1.msra.mxu0 0.0
    %746 = vmatprep.subr.mxu0 0.0
    %747 = vmatpush1.msra.mxu0 0.0
    %748 = vmatprep.subr.mxu0 0.0
    %749 = vmatpush1.msra.mxu0 0.0
    %750 = vmatprep.subr.mxu0 0.0
    %751 = vmatpush1.msra.mxu0 0.0
    %752 = vmatprep.subr.mxu0 0.0
    %753 = vmatpush1.msra.mxu0 0.0
    %754 = vmatprep.subr.mxu0 0.0
    %755 = vmatpush1.msra.mxu0 0.0
    %756 = vmatprep.subr.mxu0 0.0
    %757 = vmatpush1.msra.mxu0 0.0
    %758 = vmatprep.subr.mxu0 0.0
    %759 = vmatpush1.msra.mxu0 0.0
    %760 = vmatprep.subr.mxu0 0.0
    %761 = vmatpush1.msra.mxu0 0.0
    %762 = vmatprep.subr.mxu0 0.0
    %763 = vmatpush1.msra.mxu0 0.0
    %764 = vmatprep.subr.mxu0 0.0
    %765 = vmatpush1.msra.mxu0 0.0
    %766 = vmatprep.subr.mxu0 0.0
    %767 = vmatpush1.msra.mxu0 0.0
    %768 = vmatprep.subr.mxu0 0.0
    %769 = vmatpush1.msra.mxu0 0.0
    %770 = vmatprep.subr.mxu0 0.0
    %771 = vmatpush1.msra.mxu0 0.0
    %772 = vmatprep.mubr.f32.mxu0 0.0
    %773 = vmatmul.mubr.f32.gmra.mrb[0].mxu0 %v599
    %v774 = vpop.f32.mrb[0].mxu0
    %v775 = vadd.f32 0.0, %v774
    %v776 = vpop.f32.mrb[0].mxu0
    %777 = vdwg.mxu0
    %778 = vmatprep.subr.mxu0 0.0
    %779 = vmatpush1.msra.mxu0 %v692
    %780 = vmatprep.subr.mxu0 0.0
    %781 = vmatpush1.msra.mxu0 %v693
    %782 = vmatprep.subr.mxu0 0.0
    %783 = vmatpush1.msra.mxu0 %v694
    %784 = vmatprep.subr.mxu0 0.0
    %785 = vmatpush1.msra.mxu0 %v695
    %786 = vmatprep.subr.mxu0 0.0
    %787 = vmatpush1.msra.mxu0 %v696
    %788 = vmatprep.subr.mxu0 0.0
    %789 = vmatpush1.msra.mxu0 %v697
    %790 = vmatprep.subr.mxu0 0.0
    %791 = vmatpush1.msra.mxu0 %v698
    %792 = vmatprep.subr.mxu0 0.0
    %793 = vmatpush1.msra.mxu0 %v699
    %794 = vmatprep.subr.mxu0 0.0
    %795 = vmatpush1.msra.mxu0 %v700
    %796 = vmatprep.subr.mxu0 0.0
    %797 = vmatpush1.msra.mxu0 %v701
    %798 = vmatprep.subr.mxu0 0.0
    %799 = vmatpush1.msra.mxu0 %v702
    %800 = vmatprep.subr.mxu0 0.0
    %801 = vmatpush1.msra.mxu0 %v703
    %802 = vmatprep.subr.mxu0 0.0
    %803 = vmatpush1.msra.mxu0 %v704
    %804 = vmatprep.subr.mxu0 0.0
    %805 = vmatpush1.msra.mxu0 %v705
    %806 = vmatprep.subr.mxu0 0.0
    %807 = vmatpush1.msra.mxu0 %v706
    %808 = vmatprep.subr.mxu0 0.0
    %809 = vmatpush1.msra.mxu0 %v707
    %810 = vmatprep.subr.mxu0 0.0
    %811 = vmatpush1.msra.mxu0 0.0
    %812 = vmatprep.subr.mxu0 0.0
    %813 = vmatpush1.msra.mxu0 0.0
    %814 = vmatprep.subr.mxu0 0.0
    %815 = vmatpush1.msra.mxu0 0.0
    %816 = vmatprep.subr.mxu0 0.0
    %817 = vmatpush1.msra.mxu0 0.0
    %818 = vmatprep.subr.mxu0 0.0
    %819 = vmatpush1.msra.mxu0 0.0
    %820 = vmatprep.subr.mxu0 0.0
    %821 = vmatpush1.msra.mxu0 0.0
    %822 = vmatprep.subr.mxu0 0.0
    %823 = vmatpush1.msra.mxu0 0.0
    %824 = vmatprep.subr.mxu0 0.0
    %825 = vmatpush1.msra.mxu0 0.0
    %826 = vmatprep.subr.mxu0 0.0
    %827 = vmatpush1.msra.mxu0 0.0
    %828 = vmatprep.subr.mxu0 0.0
    %829 = vmatpush1.msra.mxu0 0.0
    %830 = vmatprep.subr.mxu0 0.0
    %831 = vmatpush1.msra.mxu0 0.0
    %832 = vmatprep.subr.mxu0 0.0
    %833 = vmatpush1.msra.mxu0 0.0
    %834 = vmatprep.subr.mxu0 0.0
    %835 = vmatpush1.msra.mxu0 0.0
    %836 = vmatprep.subr.mxu0 0.0
    %837 = vmatpush1.msra.mxu0 0.0
    %838 = vmatprep.subr.mxu0 0.0
    %839 = vmatpush1.msra.mxu0 0.0
    %840 = vmatprep.subr.mxu0 0.0
    %841 = vmatpush1.msra.mxu0 0.0
    %842 = vmatprep.mubr.f32.mxu0 0.0
    %843 = vmatmul.mubr.f32.gmra.mrb[0].mxu0 %v691
    %v844 = vpop.f32.mrb[0].mxu0
    %v845 = vadd.f32 %v775, %v844
    %v846 = vpop.f32.mrb[0].mxu0
    %847 = vdwg.mxu0
    %v848 = vadd.f32 %v845, %v333
    %v849 = vxor.u32 %v848, 2147483648
    %v850 = vmul.f32 %v849, 1.442695
    %v851 = vpow.pop %v850
    %v852 = vadd.f32 %v851, 1.0
    %v853 = vrcp.pop %v852
    %v854 = vmul.f32 1.0, %v853
    %v855 = vtanh.pop %v848
    %856 = vrot.lane.b32.xlu0 %v854, 96
    %v857 = vpop.permute.xlu0 %856
    %858 = vrot.lane.b32.xlu0 %v855, 64
    %v859 = vpop.permute.xlu0 %858
    %860 = vrot.lane.b32.xlu0 %v854, 32
    %v861 = vpop.permute.xlu0 %860
    %v862 = vmul.f32 %v857, %v597
    %v863 = vmul.f32 %v854, %v859
    %v864 = vadd.f32 %v862, %v863
    %v865 = vtanh.pop %v864
    %v866 = vmul.f32 %v861, %v865
    %s867 = scalar_lea.vmem %s7, 8
    %868 = vst [vmem:[%s867] sm:$0xff] %v866
    %s869 = scalar_lea.vmem [#allocation2], 16
    %v870 = vld [vmem:[%s869] sm:$0xff]
    %871 = vmatprep.subr.mxu0 0.0
    %872 = vmatpush1.msra.mxu0 %v296
    %873 = vmatprep.subr.mxu0 0.0
    %874 = vmatpush1.msra.mxu0 %v297
    %875 = vmatprep.subr.mxu0 0.0
    %876 = vmatpush1.msra.mxu0 %v298
    %877 = vmatprep.subr.mxu0 0.0
    %878 = vmatpush1.msra.mxu0 %v299
    %879 = vmatprep.subr.mxu0 0.0
    %880 = vmatpush1.msra.mxu0 %v300
    %881 = vmatprep.subr.mxu0 0.0
    %882 = vmatpush1.msra.mxu0 %v301
    %883 = vmatprep.subr.mxu0 0.0
    %884 = vmatpush1.msra.mxu0 %v302
    %885 = vmatprep.subr.mxu0 0.0
    %886 = vmatpush1.msra.mxu0 %v303
    %887 = vmatprep.subr.mxu0 0.0
    %888 = vmatpush1.msra.mxu0 %v304
    %889 = vmatprep.subr.mxu0 0.0
    %890 = vmatpush1.msra.mxu0 %v305
    %891 = vmatprep.subr.mxu0 0.0
    %892 = vmatpush1.msra.mxu0 %v306
    %893 = vmatprep.subr.mxu0 0.0
    %894 = vmatpush1.msra.mxu0 %v307
    %895 = vmatprep.subr.mxu0 0.0
    %896 = vmatpush1.msra.mxu0 %v308
    %897 = vmatprep.subr.mxu0 0.0
    %898 = vmatpush1.msra.mxu0 %v309
    %899 = vmatprep.subr.mxu0 0.0
    %900 = vmatpush1.msra.mxu0 %v310
    %901 = vmatprep.subr.mxu0 0.0
    %902 = vmatpush1.msra.mxu0 %v311
    %903 = vmatprep.subr.mxu0 0.0
    %904 = vmatpush1.msra.mxu0 0.0
    %905 = vmatprep.subr.mxu0 0.0
    %906 = vmatpush1.msra.mxu0 0.0
    %907 = vmatprep.subr.mxu0 0.0
    %908 = vmatpush1.msra.mxu0 0.0
    %909 = vmatprep.subr.mxu0 0.0
    %910 = vmatpush1.msra.mxu0 0.0
    %911 = vmatprep.subr.mxu0 0.0
    %912 = vmatpush1.msra.mxu0 0.0
    %913 = vmatprep.subr.mxu0 0.0
    %914 = vmatpush1.msra.mxu0 0.0
    %915 = vmatprep.subr.mxu0 0.0
    %916 = vmatpush1.msra.mxu0 0.0
    %917 = vmatprep.subr.mxu0 0.0
    %918 = vmatpush1.msra.mxu0 0.0
    %919 = vmatprep.subr.mxu0 0.0
    %920 = vmatpush1.msra.mxu0 0.0
    %921 = vmatprep.subr.mxu0 0.0
    %922 = vmatpush1.msra.mxu0 0.0
    %923 = vmatprep.subr.mxu0 0.0
    %924 = vmatpush1.msra.mxu0 0.0
    %925 = vmatprep.subr.mxu0 0.0
    %926 = vmatpush1.msra.mxu0 0.0
    %927 = vmatprep.subr.mxu0 0.0
    %928 = vmatpush1.msra.mxu0 0.0
    %929 = vmatprep.subr.mxu0 0.0
    %930 = vmatpush1.msra.mxu0 0.0
    %931 = vmatprep.subr.mxu0 0.0
    %932 = vmatpush1.msra.mxu0 0.0
    %933 = vmatprep.subr.mxu0 0.0
    %934 = vmatpush1.msra.mxu0 0.0
    %935 = vmatprep.mubr.f32.mxu0 0.0
    %936 = vmatmul.mubr.f32.gmra.mrb[0].mxu0 %v691
    %v937 = vpop.f32.mrb[0].mxu0
    %v938 = vadd.f32 0.0, %v937
    %v939 = vpop.f32.mrb[0].mxu0
    %940 = vdwg.mxu0
    %v941 = vadd.f32 %v870, %v938
    %v942 = vxor.u32 %v941, 2147483648
    %v943 = vmul.f32 %v942, 1.442695
    %v944 = vpow.pop %v943
    %v945 = vadd.f32 %v944, 1.0
    %v946 = vrcp.pop %v945
    %v947 = vmul.f32 1.0, %v946
    %v948 = vtanh.pop %v941
    %949 = vrot.lane.b32.xlu0 %v947, 96
    %v950 = vpop.permute.xlu0 %949
    %951 = vrot.lane.b32.xlu0 %v948, 64
    %v952 = vpop.permute.xlu0 %951
    %953 = vrot.lane.b32.xlu0 %v947, 32
    %v954 = vpop.permute.xlu0 %953
    %v955 = vmul.f32 %v950, %v689
    %v956 = vmul.f32 %v947, %v952
    %v957 = vadd.f32 %v955, %v956
    %v958 = vtanh.pop %v957
    %v959 = vmul.f32 %v954, %v958
    %v960 = vld [vmem:[%s4] sm:$0xff]
    %v961 = vld [vmem:[%s4 + $0x8] sm:$0xff]
    %v962 = vld [vmem:[%s4 + $0x10] sm:$0xff]
    %v963 = vld [vmem:[%s4 + $0x18] sm:$0xff]
    %v964 = vld [vmem:[%s4 + $0x20] sm:$0xff]
    %v965 = vld [vmem:[%s4 + $0x28] sm:$0xff]
    %v966 = vld [vmem:[%s4 + $0x30] sm:$0xff]
    %v967 = vld [vmem:[%s4 + $0x38] sm:$0xff]
    %v968 = vld [vmem:[%s4 + $0x40] sm:$0xff]
    %v969 = vld [vmem:[%s4 + $0x48] sm:$0xff]
    %v970 = vld [vmem:[%s4 + $0x50] sm:$0xff]
    %v971 = vld [vmem:[%s4 + $0x58] sm:$0xff]
    %v972 = vld [vmem:[%s4 + $0x60] sm:$0xff]
    %v973 = vld [vmem:[%s4 + $0x68] sm:$0xff]
    %v974 = vld [vmem:[%s4 + $0x70] sm:$0xff]
    %v975 = vld [vmem:[%s4 + $0x78] sm:$0xff]
    %976 = vmatprep.subr.mxu0 0.0
    %977 = vmatpush1.msra.mxu0 %v312
    %978 = vmatprep.subr.mxu0 0.0
    %979 = vmatpush1.msra.mxu0 %v313
    %980 = vmatprep.subr.mxu0 0.0
    %981 = vmatpush1.msra.mxu0 %v314
    %982 = vmatprep.subr.mxu0 0.0
    %983 = vmatpush1.msra.mxu0 %v315
    %984 = vmatprep.subr.mxu0 0.0
    %985 = vmatpush1.msra.mxu0 %v316
    %986 = vmatprep.subr.mxu0 0.0
    %987 = vmatpush1.msra.mxu0 %v317
    %988 = vmatprep.subr.mxu0 0.0
    %989 = vmatpush1.msra.mxu0 %v318
    %990 = vmatprep.subr.mxu0 0.0
    %991 = vmatpush1.msra.mxu0 %v319
    %992 = vmatprep.subr.mxu0 0.0
    %993 = vmatpush1.msra.mxu0 %v320
    %994 = vmatprep.subr.mxu0 0.0
    %995 = vmatpush1.msra.mxu0 %v321
    %996 = vmatprep.subr.mxu0 0.0
    %997 = vmatpush1.msra.mxu0 %v322
    %998 = vmatprep.subr.mxu0 0.0
    %999 = vmatpush1.msra.mxu0 %v323
    %1000 = vmatprep.subr.mxu0 0.0
    %1001 = vmatpush1.msra.mxu0 %v324
    %1002 = vmatprep.subr.mxu0 0.0
    %1003 = vmatpush1.msra.mxu0 %v325
    %1004 = vmatprep.subr.mxu0 0.0
    %1005 = vmatpush1.msra.mxu0 %v326
    %1006 = vmatprep.subr.mxu0 0.0
    %1007 = vmatpush1.msra.mxu0 %v327
    %1008 = vmatprep.subr.mxu0 0.0
    %1009 = vmatpush1.msra.mxu0 0.0
    %1010 = vmatprep.subr.mxu0 0.0
    %1011 = vmatpush1.msra.mxu0 0.0
    %1012 = vmatprep.subr.mxu0 0.0
    %1013 = vmatpush1.msra.mxu0 0.0
    %1014 = vmatprep.subr.mxu0 0.0
    %1015 = vmatpush1.msra.mxu0 0.0
    %1016 = vmatprep.subr.mxu0 0.0
    %1017 = vmatpush1.msra.mxu0 0.0
    %1018 = vmatprep.subr.mxu0 0.0
    %1019 = vmatpush1.msra.mxu0 0.0
    %1020 = vmatprep.subr.mxu0 0.0
    %1021 = vmatpush1.msra.mxu0 0.0
    %1022 = vmatprep.subr.mxu0 0.0
    %1023 = vmatpush1.msra.mxu0 0.0
    %1024 = vmatprep.subr.mxu0 0.0
    %1025 = vmatpush1.msra.mxu0 0.0
    %1026 = vmatprep.subr.mxu0 0.0
    %1027 = vmatpush1.msra.mxu0 0.0
    %1028 = vmatprep.subr.mxu0 0.0
    %1029 = vmatpush1.msra.mxu0 0.0
    %1030 = vmatprep.subr.mxu0 0.0
    %1031 = vmatpush1.msra.mxu0 0.0
    %1032 = vmatprep.subr.mxu0 0.0
    %1033 = vmatpush1.msra.mxu0 0.0
    %1034 = vmatprep.subr.mxu0 0.0
    %1035 = vmatpush1.msra.mxu0 0.0
    %1036 = vmatprep.subr.mxu0 0.0
    %1037 = vmatpush1.msra.mxu0 0.0
    %1038 = vmatprep.subr.mxu0 0.0
    %1039 = vmatpush1.msra.mxu0 0.0
    %1040 = vmatprep.mubr.f32.mxu0 0.0
    %1041 = vmatmul.mubr.f32.gmra.mrb[0].mxu0 %v866
    %v1042 = vpop.f32.mrb[0].mxu0
    %v1043 = vadd.f32 0.0, %v1042
    %v1044 = vpop.f32.mrb[0].mxu0
    %1045 = vdwg.mxu0
    %1046 = vmatprep.subr.mxu0 0.0
    %1047 = vmatpush1.msra.mxu0 %v960
    %1048 = vmatprep.subr.mxu0 0.0
    %1049 = vmatpush1.msra.mxu0 %v961
    %1050 = vmatprep.subr.mxu0 0.0
    %1051 = vmatpush1.msra.mxu0 %v962
    %1052 = vmatprep.subr.mxu0 0.0
    %1053 = vmatpush1.msra.mxu0 %v963
    %1054 = vmatprep.subr.mxu0 0.0
    %1055 = vmatpush1.msra.mxu0 %v964
    %1056 = vmatprep.subr.mxu0 0.0
    %1057 = vmatpush1.msra.mxu0 %v965
    %1058 = vmatprep.subr.mxu0 0.0
    %1059 = vmatpush1.msra.mxu0 %v966
    %1060 = vmatprep.subr.mxu0 0.0
    %1061 = vmatpush1.msra.mxu0 %v967
    %1062 = vmatprep.subr.mxu0 0.0
    %1063 = vmatpush1.msra.mxu0 %v968
    %1064 = vmatprep.subr.mxu0 0.0
    %1065 = vmatpush1.msra.mxu0 %v969
    %1066 = vmatprep.subr.mxu0 0.0
    %1067 = vmatpush1.msra.mxu0 %v970
    %1068 = vmatprep.subr.mxu0 0.0
    %1069 = vmatpush1.msra.mxu0 %v971
    %1070 = vmatprep.subr.mxu0 0.0
    %1071 = vmatpush1.msra.mxu0 %v972
    %1072 = vmatprep.subr.mxu0 0.0
    %1073 = vmatpush1.msra.mxu0 %v973
    %1074 = vmatprep.subr.mxu0 0.0
    %1075 = vmatpush1.msra.mxu0 %v974
    %1076 = vmatprep.subr.mxu0 0.0
    %1077 = vmatpush1.msra.mxu0 %v975
    %1078 = vmatprep.subr.mxu0 0.0
    %1079 = vmatpush1.msra.mxu0 0.0
    %1080 = vmatprep.subr.mxu0 0.0
    %1081 = vmatpush1.msra.mxu0 0.0
    %1082 = vmatprep.subr.mxu0 0.0
    %1083 = vmatpush1.msra.mxu0 0.0
    %1084 = vmatprep.subr.mxu0 0.0
    %1085 = vmatpush1.msra.mxu0 0.0
    %1086 = vmatprep.subr.mxu0 0.0
    %1087 = vmatpush1.msra.mxu0 0.0
    %1088 = vmatprep.subr.mxu0 0.0
    %1089 = vmatpush1.msra.mxu0 0.0
    %1090 = vmatprep.subr.mxu0 0.0
    %1091 = vmatpush1.msra.mxu0 0.0
    %1092 = vmatprep.subr.mxu0 0.0
    %1093 = vmatpush1.msra.mxu0 0.0
    %1094 = vmatprep.subr.mxu0 0.0
    %1095 = vmatpush1.msra.mxu0 0.0
    %1096 = vmatprep.subr.mxu0 0.0
    %1097 = vmatpush1.msra.mxu0 0.0
    %1098 = vmatprep.subr.mxu0 0.0
    %1099 = vmatpush1.msra.mxu0 0.0
    %1100 = vmatprep.subr.mxu0 0.0
    %1101 = vmatpush1.msra.mxu0 0.0
    %1102 = vmatprep.subr.mxu0 0.0
    %1103 = vmatpush1.msra.mxu0 0.0
    %1104 = vmatprep.subr.mxu0 0.0
    %1105 = vmatpush1.msra.mxu0 0.0
    %1106 = vmatprep.subr.mxu0 0.0
    %1107 = vmatpush1.msra.mxu0 0.0
    %1108 = vmatprep.subr.mxu0 0.0
    %1109 = vmatpush1.msra.mxu0 0.0
    %1110 = vmatprep.mubr.f32.mxu0 0.0
    %1111 = vmatmul.mubr.f32.gmra.mrb[0].mxu0 %v959
    %v1112 = vpop.f32.mrb[0].mxu0
    %v1113 = vadd.f32 %v1043, %v1112
    %v1114 = vpop.f32.mrb[0].mxu0
    %1115 = vdwg.mxu0
    %v1116 = vadd.f32 %v1113, %v333
    %v1117 = vxor.u32 %v1116, 2147483648
    %v1118 = vmul.f32 %v1117, 1.442695
    %v1119 = vpow.pop %v1118
    %v1120 = vadd.f32 %v1119, 1.0
    %v1121 = vrcp.pop %v1120
    %v1122 = vmul.f32 1.0, %v1121
    %v1123 = vtanh.pop %v1116
    %1124 = vrot.lane.b32.xlu0 %v1122, 96
    %v1125 = vpop.permute.xlu0 %1124
    %1126 = vrot.lane.b32.xlu0 %v1123, 64
    %v1127 = vpop.permute.xlu0 %1126
    %1128 = vrot.lane.b32.xlu0 %v1122, 32
    %v1129 = vpop.permute.xlu0 %1128
    %v1130 = vmul.f32 %v1125, %v864
    %v1131 = vmul.f32 %v1122, %v1127
    %v1132 = vadd.f32 %v1130, %v1131
    %v1133 = vtanh.pop %v1132
    %v1134 = vmul.f32 %v1129, %v1133
    %s1135 = scalar_lea.vmem %s7, 16
    %1136 = vst [vmem:[%s1135] sm:$0xff] %v1134
    %s1137 = scalar_lea.vmem [#allocation2], 24
    %v1138 = vld [vmem:[%s1137] sm:$0xff]
    %1139 = vmatprep.subr.mxu0 0.0
    %1140 = vmatpush1.msra.mxu0 %v296
    %1141 = vmatprep.subr.mxu0 0.0
    %1142 = vmatpush1.msra.mxu0 %v297
    %1143 = vmatprep.subr.mxu0 0.0
    %1144 = vmatpush1.msra.mxu0 %v298
    %1145 = vmatprep.subr.mxu0 0.0
    %1146 = vmatpush1.msra.mxu0 %v299
    %1147 = vmatprep.subr.mxu0 0.0
    %1148 = vmatpush1.msra.mxu0 %v300
    %1149 = vmatprep.subr.mxu0 0.0
    %1150 = vmatpush1.msra.mxu0 %v301
    %1151 = vmatprep.subr.mxu0 0.0
    %1152 = vmatpush1.msra.mxu0 %v302
    %1153 = vmatprep.subr.mxu0 0.0
    %1154 = vmatpush1.msra.mxu0 %v303
    %1155 = vmatprep.subr.mxu0 0.0
    %1156 = vmatpush1.msra.mxu0 %v304
    %1157 = vmatprep.subr.mxu0 0.0
    %1158 = vmatpush1.msra.mxu0 %v305
    %1159 = vmatprep.subr.mxu0 0.0
    %1160 = vmatpush1.msra.mxu0 %v306
    %1161 = vmatprep.subr.mxu0 0.0
    %1162 = vmatpush1.msra.mxu0 %v307
    %1163 = vmatprep.subr.mxu0 0.0
    %1164 = vmatpush1.msra.mxu0 %v308
    %1165 = vmatprep.subr.mxu0 0.0
    %1166 = vmatpush1.msra.mxu0 %v309
    %1167 = vmatprep.subr.mxu0 0.0
    %1168 = vmatpush1.msra.mxu0 %v310
    %1169 = vmatprep.subr.mxu0 0.0
    %1170 = vmatpush1.msra.mxu0 %v311
    %1171 = vmatprep.subr.mxu0 0.0
    %1172 = vmatpush1.msra.mxu0 0.0
    %1173 = vmatprep.subr.mxu0 0.0
    %1174 = vmatpush1.msra.mxu0 0.0
    %1175 = vmatprep.subr.mxu0 0.0
    %1176 = vmatpush1.msra.mxu0 0.0
    %1177 = vmatprep.subr.mxu0 0.0
    %1178 = vmatpush1.msra.mxu0 0.0
    %1179 = vmatprep.subr.mxu0 0.0
    %1180 = vmatpush1.msra.mxu0 0.0
    %1181 = vmatprep.subr.mxu0 0.0
    %1182 = vmatpush1.msra.mxu0 0.0
    %1183 = vmatprep.subr.mxu0 0.0
    %1184 = vmatpush1.msra.mxu0 0.0
    %1185 = vmatprep.subr.mxu0 0.0
    %1186 = vmatpush1.msra.mxu0 0.0
    %1187 = vmatprep.subr.mxu0 0.0
    %1188 = vmatpush1.msra.mxu0 0.0
    %1189 = vmatprep.subr.mxu0 0.0
    %1190 = vmatpush1.msra.mxu0 0.0
    %1191 = vmatprep.subr.mxu0 0.0
    %1192 = vmatpush1.msra.mxu0 0.0
    %1193 = vmatprep.subr.mxu0 0.0
    %1194 = vmatpush1.msra.mxu0 0.0
    %1195 = vmatprep.subr.mxu0 0.0
    %1196 = vmatpush1.msra.mxu0 0.0
    %1197 = vmatprep.subr.mxu0 0.0
    %1198 = vmatpush1.msra.mxu0 0.0
    %1199 = vmatprep.subr.mxu0 0.0
    %1200 = vmatpush1.msra.mxu0 0.0
    %1201 = vmatprep.subr.mxu0 0.0
    %1202 = vmatpush1.msra.mxu0 0.0
    %1203 = vmatprep.mubr.f32.mxu0 0.0
    %1204 = vmatmul.mubr.f32.gmra.mrb[0].mxu0 %v959
    %v1205 = vpop.f32.mrb[0].mxu0
    %v1206 = vadd.f32 0.0, %v1205
    %v1207 = vpop.f32.mrb[0].mxu0
    %1208 = vdwg.mxu0
    %v1209 = vadd.f32 %v1138, %v1206
    %v1210 = vxor.u32 %v1209, 2147483648
    %v1211 = vmul.f32 %v1210, 1.442695
    %v1212 = vpow.pop %v1211
    %v1213 = vadd.f32 %v1212, 1.0
    %v1214 = vrcp.pop %v1213
    %v1215 = vmul.f32 1.0, %v1214
    %v1216 = vtanh.pop %v1209
    %1217 = vrot.lane.b32.xlu0 %v1215, 96
    %v1218 = vpop.permute.xlu0 %1217
    %1219 = vrot.lane.b32.xlu0 %v1216, 64
    %v1220 = vpop.permute.xlu0 %1219
    %1221 = vrot.lane.b32.xlu0 %v1215, 32
    %v1222 = vpop.permute.xlu0 %1221
    %v1223 = vmul.f32 %v1218, %v957
    %v1224 = vmul.f32 %v1215, %v1220
    %v1225 = vadd.f32 %v1223, %v1224
    %v1226 = vtanh.pop %v1225
    %v1227 = vmul.f32 %v1222, %v1226
    %v1228 = vld [vmem:[%s4] sm:$0xff]
    %v1229 = vld [vmem:[%s4 + $0x8] sm:$0xff]
    %v1230 = vld [vmem:[%s4 + $0x10] sm:$0xff]
    %v1231 = vld [vmem:[%s4 + $0x18] sm:$0xff]
    %v1232 = vld [vmem:[%s4 + $0x20] sm:$0xff]
    %v1233 = vld [vmem:[%s4 + $0x28] sm:$0xff]
    %v1234 = vld [vmem:[%s4 + $0x30] sm:$0xff]
    %v1235 = vld [vmem:[%s4 + $0x38] sm:$0xff]
    %v1236 = vld [vmem:[%s4 + $0x40] sm:$0xff]
    %v1237 = vld [vmem:[%s4 + $0x48] sm:$0xff]
    %v1238 = vld [vmem:[%s4 + $0x50] sm:$0xff]
    %v1239 = vld [vmem:[%s4 + $0x58] sm:$0xff]
    %v1240 = vld [vmem:[%s4 + $0x60] sm:$0xff]
    %v1241 = vld [vmem:[%s4 + $0x68] sm:$0xff]
    %v1242 = vld [vmem:[%s4 + $0x70] sm:$0xff]
    %v1243 = vld [vmem:[%s4 + $0x78] sm:$0xff]
    %1244 = vmatprep.subr.mxu0 0.0
    %1245 = vmatpush1.msra.mxu0 %v312
    %1246 = vmatprep.subr.mxu0 0.0
    %1247 = vmatpush1.msra.mxu0 %v313
    %1248 = vmatprep.subr.mxu0 0.0
    %1249 = vmatpush1.msra.mxu0 %v314
    %1250 = vmatprep.subr.mxu0 0.0
    %1251 = vmatpush1.msra.mxu0 %v315
    %1252 = vmatprep.subr.mxu0 0.0
    %1253 = vmatpush1.msra.mxu0 %v316
    %1254 = vmatprep.subr.mxu0 0.0
    %1255 = vmatpush1.msra.mxu0 %v317
    %1256 = vmatprep.subr.mxu0 0.0
    %1257 = vmatpush1.msra.mxu0 %v318
    %1258 = vmatprep.subr.mxu0 0.0
    %1259 = vmatpush1.msra.mxu0 %v319
    %1260 = vmatprep.subr.mxu0 0.0
    %1261 = vmatpush1.msra.mxu0 %v320
    %1262 = vmatprep.subr.mxu0 0.0
    %1263 = vmatpush1.msra.mxu0 %v321
    %1264 = vmatprep.subr.mxu0 0.0
    %1265 = vmatpush1.msra.mxu0 %v322
    %1266 = vmatprep.subr.mxu0 0.0
    %1267 = vmatpush1.msra.mxu0 %v323
    %1268 = vmatprep.subr.mxu0 0.0
    %1269 = vmatpush1.msra.mxu0 %v324
    %1270 = vmatprep.subr.mxu0 0.0
    %1271 = vmatpush1.msra.mxu0 %v325
    %1272 = vmatprep.subr.mxu0 0.0
    %1273 = vmatpush1.msra.mxu0 %v326
    %1274 = vmatprep.subr.mxu0 0.0
    %1275 = vmatpush1.msra.mxu0 %v327
    %1276 = vmatprep.subr.mxu0 0.0
    %1277 = vmatpush1.msra.mxu0 0.0
    %1278 = vmatprep.subr.mxu0 0.0
    %1279 = vmatpush1.msra.mxu0 0.0
    %1280 = vmatprep.subr.mxu0 0.0
    %1281 = vmatpush1.msra.mxu0 0.0
    %1282 = vmatprep.subr.mxu0 0.0
    %1283 = vmatpush1.msra.mxu0 0.0
    %1284 = vmatprep.subr.mxu0 0.0
    %1285 = vmatpush1.msra.mxu0 0.0
    %1286 = vmatprep.subr.mxu0 0.0
    %1287 = vmatpush1.msra.mxu0 0.0
    %1288 = vmatprep.subr.mxu0 0.0
    %1289 = vmatpush1.msra.mxu0 0.0
    %1290 = vmatprep.subr.mxu0 0.0
    %1291 = vmatpush1.msra.mxu0 0.0
    %1292 = vmatprep.subr.mxu0 0.0
    %1293 = vmatpush1.msra.mxu0 0.0
    %1294 = vmatprep.subr.mxu0 0.0
    %1295 = vmatpush1.msra.mxu0 0.0
    %1296 = vmatprep.subr.mxu0 0.0
    %1297 = vmatpush1.msra.mxu0 0.0
    %1298 = vmatprep.subr.mxu0 0.0
    %1299 = vmatpush1.msra.mxu0 0.0
    %1300 = vmatprep.subr.mxu0 0.0
    %1301 = vmatpush1.msra.mxu0 0.0
    %1302 = vmatprep.subr.mxu0 0.0
    %1303 = vmatpush1.msra.mxu0 0.0
    %1304 = vmatprep.subr.mxu0 0.0
    %1305 = vmatpush1.msra.mxu0 0.0
    %1306 = vmatprep.subr.mxu0 0.0
    %1307 = vmatpush1.msra.mxu0 0.0
    %1308 = vmatprep.mubr.f32.mxu0 0.0
    %1309 = vmatmul.mubr.f32.gmra.mrb[0].mxu0 %v1134
    %v1310 = vpop.f32.mrb[0].mxu0
    %v1311 = vadd.f32 0.0, %v1310
    %v1312 = vpop.f32.mrb[0].mxu0
    %1313 = vdwg.mxu0
    %1314 = vmatprep.subr.mxu0 0.0
    %1315 = vmatpush1.msra.mxu0 %v1228
    %1316 = vmatprep.subr.mxu0 0.0
    %1317 = vmatpush1.msra.mxu0 %v1229
    %1318 = vmatprep.subr.mxu0 0.0
    %1319 = vmatpush1.msra.mxu0 %v1230
    %1320 = vmatprep.subr.mxu0 0.0
    %1321 = vmatpush1.msra.mxu0 %v1231
    %1322 = vmatprep.subr.mxu0 0.0
    %1323 = vmatpush1.msra.mxu0 %v1232
    %1324 = vmatprep.subr.mxu0 0.0
    %1325 = vmatpush1.msra.mxu0 %v1233
    %1326 = vmatprep.subr.mxu0 0.0
    %1327 = vmatpush1.msra.mxu0 %v1234
    %1328 = vmatprep.subr.mxu0 0.0
    %1329 = vmatpush1.msra.mxu0 %v1235
    %1330 = vmatprep.subr.mxu0 0.0
    %1331 = vmatpush1.msra.mxu0 %v1236
    %1332 = vmatprep.subr.mxu0 0.0
    %1333 = vmatpush1.msra.mxu0 %v1237
    %1334 = vmatprep.subr.mxu0 0.0
    %1335 = vmatpush1.msra.mxu0 %v1238
    %1336 = vmatprep.subr.mxu0 0.0
    %1337 = vmatpush1.msra.mxu0 %v1239
    %1338 = vmatprep.subr.mxu0 0.0
    %1339 = vmatpush1.msra.mxu0 %v1240
    %1340 = vmatprep.subr.mxu0 0.0
    %1341 = vmatpush1.msra.mxu0 %v1241
    %1342 = vmatprep.subr.mxu0 0.0
    %1343 = vmatpush1.msra.mxu0 %v1242
    %1344 = vmatprep.subr.mxu0 0.0
    %1345 = vmatpush1.msra.mxu0 %v1243
    %1346 = vmatprep.subr.mxu0 0.0
    %1347 = vmatpush1.msra.mxu0 0.0
    %1348 = vmatprep.subr.mxu0 0.0
    %1349 = vmatpush1.msra.mxu0 0.0
    %1350 = vmatprep.subr.mxu0 0.0
    %1351 = vmatpush1.msra.mxu0 0.0
    %1352 = vmatprep.subr.mxu0 0.0
    %1353 = vmatpush1.msra.mxu0 0.0
    %1354 = vmatprep.subr.mxu0 0.0
    %1355 = vmatpush1.msra.mxu0 0.0
    %1356 = vmatprep.subr.mxu0 0.0
    %1357 = vmatpush1.msra.mxu0 0.0
    %1358 = vmatprep.subr.mxu0 0.0
    %1359 = vmatpush1.msra.mxu0 0.0
    %1360 = vmatprep.subr.mxu0 0.0
    %1361 = vmatpush1.msra.mxu0 0.0
    %1362 = vmatprep.subr.mxu0 0.0
    %1363 = vmatpush1.msra.mxu0 0.0
    %1364 = vmatprep.subr.mxu0 0.0
    %1365 = vmatpush1.msra.mxu0 0.0
    %1366 = vmatprep.subr.mxu0 0.0
    %1367 = vmatpush1.msra.mxu0 0.0
    %1368 = vmatprep.subr.mxu0 0.0
    %1369 = vmatpush1.msra.mxu0 0.0
    %1370 = vmatprep.subr.mxu0 0.0
    %1371 = vmatpush1.msra.mxu0 0.0
    %1372 = vmatprep.subr.mxu0 0.0
    %1373 = vmatpush1.msra.mxu0 0.0
    %1374 = vmatprep.subr.mxu0 0.0
    %1375 = vmatpush1.msra.mxu0 0.0
    %1376 = vmatprep.subr.mxu0 0.0
    %1377 = vmatpush1.msra.mxu0 0.0
    %1378 = vmatprep.mubr.f32.mxu0 0.0
    %1379 = vmatmul.mubr.f32.gmra.mrb[0].mxu0 %v1227
    %v1380 = vpop.f32.mrb[0].mxu0
    %v1381 = vadd.f32 %v1311, %v1380
    %v1382 = vpop.f32.mrb[0].mxu0
    %1383 = vdwg.mxu0
    %v1384 = vadd.f32 %v1381, %v333
    %v1385 = vxor.u32 %v1384, 2147483648
    %v1386 = vmul.f32 %v1385, 1.442695
    %v1387 = vpow.pop %v1386
    %v1388 = vadd.f32 %v1387, 1.0
    %v1389 = vrcp.pop %v1388
    %v1390 = vmul.f32 1.0, %v1389
    %v1391 = vtanh.pop %v1384
    %1392 = vrot.lane.b32.xlu0 %v1390, 96
    %v1393 = vpop.permute.xlu0 %1392
    %1394 = vrot.lane.b32.xlu0 %v1391, 64
    %v1395 = vpop.permute.xlu0 %1394
    %1396 = vrot.lane.b32.xlu0 %v1390, 32
    %v1397 = vpop.permute.xlu0 %1396
    %v1398 = vmul.f32 %v1393, %v1132
    %v1399 = vmul.f32 %v1390, %v1395
    %v1400 = vadd.f32 %v1398, %v1399
    %v1401 = vtanh.pop %v1400
    %v1402 = vmul.f32 %v1397, %v1401
    %s1403 = scalar_lea.vmem %s7, 24
    %1404 = vst [vmem:[%s1403] sm:$0xff] %v1402
    %s1405 = scalar_lea.vmem [#allocation2], 32
    %v1406 = vld [vmem:[%s1405] sm:$0xff]
    %1407 = vmatprep.subr.mxu0 0.0
    %1408 = vmatpush1.msra.mxu0 %v296
    %1409 = vmatprep.subr.mxu0 0.0
    %1410 = vmatpush1.msra.mxu0 %v297
    %1411 = vmatprep.subr.mxu0 0.0
    %1412 = vmatpush1.msra.mxu0 %v298
    %1413 = vmatprep.subr.mxu0 0.0
    %1414 = vmatpush1.msra.mxu0 %v299
    %1415 = vmatprep.subr.mxu0 0.0
    %1416 = vmatpush1.msra.mxu0 %v300
    %1417 = vmatprep.subr.mxu0 0.0
    %1418 = vmatpush1.msra.mxu0 %v301
    %1419 = vmatprep.subr.mxu0 0.0
    %1420 = vmatpush1.msra.mxu0 %v302
    %1421 = vmatprep.subr.mxu0 0.0
    %1422 = vmatpush1.msra.mxu0 %v303
    %1423 = vmatprep.subr.mxu0 0.0
    %1424 = vmatpush1.msra.mxu0 %v304
    %1425 = vmatprep.subr.mxu0 0.0
    %1426 = vmatpush1.msra.mxu0 %v305
    %1427 = vmatprep.subr.mxu0 0.0
    %1428 = vmatpush1.msra.mxu0 %v306
    %1429 = vmatprep.subr.mxu0 0.0
    %1430 = vmatpush1.msra.mxu0 %v307
    %1431 = vmatprep.subr.mxu0 0.0
    %1432 = vmatpush1.msra.mxu0 %v308
    %1433 = vmatprep.subr.mxu0 0.0
    %1434 = vmatpush1.msra.mxu0 %v309
    %1435 = vmatprep.subr.mxu0 0.0
    %1436 = vmatpush1.msra.mxu0 %v310
    %1437 = vmatprep.subr.mxu0 0.0
    %1438 = vmatpush1.msra.mxu0 %v311
    %1439 = vmatprep.subr.mxu0 0.0
    %1440 = vmatpush1.msra.mxu0 0.0
    %1441 = vmatprep.subr.mxu0 0.0
    %1442 = vmatpush1.msra.mxu0 0.0
    %1443 = vmatprep.subr.mxu0 0.0
    %1444 = vmatpush1.msra.mxu0 0.0
    %1445 = vmatprep.subr.mxu0 0.0
    %1446 = vmatpush1.msra.mxu0 0.0
    %1447 = vmatprep.subr.mxu0 0.0
    %1448 = vmatpush1.msra.mxu0 0.0
    %1449 = vmatprep.subr.mxu0 0.0
    %1450 = vmatpush1.msra.mxu0 0.0
    %1451 = vmatprep.subr.mxu0 0.0
    %1452 = vmatpush1.msra.mxu0 0.0
    %1453 = vmatprep.subr.mxu0 0.0
    %1454 = vmatpush1.msra.mxu0 0.0
    %1455 = vmatprep.subr.mxu0 0.0
    %1456 = vmatpush1.msra.mxu0 0.0
    %1457 = vmatprep.subr.mxu0 0.0
    %1458 = vmatpush1.msra.mxu0 0.0
    %1459 = vmatprep.subr.mxu0 0.0
    %1460 = vmatpush1.msra.mxu0 0.0
    %1461 = vmatprep.subr.mxu0 0.0
    %1462 = vmatpush1.msra.mxu0 0.0
    %1463 = vmatprep.subr.mxu0 0.0
    %1464 = vmatpush1.msra.mxu0 0.0
    %1465 = vmatprep.subr.mxu0 0.0
    %1466 = vmatpush1.msra.mxu0 0.0
    %1467 = vmatprep.subr.mxu0 0.0
    %1468 = vmatpush1.msra.mxu0 0.0
    %1469 = vmatprep.subr.mxu0 0.0
    %1470 = vmatpush1.msra.mxu0 0.0
    %1471 = vmatprep.mubr.f32.mxu0 0.0
    %1472 = vmatmul.mubr.f32.gmra.mrb[0].mxu0 %v1227
    %v1473 = vpop.f32.mrb[0].mxu0
    %v1474 = vadd.f32 0.0, %v1473
    %v1475 = vpop.f32.mrb[0].mxu0
    %1476 = vdwg.mxu0
    %v1477 = vadd.f32 %v1406, %v1474
    %v1478 = vxor.u32 %v1477, 2147483648
    %v1479 = vmul.f32 %v1478, 1.442695
    %v1480 = vpow.pop %v1479
    %v1481 = vadd.f32 %v1480, 1.0
    %v1482 = vrcp.pop %v1481
    %v1483 = vmul.f32 1.0, %v1482
    %v1484 = vtanh.pop %v1477
    %1485 = vrot.lane.b32.xlu0 %v1483, 96
    %v1486 = vpop.permute.xlu0 %1485
    %1487 = vrot.lane.b32.xlu0 %v1484, 64
    %v1488 = vpop.permute.xlu0 %1487
    %1489 = vrot.lane.b32.xlu0 %v1483, 32
    %v1490 = vpop.permute.xlu0 %1489
    %v1491 = vmul.f32 %v1486, %v1225
    %v1492 = vmul.f32 %v1483, %v1488
    %v1493 = vadd.f32 %v1491, %v1492
    %v1494 = vtanh.pop %v1493
    %v1495 = vmul.f32 %v1490, %v1494
    %v1496 = vld [vmem:[%s4] sm:$0xff]
    %v1497 = vld [vmem:[%s4 + $0x8] sm:$0xff]
    %v1498 = vld [vmem:[%s4 + $0x10] sm:$0xff]
    %v1499 = vld [vmem:[%s4 + $0x18] sm:$0xff]
    %v1500 = vld [vmem:[%s4 + $0x20] sm:$0xff]
    %v1501 = vld [vmem:[%s4 + $0x28] sm:$0xff]
    %v1502 = vld [vmem:[%s4 + $0x30] sm:$0xff]
    %v1503 = vld [vmem:[%s4 + $0x38] sm:$0xff]
    %v1504 = vld [vmem:[%s4 + $0x40] sm:$0xff]
    %v1505 = vld [vmem:[%s4 + $0x48] sm:$0xff]
    %v1506 = vld [vmem:[%s4 + $0x50] sm:$0xff]
    %v1507 = vld [vmem:[%s4 + $0x58] sm:$0xff]
    %v1508 = vld [vmem:[%s4 + $0x60] sm:$0xff]
    %v1509 = vld [vmem:[%s4 + $0x68] sm:$0xff]
    %v1510 = vld [vmem:[%s4 + $0x70] sm:$0xff]
    %v1511 = vld [vmem:[%s4 + $0x78] sm:$0xff]
    %1512 = vmatprep.subr.mxu0 0.0
    %1513 = vmatpush1.msra.mxu0 %v312
    %1514 = vmatprep.subr.mxu0 0.0
    %1515 = vmatpush1.msra.mxu0 %v313
    %1516 = vmatprep.subr.mxu0 0.0
    %1517 = vmatpush1.msra.mxu0 %v314
    %1518 = vmatprep.subr.mxu0 0.0
    %1519 = vmatpush1.msra.mxu0 %v315
    %1520 = vmatprep.subr.mxu0 0.0
    %1521 = vmatpush1.msra.mxu0 %v316
    %1522 = vmatprep.subr.mxu0 0.0
    %1523 = vmatpush1.msra.mxu0 %v317
    %1524 = vmatprep.subr.mxu0 0.0
    %1525 = vmatpush1.msra.mxu0 %v318
    %1526 = vmatprep.subr.mxu0 0.0
    %1527 = vmatpush1.msra.mxu0 %v319
    %1528 = vmatprep.subr.mxu0 0.0
    %1529 = vmatpush1.msra.mxu0 %v320
    %1530 = vmatprep.subr.mxu0 0.0
    %1531 = vmatpush1.msra.mxu0 %v321
    %1532 = vmatprep.subr.mxu0 0.0
    %1533 = vmatpush1.msra.mxu0 %v322
    %1534 = vmatprep.subr.mxu0 0.0
    %1535 = vmatpush1.msra.mxu0 %v323
    %1536 = vmatprep.subr.mxu0 0.0
    %1537 = vmatpush1.msra.mxu0 %v324
    %1538 = vmatprep.subr.mxu0 0.0
    %1539 = vmatpush1.msra.mxu0 %v325
    %1540 = vmatprep.subr.mxu0 0.0
    %1541 = vmatpush1.msra.mxu0 %v326
    %1542 = vmatprep.subr.mxu0 0.0
    %1543 = vmatpush1.msra.mxu0 %v327
    %1544 = vmatprep.subr.mxu0 0.0
    %1545 = vmatpush1.msra.mxu0 0.0
    %1546 = vmatprep.subr.mxu0 0.0
    %1547 = vmatpush1.msra.mxu0 0.0
    %1548 = vmatprep.subr.mxu0 0.0
    %1549 = vmatpush1.msra.mxu0 0.0
    %1550 = vmatprep.subr.mxu0 0.0
    %1551 = vmatpush1.msra.mxu0 0.0
    %1552 = vmatprep.subr.mxu0 0.0
    %1553 = vmatpush1.msra.mxu0 0.0
    %1554 = vmatprep.subr.mxu0 0.0
    %1555 = vmatpush1.msra.mxu0 0.0
    %1556 = vmatprep.subr.mxu0 0.0
    %1557 = vmatpush1.msra.mxu0 0.0
    %1558 = vmatprep.subr.mxu0 0.0
    %1559 = vmatpush1.msra.mxu0 0.0
    %1560 = vmatprep.subr.mxu0 0.0
    %1561 = vmatpush1.msra.mxu0 0.0
    %1562 = vmatprep.subr.mxu0 0.0
    %1563 = vmatpush1.msra.mxu0 0.0
    %1564 = vmatprep.subr.mxu0 0.0
    %1565 = vmatpush1.msra.mxu0 0.0
    %1566 = vmatprep.subr.mxu0 0.0
    %1567 = vmatpush1.msra.mxu0 0.0
    %1568 = vmatprep.subr.mxu0 0.0
    %1569 = vmatpush1.msra.mxu0 0.0
    %1570 = vmatprep.subr.mxu0 0.0
    %1571 = vmatpush1.msra.mxu0 0.0
    %1572 = vmatprep.subr.mxu0 0.0
    %1573 = vmatpush1.msra.mxu0 0.0
    %1574 = vmatprep.subr.mxu0 0.0
    %1575 = vmatpush1.msra.mxu0 0.0
    %1576 = vmatprep.mubr.f32.mxu0 0.0
    %1577 = vmatmul.mubr.f32.gmra.mrb[0].mxu0 %v1402
    %v1578 = vpop.f32.mrb[0].mxu0
    %v1579 = vadd.f32 0.0, %v1578
    %v1580 = vpop.f32.mrb[0].mxu0
    %1581 = vdwg.mxu0
    %1582 = vmatprep.subr.mxu0 0.0
    %1583 = vmatpush1.msra.mxu0 %v1496
    %1584 = vmatprep.subr.mxu0 0.0
    %1585 = vmatpush1.msra.mxu0 %v1497
    %1586 = vmatprep.subr.mxu0 0.0
    %1587 = vmatpush1.msra.mxu0 %v1498
    %1588 = vmatprep.subr.mxu0 0.0
    %1589 = vmatpush1.msra.mxu0 %v1499
    %1590 = vmatprep.subr.mxu0 0.0
    %1591 = vmatpush1.msra.mxu0 %v1500
    %1592 = vmatprep.subr.mxu0 0.0
    %1593 = vmatpush1.msra.mxu0 %v1501
    %1594 = vmatprep.subr.mxu0 0.0
    %1595 = vmatpush1.msra.mxu0 %v1502
    %1596 = vmatprep.subr.mxu0 0.0
    %1597 = vmatpush1.msra.mxu0 %v1503
    %1598 = vmatprep.subr.mxu0 0.0
    %1599 = vmatpush1.msra.mxu0 %v1504
    %1600 = vmatprep.subr.mxu0 0.0
    %1601 = vmatpush1.msra.mxu0 %v1505
    %1602 = vmatprep.subr.mxu0 0.0
    %1603 = vmatpush1.msra.mxu0 %v1506
    %1604 = vmatprep.subr.mxu0 0.0
    %1605 = vmatpush1.msra.mxu0 %v1507
    %1606 = vmatprep.subr.mxu0 0.0
    %1607 = vmatpush1.msra.mxu0 %v1508
    %1608 = vmatprep.subr.mxu0 0.0
    %1609 = vmatpush1.msra.mxu0 %v1509
    %1610 = vmatprep.subr.mxu0 0.0
    %1611 = vmatpush1.msra.mxu0 %v1510
    %1612 = vmatprep.subr.mxu0 0.0
    %1613 = vmatpush1.msra.mxu0 %v1511
    %1614 = vmatprep.subr.mxu0 0.0
    %1615 = vmatpush1.msra.mxu0 0.0
    %1616 = vmatprep.subr.mxu0 0.0
    %1617 = vmatpush1.msra.mxu0 0.0
    %1618 = vmatprep.subr.mxu0 0.0
    %1619 = vmatpush1.msra.mxu0 0.0
    %1620 = vmatprep.subr.mxu0 0.0
    %1621 = vmatpush1.msra.mxu0 0.0
    %1622 = vmatprep.subr.mxu0 0.0
    %1623 = vmatpush1.msra.mxu0 0.0
    %1624 = vmatprep.subr.mxu0 0.0
    %1625 = vmatpush1.msra.mxu0 0.0
    %1626 = vmatprep.subr.mxu0 0.0
    %1627 = vmatpush1.msra.mxu0 0.0
    %1628 = vmatprep.subr.mxu0 0.0
    %1629 = vmatpush1.msra.mxu0 0.0
    %1630 = vmatprep.subr.mxu0 0.0
    %1631 = vmatpush1.msra.mxu0 0.0
    %1632 = vmatprep.subr.mxu0 0.0
    %1633 = vmatpush1.msra.mxu0 0.0
    %1634 = vmatprep.subr.mxu0 0.0
    %1635 = vmatpush1.msra.mxu0 0.0
    %1636 = vmatprep.subr.mxu0 0.0
    %1637 = vmatpush1.msra.mxu0 0.0
    %1638 = vmatprep.subr.mxu0 0.0
    %1639 = vmatpush1.msra.mxu0 0.0
    %1640 = vmatprep.subr.mxu0 0.0
    %1641 = vmatpush1.msra.mxu0 0.0
    %1642 = vmatprep.subr.mxu0 0.0
    %1643 = vmatpush1.msra.mxu0 0.0
    %1644 = vmatprep.subr.mxu0 0.0
    %1645 = vmatpush1.msra.mxu0 0.0
    %1646 = vmatprep.mubr.f32.mxu0 0.0
    %1647 = vmatmul.mubr.f32.gmra.mrb[0].mxu0 %v1495
    %v1648 = vpop.f32.mrb[0].mxu0
    %v1649 = vadd.f32 %v1579, %v1648
    %v1650 = vpop.f32.mrb[0].mxu0
    %1651 = vdwg.mxu0
    %v1652 = vadd.f32 %v1649, %v333
    %v1653 = vxor.u32 %v1652, 2147483648
    %v1654 = vmul.f32 %v1653, 1.442695
    %v1655 = vpow.pop %v1654
    %v1656 = vadd.f32 %v1655, 1.0
    %v1657 = vrcp.pop %v1656
    %v1658 = vmul.f32 1.0, %v1657
    %v1659 = vtanh.pop %v1652
    %1660 = vrot.lane.b32.xlu0 %v1658, 96
    %v1661 = vpop.permute.xlu0 %1660
    %1662 = vrot.lane.b32.xlu0 %v1659, 64
    %v1663 = vpop.permute.xlu0 %1662
    %1664 = vrot.lane.b32.xlu0 %v1658, 32
    %v1665 = vpop.permute.xlu0 %1664
    %v1666 = vmul.f32 %v1661, %v1400
    %v1667 = vmul.f32 %v1658, %v1663
    %v1668 = vadd.f32 %v1666, %v1667
    %v1669 = vtanh.pop %v1668
    %v1670 = vmul.f32 %v1665, %v1669
    %s1671 = scalar_lea.vmem %s7, 32
    %1672 = vst [vmem:[%s1671] sm:$0xff] %v1670
    %s1673 = scalar_lea.vmem [#allocation2], 40
    %v1674 = vld [vmem:[%s1673] sm:$0xff]
    %1675 = vmatprep.subr.mxu0 0.0
    %1676 = vmatpush1.msra.mxu0 %v296
    %1677 = vmatprep.subr.mxu0 0.0
    %1678 = vmatpush1.msra.mxu0 %v297
    %1679 = vmatprep.subr.mxu0 0.0
    %1680 = vmatpush1.msra.mxu0 %v298
    %1681 = vmatprep.subr.mxu0 0.0
    %1682 = vmatpush1.msra.mxu0 %v299
    %1683 = vmatprep.subr.mxu0 0.0
    %1684 = vmatpush1.msra.mxu0 %v300
    %1685 = vmatprep.subr.mxu0 0.0
    %1686 = vmatpush1.msra.mxu0 %v301
    %1687 = vmatprep.subr.mxu0 0.0
    %1688 = vmatpush1.msra.mxu0 %v302
    %1689 = vmatprep.subr.mxu0 0.0
    %1690 = vmatpush1.msra.mxu0 %v303
    %1691 = vmatprep.subr.mxu0 0.0
    %1692 = vmatpush1.msra.mxu0 %v304
    %1693 = vmatprep.subr.mxu0 0.0
    %1694 = vmatpush1.msra.mxu0 %v305
    %1695 = vmatprep.subr.mxu0 0.0
    %1696 = vmatpush1.msra.mxu0 %v306
    %1697 = vmatprep.subr.mxu0 0.0
    %1698 = vmatpush1.msra.mxu0 %v307
    %1699 = vmatprep.subr.mxu0 0.0
    %1700 = vmatpush1.msra.mxu0 %v308
    %1701 = vmatprep.subr.mxu0 0.0
    %1702 = vmatpush1.msra.mxu0 %v309
    %1703 = vmatprep.subr.mxu0 0.0
    %1704 = vmatpush1.msra.mxu0 %v310
    %1705 = vmatprep.subr.mxu0 0.0
    %1706 = vmatpush1.msra.mxu0 %v311
    %1707 = vmatprep.subr.mxu0 0.0
    %1708 = vmatpush1.msra.mxu0 0.0
    %1709 = vmatprep.subr.mxu0 0.0
    %1710 = vmatpush1.msra.mxu0 0.0
    %1711 = vmatprep.subr.mxu0 0.0
    %1712 = vmatpush1.msra.mxu0 0.0
    %1713 = vmatprep.subr.mxu0 0.0
    %1714 = vmatpush1.msra.mxu0 0.0
    %1715 = vmatprep.subr.mxu0 0.0
    %1716 = vmatpush1.msra.mxu0 0.0
    %1717 = vmatprep.subr.mxu0 0.0
    %1718 = vmatpush1.msra.mxu0 0.0
    %1719 = vmatprep.subr.mxu0 0.0
    %1720 = vmatpush1.msra.mxu0 0.0
    %1721 = vmatprep.subr.mxu0 0.0
    %1722 = vmatpush1.msra.mxu0 0.0
    %1723 = vmatprep.subr.mxu0 0.0
    %1724 = vmatpush1.msra.mxu0 0.0
    %1725 = vmatprep.subr.mxu0 0.0
    %1726 = vmatpush1.msra.mxu0 0.0
    %1727 = vmatprep.subr.mxu0 0.0
    %1728 = vmatpush1.msra.mxu0 0.0
    %1729 = vmatprep.subr.mxu0 0.0
    %1730 = vmatpush1.msra.mxu0 0.0
    %1731 = vmatprep.subr.mxu0 0.0
    %1732 = vmatpush1.msra.mxu0 0.0
    %1733 = vmatprep.subr.mxu0 0.0
    %1734 = vmatpush1.msra.mxu0 0.0
    %1735 = vmatprep.subr.mxu0 0.0
    %1736 = vmatpush1.msra.mxu0 0.0
    %1737 = vmatprep.subr.mxu0 0.0
    %1738 = vmatpush1.msra.mxu0 0.0
    %1739 = vmatprep.mubr.f32.mxu0 0.0
    %1740 = vmatmul.mubr.f32.gmra.mrb[0].mxu0 %v1495
    %v1741 = vpop.f32.mrb[0].mxu0
    %v1742 = vadd.f32 0.0, %v1741
    %v1743 = vpop.f32.mrb[0].mxu0
    %1744 = vdwg.mxu0
    %v1745 = vadd.f32 %v1674, %v1742
    %v1746 = vxor.u32 %v1745, 2147483648
    %v1747 = vmul.f32 %v1746, 1.442695
    %v1748 = vpow.pop %v1747
    %v1749 = vadd.f32 %v1748, 1.0
    %v1750 = vrcp.pop %v1749
    %v1751 = vmul.f32 1.0, %v1750
    %v1752 = vtanh.pop %v1745
    %1753 = vrot.lane.b32.xlu0 %v1751, 96
    %v1754 = vpop.permute.xlu0 %1753
    %1755 = vrot.lane.b32.xlu0 %v1752, 64
    %v1756 = vpop.permute.xlu0 %1755
    %1757 = vrot.lane.b32.xlu0 %v1751, 32
    %v1758 = vpop.permute.xlu0 %1757
    %v1759 = vmul.f32 %v1754, %v1493
    %v1760 = vmul.f32 %v1751, %v1756
    %v1761 = vadd.f32 %v1759, %v1760
    %v1762 = vtanh.pop %v1761
    %v1763 = vmul.f32 %v1758, %v1762
    %v1764 = vld [vmem:[%s4] sm:$0xff]
    %v1765 = vld [vmem:[%s4 + $0x8] sm:$0xff]
    %v1766 = vld [vmem:[%s4 + $0x10] sm:$0xff]
    %v1767 = vld [vmem:[%s4 + $0x18] sm:$0xff]
    %v1768 = vld [vmem:[%s4 + $0x20] sm:$0xff]
    %v1769 = vld [vmem:[%s4 + $0x28] sm:$0xff]
    %v1770 = vld [vmem:[%s4 + $0x30] sm:$0xff]
    %v1771 = vld [vmem:[%s4 + $0x38] sm:$0xff]
    %v1772 = vld [vmem:[%s4 + $0x40] sm:$0xff]
    %v1773 = vld [vmem:[%s4 + $0x48] sm:$0xff]
    %v1774 = vld [vmem:[%s4 + $0x50] sm:$0xff]
    %v1775 = vld [vmem:[%s4 + $0x58] sm:$0xff]
    %v1776 = vld [vmem:[%s4 + $0x60] sm:$0xff]
    %v1777 = vld [vmem:[%s4 + $0x68] sm:$0xff]
    %v1778 = vld [vmem:[%s4 + $0x70] sm:$0xff]
    %v1779 = vld [vmem:[%s4 + $0x78] sm:$0xff]
    %1780 = vmatprep.subr.mxu0 0.0
    %1781 = vmatpush1.msra.mxu0 %v312
    %1782 = vmatprep.subr.mxu0 0.0
    %1783 = vmatpush1.msra.mxu0 %v313
    %1784 = vmatprep.subr.mxu0 0.0
    %1785 = vmatpush1.msra.mxu0 %v314
    %1786 = vmatprep.subr.mxu0 0.0
    %1787 = vmatpush1.msra.mxu0 %v315
    %1788 = vmatprep.subr.mxu0 0.0
    %1789 = vmatpush1.msra.mxu0 %v316
    %1790 = vmatprep.subr.mxu0 0.0
    %1791 = vmatpush1.msra.mxu0 %v317
    %1792 = vmatprep.subr.mxu0 0.0
    %1793 = vmatpush1.msra.mxu0 %v318
    %1794 = vmatprep.subr.mxu0 0.0
    %1795 = vmatpush1.msra.mxu0 %v319
    %1796 = vmatprep.subr.mxu0 0.0
    %1797 = vmatpush1.msra.mxu0 %v320
    %1798 = vmatprep.subr.mxu0 0.0
    %1799 = vmatpush1.msra.mxu0 %v321
    %1800 = vmatprep.subr.mxu0 0.0
    %1801 = vmatpush1.msra.mxu0 %v322
    %1802 = vmatprep.subr.mxu0 0.0
    %1803 = vmatpush1.msra.mxu0 %v323
    %1804 = vmatprep.subr.mxu0 0.0
    %1805 = vmatpush1.msra.mxu0 %v324
    %1806 = vmatprep.subr.mxu0 0.0
    %1807 = vmatpush1.msra.mxu0 %v325
    %1808 = vmatprep.subr.mxu0 0.0
    %1809 = vmatpush1.msra.mxu0 %v326
    %1810 = vmatprep.subr.mxu0 0.0
    %1811 = vmatpush1.msra.mxu0 %v327
    %1812 = vmatprep.subr.mxu0 0.0
    %1813 = vmatpush1.msra.mxu0 0.0
    %1814 = vmatprep.subr.mxu0 0.0
    %1815 = vmatpush1.msra.mxu0 0.0
    %1816 = vmatprep.subr.mxu0 0.0
    %1817 = vmatpush1.msra.mxu0 0.0
    %1818 = vmatprep.subr.mxu0 0.0
    %1819 = vmatpush1.msra.mxu0 0.0
    %1820 = vmatprep.subr.mxu0 0.0
    %1821 = vmatpush1.msra.mxu0 0.0
    %1822 = vmatprep.subr.mxu0 0.0
    %1823 = vmatpush1.msra.mxu0 0.0
    %1824 = vmatprep.subr.mxu0 0.0
    %1825 = vmatpush1.msra.mxu0 0.0
    %1826 = vmatprep.subr.mxu0 0.0
    %1827 = vmatpush1.msra.mxu0 0.0
    %1828 = vmatprep.subr.mxu0 0.0
    %1829 = vmatpush1.msra.mxu0 0.0
    %1830 = vmatprep.subr.mxu0 0.0
    %1831 = vmatpush1.msra.mxu0 0.0
    %1832 = vmatprep.subr.mxu0 0.0
    %1833 = vmatpush1.msra.mxu0 0.0
    %1834 = vmatprep.subr.mxu0 0.0
    %1835 = vmatpush1.msra.mxu0 0.0
    %1836 = vmatprep.subr.mxu0 0.0
    %1837 = vmatpush1.msra.mxu0 0.0
    %1838 = vmatprep.subr.mxu0 0.0
    %1839 = vmatpush1.msra.mxu0 0.0
    %1840 = vmatprep.subr.mxu0 0.0
    %1841 = vmatpush1.msra.mxu0 0.0
    %1842 = vmatprep.subr.mxu0 0.0
    %1843 = vmatpush1.msra.mxu0 0.0
    %1844 = vmatprep.mubr.f32.mxu0 0.0
    %1845 = vmatmul.mubr.f32.gmra.mrb[0].mxu0 %v1670
    %v1846 = vpop.f32.mrb[0].mxu0
    %v1847 = vadd.f32 0.0, %v1846
    %v1848 = vpop.f32.mrb[0].mxu0
    %1849 = vdwg.mxu0
    %1850 = vmatprep.subr.mxu0 0.0
    %1851 = vmatpush1.msra.mxu0 %v1764
    %1852 = vmatprep.subr.mxu0 0.0
    %1853 = vmatpush1.msra.mxu0 %v1765
    %1854 = vmatprep.subr.mxu0 0.0
    %1855 = vmatpush1.msra.mxu0 %v1766
    %1856 = vmatprep.subr.mxu0 0.0
    %1857 = vmatpush1.msra.mxu0 %v1767
    %1858 = vmatprep.subr.mxu0 0.0
    %1859 = vmatpush1.msra.mxu0 %v1768
    %1860 = vmatprep.subr.mxu0 0.0
    %1861 = vmatpush1.msra.mxu0 %v1769
    %1862 = vmatprep.subr.mxu0 0.0
    %1863 = vmatpush1.msra.mxu0 %v1770
    %1864 = vmatprep.subr.mxu0 0.0
    %1865 = vmatpush1.msra.mxu0 %v1771
    %1866 = vmatprep.subr.mxu0 0.0
    %1867 = vmatpush1.msra.mxu0 %v1772
    %1868 = vmatprep.subr.mxu0 0.0
    %1869 = vmatpush1.msra.mxu0 %v1773
    %1870 = vmatprep.subr.mxu0 0.0
    %1871 = vmatpush1.msra.mxu0 %v1774
    %1872 = vmatprep.subr.mxu0 0.0
    %1873 = vmatpush1.msra.mxu0 %v1775
    %1874 = vmatprep.subr.mxu0 0.0
    %1875 = vmatpush1.msra.mxu0 %v1776
    %1876 = vmatprep.subr.mxu0 0.0
    %1877 = vmatpush1.msra.mxu0 %v1777
    %1878 = vmatprep.subr.mxu0 0.0
    %1879 = vmatpush1.msra.mxu0 %v1778
    %1880 = vmatprep.subr.mxu0 0.0
    %1881 = vmatpush1.msra.mxu0 %v1779
    %1882 = vmatprep.subr.mxu0 0.0
    %1883 = vmatpush1.msra.mxu0 0.0
    %1884 = vmatprep.subr.mxu0 0.0
    %1885 = vmatpush1.msra.mxu0 0.0
    %1886 = vmatprep.subr.mxu0 0.0
    %1887 = vmatpush1.msra.mxu0 0.0
    %1888 = vmatprep.subr.mxu0 0.0
    %1889 = vmatpush1.msra.mxu0 0.0
    %1890 = vmatprep.subr.mxu0 0.0
    %1891 = vmatpush1.msra.mxu0 0.0
    %1892 = vmatprep.subr.mxu0 0.0
    %1893 = vmatpush1.msra.mxu0 0.0
    %1894 = vmatprep.subr.mxu0 0.0
    %1895 = vmatpush1.msra.mxu0 0.0
    %1896 = vmatprep.subr.mxu0 0.0
    %1897 = vmatpush1.msra.mxu0 0.0
    %1898 = vmatprep.subr.mxu0 0.0
    %1899 = vmatpush1.msra.mxu0 0.0
    %1900 = vmatprep.subr.mxu0 0.0
    %1901 = vmatpush1.msra.mxu0 0.0
    %1902 = vmatprep.subr.mxu0 0.0
    %1903 = vmatpush1.msra.mxu0 0.0
    %1904 = vmatprep.subr.mxu0 0.0
    %1905 = vmatpush1.msra.mxu0 0.0
    %1906 = vmatprep.subr.mxu0 0.0
    %1907 = vmatpush1.msra.mxu0 0.0
    %1908 = vmatprep.subr.mxu0 0.0
    %1909 = vmatpush1.msra.mxu0 0.0
    %1910 = vmatprep.subr.mxu0 0.0
    %1911 = vmatpush1.msra.mxu0 0.0
    %1912 = vmatprep.subr.mxu0 0.0
    %1913 = vmatpush1.msra.mxu0 0.0
    %1914 = vmatprep.mubr.f32.mxu0 0.0
    %1915 = vmatmul.mubr.f32.gmra.mrb[0].mxu0 %v1763
    %v1916 = vpop.f32.mrb[0].mxu0
    %v1917 = vadd.f32 %v1847, %v1916
    %v1918 = vpop.f32.mrb[0].mxu0
    %1919 = vdwg.mxu0
    %v1920 = vadd.f32 %v1917, %v333
    %v1921 = vxor.u32 %v1920, 2147483648
    %v1922 = vmul.f32 %v1921, 1.442695
    %v1923 = vpow.pop %v1922
    %v1924 = vadd.f32 %v1923, 1.0
    %v1925 = vrcp.pop %v1924
    %v1926 = vmul.f32 1.0, %v1925
    %v1927 = vtanh.pop %v1920
    %1928 = vrot.lane.b32.xlu0 %v1926, 96
    %v1929 = vpop.permute.xlu0 %1928
    %1930 = vrot.lane.b32.xlu0 %v1927, 64
    %v1931 = vpop.permute.xlu0 %1930
    %1932 = vrot.lane.b32.xlu0 %v1926, 32
    %v1933 = vpop.permute.xlu0 %1932
    %v1934 = vmul.f32 %v1929, %v1668
    %v1935 = vmul.f32 %v1926, %v1931
    %v1936 = vadd.f32 %v1934, %v1935
    %v1937 = vtanh.pop %v1936
    %v1938 = vmul.f32 %v1933, %v1937
    %s1939 = scalar_lea.vmem %s7, 40
    %1940 = vst [vmem:[%s1939] sm:$0xff] %v1938
    %s1941 = scalar_lea.vmem [#allocation2], 48
    %v1942 = vld [vmem:[%s1941] sm:$0xff]
    %1943 = vmatprep.subr.mxu0 0.0
    %1944 = vmatpush1.msra.mxu0 %v296
    %1945 = vmatprep.subr.mxu0 0.0
    %1946 = vmatpush1.msra.mxu0 %v297
    %1947 = vmatprep.subr.mxu0 0.0
    %1948 = vmatpush1.msra.mxu0 %v298
    %1949 = vmatprep.subr.mxu0 0.0
    %1950 = vmatpush1.msra.mxu0 %v299
    %1951 = vmatprep.subr.mxu0 0.0
    %1952 = vmatpush1.msra.mxu0 %v300
    %1953 = vmatprep.subr.mxu0 0.0
    %1954 = vmatpush1.msra.mxu0 %v301
    %1955 = vmatprep.subr.mxu0 0.0
    %1956 = vmatpush1.msra.mxu0 %v302
    %1957 = vmatprep.subr.mxu0 0.0
    %1958 = vmatpush1.msra.mxu0 %v303
    %1959 = vmatprep.subr.mxu0 0.0
    %1960 = vmatpush1.msra.mxu0 %v304
    %1961 = vmatprep.subr.mxu0 0.0
    %1962 = vmatpush1.msra.mxu0 %v305
    %1963 = vmatprep.subr.mxu0 0.0
    %1964 = vmatpush1.msra.mxu0 %v306
    %1965 = vmatprep.subr.mxu0 0.0
    %1966 = vmatpush1.msra.mxu0 %v307
    %1967 = vmatprep.subr.mxu0 0.0
    %1968 = vmatpush1.msra.mxu0 %v308
    %1969 = vmatprep.subr.mxu0 0.0
    %1970 = vmatpush1.msra.mxu0 %v309
    %1971 = vmatprep.subr.mxu0 0.0
    %1972 = vmatpush1.msra.mxu0 %v310
    %1973 = vmatprep.subr.mxu0 0.0
    %1974 = vmatpush1.msra.mxu0 %v311
    %1975 = vmatprep.subr.mxu0 0.0
    %1976 = vmatpush1.msra.mxu0 0.0
    %1977 = vmatprep.subr.mxu0 0.0
    %1978 = vmatpush1.msra.mxu0 0.0
    %1979 = vmatprep.subr.mxu0 0.0
    %1980 = vmatpush1.msra.mxu0 0.0
    %1981 = vmatprep.subr.mxu0 0.0
    %1982 = vmatpush1.msra.mxu0 0.0
    %1983 = vmatprep.subr.mxu0 0.0
    %1984 = vmatpush1.msra.mxu0 0.0
    %1985 = vmatprep.subr.mxu0 0.0
    %1986 = vmatpush1.msra.mxu0 0.0
    %1987 = vmatprep.subr.mxu0 0.0
    %1988 = vmatpush1.msra.mxu0 0.0
    %1989 = vmatprep.subr.mxu0 0.0
    %1990 = vmatpush1.msra.mxu0 0.0
    %1991 = vmatprep.subr.mxu0 0.0
    %1992 = vmatpush1.msra.mxu0 0.0
    %1993 = vmatprep.subr.mxu0 0.0
    %1994 = vmatpush1.msra.mxu0 0.0
    %1995 = vmatprep.subr.mxu0 0.0
    %1996 = vmatpush1.msra.mxu0 0.0
    %1997 = vmatprep.subr.mxu0 0.0
    %1998 = vmatpush1.msra.mxu0 0.0
    %1999 = vmatprep.subr.mxu0 0.0
    %2000 = vmatpush1.msra.mxu0 0.0
    %2001 = vmatprep.subr.mxu0 0.0
    %2002 = vmatpush1.msra.mxu0 0.0
    %2003 = vmatprep.subr.mxu0 0.0
    %2004 = vmatpush1.msra.mxu0 0.0
    %2005 = vmatprep.subr.mxu0 0.0
    %2006 = vmatpush1.msra.mxu0 0.0
    %2007 = vmatprep.mubr.f32.mxu0 0.0
    %2008 = vmatmul.mubr.f32.gmra.mrb[0].mxu0 %v1763
    %v2009 = vpop.f32.mrb[0].mxu0
    %v2010 = vadd.f32 0.0, %v2009
    %v2011 = vpop.f32.mrb[0].mxu0
    %2012 = vdwg.mxu0
    %v2013 = vadd.f32 %v1942, %v2010
    %v2014 = vxor.u32 %v2013, 2147483648
    %v2015 = vmul.f32 %v2014, 1.442695
    %v2016 = vpow.pop %v2015
    %v2017 = vadd.f32 %v2016, 1.0
    %v2018 = vrcp.pop %v2017
    %v2019 = vmul.f32 1.0, %v2018
    %v2020 = vtanh.pop %v2013
    %2021 = vrot.lane.b32.xlu0 %v2019, 96
    %v2022 = vpop.permute.xlu0 %2021
    %2023 = vrot.lane.b32.xlu0 %v2020, 64
    %v2024 = vpop.permute.xlu0 %2023
    %2025 = vrot.lane.b32.xlu0 %v2019, 32
    %v2026 = vpop.permute.xlu0 %2025
    %v2027 = vmul.f32 %v2022, %v1761
    %v2028 = vmul.f32 %v2019, %v2024
    %v2029 = vadd.f32 %v2027, %v2028
    %v2030 = vtanh.pop %v2029
    %v2031 = vmul.f32 %v2026, %v2030
    %v2032 = vld [vmem:[%s4] sm:$0xff]
    %v2033 = vld [vmem:[%s4 + $0x8] sm:$0xff]
    %v2034 = vld [vmem:[%s4 + $0x10] sm:$0xff]
    %v2035 = vld [vmem:[%s4 + $0x18] sm:$0xff]
    %v2036 = vld [vmem:[%s4 + $0x20] sm:$0xff]
    %v2037 = vld [vmem:[%s4 + $0x28] sm:$0xff]
    %v2038 = vld [vmem:[%s4 + $0x30] sm:$0xff]
    %v2039 = vld [vmem:[%s4 + $0x38] sm:$0xff]
    %v2040 = vld [vmem:[%s4 + $0x40] sm:$0xff]
    %v2041 = vld [vmem:[%s4 + $0x48] sm:$0xff]
    %v2042 = vld [vmem:[%s4 + $0x50] sm:$0xff]
    %v2043 = vld [vmem:[%s4 + $0x58] sm:$0xff]
    %v2044 = vld [vmem:[%s4 + $0x60] sm:$0xff]
    %v2045 = vld [vmem:[%s4 + $0x68] sm:$0xff]
    %v2046 = vld [vmem:[%s4 + $0x70] sm:$0xff]
    %v2047 = vld [vmem:[%s4 + $0x78] sm:$0xff]
    %2048 = vmatprep.subr.mxu0 0.0
    %2049 = vmatpush1.msra.mxu0 %v312
    %2050 = vmatprep.subr.mxu0 0.0
    %2051 = vmatpush1.msra.mxu0 %v313
    %2052 = vmatprep.subr.mxu0 0.0
    %2053 = vmatpush1.msra.mxu0 %v314
    %2054 = vmatprep.subr.mxu0 0.0
    %2055 = vmatpush1.msra.mxu0 %v315
    %2056 = vmatprep.subr.mxu0 0.0
    %2057 = vmatpush1.msra.mxu0 %v316
    %2058 = vmatprep.subr.mxu0 0.0
    %2059 = vmatpush1.msra.mxu0 %v317
    %2060 = vmatprep.subr.mxu0 0.0
    %2061 = vmatpush1.msra.mxu0 %v318
    %2062 = vmatprep.subr.mxu0 0.0
    %2063 = vmatpush1.msra.mxu0 %v319
    %2064 = vmatprep.subr.mxu0 0.0
    %2065 = vmatpush1.msra.mxu0 %v320
    %2066 = vmatprep.subr.mxu0 0.0
    %2067 = vmatpush1.msra.mxu0 %v321
    %2068 = vmatprep.subr.mxu0 0.0
    %2069 = vmatpush1.msra.mxu0 %v322
    %2070 = vmatprep.subr.mxu0 0.0
    %2071 = vmatpush1.msra.mxu0 %v323
    %2072 = vmatprep.subr.mxu0 0.0
    %2073 = vmatpush1.msra.mxu0 %v324
    %2074 = vmatprep.subr.mxu0 0.0
    %2075 = vmatpush1.msra.mxu0 %v325
    %2076 = vmatprep.subr.mxu0 0.0
    %2077 = vmatpush1.msra.mxu0 %v326
    %2078 = vmatprep.subr.mxu0 0.0
    %2079 = vmatpush1.msra.mxu0 %v327
    %2080 = vmatprep.subr.mxu0 0.0
    %2081 = vmatpush1.msra.mxu0 0.0
    %2082 = vmatprep.subr.mxu0 0.0
    %2083 = vmatpush1.msra.mxu0 0.0
    %2084 = vmatprep.subr.mxu0 0.0
    %2085 = vmatpush1.msra.mxu0 0.0
    %2086 = vmatprep.subr.mxu0 0.0
    %2087 = vmatpush1.msra.mxu0 0.0
    %2088 = vmatprep.subr.mxu0 0.0
    %2089 = vmatpush1.msra.mxu0 0.0
    %2090 = vmatprep.subr.mxu0 0.0
    %2091 = vmatpush1.msra.mxu0 0.0
    %2092 = vmatprep.subr.mxu0 0.0
    %2093 = vmatpush1.msra.mxu0 0.0
    %2094 = vmatprep.subr.mxu0 0.0
    %2095 = vmatpush1.msra.mxu0 0.0
    %2096 = vmatprep.subr.mxu0 0.0
    %2097 = vmatpush1.msra.mxu0 0.0
    %2098 = vmatprep.subr.mxu0 0.0
    %2099 = vmatpush1.msra.mxu0 0.0
    %2100 = vmatprep.subr.mxu0 0.0
    %2101 = vmatpush1.msra.mxu0 0.0
    %2102 = vmatprep.subr.mxu0 0.0
    %2103 = vmatpush1.msra.mxu0 0.0
    %2104 = vmatprep.subr.mxu0 0.0
    %2105 = vmatpush1.msra.mxu0 0.0
    %2106 = vmatprep.subr.mxu0 0.0
    %2107 = vmatpush1.msra.mxu0 0.0
    %2108 = vmatprep.subr.mxu0 0.0
    %2109 = vmatpush1.msra.mxu0 0.0
    %2110 = vmatprep.subr.mxu0 0.0
    %2111 = vmatpush1.msra.mxu0 0.0
    %2112 = vmatprep.mubr.f32.mxu0 0.0
    %2113 = vmatmul.mubr.f32.gmra.mrb[0].mxu0 %v1938
    %v2114 = vpop.f32.mrb[0].mxu0
    %v2115 = vadd.f32 0.0, %v2114
    %v2116 = vpop.f32.mrb[0].mxu0
    %2117 = vdwg.mxu0
    %2118 = vmatprep.subr.mxu0 0.0
    %2119 = vmatpush1.msra.mxu0 %v2032
    %2120 = vmatprep.subr.mxu0 0.0
    %2121 = vmatpush1.msra.mxu0 %v2033
    %2122 = vmatprep.subr.mxu0 0.0
    %2123 = vmatpush1.msra.mxu0 %v2034
    %2124 = vmatprep.subr.mxu0 0.0
    %2125 = vmatpush1.msra.mxu0 %v2035
    %2126 = vmatprep.subr.mxu0 0.0
    %2127 = vmatpush1.msra.mxu0 %v2036
    %2128 = vmatprep.subr.mxu0 0.0
    %2129 = vmatpush1.msra.mxu0 %v2037
    %2130 = vmatprep.subr.mxu0 0.0
    %2131 = vmatpush1.msra.mxu0 %v2038
    %2132 = vmatprep.subr.mxu0 0.0
    %2133 = vmatpush1.msra.mxu0 %v2039
    %2134 = vmatprep.subr.mxu0 0.0
    %2135 = vmatpush1.msra.mxu0 %v2040
    %2136 = vmatprep.subr.mxu0 0.0
    %2137 = vmatpush1.msra.mxu0 %v2041
    %2138 = vmatprep.subr.mxu0 0.0
    %2139 = vmatpush1.msra.mxu0 %v2042
    %2140 = vmatprep.subr.mxu0 0.0
    %2141 = vmatpush1.msra.mxu0 %v2043
    %2142 = vmatprep.subr.mxu0 0.0
    %2143 = vmatpush1.msra.mxu0 %v2044
    %2144 = vmatprep.subr.mxu0 0.0
    %2145 = vmatpush1.msra.mxu0 %v2045
    %2146 = vmatprep.subr.mxu0 0.0
    %2147 = vmatpush1.msra.mxu0 %v2046
    %2148 = vmatprep.subr.mxu0 0.0
    %2149 = vmatpush1.msra.mxu0 %v2047
    %2150 = vmatprep.subr.mxu0 0.0
    %2151 = vmatpush1.msra.mxu0 0.0
    %2152 = vmatprep.subr.mxu0 0.0
    %2153 = vmatpush1.msra.mxu0 0.0
    %2154 = vmatprep.subr.mxu0 0.0
    %2155 = vmatpush1.msra.mxu0 0.0
    %2156 = vmatprep.subr.mxu0 0.0
    %2157 = vmatpush1.msra.mxu0 0.0
    %2158 = vmatprep.subr.mxu0 0.0
    %2159 = vmatpush1.msra.mxu0 0.0
    %2160 = vmatprep.subr.mxu0 0.0
    %2161 = vmatpush1.msra.mxu0 0.0
    %2162 = vmatprep.subr.mxu0 0.0
    %2163 = vmatpush1.msra.mxu0 0.0
    %2164 = vmatprep.subr.mxu0 0.0
    %2165 = vmatpush1.msra.mxu0 0.0
    %2166 = vmatprep.subr.mxu0 0.0
    %2167 = vmatpush1.msra.mxu0 0.0
    %2168 = vmatprep.subr.mxu0 0.0
    %2169 = vmatpush1.msra.mxu0 0.0
    %2170 = vmatprep.subr.mxu0 0.0
    %2171 = vmatpush1.msra.mxu0 0.0
    %2172 = vmatprep.subr.mxu0 0.0
    %2173 = vmatpush1.msra.mxu0 0.0
    %2174 = vmatprep.subr.mxu0 0.0
    %2175 = vmatpush1.msra.mxu0 0.0
    %2176 = vmatprep.subr.mxu0 0.0
    %2177 = vmatpush1.msra.mxu0 0.0
    %2178 = vmatprep.subr.mxu0 0.0
    %2179 = vmatpush1.msra.mxu0 0.0
    %2180 = vmatprep.subr.mxu0 0.0
    %2181 = vmatpush1.msra.mxu0 0.0
    %2182 = vmatprep.mubr.f32.mxu0 0.0
    %2183 = vmatmul.mubr.f32.gmra.mrb[0].mxu0 %v2031
    %v2184 = vpop.f32.mrb[0].mxu0
    %v2185 = vadd.f32 %v2115, %v2184
    %v2186 = vpop.f32.mrb[0].mxu0
    %2187 = vdwg.mxu0
    %v2188 = vadd.f32 %v2185, %v333
    %v2189 = vxor.u32 %v2188, 2147483648
    %v2190 = vmul.f32 %v2189, 1.442695
    %v2191 = vpow.pop %v2190
    %v2192 = vadd.f32 %v2191, 1.0
    %v2193 = vrcp.pop %v2192
    %v2194 = vmul.f32 1.0, %v2193
    %v2195 = vtanh.pop %v2188
    %2196 = vrot.lane.b32.xlu0 %v2194, 96
    %v2197 = vpop.permute.xlu0 %2196
    %2198 = vrot.lane.b32.xlu0 %v2195, 64
    %v2199 = vpop.permute.xlu0 %2198
    %2200 = vrot.lane.b32.xlu0 %v2194, 32
    %v2201 = vpop.permute.xlu0 %2200
    %v2202 = vmul.f32 %v2197, %v1936
    %v2203 = vmul.f32 %v2194, %v2199
    %v2204 = vadd.f32 %v2202, %v2203
    %v2205 = vtanh.pop %v2204
    %v2206 = vmul.f32 %v2201, %v2205
    %s2207 = scalar_lea.vmem %s7, 48
    %2208 = vst [vmem:[%s2207] sm:$0xff] %v2206
    %s2209 = scalar_lea.vmem [#allocation2], 56
    %v2210 = vld [vmem:[%s2209] sm:$0xff]
    %2211 = vmatprep.subr.mxu0 0.0
    %2212 = vmatpush1.msra.mxu0 %v296
    %2213 = vmatprep.subr.mxu0 0.0
    %2214 = vmatpush1.msra.mxu0 %v297
    %2215 = vmatprep.subr.mxu0 0.0
    %2216 = vmatpush1.msra.mxu0 %v298
    %2217 = vmatprep.subr.mxu0 0.0
    %2218 = vmatpush1.msra.mxu0 %v299
    %2219 = vmatprep.subr.mxu0 0.0
    %2220 = vmatpush1.msra.mxu0 %v300
    %2221 = vmatprep.subr.mxu0 0.0
    %2222 = vmatpush1.msra.mxu0 %v301
    %2223 = vmatprep.subr.mxu0 0.0
    %2224 = vmatpush1.msra.mxu0 %v302
    %2225 = vmatprep.subr.mxu0 0.0
    %2226 = vmatpush1.msra.mxu0 %v303
    %2227 = vmatprep.subr.mxu0 0.0
    %2228 = vmatpush1.msra.mxu0 %v304
    %2229 = vmatprep.subr.mxu0 0.0
    %2230 = vmatpush1.msra.mxu0 %v305
    %2231 = vmatprep.subr.mxu0 0.0
    %2232 = vmatpush1.msra.mxu0 %v306
    %2233 = vmatprep.subr.mxu0 0.0
    %2234 = vmatpush1.msra.mxu0 %v307
    %2235 = vmatprep.subr.mxu0 0.0
    %2236 = vmatpush1.msra.mxu0 %v308
    %2237 = vmatprep.subr.mxu0 0.0
    %2238 = vmatpush1.msra.mxu0 %v309
    %2239 = vmatprep.subr.mxu0 0.0
    %2240 = vmatpush1.msra.mxu0 %v310
    %2241 = vmatprep.subr.mxu0 0.0
    %2242 = vmatpush1.msra.mxu0 %v311
    %2243 = vmatprep.subr.mxu0 0.0
    %2244 = vmatpush1.msra.mxu0 0.0
    %2245 = vmatprep.subr.mxu0 0.0
    %2246 = vmatpush1.msra.mxu0 0.0
    %2247 = vmatprep.subr.mxu0 0.0
    %2248 = vmatpush1.msra.mxu0 0.0
    %2249 = vmatprep.subr.mxu0 0.0
    %2250 = vmatpush1.msra.mxu0 0.0
    %2251 = vmatprep.subr.mxu0 0.0
    %2252 = vmatpush1.msra.mxu0 0.0
    %2253 = vmatprep.subr.mxu0 0.0
    %2254 = vmatpush1.msra.mxu0 0.0
    %2255 = vmatprep.subr.mxu0 0.0
    %2256 = vmatpush1.msra.mxu0 0.0
    %2257 = vmatprep.subr.mxu0 0.0
    %2258 = vmatpush1.msra.mxu0 0.0
    %2259 = vmatprep.subr.mxu0 0.0
    %2260 = vmatpush1.msra.mxu0 0.0
    %2261 = vmatprep.subr.mxu0 0.0
    %2262 = vmatpush1.msra.mxu0 0.0
    %2263 = vmatprep.subr.mxu0 0.0
    %2264 = vmatpush1.msra.mxu0 0.0
    %2265 = vmatprep.subr.mxu0 0.0
    %2266 = vmatpush1.msra.mxu0 0.0
    %2267 = vmatprep.subr.mxu0 0.0
    %2268 = vmatpush1.msra.mxu0 0.0
    %2269 = vmatprep.subr.mxu0 0.0
    %2270 = vmatpush1.msra.mxu0 0.0
    %2271 = vmatprep.subr.mxu0 0.0
    %2272 = vmatpush1.msra.mxu0 0.0
    %2273 = vmatprep.subr.mxu0 0.0
    %2274 = vmatpush1.msra.mxu0 0.0
    %2275 = vmatprep.mubr.f32.mxu0 0.0
    %2276 = vmatmul.mubr.f32.gmra.mrb[0].mxu0 %v2031
    %v2277 = vpop.f32.mrb[0].mxu0
    %v2278 = vadd.f32 0.0, %v2277
    %v2279 = vpop.f32.mrb[0].mxu0
    %2280 = vdwg.mxu0
    %v2281 = vadd.f32 %v2210, %v2278
    %v2282 = vxor.u32 %v2281, 2147483648
    %v2283 = vmul.f32 %v2282, 1.442695
    %v2284 = vpow.pop %v2283
    %v2285 = vadd.f32 %v2284, 1.0
    %v2286 = vrcp.pop %v2285
    %v2287 = vmul.f32 1.0, %v2286
    %v2288 = vtanh.pop %v2281
    %2289 = vrot.lane.b32.xlu0 %v2287, 96
    %v2290 = vpop.permute.xlu0 %2289
    %2291 = vrot.lane.b32.xlu0 %v2288, 64
    %v2292 = vpop.permute.xlu0 %2291
    %2293 = vrot.lane.b32.xlu0 %v2287, 32
    %v2294 = vpop.permute.xlu0 %2293
    %v2295 = vmul.f32 %v2290, %v2029
    %v2296 = vmul.f32 %v2287, %v2292
    %v2297 = vadd.f32 %v2295, %v2296
    %v2298 = vtanh.pop %v2297
    %v2299 = vmul.f32 %v2294, %v2298
    %v2300 = vld [vmem:[%s4] sm:$0xff]
    %v2301 = vld [vmem:[%s4 + $0x8] sm:$0xff]
    %v2302 = vld [vmem:[%s4 + $0x10] sm:$0xff]
    %v2303 = vld [vmem:[%s4 + $0x18] sm:$0xff]
    %v2304 = vld [vmem:[%s4 + $0x20] sm:$0xff]
    %v2305 = vld [vmem:[%s4 + $0x28] sm:$0xff]
    %v2306 = vld [vmem:[%s4 + $0x30] sm:$0xff]
    %v2307 = vld [vmem:[%s4 + $0x38] sm:$0xff]
    %v2308 = vld [vmem:[%s4 + $0x40] sm:$0xff]
    %v2309 = vld [vmem:[%s4 + $0x48] sm:$0xff]
    %v2310 = vld [vmem:[%s4 + $0x50] sm:$0xff]
    %v2311 = vld [vmem:[%s4 + $0x58] sm:$0xff]
    %v2312 = vld [vmem:[%s4 + $0x60] sm:$0xff]
    %v2313 = vld [vmem:[%s4 + $0x68] sm:$0xff]
    %v2314 = vld [vmem:[%s4 + $0x70] sm:$0xff]
    %v2315 = vld [vmem:[%s4 + $0x78] sm:$0xff]
    %2316 = vmatprep.subr.mxu0 0.0
    %2317 = vmatpush1.msra.mxu0 %v312
    %2318 = vmatprep.subr.mxu0 0.0
    %2319 = vmatpush1.msra.mxu0 %v313
    %2320 = vmatprep.subr.mxu0 0.0
    %2321 = vmatpush1.msra.mxu0 %v314
    %2322 = vmatprep.subr.mxu0 0.0
    %2323 = vmatpush1.msra.mxu0 %v315
    %2324 = vmatprep.subr.mxu0 0.0
    %2325 = vmatpush1.msra.mxu0 %v316
    %2326 = vmatprep.subr.mxu0 0.0
    %2327 = vmatpush1.msra.mxu0 %v317
    %2328 = vmatprep.subr.mxu0 0.0
    %2329 = vmatpush1.msra.mxu0 %v318
    %2330 = vmatprep.subr.mxu0 0.0
    %2331 = vmatpush1.msra.mxu0 %v319
    %2332 = vmatprep.subr.mxu0 0.0
    %2333 = vmatpush1.msra.mxu0 %v320
    %2334 = vmatprep.subr.mxu0 0.0
    %2335 = vmatpush1.msra.mxu0 %v321
    %2336 = vmatprep.subr.mxu0 0.0
    %2337 = vmatpush1.msra.mxu0 %v322
    %2338 = vmatprep.subr.mxu0 0.0
    %2339 = vmatpush1.msra.mxu0 %v323
    %2340 = vmatprep.subr.mxu0 0.0
    %2341 = vmatpush1.msra.mxu0 %v324
    %2342 = vmatprep.subr.mxu0 0.0
    %2343 = vmatpush1.msra.mxu0 %v325
    %2344 = vmatprep.subr.mxu0 0.0
    %2345 = vmatpush1.msra.mxu0 %v326
    %2346 = vmatprep.subr.mxu0 0.0
    %2347 = vmatpush1.msra.mxu0 %v327
    %2348 = vmatprep.subr.mxu0 0.0
    %2349 = vmatpush1.msra.mxu0 0.0
    %2350 = vmatprep.subr.mxu0 0.0
    %2351 = vmatpush1.msra.mxu0 0.0
    %2352 = vmatprep.subr.mxu0 0.0
    %2353 = vmatpush1.msra.mxu0 0.0
    %2354 = vmatprep.subr.mxu0 0.0
    %2355 = vmatpush1.msra.mxu0 0.0
    %2356 = vmatprep.subr.mxu0 0.0
    %2357 = vmatpush1.msra.mxu0 0.0
    %2358 = vmatprep.subr.mxu0 0.0
    %2359 = vmatpush1.msra.mxu0 0.0
    %2360 = vmatprep.subr.mxu0 0.0
    %2361 = vmatpush1.msra.mxu0 0.0
    %2362 = vmatprep.subr.mxu0 0.0
    %2363 = vmatpush1.msra.mxu0 0.0
    %2364 = vmatprep.subr.mxu0 0.0
    %2365 = vmatpush1.msra.mxu0 0.0
    %2366 = vmatprep.subr.mxu0 0.0
    %2367 = vmatpush1.msra.mxu0 0.0
    %2368 = vmatprep.subr.mxu0 0.0
    %2369 = vmatpush1.msra.mxu0 0.0
    %2370 = vmatprep.subr.mxu0 0.0
    %2371 = vmatpush1.msra.mxu0 0.0
    %2372 = vmatprep.subr.mxu0 0.0
    %2373 = vmatpush1.msra.mxu0 0.0
    %2374 = vmatprep.subr.mxu0 0.0
    %2375 = vmatpush1.msra.mxu0 0.0
    %2376 = vmatprep.subr.mxu0 0.0
    %2377 = vmatpush1.msra.mxu0 0.0
    %2378 = vmatprep.subr.mxu0 0.0
    %2379 = vmatpush1.msra.mxu0 0.0
    %2380 = vmatprep.mubr.f32.mxu0 0.0
    %2381 = vmatmul.mubr.f32.gmra.mrb[0].mxu0 %v2206
    %v2382 = vpop.f32.mrb[0].mxu0
    %v2383 = vadd.f32 0.0, %v2382
    %v2384 = vpop.f32.mrb[0].mxu0
    %2385 = vdwg.mxu0
    %2386 = vmatprep.subr.mxu0 0.0
    %2387 = vmatpush1.msra.mxu0 %v2300
    %2388 = vmatprep.subr.mxu0 0.0
    %2389 = vmatpush1.msra.mxu0 %v2301
    %2390 = vmatprep.subr.mxu0 0.0
    %2391 = vmatpush1.msra.mxu0 %v2302
    %2392 = vmatprep.subr.mxu0 0.0
    %2393 = vmatpush1.msra.mxu0 %v2303
    %2394 = vmatprep.subr.mxu0 0.0
    %2395 = vmatpush1.msra.mxu0 %v2304
    %2396 = vmatprep.subr.mxu0 0.0
    %2397 = vmatpush1.msra.mxu0 %v2305
    %2398 = vmatprep.subr.mxu0 0.0
    %2399 = vmatpush1.msra.mxu0 %v2306
    %2400 = vmatprep.subr.mxu0 0.0
    %2401 = vmatpush1.msra.mxu0 %v2307
    %2402 = vmatprep.subr.mxu0 0.0
    %2403 = vmatpush1.msra.mxu0 %v2308
    %2404 = vmatprep.subr.mxu0 0.0
    %2405 = vmatpush1.msra.mxu0 %v2309
    %2406 = vmatprep.subr.mxu0 0.0
    %2407 = vmatpush1.msra.mxu0 %v2310
    %2408 = vmatprep.subr.mxu0 0.0
    %2409 = vmatpush1.msra.mxu0 %v2311
    %2410 = vmatprep.subr.mxu0 0.0
    %2411 = vmatpush1.msra.mxu0 %v2312
    %2412 = vmatprep.subr.mxu0 0.0
    %2413 = vmatpush1.msra.mxu0 %v2313
    %2414 = vmatprep.subr.mxu0 0.0
    %2415 = vmatpush1.msra.mxu0 %v2314
    %2416 = vmatprep.subr.mxu0 0.0
    %2417 = vmatpush1.msra.mxu0 %v2315
    %2418 = vmatprep.subr.mxu0 0.0
    %2419 = vmatpush1.msra.mxu0 0.0
    %2420 = vmatprep.subr.mxu0 0.0
    %2421 = vmatpush1.msra.mxu0 0.0
    %2422 = vmatprep.subr.mxu0 0.0
    %2423 = vmatpush1.msra.mxu0 0.0
    %2424 = vmatprep.subr.mxu0 0.0
    %2425 = vmatpush1.msra.mxu0 0.0
    %2426 = vmatprep.subr.mxu0 0.0
    %2427 = vmatpush1.msra.mxu0 0.0
    %2428 = vmatprep.subr.mxu0 0.0
    %2429 = vmatpush1.msra.mxu0 0.0
    %2430 = vmatprep.subr.mxu0 0.0
    %2431 = vmatpush1.msra.mxu0 0.0
    %2432 = vmatprep.subr.mxu0 0.0
    %2433 = vmatpush1.msra.mxu0 0.0
    %2434 = vmatprep.subr.mxu0 0.0
    %2435 = vmatpush1.msra.mxu0 0.0
    %2436 = vmatprep.subr.mxu0 0.0
    %2437 = vmatpush1.msra.mxu0 0.0
    %2438 = vmatprep.subr.mxu0 0.0
    %2439 = vmatpush1.msra.mxu0 0.0
    %2440 = vmatprep.subr.mxu0 0.0
    %2441 = vmatpush1.msra.mxu0 0.0
    %2442 = vmatprep.subr.mxu0 0.0
    %2443 = vmatpush1.msra.mxu0 0.0
    %2444 = vmatprep.subr.mxu0 0.0
    %2445 = vmatpush1.msra.mxu0 0.0
    %2446 = vmatprep.subr.mxu0 0.0
    %2447 = vmatpush1.msra.mxu0 0.0
    %2448 = vmatprep.subr.mxu0 0.0
    %2449 = vmatpush1.msra.mxu0 0.0
    %2450 = vmatprep.mubr.f32.mxu0 0.0
    %2451 = vmatmul.mubr.f32.gmra.mrb[0].mxu0 %v2299
    %v2452 = vpop.f32.mrb[0].mxu0
    %v2453 = vadd.f32 %v2383, %v2452
    %v2454 = vpop.f32.mrb[0].mxu0
    %2455 = vdwg.mxu0
    %v2456 = vadd.f32 %v2453, %v333
    %v2457 = vxor.u32 %v2456, 2147483648
    %v2458 = vmul.f32 %v2457, 1.442695
    %v2459 = vpow.pop %v2458
    %v2460 = vadd.f32 %v2459, 1.0
    %v2461 = vrcp.pop %v2460
    %v2462 = vmul.f32 1.0, %v2461
    %v2463 = vtanh.pop %v2456
    %2464 = vrot.lane.b32.xlu0 %v2462, 96
    %v2465 = vpop.permute.xlu0 %2464
    %2466 = vrot.lane.b32.xlu0 %v2463, 64
    %v2467 = vpop.permute.xlu0 %2466
    %2468 = vrot.lane.b32.xlu0 %v2462, 32
    %v2469 = vpop.permute.xlu0 %2468
    %v2470 = vmul.f32 %v2465, %v2204
    %v2471 = vmul.f32 %v2462, %v2467
    %v2472 = vadd.f32 %v2470, %v2471
    %v2473 = vtanh.pop %v2472
    %v2474 = vmul.f32 %v2469, %v2473
    %s2475 = scalar_lea.vmem %s7, 56
    %2476 = vst [vmem:[%s2475] sm:$0xff] %v2474
    %s2477 = scalar_lea.vmem [#allocation2], 64
    %v2478 = vld [vmem:[%s2477] sm:$0xff]
    %2479 = vmatprep.subr.mxu0 0.0
    %2480 = vmatpush1.msra.mxu0 %v296
    %2481 = vmatprep.subr.mxu0 0.0
    %2482 = vmatpush1.msra.mxu0 %v297
    %2483 = vmatprep.subr.mxu0 0.0
    %2484 = vmatpush1.msra.mxu0 %v298
    %2485 = vmatprep.subr.mxu0 0.0
    %2486 = vmatpush1.msra.mxu0 %v299
    %2487 = vmatprep.subr.mxu0 0.0
    %2488 = vmatpush1.msra.mxu0 %v300
    %2489 = vmatprep.subr.mxu0 0.0
    %2490 = vmatpush1.msra.mxu0 %v301
    %2491 = vmatprep.subr.mxu0 0.0
    %2492 = vmatpush1.msra.mxu0 %v302
    %2493 = vmatprep.subr.mxu0 0.0
    %2494 = vmatpush1.msra.mxu0 %v303
    %2495 = vmatprep.subr.mxu0 0.0
    %2496 = vmatpush1.msra.mxu0 %v304
    %2497 = vmatprep.subr.mxu0 0.0
    %2498 = vmatpush1.msra.mxu0 %v305
    %2499 = vmatprep.subr.mxu0 0.0
    %2500 = vmatpush1.msra.mxu0 %v306
    %2501 = vmatprep.subr.mxu0 0.0
    %2502 = vmatpush1.msra.mxu0 %v307
    %2503 = vmatprep.subr.mxu0 0.0
    %2504 = vmatpush1.msra.mxu0 %v308
    %2505 = vmatprep.subr.mxu0 0.0
    %2506 = vmatpush1.msra.mxu0 %v309
    %2507 = vmatprep.subr.mxu0 0.0
    %2508 = vmatpush1.msra.mxu0 %v310
    %2509 = vmatprep.subr.mxu0 0.0
    %2510 = vmatpush1.msra.mxu0 %v311
    %2511 = vmatprep.subr.mxu0 0.0
    %2512 = vmatpush1.msra.mxu0 0.0
    %2513 = vmatprep.subr.mxu0 0.0
    %2514 = vmatpush1.msra.mxu0 0.0
    %2515 = vmatprep.subr.mxu0 0.0
    %2516 = vmatpush1.msra.mxu0 0.0
    %2517 = vmatprep.subr.mxu0 0.0
    %2518 = vmatpush1.msra.mxu0 0.0
    %2519 = vmatprep.subr.mxu0 0.0
    %2520 = vmatpush1.msra.mxu0 0.0
    %2521 = vmatprep.subr.mxu0 0.0
    %2522 = vmatpush1.msra.mxu0 0.0
    %2523 = vmatprep.subr.mxu0 0.0
    %2524 = vmatpush1.msra.mxu0 0.0
    %2525 = vmatprep.subr.mxu0 0.0
    %2526 = vmatpush1.msra.mxu0 0.0
    %2527 = vmatprep.subr.mxu0 0.0
    %2528 = vmatpush1.msra.mxu0 0.0
    %2529 = vmatprep.subr.mxu0 0.0
    %2530 = vmatpush1.msra.mxu0 0.0
    %2531 = vmatprep.subr.mxu0 0.0
    %2532 = vmatpush1.msra.mxu0 0.0
    %2533 = vmatprep.subr.mxu0 0.0
    %2534 = vmatpush1.msra.mxu0 0.0
    %2535 = vmatprep.subr.mxu0 0.0
    %2536 = vmatpush1.msra.mxu0 0.0
    %2537 = vmatprep.subr.mxu0 0.0
    %2538 = vmatpush1.msra.mxu0 0.0
    %2539 = vmatprep.subr.mxu0 0.0
    %2540 = vmatpush1.msra.mxu0 0.0
    %2541 = vmatprep.subr.mxu0 0.0
    %2542 = vmatpush1.msra.mxu0 0.0
    %2543 = vmatprep.mubr.f32.mxu0 0.0
    %2544 = vmatmul.mubr.f32.gmra.mrb[0].mxu0 %v2299
    %v2545 = vpop.f32.mrb[0].mxu0
    %v2546 = vadd.f32 0.0, %v2545
    %v2547 = vpop.f32.mrb[0].mxu0
    %2548 = vdwg.mxu0
    %v2549 = vadd.f32 %v2478, %v2546
    %v2550 = vxor.u32 %v2549, 2147483648
    %v2551 = vmul.f32 %v2550, 1.442695
    %v2552 = vpow.pop %v2551
    %v2553 = vadd.f32 %v2552, 1.0
    %v2554 = vrcp.pop %v2553
    %v2555 = vmul.f32 1.0, %v2554
    %v2556 = vtanh.pop %v2549
    %2557 = vrot.lane.b32.xlu0 %v2555, 96
    %v2558 = vpop.permute.xlu0 %2557
    %2559 = vrot.lane.b32.xlu0 %v2556, 64
    %v2560 = vpop.permute.xlu0 %2559
    %2561 = vrot.lane.b32.xlu0 %v2555, 32
    %v2562 = vpop.permute.xlu0 %2561
    %v2563 = vmul.f32 %v2558, %v2297
    %v2564 = vmul.f32 %v2555, %v2560
    %v2565 = vadd.f32 %v2563, %v2564
    %v2566 = vtanh.pop %v2565
    %v2567 = vmul.f32 %v2562, %v2566
    %v2568 = vld [vmem:[%s4] sm:$0xff]
    %v2569 = vld [vmem:[%s4 + $0x8] sm:$0xff]
    %v2570 = vld [vmem:[%s4 + $0x10] sm:$0xff]
    %v2571 = vld [vmem:[%s4 + $0x18] sm:$0xff]
    %v2572 = vld [vmem:[%s4 + $0x20] sm:$0xff]
    %v2573 = vld [vmem:[%s4 + $0x28] sm:$0xff]
    %v2574 = vld [vmem:[%s4 + $0x30] sm:$0xff]
    %v2575 = vld [vmem:[%s4 + $0x38] sm:$0xff]
    %v2576 = vld [vmem:[%s4 + $0x40] sm:$0xff]
    %v2577 = vld [vmem:[%s4 + $0x48] sm:$0xff]
    %v2578 = vld [vmem:[%s4 + $0x50] sm:$0xff]
    %v2579 = vld [vmem:[%s4 + $0x58] sm:$0xff]
    %v2580 = vld [vmem:[%s4 + $0x60] sm:$0xff]
    %v2581 = vld [vmem:[%s4 + $0x68] sm:$0xff]
    %v2582 = vld [vmem:[%s4 + $0x70] sm:$0xff]
    %v2583 = vld [vmem:[%s4 + $0x78] sm:$0xff]
    %2584 = vmatprep.subr.mxu0 0.0
    %2585 = vmatpush1.msra.mxu0 %v312
    %2586 = vmatprep.subr.mxu0 0.0
    %2587 = vmatpush1.msra.mxu0 %v313
    %2588 = vmatprep.subr.mxu0 0.0
    %2589 = vmatpush1.msra.mxu0 %v314
    %2590 = vmatprep.subr.mxu0 0.0
    %2591 = vmatpush1.msra.mxu0 %v315
    %2592 = vmatprep.subr.mxu0 0.0
    %2593 = vmatpush1.msra.mxu0 %v316
    %2594 = vmatprep.subr.mxu0 0.0
    %2595 = vmatpush1.msra.mxu0 %v317
    %2596 = vmatprep.subr.mxu0 0.0
    %2597 = vmatpush1.msra.mxu0 %v318
    %2598 = vmatprep.subr.mxu0 0.0
    %2599 = vmatpush1.msra.mxu0 %v319
    %2600 = vmatprep.subr.mxu0 0.0
    %2601 = vmatpush1.msra.mxu0 %v320
    %2602 = vmatprep.subr.mxu0 0.0
    %2603 = vmatpush1.msra.mxu0 %v321
    %2604 = vmatprep.subr.mxu0 0.0
    %2605 = vmatpush1.msra.mxu0 %v322
    %2606 = vmatprep.subr.mxu0 0.0
    %2607 = vmatpush1.msra.mxu0 %v323
    %2608 = vmatprep.subr.mxu0 0.0
    %2609 = vmatpush1.msra.mxu0 %v324
    %2610 = vmatprep.subr.mxu0 0.0
    %2611 = vmatpush1.msra.mxu0 %v325
    %2612 = vmatprep.subr.mxu0 0.0
    %2613 = vmatpush1.msra.mxu0 %v326
    %2614 = vmatprep.subr.mxu0 0.0
    %2615 = vmatpush1.msra.mxu0 %v327
    %2616 = vmatprep.subr.mxu0 0.0
    %2617 = vmatpush1.msra.mxu0 0.0
    %2618 = vmatprep.subr.mxu0 0.0
    %2619 = vmatpush1.msra.mxu0 0.0
    %2620 = vmatprep.subr.mxu0 0.0
    %2621 = vmatpush1.msra.mxu0 0.0
    %2622 = vmatprep.subr.mxu0 0.0
    %2623 = vmatpush1.msra.mxu0 0.0
    %2624 = vmatprep.subr.mxu0 0.0
    %2625 = vmatpush1.msra.mxu0 0.0
    %2626 = vmatprep.subr.mxu0 0.0
    %2627 = vmatpush1.msra.mxu0 0.0
    %2628 = vmatprep.subr.mxu0 0.0
    %2629 = vmatpush1.msra.mxu0 0.0
    %2630 = vmatprep.subr.mxu0 0.0
    %2631 = vmatpush1.msra.mxu0 0.0
    %2632 = vmatprep.subr.mxu0 0.0
    %2633 = vmatpush1.msra.mxu0 0.0
    %2634 = vmatprep.subr.mxu0 0.0
    %2635 = vmatpush1.msra.mxu0 0.0
    %2636 = vmatprep.subr.mxu0 0.0
    %2637 = vmatpush1.msra.mxu0 0.0
    %2638 = vmatprep.subr.mxu0 0.0
    %2639 = vmatpush1.msra.mxu0 0.0
    %2640 = vmatprep.subr.mxu0 0.0
    %2641 = vmatpush1.msra.mxu0 0.0
    %2642 = vmatprep.subr.mxu0 0.0
    %2643 = vmatpush1.msra.mxu0 0.0
    %2644 = vmatprep.subr.mxu0 0.0
    %2645 = vmatpush1.msra.mxu0 0.0
    %2646 = vmatprep.subr.mxu0 0.0
    %2647 = vmatpush1.msra.mxu0 0.0
    %2648 = vmatprep.mubr.f32.mxu0 0.0
    %2649 = vmatmul.mubr.f32.gmra.mrb[0].mxu0 %v2474
    %v2650 = vpop.f32.mrb[0].mxu0
    %v2651 = vadd.f32 0.0, %v2650
    %v2652 = vpop.f32.mrb[0].mxu0
    %2653 = vdwg.mxu0
    %2654 = vmatprep.subr.mxu0 0.0
    %2655 = vmatpush1.msra.mxu0 %v2568
    %2656 = vmatprep.subr.mxu0 0.0
    %2657 = vmatpush1.msra.mxu0 %v2569
    %2658 = vmatprep.subr.mxu0 0.0
    %2659 = vmatpush1.msra.mxu0 %v2570
    %2660 = vmatprep.subr.mxu0 0.0
    %2661 = vmatpush1.msra.mxu0 %v2571
    %2662 = vmatprep.subr.mxu0 0.0
    %2663 = vmatpush1.msra.mxu0 %v2572
    %2664 = vmatprep.subr.mxu0 0.0
    %2665 = vmatpush1.msra.mxu0 %v2573
    %2666 = vmatprep.subr.mxu0 0.0
    %2667 = vmatpush1.msra.mxu0 %v2574
    %2668 = vmatprep.subr.mxu0 0.0
    %2669 = vmatpush1.msra.mxu0 %v2575
    %2670 = vmatprep.subr.mxu0 0.0
    %2671 = vmatpush1.msra.mxu0 %v2576
    %2672 = vmatprep.subr.mxu0 0.0
    %2673 = vmatpush1.msra.mxu0 %v2577
    %2674 = vmatprep.subr.mxu0 0.0
    %2675 = vmatpush1.msra.mxu0 %v2578
    %2676 = vmatprep.subr.mxu0 0.0
    %2677 = vmatpush1.msra.mxu0 %v2579
    %2678 = vmatprep.subr.mxu0 0.0
    %2679 = vmatpush1.msra.mxu0 %v2580
    %2680 = vmatprep.subr.mxu0 0.0
    %2681 = vmatpush1.msra.mxu0 %v2581
    %2682 = vmatprep.subr.mxu0 0.0
    %2683 = vmatpush1.msra.mxu0 %v2582
    %2684 = vmatprep.subr.mxu0 0.0
    %2685 = vmatpush1.msra.mxu0 %v2583
    %2686 = vmatprep.subr.mxu0 0.0
    %2687 = vmatpush1.msra.mxu0 0.0
    %2688 = vmatprep.subr.mxu0 0.0
    %2689 = vmatpush1.msra.mxu0 0.0
    %2690 = vmatprep.subr.mxu0 0.0
    %2691 = vmatpush1.msra.mxu0 0.0
    %2692 = vmatprep.subr.mxu0 0.0
    %2693 = vmatpush1.msra.mxu0 0.0
    %2694 = vmatprep.subr.mxu0 0.0
    %2695 = vmatpush1.msra.mxu0 0.0
    %2696 = vmatprep.subr.mxu0 0.0
    %2697 = vmatpush1.msra.mxu0 0.0
    %2698 = vmatprep.subr.mxu0 0.0
    %2699 = vmatpush1.msra.mxu0 0.0
    %2700 = vmatprep.subr.mxu0 0.0
    %2701 = vmatpush1.msra.mxu0 0.0
    %2702 = vmatprep.subr.mxu0 0.0
    %2703 = vmatpush1.msra.mxu0 0.0
    %2704 = vmatprep.subr.mxu0 0.0
    %2705 = vmatpush1.msra.mxu0 0.0
    %2706 = vmatprep.subr.mxu0 0.0
    %2707 = vmatpush1.msra.mxu0 0.0
    %2708 = vmatprep.subr.mxu0 0.0
    %2709 = vmatpush1.msra.mxu0 0.0
    %2710 = vmatprep.subr.mxu0 0.0
    %2711 = vmatpush1.msra.mxu0 0.0
    %2712 = vmatprep.subr.mxu0 0.0
    %2713 = vmatpush1.msra.mxu0 0.0
    %2714 = vmatprep.subr.mxu0 0.0
    %2715 = vmatpush1.msra.mxu0 0.0
    %2716 = vmatprep.subr.mxu0 0.0
    %2717 = vmatpush1.msra.mxu0 0.0
    %2718 = vmatprep.mubr.f32.mxu0 0.0
    %2719 = vmatmul.mubr.f32.gmra.mrb[0].mxu0 %v2567
    %v2720 = vpop.f32.mrb[0].mxu0
    %v2721 = vadd.f32 %v2651, %v2720
    %v2722 = vpop.f32.mrb[0].mxu0
    %2723 = vdwg.mxu0
    %v2724 = vadd.f32 %v2721, %v333
    %v2725 = vxor.u32 %v2724, 2147483648
    %v2726 = vmul.f32 %v2725, 1.442695
    %v2727 = vpow.pop %v2726
    %v2728 = vadd.f32 %v2727, 1.0
    %v2729 = vrcp.pop %v2728
    %v2730 = vmul.f32 1.0, %v2729
    %v2731 = vtanh.pop %v2724
    %2732 = vrot.lane.b32.xlu0 %v2730, 96
    %v2733 = vpop.permute.xlu0 %2732
    %2734 = vrot.lane.b32.xlu0 %v2731, 64
    %v2735 = vpop.permute.xlu0 %2734
    %2736 = vrot.lane.b32.xlu0 %v2730, 32
    %v2737 = vpop.permute.xlu0 %2736
    %v2738 = vmul.f32 %v2733, %v2472
    %v2739 = vmul.f32 %v2730, %v2735
    %v2740 = vadd.f32 %v2738, %v2739
    %v2741 = vtanh.pop %v2740
    %v2742 = vmul.f32 %v2737, %v2741
    %s2743 = scalar_lea.vmem %s7, 64
    %2744 = vst [vmem:[%s2743] sm:$0xff] %v2742
    %s2745 = scalar_lea.vmem [#allocation2], 72
    %v2746 = vld [vmem:[%s2745] sm:$0xff]
    %2747 = vmatprep.subr.mxu0 0.0
    %2748 = vmatpush1.msra.mxu0 %v296
    %2749 = vmatprep.subr.mxu0 0.0
    %2750 = vmatpush1.msra.mxu0 %v297
    %2751 = vmatprep.subr.mxu0 0.0
    %2752 = vmatpush1.msra.mxu0 %v298
    %2753 = vmatprep.subr.mxu0 0.0
    %2754 = vmatpush1.msra.mxu0 %v299
    %2755 = vmatprep.subr.mxu0 0.0
    %2756 = vmatpush1.msra.mxu0 %v300
    %2757 = vmatprep.subr.mxu0 0.0
    %2758 = vmatpush1.msra.mxu0 %v301
    %2759 = vmatprep.subr.mxu0 0.0
    %2760 = vmatpush1.msra.mxu0 %v302
    %2761 = vmatprep.subr.mxu0 0.0
    %2762 = vmatpush1.msra.mxu0 %v303
    %2763 = vmatprep.subr.mxu0 0.0
    %2764 = vmatpush1.msra.mxu0 %v304
    %2765 = vmatprep.subr.mxu0 0.0
    %2766 = vmatpush1.msra.mxu0 %v305
    %2767 = vmatprep.subr.mxu0 0.0
    %2768 = vmatpush1.msra.mxu0 %v306
    %2769 = vmatprep.subr.mxu0 0.0
    %2770 = vmatpush1.msra.mxu0 %v307
    %2771 = vmatprep.subr.mxu0 0.0
    %2772 = vmatpush1.msra.mxu0 %v308
    %2773 = vmatprep.subr.mxu0 0.0
    %2774 = vmatpush1.msra.mxu0 %v309
    %2775 = vmatprep.subr.mxu0 0.0
    %2776 = vmatpush1.msra.mxu0 %v310
    %2777 = vmatprep.subr.mxu0 0.0
    %2778 = vmatpush1.msra.mxu0 %v311
    %2779 = vmatprep.subr.mxu0 0.0
    %2780 = vmatpush1.msra.mxu0 0.0
    %2781 = vmatprep.subr.mxu0 0.0
    %2782 = vmatpush1.msra.mxu0 0.0
    %2783 = vmatprep.subr.mxu0 0.0
    %2784 = vmatpush1.msra.mxu0 0.0
    %2785 = vmatprep.subr.mxu0 0.0
    %2786 = vmatpush1.msra.mxu0 0.0
    %2787 = vmatprep.subr.mxu0 0.0
    %2788 = vmatpush1.msra.mxu0 0.0
    %2789 = vmatprep.subr.mxu0 0.0
    %2790 = vmatpush1.msra.mxu0 0.0
    %2791 = vmatprep.subr.mxu0 0.0
    %2792 = vmatpush1.msra.mxu0 0.0
    %2793 = vmatprep.subr.mxu0 0.0
    %2794 = vmatpush1.msra.mxu0 0.0
    %2795 = vmatprep.subr.mxu0 0.0
    %2796 = vmatpush1.msra.mxu0 0.0
    %2797 = vmatprep.subr.mxu0 0.0
    %2798 = vmatpush1.msra.mxu0 0.0
    %2799 = vmatprep.subr.mxu0 0.0
    %2800 = vmatpush1.msra.mxu0 0.0
    %2801 = vmatprep.subr.mxu0 0.0
    %2802 = vmatpush1.msra.mxu0 0.0
    %2803 = vmatprep.subr.mxu0 0.0
    %2804 = vmatpush1.msra.mxu0 0.0
    %2805 = vmatprep.subr.mxu0 0.0
    %2806 = vmatpush1.msra.mxu0 0.0
    %2807 = vmatprep.subr.mxu0 0.0
    %2808 = vmatpush1.msra.mxu0 0.0
    %2809 = vmatprep.subr.mxu0 0.0
    %2810 = vmatpush1.msra.mxu0 0.0
    %2811 = vmatprep.mubr.f32.mxu0 0.0
    %2812 = vmatmul.mubr.f32.gmra.mrb[0].mxu0 %v2567
    %v2813 = vpop.f32.mrb[0].mxu0
    %v2814 = vadd.f32 0.0, %v2813
    %v2815 = vpop.f32.mrb[0].mxu0
    %2816 = vdwg.mxu0
    %v2817 = vadd.f32 %v2746, %v2814
    %v2818 = vxor.u32 %v2817, 2147483648
    %v2819 = vmul.f32 %v2818, 1.442695
    %v2820 = vpow.pop %v2819
    %v2821 = vadd.f32 %v2820, 1.0
    %v2822 = vrcp.pop %v2821
    %v2823 = vmul.f32 1.0, %v2822
    %v2824 = vtanh.pop %v2817
    %2825 = vrot.lane.b32.xlu0 %v2823, 96
    %v2826 = vpop.permute.xlu0 %2825
    %2827 = vrot.lane.b32.xlu0 %v2824, 64
    %v2828 = vpop.permute.xlu0 %2827
    %2829 = vrot.lane.b32.xlu0 %v2823, 32
    %v2830 = vpop.permute.xlu0 %2829
    %v2831 = vmul.f32 %v2826, %v2565
    %v2832 = vmul.f32 %v2823, %v2828
    %v2833 = vadd.f32 %v2831, %v2832
    %v2834 = vtanh.pop %v2833
    %v2835 = vmul.f32 %v2830, %v2834
    %v2836 = vld [vmem:[%s4] sm:$0xff]
    %v2837 = vld [vmem:[%s4 + $0x8] sm:$0xff]
    %v2838 = vld [vmem:[%s4 + $0x10] sm:$0xff]
    %v2839 = vld [vmem:[%s4 + $0x18] sm:$0xff]
    %v2840 = vld [vmem:[%s4 + $0x20] sm:$0xff]
    %v2841 = vld [vmem:[%s4 + $0x28] sm:$0xff]
    %v2842 = vld [vmem:[%s4 + $0x30] sm:$0xff]
    %v2843 = vld [vmem:[%s4 + $0x38] sm:$0xff]
    %v2844 = vld [vmem:[%s4 + $0x40] sm:$0xff]
    %v2845 = vld [vmem:[%s4 + $0x48] sm:$0xff]
    %v2846 = vld [vmem:[%s4 + $0x50] sm:$0xff]
    %v2847 = vld [vmem:[%s4 + $0x58] sm:$0xff]
    %v2848 = vld [vmem:[%s4 + $0x60] sm:$0xff]
    %v2849 = vld [vmem:[%s4 + $0x68] sm:$0xff]
    %v2850 = vld [vmem:[%s4 + $0x70] sm:$0xff]
    %v2851 = vld [vmem:[%s4 + $0x78] sm:$0xff]
    %2852 = vmatprep.subr.mxu0 0.0
    %2853 = vmatpush1.msra.mxu0 %v312
    %2854 = vmatprep.subr.mxu0 0.0
    %2855 = vmatpush1.msra.mxu0 %v313
    %2856 = vmatprep.subr.mxu0 0.0
    %2857 = vmatpush1.msra.mxu0 %v314
    %2858 = vmatprep.subr.mxu0 0.0
    %2859 = vmatpush1.msra.mxu0 %v315
    %2860 = vmatprep.subr.mxu0 0.0
    %2861 = vmatpush1.msra.mxu0 %v316
    %2862 = vmatprep.subr.mxu0 0.0
    %2863 = vmatpush1.msra.mxu0 %v317
    %2864 = vmatprep.subr.mxu0 0.0
    %2865 = vmatpush1.msra.mxu0 %v318
    %2866 = vmatprep.subr.mxu0 0.0
    %2867 = vmatpush1.msra.mxu0 %v319
    %2868 = vmatprep.subr.mxu0 0.0
    %2869 = vmatpush1.msra.mxu0 %v320
    %2870 = vmatprep.subr.mxu0 0.0
    %2871 = vmatpush1.msra.mxu0 %v321
    %2872 = vmatprep.subr.mxu0 0.0
    %2873 = vmatpush1.msra.mxu0 %v322
    %2874 = vmatprep.subr.mxu0 0.0
    %2875 = vmatpush1.msra.mxu0 %v323
    %2876 = vmatprep.subr.mxu0 0.0
    %2877 = vmatpush1.msra.mxu0 %v324
    %2878 = vmatprep.subr.mxu0 0.0
    %2879 = vmatpush1.msra.mxu0 %v325
    %2880 = vmatprep.subr.mxu0 0.0
    %2881 = vmatpush1.msra.mxu0 %v326
    %2882 = vmatprep.subr.mxu0 0.0
    %2883 = vmatpush1.msra.mxu0 %v327
    %2884 = vmatprep.subr.mxu0 0.0
    %2885 = vmatpush1.msra.mxu0 0.0
    %2886 = vmatprep.subr.mxu0 0.0
    %2887 = vmatpush1.msra.mxu0 0.0
    %2888 = vmatprep.subr.mxu0 0.0
    %2889 = vmatpush1.msra.mxu0 0.0
    %2890 = vmatprep.subr.mxu0 0.0
    %2891 = vmatpush1.msra.mxu0 0.0
    %2892 = vmatprep.subr.mxu0 0.0
    %2893 = vmatpush1.msra.mxu0 0.0
    %2894 = vmatprep.subr.mxu0 0.0
    %2895 = vmatpush1.msra.mxu0 0.0
    %2896 = vmatprep.subr.mxu0 0.0
    %2897 = vmatpush1.msra.mxu0 0.0
    %2898 = vmatprep.subr.mxu0 0.0
    %2899 = vmatpush1.msra.mxu0 0.0
    %2900 = vmatprep.subr.mxu0 0.0
    %2901 = vmatpush1.msra.mxu0 0.0
    %2902 = vmatprep.subr.mxu0 0.0
    %2903 = vmatpush1.msra.mxu0 0.0
    %2904 = vmatprep.subr.mxu0 0.0
    %2905 = vmatpush1.msra.mxu0 0.0
    %2906 = vmatprep.subr.mxu0 0.0
    %2907 = vmatpush1.msra.mxu0 0.0
    %2908 = vmatprep.subr.mxu0 0.0
    %2909 = vmatpush1.msra.mxu0 0.0
    %2910 = vmatprep.subr.mxu0 0.0
    %2911 = vmatpush1.msra.mxu0 0.0
    %2912 = vmatprep.subr.mxu0 0.0
    %2913 = vmatpush1.msra.mxu0 0.0
    %2914 = vmatprep.subr.mxu0 0.0
    %2915 = vmatpush1.msra.mxu0 0.0
    %2916 = vmatprep.mubr.f32.mxu0 0.0
    %2917 = vmatmul.mubr.f32.gmra.mrb[0].mxu0 %v2742
    %v2918 = vpop.f32.mrb[0].mxu0
    %v2919 = vadd.f32 0.0, %v2918
    %v2920 = vpop.f32.mrb[0].mxu0
    %2921 = vdwg.mxu0
    %2922 = vmatprep.subr.mxu0 0.0
    %2923 = vmatpush1.msra.mxu0 %v2836
    %2924 = vmatprep.subr.mxu0 0.0
    %2925 = vmatpush1.msra.mxu0 %v2837
    %2926 = vmatprep.subr.mxu0 0.0
    %2927 = vmatpush1.msra.mxu0 %v2838
    %2928 = vmatprep.subr.mxu0 0.0
    %2929 = vmatpush1.msra.mxu0 %v2839
    %2930 = vmatprep.subr.mxu0 0.0
    %2931 = vmatpush1.msra.mxu0 %v2840
    %2932 = vmatprep.subr.mxu0 0.0
    %2933 = vmatpush1.msra.mxu0 %v2841
    %2934 = vmatprep.subr.mxu0 0.0
    %2935 = vmatpush1.msra.mxu0 %v2842
    %2936 = vmatprep.subr.mxu0 0.0
    %2937 = vmatpush1.msra.mxu0 %v2843
    %2938 = vmatprep.subr.mxu0 0.0
    %2939 = vmatpush1.msra.mxu0 %v2844
    %2940 = vmatprep.subr.mxu0 0.0
    %2941 = vmatpush1.msra.mxu0 %v2845
    %2942 = vmatprep.subr.mxu0 0.0
    %2943 = vmatpush1.msra.mxu0 %v2846
    %2944 = vmatprep.subr.mxu0 0.0
    %2945 = vmatpush1.msra.mxu0 %v2847
    %2946 = vmatprep.subr.mxu0 0.0
    %2947 = vmatpush1.msra.mxu0 %v2848
    %2948 = vmatprep.subr.mxu0 0.0
    %2949 = vmatpush1.msra.mxu0 %v2849
    %2950 = vmatprep.subr.mxu0 0.0
    %2951 = vmatpush1.msra.mxu0 %v2850
    %2952 = vmatprep.subr.mxu0 0.0
    %2953 = vmatpush1.msra.mxu0 %v2851
    %2954 = vmatprep.subr.mxu0 0.0
    %2955 = vmatpush1.msra.mxu0 0.0
    %2956 = vmatprep.subr.mxu0 0.0
    %2957 = vmatpush1.msra.mxu0 0.0
    %2958 = vmatprep.subr.mxu0 0.0
    %2959 = vmatpush1.msra.mxu0 0.0
    %2960 = vmatprep.subr.mxu0 0.0
    %2961 = vmatpush1.msra.mxu0 0.0
    %2962 = vmatprep.subr.mxu0 0.0
    %2963 = vmatpush1.msra.mxu0 0.0
    %2964 = vmatprep.subr.mxu0 0.0
    %2965 = vmatpush1.msra.mxu0 0.0
    %2966 = vmatprep.subr.mxu0 0.0
    %2967 = vmatpush1.msra.mxu0 0.0
    %2968 = vmatprep.subr.mxu0 0.0
    %2969 = vmatpush1.msra.mxu0 0.0
    %2970 = vmatprep.subr.mxu0 0.0
    %2971 = vmatpush1.msra.mxu0 0.0
    %2972 = vmatprep.subr.mxu0 0.0
    %2973 = vmatpush1.msra.mxu0 0.0
    %2974 = vmatprep.subr.mxu0 0.0
    %2975 = vmatpush1.msra.mxu0 0.0
    %2976 = vmatprep.subr.mxu0 0.0
    %2977 = vmatpush1.msra.mxu0 0.0
    %2978 = vmatprep.subr.mxu0 0.0
    %2979 = vmatpush1.msra.mxu0 0.0
    %2980 = vmatprep.subr.mxu0 0.0
    %2981 = vmatpush1.msra.mxu0 0.0
    %2982 = vmatprep.subr.mxu0 0.0
    %2983 = vmatpush1.msra.mxu0 0.0
    %2984 = vmatprep.subr.mxu0 0.0
    %2985 = vmatpush1.msra.mxu0 0.0
    %2986 = vmatprep.mubr.f32.mxu0 0.0
    %2987 = vmatmul.mubr.f32.gmra.mrb[0].mxu0 %v2835
    %v2988 = vpop.f32.mrb[0].mxu0
    %v2989 = vadd.f32 %v2919, %v2988
    %v2990 = vpop.f32.mrb[0].mxu0
    %2991 = vdwg.mxu0
    %v2992 = vadd.f32 %v2989, %v333
    %v2993 = vxor.u32 %v2992, 2147483648
    %v2994 = vmul.f32 %v2993, 1.442695
    %v2995 = vpow.pop %v2994
    %v2996 = vadd.f32 %v2995, 1.0
    %v2997 = vrcp.pop %v2996
    %v2998 = vmul.f32 1.0, %v2997
    %v2999 = vtanh.pop %v2992
    %3000 = vrot.lane.b32.xlu0 %v2998, 96
    %v3001 = vpop.permute.xlu0 %3000
    %3002 = vrot.lane.b32.xlu0 %v2999, 64
    %v3003 = vpop.permute.xlu0 %3002
    %3004 = vrot.lane.b32.xlu0 %v2998, 32
    %v3005 = vpop.permute.xlu0 %3004
    %v3006 = vmul.f32 %v3001, %v2740
    %v3007 = vmul.f32 %v2998, %v3003
    %v3008 = vadd.f32 %v3006, %v3007
    %v3009 = vtanh.pop %v3008
    %v3010 = vmul.f32 %v3005, %v3009
    %s3011 = scalar_lea.vmem %s7, 72
    %3012 = vst [vmem:[%s3011] sm:$0xff] %v3010
    %s3013 = scalar_lea.vmem [#allocation2], 80
    %v3014 = vld [vmem:[%s3013] sm:$0xff]
    %3015 = vmatprep.subr.mxu0 0.0
    %3016 = vmatpush1.msra.mxu0 %v296
    %3017 = vmatprep.subr.mxu0 0.0
    %3018 = vmatpush1.msra.mxu0 %v297
    %3019 = vmatprep.subr.mxu0 0.0
    %3020 = vmatpush1.msra.mxu0 %v298
    %3021 = vmatprep.subr.mxu0 0.0
    %3022 = vmatpush1.msra.mxu0 %v299
    %3023 = vmatprep.subr.mxu0 0.0
    %3024 = vmatpush1.msra.mxu0 %v300
    %3025 = vmatprep.subr.mxu0 0.0
    %3026 = vmatpush1.msra.mxu0 %v301
    %3027 = vmatprep.subr.mxu0 0.0
    %3028 = vmatpush1.msra.mxu0 %v302
    %3029 = vmatprep.subr.mxu0 0.0
    %3030 = vmatpush1.msra.mxu0 %v303
    %3031 = vmatprep.subr.mxu0 0.0
    %3032 = vmatpush1.msra.mxu0 %v304
    %3033 = vmatprep.subr.mxu0 0.0
    %3034 = vmatpush1.msra.mxu0 %v305
    %3035 = vmatprep.subr.mxu0 0.0
    %3036 = vmatpush1.msra.mxu0 %v306
    %3037 = vmatprep.subr.mxu0 0.0
    %3038 = vmatpush1.msra.mxu0 %v307
    %3039 = vmatprep.subr.mxu0 0.0
    %3040 = vmatpush1.msra.mxu0 %v308
    %3041 = vmatprep.subr.mxu0 0.0
    %3042 = vmatpush1.msra.mxu0 %v309
    %3043 = vmatprep.subr.mxu0 0.0
    %3044 = vmatpush1.msra.mxu0 %v310
    %3045 = vmatprep.subr.mxu0 0.0
    %3046 = vmatpush1.msra.mxu0 %v311
    %3047 = vmatprep.subr.mxu0 0.0
    %3048 = vmatpush1.msra.mxu0 0.0
    %3049 = vmatprep.subr.mxu0 0.0
    %3050 = vmatpush1.msra.mxu0 0.0
    %3051 = vmatprep.subr.mxu0 0.0
    %3052 = vmatpush1.msra.mxu0 0.0
    %3053 = vmatprep.subr.mxu0 0.0
    %3054 = vmatpush1.msra.mxu0 0.0
    %3055 = vmatprep.subr.mxu0 0.0
    %3056 = vmatpush1.msra.mxu0 0.0
    %3057 = vmatprep.subr.mxu0 0.0
    %3058 = vmatpush1.msra.mxu0 0.0
    %3059 = vmatprep.subr.mxu0 0.0
    %3060 = vmatpush1.msra.mxu0 0.0
    %3061 = vmatprep.subr.mxu0 0.0
    %3062 = vmatpush1.msra.mxu0 0.0
    %3063 = vmatprep.subr.mxu0 0.0
    %3064 = vmatpush1.msra.mxu0 0.0
    %3065 = vmatprep.subr.mxu0 0.0
    %3066 = vmatpush1.msra.mxu0 0.0
    %3067 = vmatprep.subr.mxu0 0.0
    %3068 = vmatpush1.msra.mxu0 0.0
    %3069 = vmatprep.subr.mxu0 0.0
    %3070 = vmatpush1.msra.mxu0 0.0
    %3071 = vmatprep.subr.mxu0 0.0
    %3072 = vmatpush1.msra.mxu0 0.0
    %3073 = vmatprep.subr.mxu0 0.0
    %3074 = vmatpush1.msra.mxu0 0.0
    %3075 = vmatprep.subr.mxu0 0.0
    %3076 = vmatpush1.msra.mxu0 0.0
    %3077 = vmatprep.subr.mxu0 0.0
    %3078 = vmatpush1.msra.mxu0 0.0
    %3079 = vmatprep.mubr.f32.mxu0 0.0
    %3080 = vmatmul.mubr.f32.gmra.mrb[0].mxu0 %v2835
    %v3081 = vpop.f32.mrb[0].mxu0
    %v3082 = vadd.f32 0.0, %v3081
    %v3083 = vpop.f32.mrb[0].mxu0
    %3084 = vdwg.mxu0
    %v3085 = vadd.f32 %v3014, %v3082
    %v3086 = vxor.u32 %v3085, 2147483648
    %v3087 = vmul.f32 %v3086, 1.442695
    %v3088 = vpow.pop %v3087
    %v3089 = vadd.f32 %v3088, 1.0
    %v3090 = vrcp.pop %v3089
    %v3091 = vmul.f32 1.0, %v3090
    %v3092 = vtanh.pop %v3085
    %3093 = vrot.lane.b32.xlu0 %v3091, 96
    %v3094 = vpop.permute.xlu0 %3093
    %3095 = vrot.lane.b32.xlu0 %v3092, 64
    %v3096 = vpop.permute.xlu0 %3095
    %3097 = vrot.lane.b32.xlu0 %v3091, 32
    %v3098 = vpop.permute.xlu0 %3097
    %v3099 = vmul.f32 %v3094, %v2833
    %v3100 = vmul.f32 %v3091, %v3096
    %v3101 = vadd.f32 %v3099, %v3100
    %v3102 = vtanh.pop %v3101
    %v3103 = vmul.f32 %v3098, %v3102
    %v3104 = vld [vmem:[%s4] sm:$0xff]
    %v3105 = vld [vmem:[%s4 + $0x8] sm:$0xff]
    %v3106 = vld [vmem:[%s4 + $0x10] sm:$0xff]
    %v3107 = vld [vmem:[%s4 + $0x18] sm:$0xff]
    %v3108 = vld [vmem:[%s4 + $0x20] sm:$0xff]
    %v3109 = vld [vmem:[%s4 + $0x28] sm:$0xff]
    %v3110 = vld [vmem:[%s4 + $0x30] sm:$0xff]
    %v3111 = vld [vmem:[%s4 + $0x38] sm:$0xff]
    %v3112 = vld [vmem:[%s4 + $0x40] sm:$0xff]
    %v3113 = vld [vmem:[%s4 + $0x48] sm:$0xff]
    %v3114 = vld [vmem:[%s4 + $0x50] sm:$0xff]
    %v3115 = vld [vmem:[%s4 + $0x58] sm:$0xff]
    %v3116 = vld [vmem:[%s4 + $0x60] sm:$0xff]
    %v3117 = vld [vmem:[%s4 + $0x68] sm:$0xff]
    %v3118 = vld [vmem:[%s4 + $0x70] sm:$0xff]
    %v3119 = vld [vmem:[%s4 + $0x78] sm:$0xff]
    %3120 = vmatprep.subr.mxu0 0.0
    %3121 = vmatpush1.msra.mxu0 %v312
    %3122 = vmatprep.subr.mxu0 0.0
    %3123 = vmatpush1.msra.mxu0 %v313
    %3124 = vmatprep.subr.mxu0 0.0
    %3125 = vmatpush1.msra.mxu0 %v314
    %3126 = vmatprep.subr.mxu0 0.0
    %3127 = vmatpush1.msra.mxu0 %v315
    %3128 = vmatprep.subr.mxu0 0.0
    %3129 = vmatpush1.msra.mxu0 %v316
    %3130 = vmatprep.subr.mxu0 0.0
    %3131 = vmatpush1.msra.mxu0 %v317
    %3132 = vmatprep.subr.mxu0 0.0
    %3133 = vmatpush1.msra.mxu0 %v318
    %3134 = vmatprep.subr.mxu0 0.0
    %3135 = vmatpush1.msra.mxu0 %v319
    %3136 = vmatprep.subr.mxu0 0.0
    %3137 = vmatpush1.msra.mxu0 %v320
    %3138 = vmatprep.subr.mxu0 0.0
    %3139 = vmatpush1.msra.mxu0 %v321
    %3140 = vmatprep.subr.mxu0 0.0
    %3141 = vmatpush1.msra.mxu0 %v322
    %3142 = vmatprep.subr.mxu0 0.0
    %3143 = vmatpush1.msra.mxu0 %v323
    %3144 = vmatprep.subr.mxu0 0.0
    %3145 = vmatpush1.msra.mxu0 %v324
    %3146 = vmatprep.subr.mxu0 0.0
    %3147 = vmatpush1.msra.mxu0 %v325
    %3148 = vmatprep.subr.mxu0 0.0
    %3149 = vmatpush1.msra.mxu0 %v326
    %3150 = vmatprep.subr.mxu0 0.0
    %3151 = vmatpush1.msra.mxu0 %v327
    %3152 = vmatprep.subr.mxu0 0.0
    %3153 = vmatpush1.msra.mxu0 0.0
    %3154 = vmatprep.subr.mxu0 0.0
    %3155 = vmatpush1.msra.mxu0 0.0
    %3156 = vmatprep.subr.mxu0 0.0
    %3157 = vmatpush1.msra.mxu0 0.0
    %3158 = vmatprep.subr.mxu0 0.0
    %3159 = vmatpush1.msra.mxu0 0.0
    %3160 = vmatprep.subr.mxu0 0.0
    %3161 = vmatpush1.msra.mxu0 0.0
    %3162 = vmatprep.subr.mxu0 0.0
    %3163 = vmatpush1.msra.mxu0 0.0
    %3164 = vmatprep.subr.mxu0 0.0
    %3165 = vmatpush1.msra.mxu0 0.0
    %3166 = vmatprep.subr.mxu0 0.0
    %3167 = vmatpush1.msra.mxu0 0.0
    %3168 = vmatprep.subr.mxu0 0.0
    %3169 = vmatpush1.msra.mxu0 0.0
    %3170 = vmatprep.subr.mxu0 0.0
    %3171 = vmatpush1.msra.mxu0 0.0
    %3172 = vmatprep.subr.mxu0 0.0
    %3173 = vmatpush1.msra.mxu0 0.0
    %3174 = vmatprep.subr.mxu0 0.0
    %3175 = vmatpush1.msra.mxu0 0.0
    %3176 = vmatprep.subr.mxu0 0.0
    %3177 = vmatpush1.msra.mxu0 0.0
    %3178 = vmatprep.subr.mxu0 0.0
    %3179 = vmatpush1.msra.mxu0 0.0
    %3180 = vmatprep.subr.mxu0 0.0
    %3181 = vmatpush1.msra.mxu0 0.0
    %3182 = vmatprep.subr.mxu0 0.0
    %3183 = vmatpush1.msra.mxu0 0.0
    %3184 = vmatprep.mubr.f32.mxu0 0.0
    %3185 = vmatmul.mubr.f32.gmra.mrb[0].mxu0 %v3010
    %v3186 = vpop.f32.mrb[0].mxu0
    %v3187 = vadd.f32 0.0, %v3186
    %v3188 = vpop.f32.mrb[0].mxu0
    %3189 = vdwg.mxu0
    %3190 = vmatprep.subr.mxu0 0.0
    %3191 = vmatpush1.msra.mxu0 %v3104
    %3192 = vmatprep.subr.mxu0 0.0
    %3193 = vmatpush1.msra.mxu0 %v3105
    %3194 = vmatprep.subr.mxu0 0.0
    %3195 = vmatpush1.msra.mxu0 %v3106
    %3196 = vmatprep.subr.mxu0 0.0
    %3197 = vmatpush1.msra.mxu0 %v3107
    %3198 = vmatprep.subr.mxu0 0.0
    %3199 = vmatpush1.msra.mxu0 %v3108
    %3200 = vmatprep.subr.mxu0 0.0
    %3201 = vmatpush1.msra.mxu0 %v3109
    %3202 = vmatprep.subr.mxu0 0.0
    %3203 = vmatpush1.msra.mxu0 %v3110
    %3204 = vmatprep.subr.mxu0 0.0
    %3205 = vmatpush1.msra.mxu0 %v3111
    %3206 = vmatprep.subr.mxu0 0.0
    %3207 = vmatpush1.msra.mxu0 %v3112
    %3208 = vmatprep.subr.mxu0 0.0
    %3209 = vmatpush1.msra.mxu0 %v3113
    %3210 = vmatprep.subr.mxu0 0.0
    %3211 = vmatpush1.msra.mxu0 %v3114
    %3212 = vmatprep.subr.mxu0 0.0
    %3213 = vmatpush1.msra.mxu0 %v3115
    %3214 = vmatprep.subr.mxu0 0.0
    %3215 = vmatpush1.msra.mxu0 %v3116
    %3216 = vmatprep.subr.mxu0 0.0
    %3217 = vmatpush1.msra.mxu0 %v3117
    %3218 = vmatprep.subr.mxu0 0.0
    %3219 = vmatpush1.msra.mxu0 %v3118
    %3220 = vmatprep.subr.mxu0 0.0
    %3221 = vmatpush1.msra.mxu0 %v3119
    %3222 = vmatprep.subr.mxu0 0.0
    %3223 = vmatpush1.msra.mxu0 0.0
    %3224 = vmatprep.subr.mxu0 0.0
    %3225 = vmatpush1.msra.mxu0 0.0
    %3226 = vmatprep.subr.mxu0 0.0
    %3227 = vmatpush1.msra.mxu0 0.0
    %3228 = vmatprep.subr.mxu0 0.0
    %3229 = vmatpush1.msra.mxu0 0.0
    %3230 = vmatprep.subr.mxu0 0.0
    %3231 = vmatpush1.msra.mxu0 0.0
    %3232 = vmatprep.subr.mxu0 0.0
    %3233 = vmatpush1.msra.mxu0 0.0
    %3234 = vmatprep.subr.mxu0 0.0
    %3235 = vmatpush1.msra.mxu0 0.0
    %3236 = vmatprep.subr.mxu0 0.0
    %3237 = vmatpush1.msra.mxu0 0.0
    %3238 = vmatprep.subr.mxu0 0.0
    %3239 = vmatpush1.msra.mxu0 0.0
    %3240 = vmatprep.subr.mxu0 0.0
    %3241 = vmatpush1.msra.mxu0 0.0
    %3242 = vmatprep.subr.mxu0 0.0
    %3243 = vmatpush1.msra.mxu0 0.0
    %3244 = vmatprep.subr.mxu0 0.0
    %3245 = vmatpush1.msra.mxu0 0.0
    %3246 = vmatprep.subr.mxu0 0.0
    %3247 = vmatpush1.msra.mxu0 0.0
    %3248 = vmatprep.subr.mxu0 0.0
    %3249 = vmatpush1.msra.mxu0 0.0
    %3250 = vmatprep.subr.mxu0 0.0
    %3251 = vmatpush1.msra.mxu0 0.0
    %3252 = vmatprep.subr.mxu0 0.0
    %3253 = vmatpush1.msra.mxu0 0.0
    %3254 = vmatprep.mubr.f32.mxu0 0.0
    %3255 = vmatmul.mubr.f32.gmra.mrb[0].mxu0 %v3103
    %v3256 = vpop.f32.mrb[0].mxu0
    %v3257 = vadd.f32 %v3187, %v3256
    %v3258 = vpop.f32.mrb[0].mxu0
    %3259 = vdwg.mxu0
    %v3260 = vadd.f32 %v3257, %v333
    %v3261 = vxor.u32 %v3260, 2147483648
    %v3262 = vmul.f32 %v3261, 1.442695
    %v3263 = vpow.pop %v3262
    %v3264 = vadd.f32 %v3263, 1.0
    %v3265 = vrcp.pop %v3264
    %v3266 = vmul.f32 1.0, %v3265
    %v3267 = vtanh.pop %v3260
    %3268 = vrot.lane.b32.xlu0 %v3266, 96
    %v3269 = vpop.permute.xlu0 %3268
    %3270 = vrot.lane.b32.xlu0 %v3267, 64
    %v3271 = vpop.permute.xlu0 %3270
    %3272 = vrot.lane.b32.xlu0 %v3266, 32
    %v3273 = vpop.permute.xlu0 %3272
    %v3274 = vmul.f32 %v3269, %v3008
    %v3275 = vmul.f32 %v3266, %v3271
    %v3276 = vadd.f32 %v3274, %v3275
    %v3277 = vtanh.pop %v3276
    %v3278 = vmul.f32 %v3273, %v3277
    %s3279 = scalar_lea.vmem %s7, 80
    %3280 = vst [vmem:[%s3279] sm:$0xff] %v3278
    %s3281 = scalar_lea.vmem [#allocation2], 88
    %v3282 = vld [vmem:[%s3281] sm:$0xff]
    %3283 = vmatprep.subr.mxu0 0.0
    %3284 = vmatpush1.msra.mxu0 %v296
    %3285 = vmatprep.subr.mxu0 0.0
    %3286 = vmatpush1.msra.mxu0 %v297
    %3287 = vmatprep.subr.mxu0 0.0
    %3288 = vmatpush1.msra.mxu0 %v298
    %3289 = vmatprep.subr.mxu0 0.0
    %3290 = vmatpush1.msra.mxu0 %v299
    %3291 = vmatprep.subr.mxu0 0.0
    %3292 = vmatpush1.msra.mxu0 %v300
    %3293 = vmatprep.subr.mxu0 0.0
    %3294 = vmatpush1.msra.mxu0 %v301
    %3295 = vmatprep.subr.mxu0 0.0
    %3296 = vmatpush1.msra.mxu0 %v302
    %3297 = vmatprep.subr.mxu0 0.0
    %3298 = vmatpush1.msra.mxu0 %v303
    %3299 = vmatprep.subr.mxu0 0.0
    %3300 = vmatpush1.msra.mxu0 %v304
    %3301 = vmatprep.subr.mxu0 0.0
    %3302 = vmatpush1.msra.mxu0 %v305
    %3303 = vmatprep.subr.mxu0 0.0
    %3304 = vmatpush1.msra.mxu0 %v306
    %3305 = vmatprep.subr.mxu0 0.0
    %3306 = vmatpush1.msra.mxu0 %v307
    %3307 = vmatprep.subr.mxu0 0.0
    %3308 = vmatpush1.msra.mxu0 %v308
    %3309 = vmatprep.subr.mxu0 0.0
    %3310 = vmatpush1.msra.mxu0 %v309
    %3311 = vmatprep.subr.mxu0 0.0
    %3312 = vmatpush1.msra.mxu0 %v310
    %3313 = vmatprep.subr.mxu0 0.0
    %3314 = vmatpush1.msra.mxu0 %v311
    %3315 = vmatprep.subr.mxu0 0.0
    %3316 = vmatpush1.msra.mxu0 0.0
    %3317 = vmatprep.subr.mxu0 0.0
    %3318 = vmatpush1.msra.mxu0 0.0
    %3319 = vmatprep.subr.mxu0 0.0
    %3320 = vmatpush1.msra.mxu0 0.0
    %3321 = vmatprep.subr.mxu0 0.0
    %3322 = vmatpush1.msra.mxu0 0.0
    %3323 = vmatprep.subr.mxu0 0.0
    %3324 = vmatpush1.msra.mxu0 0.0
    %3325 = vmatprep.subr.mxu0 0.0
    %3326 = vmatpush1.msra.mxu0 0.0
    %3327 = vmatprep.subr.mxu0 0.0
    %3328 = vmatpush1.msra.mxu0 0.0
    %3329 = vmatprep.subr.mxu0 0.0
    %3330 = vmatpush1.msra.mxu0 0.0
    %3331 = vmatprep.subr.mxu0 0.0
    %3332 = vmatpush1.msra.mxu0 0.0
    %3333 = vmatprep.subr.mxu0 0.0
    %3334 = vmatpush1.msra.mxu0 0.0
    %3335 = vmatprep.subr.mxu0 0.0
    %3336 = vmatpush1.msra.mxu0 0.0
    %3337 = vmatprep.subr.mxu0 0.0
    %3338 = vmatpush1.msra.mxu0 0.0
    %3339 = vmatprep.subr.mxu0 0.0
    %3340 = vmatpush1.msra.mxu0 0.0
    %3341 = vmatprep.subr.mxu0 0.0
    %3342 = vmatpush1.msra.mxu0 0.0
    %3343 = vmatprep.subr.mxu0 0.0
    %3344 = vmatpush1.msra.mxu0 0.0
    %3345 = vmatprep.subr.mxu0 0.0
    %3346 = vmatpush1.msra.mxu0 0.0
    %3347 = vmatprep.mubr.f32.mxu0 0.0
    %3348 = vmatmul.mubr.f32.gmra.mrb[0].mxu0 %v3103
    %v3349 = vpop.f32.mrb[0].mxu0
    %v3350 = vadd.f32 0.0, %v3349
    %v3351 = vpop.f32.mrb[0].mxu0
    %3352 = vdwg.mxu0
    %v3353 = vadd.f32 %v3282, %v3350
    %v3354 = vxor.u32 %v3353, 2147483648
    %v3355 = vmul.f32 %v3354, 1.442695
    %v3356 = vpow.pop %v3355
    %v3357 = vadd.f32 %v3356, 1.0
    %v3358 = vrcp.pop %v3357
    %v3359 = vmul.f32 1.0, %v3358
    %v3360 = vtanh.pop %v3353
    %3361 = vrot.lane.b32.xlu0 %v3359, 96
    %v3362 = vpop.permute.xlu0 %3361
    %3363 = vrot.lane.b32.xlu0 %v3360, 64
    %v3364 = vpop.permute.xlu0 %3363
    %3365 = vrot.lane.b32.xlu0 %v3359, 32
    %v3366 = vpop.permute.xlu0 %3365
    %v3367 = vmul.f32 %v3362, %v3101
    %v3368 = vmul.f32 %v3359, %v3364
    %v3369 = vadd.f32 %v3367, %v3368
    %v3370 = vtanh.pop %v3369
    %v3371 = vmul.f32 %v3366, %v3370
    %v3372 = vld [vmem:[%s4] sm:$0xff]
    %v3373 = vld [vmem:[%s4 + $0x8] sm:$0xff]
    %v3374 = vld [vmem:[%s4 + $0x10] sm:$0xff]
    %v3375 = vld [vmem:[%s4 + $0x18] sm:$0xff]
    %v3376 = vld [vmem:[%s4 + $0x20] sm:$0xff]
    %v3377 = vld [vmem:[%s4 + $0x28] sm:$0xff]
    %v3378 = vld [vmem:[%s4 + $0x30] sm:$0xff]
    %v3379 = vld [vmem:[%s4 + $0x38] sm:$0xff]
    %v3380 = vld [vmem:[%s4 + $0x40] sm:$0xff]
    %v3381 = vld [vmem:[%s4 + $0x48] sm:$0xff]
    %v3382 = vld [vmem:[%s4 + $0x50] sm:$0xff]
    %v3383 = vld [vmem:[%s4 + $0x58] sm:$0xff]
    %v3384 = vld [vmem:[%s4 + $0x60] sm:$0xff]
    %v3385 = vld [vmem:[%s4 + $0x68] sm:$0xff]
    %v3386 = vld [vmem:[%s4 + $0x70] sm:$0xff]
    %v3387 = vld [vmem:[%s4 + $0x78] sm:$0xff]
    %3388 = vmatprep.subr.mxu0 0.0
    %3389 = vmatpush1.msra.mxu0 %v312
    %3390 = vmatprep.subr.mxu0 0.0
    %3391 = vmatpush1.msra.mxu0 %v313
    %3392 = vmatprep.subr.mxu0 0.0
    %3393 = vmatpush1.msra.mxu0 %v314
    %3394 = vmatprep.subr.mxu0 0.0
    %3395 = vmatpush1.msra.mxu0 %v315
    %3396 = vmatprep.subr.mxu0 0.0
    %3397 = vmatpush1.msra.mxu0 %v316
    %3398 = vmatprep.subr.mxu0 0.0
    %3399 = vmatpush1.msra.mxu0 %v317
    %3400 = vmatprep.subr.mxu0 0.0
    %3401 = vmatpush1.msra.mxu0 %v318
    %3402 = vmatprep.subr.mxu0 0.0
    %3403 = vmatpush1.msra.mxu0 %v319
    %3404 = vmatprep.subr.mxu0 0.0
    %3405 = vmatpush1.msra.mxu0 %v320
    %3406 = vmatprep.subr.mxu0 0.0
    %3407 = vmatpush1.msra.mxu0 %v321
    %3408 = vmatprep.subr.mxu0 0.0
    %3409 = vmatpush1.msra.mxu0 %v322
    %3410 = vmatprep.subr.mxu0 0.0
    %3411 = vmatpush1.msra.mxu0 %v323
    %3412 = vmatprep.subr.mxu0 0.0
    %3413 = vmatpush1.msra.mxu0 %v324
    %3414 = vmatprep.subr.mxu0 0.0
    %3415 = vmatpush1.msra.mxu0 %v325
    %3416 = vmatprep.subr.mxu0 0.0
    %3417 = vmatpush1.msra.mxu0 %v326
    %3418 = vmatprep.subr.mxu0 0.0
    %3419 = vmatpush1.msra.mxu0 %v327
    %3420 = vmatprep.subr.mxu0 0.0
    %3421 = vmatpush1.msra.mxu0 0.0
    %3422 = vmatprep.subr.mxu0 0.0
    %3423 = vmatpush1.msra.mxu0 0.0
    %3424 = vmatprep.subr.mxu0 0.0
    %3425 = vmatpush1.msra.mxu0 0.0
    %3426 = vmatprep.subr.mxu0 0.0
    %3427 = vmatpush1.msra.mxu0 0.0
    %3428 = vmatprep.subr.mxu0 0.0
    %3429 = vmatpush1.msra.mxu0 0.0
    %3430 = vmatprep.subr.mxu0 0.0
    %3431 = vmatpush1.msra.mxu0 0.0
    %3432 = vmatprep.subr.mxu0 0.0
    %3433 = vmatpush1.msra.mxu0 0.0
    %3434 = vmatprep.subr.mxu0 0.0
    %3435 = vmatpush1.msra.mxu0 0.0
    %3436 = vmatprep.subr.mxu0 0.0
    %3437 = vmatpush1.msra.mxu0 0.0
    %3438 = vmatprep.subr.mxu0 0.0
    %3439 = vmatpush1.msra.mxu0 0.0
    %3440 = vmatprep.subr.mxu0 0.0
    %3441 = vmatpush1.msra.mxu0 0.0
    %3442 = vmatprep.subr.mxu0 0.0
    %3443 = vmatpush1.msra.mxu0 0.0
    %3444 = vmatprep.subr.mxu0 0.0
    %3445 = vmatpush1.msra.mxu0 0.0
    %3446 = vmatprep.subr.mxu0 0.0
    %3447 = vmatpush1.msra.mxu0 0.0
    %3448 = vmatprep.subr.mxu0 0.0
    %3449 = vmatpush1.msra.mxu0 0.0
    %3450 = vmatprep.subr.mxu0 0.0
    %3451 = vmatpush1.msra.mxu0 0.0
    %3452 = vmatprep.mubr.f32.mxu0 0.0
    %3453 = vmatmul.mubr.f32.gmra.mrb[0].mxu0 %v3278
    %v3454 = vpop.f32.mrb[0].mxu0
    %v3455 = vadd.f32 0.0, %v3454
    %v3456 = vpop.f32.mrb[0].mxu0
    %3457 = vdwg.mxu0
    %3458 = vmatprep.subr.mxu0 0.0
    %3459 = vmatpush1.msra.mxu0 %v3372
    %3460 = vmatprep.subr.mxu0 0.0
    %3461 = vmatpush1.msra.mxu0 %v3373
    %3462 = vmatprep.subr.mxu0 0.0
    %3463 = vmatpush1.msra.mxu0 %v3374
    %3464 = vmatprep.subr.mxu0 0.0
    %3465 = vmatpush1.msra.mxu0 %v3375
    %3466 = vmatprep.subr.mxu0 0.0
    %3467 = vmatpush1.msra.mxu0 %v3376
    %3468 = vmatprep.subr.mxu0 0.0
    %3469 = vmatpush1.msra.mxu0 %v3377
    %3470 = vmatprep.subr.mxu0 0.0
    %3471 = vmatpush1.msra.mxu0 %v3378
    %3472 = vmatprep.subr.mxu0 0.0
    %3473 = vmatpush1.msra.mxu0 %v3379
    %3474 = vmatprep.subr.mxu0 0.0
    %3475 = vmatpush1.msra.mxu0 %v3380
    %3476 = vmatprep.subr.mxu0 0.0
    %3477 = vmatpush1.msra.mxu0 %v3381
    %3478 = vmatprep.subr.mxu0 0.0
    %3479 = vmatpush1.msra.mxu0 %v3382
    %3480 = vmatprep.subr.mxu0 0.0
    %3481 = vmatpush1.msra.mxu0 %v3383
    %3482 = vmatprep.subr.mxu0 0.0
    %3483 = vmatpush1.msra.mxu0 %v3384
    %3484 = vmatprep.subr.mxu0 0.0
    %3485 = vmatpush1.msra.mxu0 %v3385
    %3486 = vmatprep.subr.mxu0 0.0
    %3487 = vmatpush1.msra.mxu0 %v3386
    %3488 = vmatprep.subr.mxu0 0.0
    %3489 = vmatpush1.msra.mxu0 %v3387
    %3490 = vmatprep.subr.mxu0 0.0
    %3491 = vmatpush1.msra.mxu0 0.0
    %3492 = vmatprep.subr.mxu0 0.0
    %3493 = vmatpush1.msra.mxu0 0.0
    %3494 = vmatprep.subr.mxu0 0.0
    %3495 = vmatpush1.msra.mxu0 0.0
    %3496 = vmatprep.subr.mxu0 0.0
    %3497 = vmatpush1.msra.mxu0 0.0
    %3498 = vmatprep.subr.mxu0 0.0
    %3499 = vmatpush1.msra.mxu0 0.0
    %3500 = vmatprep.subr.mxu0 0.0
    %3501 = vmatpush1.msra.mxu0 0.0
    %3502 = vmatprep.subr.mxu0 0.0
    %3503 = vmatpush1.msra.mxu0 0.0
    %3504 = vmatprep.subr.mxu0 0.0
    %3505 = vmatpush1.msra.mxu0 0.0
    %3506 = vmatprep.subr.mxu0 0.0
    %3507 = vmatpush1.msra.mxu0 0.0
    %3508 = vmatprep.subr.mxu0 0.0
    %3509 = vmatpush1.msra.mxu0 0.0
    %3510 = vmatprep.subr.mxu0 0.0
    %3511 = vmatpush1.msra.mxu0 0.0
    %3512 = vmatprep.subr.mxu0 0.0
    %3513 = vmatpush1.msra.mxu0 0.0
    %3514 = vmatprep.subr.mxu0 0.0
    %3515 = vmatpush1.msra.mxu0 0.0
    %3516 = vmatprep.subr.mxu0 0.0
    %3517 = vmatpush1.msra.mxu0 0.0
    %3518 = vmatprep.subr.mxu0 0.0
    %3519 = vmatpush1.msra.mxu0 0.0
    %3520 = vmatprep.subr.mxu0 0.0
    %3521 = vmatpush1.msra.mxu0 0.0
    %3522 = vmatprep.mubr.f32.mxu0 0.0
    %3523 = vmatmul.mubr.f32.gmra.mrb[0].mxu0 %v3371
    %v3524 = vpop.f32.mrb[0].mxu0
    %v3525 = vadd.f32 %v3455, %v3524
    %v3526 = vpop.f32.mrb[0].mxu0
    %3527 = vdwg.mxu0
    %v3528 = vadd.f32 %v3525, %v333
    %v3529 = vxor.u32 %v3528, 2147483648
    %v3530 = vmul.f32 %v3529, 1.442695
    %v3531 = vpow.pop %v3530
    %v3532 = vadd.f32 %v3531, 1.0
    %v3533 = vrcp.pop %v3532
    %v3534 = vmul.f32 1.0, %v3533
    %v3535 = vtanh.pop %v3528
    %3536 = vrot.lane.b32.xlu0 %v3534, 96
    %v3537 = vpop.permute.xlu0 %3536
    %3538 = vrot.lane.b32.xlu0 %v3535, 64
    %v3539 = vpop.permute.xlu0 %3538
    %3540 = vrot.lane.b32.xlu0 %v3534, 32
    %v3541 = vpop.permute.xlu0 %3540
    %v3542 = vmul.f32 %v3537, %v3276
    %v3543 = vmul.f32 %v3534, %v3539
    %v3544 = vadd.f32 %v3542, %v3543
    %v3545 = vtanh.pop %v3544
    %v3546 = vmul.f32 %v3541, %v3545
    %s3547 = scalar_lea.vmem %s7, 88
    %3548 = vst [vmem:[%s3547] sm:$0xff] %v3546
    %s3549 = scalar_lea.vmem [#allocation2], 96
    %v3550 = vld [vmem:[%s3549] sm:$0xff]
    %3551 = vmatprep.subr.mxu0 0.0
    %3552 = vmatpush1.msra.mxu0 %v296
    %3553 = vmatprep.subr.mxu0 0.0
    %3554 = vmatpush1.msra.mxu0 %v297
    %3555 = vmatprep.subr.mxu0 0.0
    %3556 = vmatpush1.msra.mxu0 %v298
    %3557 = vmatprep.subr.mxu0 0.0
    %3558 = vmatpush1.msra.mxu0 %v299
    %3559 = vmatprep.subr.mxu0 0.0
    %3560 = vmatpush1.msra.mxu0 %v300
    %3561 = vmatprep.subr.mxu0 0.0
    %3562 = vmatpush1.msra.mxu0 %v301
    %3563 = vmatprep.subr.mxu0 0.0
    %3564 = vmatpush1.msra.mxu0 %v302
    %3565 = vmatprep.subr.mxu0 0.0
    %3566 = vmatpush1.msra.mxu0 %v303
    %3567 = vmatprep.subr.mxu0 0.0
    %3568 = vmatpush1.msra.mxu0 %v304
    %3569 = vmatprep.subr.mxu0 0.0
    %3570 = vmatpush1.msra.mxu0 %v305
    %3571 = vmatprep.subr.mxu0 0.0
    %3572 = vmatpush1.msra.mxu0 %v306
    %3573 = vmatprep.subr.mxu0 0.0
    %3574 = vmatpush1.msra.mxu0 %v307
    %3575 = vmatprep.subr.mxu0 0.0
    %3576 = vmatpush1.msra.mxu0 %v308
    %3577 = vmatprep.subr.mxu0 0.0
    %3578 = vmatpush1.msra.mxu0 %v309
    %3579 = vmatprep.subr.mxu0 0.0
    %3580 = vmatpush1.msra.mxu0 %v310
    %3581 = vmatprep.subr.mxu0 0.0
    %3582 = vmatpush1.msra.mxu0 %v311
    %3583 = vmatprep.subr.mxu0 0.0
    %3584 = vmatpush1.msra.mxu0 0.0
    %3585 = vmatprep.subr.mxu0 0.0
    %3586 = vmatpush1.msra.mxu0 0.0
    %3587 = vmatprep.subr.mxu0 0.0
    %3588 = vmatpush1.msra.mxu0 0.0
    %3589 = vmatprep.subr.mxu0 0.0
    %3590 = vmatpush1.msra.mxu0 0.0
    %3591 = vmatprep.subr.mxu0 0.0
    %3592 = vmatpush1.msra.mxu0 0.0
    %3593 = vmatprep.subr.mxu0 0.0
    %3594 = vmatpush1.msra.mxu0 0.0
    %3595 = vmatprep.subr.mxu0 0.0
    %3596 = vmatpush1.msra.mxu0 0.0
    %3597 = vmatprep.subr.mxu0 0.0
    %3598 = vmatpush1.msra.mxu0 0.0
    %3599 = vmatprep.subr.mxu0 0.0
    %3600 = vmatpush1.msra.mxu0 0.0
    %3601 = vmatprep.subr.mxu0 0.0
    %3602 = vmatpush1.msra.mxu0 0.0
    %3603 = vmatprep.subr.mxu0 0.0
    %3604 = vmatpush1.msra.mxu0 0.0
    %3605 = vmatprep.subr.mxu0 0.0
    %3606 = vmatpush1.msra.mxu0 0.0
    %3607 = vmatprep.subr.mxu0 0.0
    %3608 = vmatpush1.msra.mxu0 0.0
    %3609 = vmatprep.subr.mxu0 0.0
    %3610 = vmatpush1.msra.mxu0 0.0
    %3611 = vmatprep.subr.mxu0 0.0
    %3612 = vmatpush1.msra.mxu0 0.0
    %3613 = vmatprep.subr.mxu0 0.0
    %3614 = vmatpush1.msra.mxu0 0.0
    %3615 = vmatprep.mubr.f32.mxu0 0.0
    %3616 = vmatmul.mubr.f32.gmra.mrb[0].mxu0 %v3371
    %v3617 = vpop.f32.mrb[0].mxu0
    %v3618 = vadd.f32 0.0, %v3617
    %v3619 = vpop.f32.mrb[0].mxu0
    %3620 = vdwg.mxu0
    %v3621 = vadd.f32 %v3550, %v3618
    %v3622 = vxor.u32 %v3621, 2147483648
    %v3623 = vmul.f32 %v3622, 1.442695
    %v3624 = vpow.pop %v3623
    %v3625 = vadd.f32 %v3624, 1.0
    %v3626 = vrcp.pop %v3625
    %v3627 = vmul.f32 1.0, %v3626
    %v3628 = vtanh.pop %v3621
    %3629 = vrot.lane.b32.xlu0 %v3627, 96
    %v3630 = vpop.permute.xlu0 %3629
    %3631 = vrot.lane.b32.xlu0 %v3628, 64
    %v3632 = vpop.permute.xlu0 %3631
    %3633 = vrot.lane.b32.xlu0 %v3627, 32
    %v3634 = vpop.permute.xlu0 %3633
    %v3635 = vmul.f32 %v3630, %v3369
    %v3636 = vmul.f32 %v3627, %v3632
    %v3637 = vadd.f32 %v3635, %v3636
    %v3638 = vtanh.pop %v3637
    %v3639 = vmul.f32 %v3634, %v3638
    %v3640 = vld [vmem:[%s4] sm:$0xff]
    %v3641 = vld [vmem:[%s4 + $0x8] sm:$0xff]
    %v3642 = vld [vmem:[%s4 + $0x10] sm:$0xff]
    %v3643 = vld [vmem:[%s4 + $0x18] sm:$0xff]
    %v3644 = vld [vmem:[%s4 + $0x20] sm:$0xff]
    %v3645 = vld [vmem:[%s4 + $0x28] sm:$0xff]
    %v3646 = vld [vmem:[%s4 + $0x30] sm:$0xff]
    %v3647 = vld [vmem:[%s4 + $0x38] sm:$0xff]
    %v3648 = vld [vmem:[%s4 + $0x40] sm:$0xff]
    %v3649 = vld [vmem:[%s4 + $0x48] sm:$0xff]
    %v3650 = vld [vmem:[%s4 + $0x50] sm:$0xff]
    %v3651 = vld [vmem:[%s4 + $0x58] sm:$0xff]
    %v3652 = vld [vmem:[%s4 + $0x60] sm:$0xff]
    %v3653 = vld [vmem:[%s4 + $0x68] sm:$0xff]
    %v3654 = vld [vmem:[%s4 + $0x70] sm:$0xff]
    %v3655 = vld [vmem:[%s4 + $0x78] sm:$0xff]
    %3656 = vmatprep.subr.mxu0 0.0
    %3657 = vmatpush1.msra.mxu0 %v312
    %3658 = vmatprep.subr.mxu0 0.0
    %3659 = vmatpush1.msra.mxu0 %v313
    %3660 = vmatprep.subr.mxu0 0.0
    %3661 = vmatpush1.msra.mxu0 %v314
    %3662 = vmatprep.subr.mxu0 0.0
    %3663 = vmatpush1.msra.mxu0 %v315
    %3664 = vmatprep.subr.mxu0 0.0
    %3665 = vmatpush1.msra.mxu0 %v316
    %3666 = vmatprep.subr.mxu0 0.0
    %3667 = vmatpush1.msra.mxu0 %v317
    %3668 = vmatprep.subr.mxu0 0.0
    %3669 = vmatpush1.msra.mxu0 %v318
    %3670 = vmatprep.subr.mxu0 0.0
    %3671 = vmatpush1.msra.mxu0 %v319
    %3672 = vmatprep.subr.mxu0 0.0
    %3673 = vmatpush1.msra.mxu0 %v320
    %3674 = vmatprep.subr.mxu0 0.0
    %3675 = vmatpush1.msra.mxu0 %v321
    %3676 = vmatprep.subr.mxu0 0.0
    %3677 = vmatpush1.msra.mxu0 %v322
    %3678 = vmatprep.subr.mxu0 0.0
    %3679 = vmatpush1.msra.mxu0 %v323
    %3680 = vmatprep.subr.mxu0 0.0
    %3681 = vmatpush1.msra.mxu0 %v324
    %3682 = vmatprep.subr.mxu0 0.0
    %3683 = vmatpush1.msra.mxu0 %v325
    %3684 = vmatprep.subr.mxu0 0.0
    %3685 = vmatpush1.msra.mxu0 %v326
    %3686 = vmatprep.subr.mxu0 0.0
    %3687 = vmatpush1.msra.mxu0 %v327
    %3688 = vmatprep.subr.mxu0 0.0
    %3689 = vmatpush1.msra.mxu0 0.0
    %3690 = vmatprep.subr.mxu0 0.0
    %3691 = vmatpush1.msra.mxu0 0.0
    %3692 = vmatprep.subr.mxu0 0.0
    %3693 = vmatpush1.msra.mxu0 0.0
    %3694 = vmatprep.subr.mxu0 0.0
    %3695 = vmatpush1.msra.mxu0 0.0
    %3696 = vmatprep.subr.mxu0 0.0
    %3697 = vmatpush1.msra.mxu0 0.0
    %3698 = vmatprep.subr.mxu0 0.0
    %3699 = vmatpush1.msra.mxu0 0.0
    %3700 = vmatprep.subr.mxu0 0.0
    %3701 = vmatpush1.msra.mxu0 0.0
    %3702 = vmatprep.subr.mxu0 0.0
    %3703 = vmatpush1.msra.mxu0 0.0
    %3704 = vmatprep.subr.mxu0 0.0
    %3705 = vmatpush1.msra.mxu0 0.0
    %3706 = vmatprep.subr.mxu0 0.0
    %3707 = vmatpush1.msra.mxu0 0.0
    %3708 = vmatprep.subr.mxu0 0.0
    %3709 = vmatpush1.msra.mxu0 0.0
    %3710 = vmatprep.subr.mxu0 0.0
    %3711 = vmatpush1.msra.mxu0 0.0
    %3712 = vmatprep.subr.mxu0 0.0
    %3713 = vmatpush1.msra.mxu0 0.0
    %3714 = vmatprep.subr.mxu0 0.0
    %3715 = vmatpush1.msra.mxu0 0.0
    %3716 = vmatprep.subr.mxu0 0.0
    %3717 = vmatpush1.msra.mxu0 0.0
    %3718 = vmatprep.subr.mxu0 0.0
    %3719 = vmatpush1.msra.mxu0 0.0
    %3720 = vmatprep.mubr.f32.mxu0 0.0
    %3721 = vmatmul.mubr.f32.gmra.mrb[0].mxu0 %v3546
    %v3722 = vpop.f32.mrb[0].mxu0
    %v3723 = vadd.f32 0.0, %v3722
    %v3724 = vpop.f32.mrb[0].mxu0
    %3725 = vdwg.mxu0
    %3726 = vmatprep.subr.mxu0 0.0
    %3727 = vmatpush1.msra.mxu0 %v3640
    %3728 = vmatprep.subr.mxu0 0.0
    %3729 = vmatpush1.msra.mxu0 %v3641
    %3730 = vmatprep.subr.mxu0 0.0
    %3731 = vmatpush1.msra.mxu0 %v3642
    %3732 = vmatprep.subr.mxu0 0.0
    %3733 = vmatpush1.msra.mxu0 %v3643
    %3734 = vmatprep.subr.mxu0 0.0
    %3735 = vmatpush1.msra.mxu0 %v3644
    %3736 = vmatprep.subr.mxu0 0.0
    %3737 = vmatpush1.msra.mxu0 %v3645
    %3738 = vmatprep.subr.mxu0 0.0
    %3739 = vmatpush1.msra.mxu0 %v3646
    %3740 = vmatprep.subr.mxu0 0.0
    %3741 = vmatpush1.msra.mxu0 %v3647
    %3742 = vmatprep.subr.mxu0 0.0
    %3743 = vmatpush1.msra.mxu0 %v3648
    %3744 = vmatprep.subr.mxu0 0.0
    %3745 = vmatpush1.msra.mxu0 %v3649
    %3746 = vmatprep.subr.mxu0 0.0
    %3747 = vmatpush1.msra.mxu0 %v3650
    %3748 = vmatprep.subr.mxu0 0.0
    %3749 = vmatpush1.msra.mxu0 %v3651
    %3750 = vmatprep.subr.mxu0 0.0
    %3751 = vmatpush1.msra.mxu0 %v3652
    %3752 = vmatprep.subr.mxu0 0.0
    %3753 = vmatpush1.msra.mxu0 %v3653
    %3754 = vmatprep.subr.mxu0 0.0
    %3755 = vmatpush1.msra.mxu0 %v3654
    %3756 = vmatprep.subr.mxu0 0.0
    %3757 = vmatpush1.msra.mxu0 %v3655
    %3758 = vmatprep.subr.mxu0 0.0
    %3759 = vmatpush1.msra.mxu0 0.0
    %3760 = vmatprep.subr.mxu0 0.0
    %3761 = vmatpush1.msra.mxu0 0.0
    %3762 = vmatprep.subr.mxu0 0.0
    %3763 = vmatpush1.msra.mxu0 0.0
    %3764 = vmatprep.subr.mxu0 0.0
    %3765 = vmatpush1.msra.mxu0 0.0
    %3766 = vmatprep.subr.mxu0 0.0
    %3767 = vmatpush1.msra.mxu0 0.0
    %3768 = vmatprep.subr.mxu0 0.0
    %3769 = vmatpush1.msra.mxu0 0.0
    %3770 = vmatprep.subr.mxu0 0.0
    %3771 = vmatpush1.msra.mxu0 0.0
    %3772 = vmatprep.subr.mxu0 0.0
    %3773 = vmatpush1.msra.mxu0 0.0
    %3774 = vmatprep.subr.mxu0 0.0
    %3775 = vmatpush1.msra.mxu0 0.0
    %3776 = vmatprep.subr.mxu0 0.0
    %3777 = vmatpush1.msra.mxu0 0.0
    %3778 = vmatprep.subr.mxu0 0.0
    %3779 = vmatpush1.msra.mxu0 0.0
    %3780 = vmatprep.subr.mxu0 0.0
    %3781 = vmatpush1.msra.mxu0 0.0
    %3782 = vmatprep.subr.mxu0 0.0
    %3783 = vmatpush1.msra.mxu0 0.0
    %3784 = vmatprep.subr.mxu0 0.0
    %3785 = vmatpush1.msra.mxu0 0.0
    %3786 = vmatprep.subr.mxu0 0.0
    %3787 = vmatpush1.msra.mxu0 0.0
    %3788 = vmatprep.subr.mxu0 0.0
    %3789 = vmatpush1.msra.mxu0 0.0
    %3790 = vmatprep.mubr.f32.mxu0 0.0
    %3791 = vmatmul.mubr.f32.gmra.mrb[0].mxu0 %v3639
    %v3792 = vpop.f32.mrb[0].mxu0
    %v3793 = vadd.f32 %v3723, %v3792
    %v3794 = vpop.f32.mrb[0].mxu0
    %3795 = vdwg.mxu0
    %v3796 = vadd.f32 %v3793, %v333
    %v3797 = vxor.u32 %v3796, 2147483648
    %v3798 = vmul.f32 %v3797, 1.442695
    %v3799 = vpow.pop %v3798
    %v3800 = vadd.f32 %v3799, 1.0
    %v3801 = vrcp.pop %v3800
    %v3802 = vmul.f32 1.0, %v3801
    %v3803 = vtanh.pop %v3796
    %3804 = vrot.lane.b32.xlu0 %v3802, 96
    %v3805 = vpop.permute.xlu0 %3804
    %3806 = vrot.lane.b32.xlu0 %v3803, 64
    %v3807 = vpop.permute.xlu0 %3806
    %3808 = vrot.lane.b32.xlu0 %v3802, 32
    %v3809 = vpop.permute.xlu0 %3808
    %v3810 = vmul.f32 %v3805, %v3544
    %v3811 = vmul.f32 %v3802, %v3807
    %v3812 = vadd.f32 %v3810, %v3811
    %v3813 = vtanh.pop %v3812
    %v3814 = vmul.f32 %v3809, %v3813
    %s3815 = scalar_lea.vmem %s7, 96
    %3816 = vst [vmem:[%s3815] sm:$0xff] %v3814
    %s3817 = scalar_lea.vmem [#allocation2], 104
    %v3818 = vld [vmem:[%s3817] sm:$0xff]
    %3819 = vmatprep.subr.mxu0 0.0
    %3820 = vmatpush1.msra.mxu0 %v296
    %3821 = vmatprep.subr.mxu0 0.0
    %3822 = vmatpush1.msra.mxu0 %v297
    %3823 = vmatprep.subr.mxu0 0.0
    %3824 = vmatpush1.msra.mxu0 %v298
    %3825 = vmatprep.subr.mxu0 0.0
    %3826 = vmatpush1.msra.mxu0 %v299
    %3827 = vmatprep.subr.mxu0 0.0
    %3828 = vmatpush1.msra.mxu0 %v300
    %3829 = vmatprep.subr.mxu0 0.0
    %3830 = vmatpush1.msra.mxu0 %v301
    %3831 = vmatprep.subr.mxu0 0.0
    %3832 = vmatpush1.msra.mxu0 %v302
    %3833 = vmatprep.subr.mxu0 0.0
    %3834 = vmatpush1.msra.mxu0 %v303
    %3835 = vmatprep.subr.mxu0 0.0
    %3836 = vmatpush1.msra.mxu0 %v304
    %3837 = vmatprep.subr.mxu0 0.0
    %3838 = vmatpush1.msra.mxu0 %v305
    %3839 = vmatprep.subr.mxu0 0.0
    %3840 = vmatpush1.msra.mxu0 %v306
    %3841 = vmatprep.subr.mxu0 0.0
    %3842 = vmatpush1.msra.mxu0 %v307
    %3843 = vmatprep.subr.mxu0 0.0
    %3844 = vmatpush1.msra.mxu0 %v308
    %3845 = vmatprep.subr.mxu0 0.0
    %3846 = vmatpush1.msra.mxu0 %v309
    %3847 = vmatprep.subr.mxu0 0.0
    %3848 = vmatpush1.msra.mxu0 %v310
    %3849 = vmatprep.subr.mxu0 0.0
    %3850 = vmatpush1.msra.mxu0 %v311
    %3851 = vmatprep.subr.mxu0 0.0
    %3852 = vmatpush1.msra.mxu0 0.0
    %3853 = vmatprep.subr.mxu0 0.0
    %3854 = vmatpush1.msra.mxu0 0.0
    %3855 = vmatprep.subr.mxu0 0.0
    %3856 = vmatpush1.msra.mxu0 0.0
    %3857 = vmatprep.subr.mxu0 0.0
    %3858 = vmatpush1.msra.mxu0 0.0
    %3859 = vmatprep.subr.mxu0 0.0
    %3860 = vmatpush1.msra.mxu0 0.0
    %3861 = vmatprep.subr.mxu0 0.0
    %3862 = vmatpush1.msra.mxu0 0.0
    %3863 = vmatprep.subr.mxu0 0.0
    %3864 = vmatpush1.msra.mxu0 0.0
    %3865 = vmatprep.subr.mxu0 0.0
    %3866 = vmatpush1.msra.mxu0 0.0
    %3867 = vmatprep.subr.mxu0 0.0
    %3868 = vmatpush1.msra.mxu0 0.0
    %3869 = vmatprep.subr.mxu0 0.0
    %3870 = vmatpush1.msra.mxu0 0.0
    %3871 = vmatprep.subr.mxu0 0.0
    %3872 = vmatpush1.msra.mxu0 0.0
    %3873 = vmatprep.subr.mxu0 0.0
    %3874 = vmatpush1.msra.mxu0 0.0
    %3875 = vmatprep.subr.mxu0 0.0
    %3876 = vmatpush1.msra.mxu0 0.0
    %3877 = vmatprep.subr.mxu0 0.0
    %3878 = vmatpush1.msra.mxu0 0.0
    %3879 = vmatprep.subr.mxu0 0.0
    %3880 = vmatpush1.msra.mxu0 0.0
    %3881 = vmatprep.subr.mxu0 0.0
    %3882 = vmatpush1.msra.mxu0 0.0
    %3883 = vmatprep.mubr.f32.mxu0 0.0
    %3884 = vmatmul.mubr.f32.gmra.mrb[0].mxu0 %v3639
    %v3885 = vpop.f32.mrb[0].mxu0
    %v3886 = vadd.f32 0.0, %v3885
    %v3887 = vpop.f32.mrb[0].mxu0
    %3888 = vdwg.mxu0
    %v3889 = vadd.f32 %v3818, %v3886
    %v3890 = vxor.u32 %v3889, 2147483648
    %v3891 = vmul.f32 %v3890, 1.442695
    %v3892 = vpow.pop %v3891
    %v3893 = vadd.f32 %v3892, 1.0
    %v3894 = vrcp.pop %v3893
    %v3895 = vmul.f32 1.0, %v3894
    %v3896 = vtanh.pop %v3889
    %3897 = vrot.lane.b32.xlu0 %v3895, 96
    %v3898 = vpop.permute.xlu0 %3897
    %3899 = vrot.lane.b32.xlu0 %v3896, 64
    %v3900 = vpop.permute.xlu0 %3899
    %3901 = vrot.lane.b32.xlu0 %v3895, 32
    %v3902 = vpop.permute.xlu0 %3901
    %v3903 = vmul.f32 %v3898, %v3637
    %v3904 = vmul.f32 %v3895, %v3900
    %v3905 = vadd.f32 %v3903, %v3904
    %v3906 = vtanh.pop %v3905
    %v3907 = vmul.f32 %v3902, %v3906
    %v3908 = vld [vmem:[%s4] sm:$0xff]
    %v3909 = vld [vmem:[%s4 + $0x8] sm:$0xff]
    %v3910 = vld [vmem:[%s4 + $0x10] sm:$0xff]
    %v3911 = vld [vmem:[%s4 + $0x18] sm:$0xff]
    %v3912 = vld [vmem:[%s4 + $0x20] sm:$0xff]
    %v3913 = vld [vmem:[%s4 + $0x28] sm:$0xff]
    %v3914 = vld [vmem:[%s4 + $0x30] sm:$0xff]
    %v3915 = vld [vmem:[%s4 + $0x38] sm:$0xff]
    %v3916 = vld [vmem:[%s4 + $0x40] sm:$0xff]
    %v3917 = vld [vmem:[%s4 + $0x48] sm:$0xff]
    %v3918 = vld [vmem:[%s4 + $0x50] sm:$0xff]
    %v3919 = vld [vmem:[%s4 + $0x58] sm:$0xff]
    %v3920 = vld [vmem:[%s4 + $0x60] sm:$0xff]
    %v3921 = vld [vmem:[%s4 + $0x68] sm:$0xff]
    %v3922 = vld [vmem:[%s4 + $0x70] sm:$0xff]
    %v3923 = vld [vmem:[%s4 + $0x78] sm:$0xff]
    %3924 = vmatprep.subr.mxu0 0.0
    %3925 = vmatpush1.msra.mxu0 %v312
    %3926 = vmatprep.subr.mxu0 0.0
    %3927 = vmatpush1.msra.mxu0 %v313
    %3928 = vmatprep.subr.mxu0 0.0
    %3929 = vmatpush1.msra.mxu0 %v314
    %3930 = vmatprep.subr.mxu0 0.0
    %3931 = vmatpush1.msra.mxu0 %v315
    %3932 = vmatprep.subr.mxu0 0.0
    %3933 = vmatpush1.msra.mxu0 %v316
    %3934 = vmatprep.subr.mxu0 0.0
    %3935 = vmatpush1.msra.mxu0 %v317
    %3936 = vmatprep.subr.mxu0 0.0
    %3937 = vmatpush1.msra.mxu0 %v318
    %3938 = vmatprep.subr.mxu0 0.0
    %3939 = vmatpush1.msra.mxu0 %v319
    %3940 = vmatprep.subr.mxu0 0.0
    %3941 = vmatpush1.msra.mxu0 %v320
    %3942 = vmatprep.subr.mxu0 0.0
    %3943 = vmatpush1.msra.mxu0 %v321
    %3944 = vmatprep.subr.mxu0 0.0
    %3945 = vmatpush1.msra.mxu0 %v322
    %3946 = vmatprep.subr.mxu0 0.0
    %3947 = vmatpush1.msra.mxu0 %v323
    %3948 = vmatprep.subr.mxu0 0.0
    %3949 = vmatpush1.msra.mxu0 %v324
    %3950 = vmatprep.subr.mxu0 0.0
    %3951 = vmatpush1.msra.mxu0 %v325
    %3952 = vmatprep.subr.mxu0 0.0
    %3953 = vmatpush1.msra.mxu0 %v326
    %3954 = vmatprep.subr.mxu0 0.0
    %3955 = vmatpush1.msra.mxu0 %v327
    %3956 = vmatprep.subr.mxu0 0.0
    %3957 = vmatpush1.msra.mxu0 0.0
    %3958 = vmatprep.subr.mxu0 0.0
    %3959 = vmatpush1.msra.mxu0 0.0
    %3960 = vmatprep.subr.mxu0 0.0
    %3961 = vmatpush1.msra.mxu0 0.0
    %3962 = vmatprep.subr.mxu0 0.0
    %3963 = vmatpush1.msra.mxu0 0.0
    %3964 = vmatprep.subr.mxu0 0.0
    %3965 = vmatpush1.msra.mxu0 0.0
    %3966 = vmatprep.subr.mxu0 0.0
    %3967 = vmatpush1.msra.mxu0 0.0
    %3968 = vmatprep.subr.mxu0 0.0
    %3969 = vmatpush1.msra.mxu0 0.0
    %3970 = vmatprep.subr.mxu0 0.0
    %3971 = vmatpush1.msra.mxu0 0.0
    %3972 = vmatprep.subr.mxu0 0.0
    %3973 = vmatpush1.msra.mxu0 0.0
    %3974 = vmatprep.subr.mxu0 0.0
    %3975 = vmatpush1.msra.mxu0 0.0
    %3976 = vmatprep.subr.mxu0 0.0
    %3977 = vmatpush1.msra.mxu0 0.0
    %3978 = vmatprep.subr.mxu0 0.0
    %3979 = vmatpush1.msra.mxu0 0.0
    %3980 = vmatprep.subr.mxu0 0.0
    %3981 = vmatpush1.msra.mxu0 0.0
    %3982 = vmatprep.subr.mxu0 0.0
    %3983 = vmatpush1.msra.mxu0 0.0
    %3984 = vmatprep.subr.mxu0 0.0
    %3985 = vmatpush1.msra.mxu0 0.0
    %3986 = vmatprep.subr.mxu0 0.0
    %3987 = vmatpush1.msra.mxu0 0.0
    %3988 = vmatprep.mubr.f32.mxu0 0.0
    %3989 = vmatmul.mubr.f32.gmra.mrb[0].mxu0 %v3814
    %v3990 = vpop.f32.mrb[0].mxu0
    %v3991 = vadd.f32 0.0, %v3990
    %v3992 = vpop.f32.mrb[0].mxu0
    %3993 = vdwg.mxu0
    %3994 = vmatprep.subr.mxu0 0.0
    %3995 = vmatpush1.msra.mxu0 %v3908
    %3996 = vmatprep.subr.mxu0 0.0
    %3997 = vmatpush1.msra.mxu0 %v3909
    %3998 = vmatprep.subr.mxu0 0.0
    %3999 = vmatpush1.msra.mxu0 %v3910
    %4000 = vmatprep.subr.mxu0 0.0
    %4001 = vmatpush1.msra.mxu0 %v3911
    %4002 = vmatprep.subr.mxu0 0.0
    %4003 = vmatpush1.msra.mxu0 %v3912
    %4004 = vmatprep.subr.mxu0 0.0
    %4005 = vmatpush1.msra.mxu0 %v3913
    %4006 = vmatprep.subr.mxu0 0.0
    %4007 = vmatpush1.msra.mxu0 %v3914
    %4008 = vmatprep.subr.mxu0 0.0
    %4009 = vmatpush1.msra.mxu0 %v3915
    %4010 = vmatprep.subr.mxu0 0.0
    %4011 = vmatpush1.msra.mxu0 %v3916
    %4012 = vmatprep.subr.mxu0 0.0
    %4013 = vmatpush1.msra.mxu0 %v3917
    %4014 = vmatprep.subr.mxu0 0.0
    %4015 = vmatpush1.msra.mxu0 %v3918
    %4016 = vmatprep.subr.mxu0 0.0
    %4017 = vmatpush1.msra.mxu0 %v3919
    %4018 = vmatprep.subr.mxu0 0.0
    %4019 = vmatpush1.msra.mxu0 %v3920
    %4020 = vmatprep.subr.mxu0 0.0
    %4021 = vmatpush1.msra.mxu0 %v3921
    %4022 = vmatprep.subr.mxu0 0.0
    %4023 = vmatpush1.msra.mxu0 %v3922
    %4024 = vmatprep.subr.mxu0 0.0
    %4025 = vmatpush1.msra.mxu0 %v3923
    %4026 = vmatprep.subr.mxu0 0.0
    %4027 = vmatpush1.msra.mxu0 0.0
    %4028 = vmatprep.subr.mxu0 0.0
    %4029 = vmatpush1.msra.mxu0 0.0
    %4030 = vmatprep.subr.mxu0 0.0
    %4031 = vmatpush1.msra.mxu0 0.0
    %4032 = vmatprep.subr.mxu0 0.0
    %4033 = vmatpush1.msra.mxu0 0.0
    %4034 = vmatprep.subr.mxu0 0.0
    %4035 = vmatpush1.msra.mxu0 0.0
    %4036 = vmatprep.subr.mxu0 0.0
    %4037 = vmatpush1.msra.mxu0 0.0
    %4038 = vmatprep.subr.mxu0 0.0
    %4039 = vmatpush1.msra.mxu0 0.0
    %4040 = vmatprep.subr.mxu0 0.0
    %4041 = vmatpush1.msra.mxu0 0.0
    %4042 = vmatprep.subr.mxu0 0.0
    %4043 = vmatpush1.msra.mxu0 0.0
    %4044 = vmatprep.subr.mxu0 0.0
    %4045 = vmatpush1.msra.mxu0 0.0
    %4046 = vmatprep.subr.mxu0 0.0
    %4047 = vmatpush1.msra.mxu0 0.0
    %4048 = vmatprep.subr.mxu0 0.0
    %4049 = vmatpush1.msra.mxu0 0.0
    %4050 = vmatprep.subr.mxu0 0.0
    %4051 = vmatpush1.msra.mxu0 0.0
    %4052 = vmatprep.subr.mxu0 0.0
    %4053 = vmatpush1.msra.mxu0 0.0
    %4054 = vmatprep.subr.mxu0 0.0
    %4055 = vmatpush1.msra.mxu0 0.0
    %4056 = vmatprep.subr.mxu0 0.0
    %4057 = vmatpush1.msra.mxu0 0.0
    %4058 = vmatprep.mubr.f32.mxu0 0.0
    %4059 = vmatmul.mubr.f32.gmra.mrb[0].mxu0 %v3907
    %v4060 = vpop.f32.mrb[0].mxu0
    %v4061 = vadd.f32 %v3991, %v4060
    %v4062 = vpop.f32.mrb[0].mxu0
    %4063 = vdwg.mxu0
    %v4064 = vadd.f32 %v4061, %v333
    %v4065 = vxor.u32 %v4064, 2147483648
    %v4066 = vmul.f32 %v4065, 1.442695
    %v4067 = vpow.pop %v4066
    %v4068 = vadd.f32 %v4067, 1.0
    %v4069 = vrcp.pop %v4068
    %v4070 = vmul.f32 1.0, %v4069
    %v4071 = vtanh.pop %v4064
    %4072 = vrot.lane.b32.xlu0 %v4070, 96
    %v4073 = vpop.permute.xlu0 %4072
    %4074 = vrot.lane.b32.xlu0 %v4071, 64
    %v4075 = vpop.permute.xlu0 %4074
    %4076 = vrot.lane.b32.xlu0 %v4070, 32
    %v4077 = vpop.permute.xlu0 %4076
    %v4078 = vmul.f32 %v4073, %v3812
    %v4079 = vmul.f32 %v4070, %v4075
    %v4080 = vadd.f32 %v4078, %v4079
    %v4081 = vtanh.pop %v4080
    %v4082 = vmul.f32 %v4077, %v4081
    %s4083 = scalar_lea.vmem %s7, 104
    %4084 = vst [vmem:[%s4083] sm:$0xff] %v4082
    %s4085 = scalar_lea.vmem [#allocation2], 112
    %v4086 = vld [vmem:[%s4085] sm:$0xff]
    %4087 = vmatprep.subr.mxu0 0.0
    %4088 = vmatpush1.msra.mxu0 %v296
    %4089 = vmatprep.subr.mxu0 0.0
    %4090 = vmatpush1.msra.mxu0 %v297
    %4091 = vmatprep.subr.mxu0 0.0
    %4092 = vmatpush1.msra.mxu0 %v298
    %4093 = vmatprep.subr.mxu0 0.0
    %4094 = vmatpush1.msra.mxu0 %v299
    %4095 = vmatprep.subr.mxu0 0.0
    %4096 = vmatpush1.msra.mxu0 %v300
    %4097 = vmatprep.subr.mxu0 0.0
    %4098 = vmatpush1.msra.mxu0 %v301
    %4099 = vmatprep.subr.mxu0 0.0
    %4100 = vmatpush1.msra.mxu0 %v302
    %4101 = vmatprep.subr.mxu0 0.0
    %4102 = vmatpush1.msra.mxu0 %v303
    %4103 = vmatprep.subr.mxu0 0.0
    %4104 = vmatpush1.msra.mxu0 %v304
    %4105 = vmatprep.subr.mxu0 0.0
    %4106 = vmatpush1.msra.mxu0 %v305
    %4107 = vmatprep.subr.mxu0 0.0
    %4108 = vmatpush1.msra.mxu0 %v306
    %4109 = vmatprep.subr.mxu0 0.0
    %4110 = vmatpush1.msra.mxu0 %v307
    %4111 = vmatprep.subr.mxu0 0.0
    %4112 = vmatpush1.msra.mxu0 %v308
    %4113 = vmatprep.subr.mxu0 0.0
    %4114 = vmatpush1.msra.mxu0 %v309
    %4115 = vmatprep.subr.mxu0 0.0
    %4116 = vmatpush1.msra.mxu0 %v310
    %4117 = vmatprep.subr.mxu0 0.0
    %4118 = vmatpush1.msra.mxu0 %v311
    %4119 = vmatprep.subr.mxu0 0.0
    %4120 = vmatpush1.msra.mxu0 0.0
    %4121 = vmatprep.subr.mxu0 0.0
    %4122 = vmatpush1.msra.mxu0 0.0
    %4123 = vmatprep.subr.mxu0 0.0
    %4124 = vmatpush1.msra.mxu0 0.0
    %4125 = vmatprep.subr.mxu0 0.0
    %4126 = vmatpush1.msra.mxu0 0.0
    %4127 = vmatprep.subr.mxu0 0.0
    %4128 = vmatpush1.msra.mxu0 0.0
    %4129 = vmatprep.subr.mxu0 0.0
    %4130 = vmatpush1.msra.mxu0 0.0
    %4131 = vmatprep.subr.mxu0 0.0
    %4132 = vmatpush1.msra.mxu0 0.0
    %4133 = vmatprep.subr.mxu0 0.0
    %4134 = vmatpush1.msra.mxu0 0.0
    %4135 = vmatprep.subr.mxu0 0.0
    %4136 = vmatpush1.msra.mxu0 0.0
    %4137 = vmatprep.subr.mxu0 0.0
    %4138 = vmatpush1.msra.mxu0 0.0
    %4139 = vmatprep.subr.mxu0 0.0
    %4140 = vmatpush1.msra.mxu0 0.0
    %4141 = vmatprep.subr.mxu0 0.0
    %4142 = vmatpush1.msra.mxu0 0.0
    %4143 = vmatprep.subr.mxu0 0.0
    %4144 = vmatpush1.msra.mxu0 0.0
    %4145 = vmatprep.subr.mxu0 0.0
    %4146 = vmatpush1.msra.mxu0 0.0
    %4147 = vmatprep.subr.mxu0 0.0
    %4148 = vmatpush1.msra.mxu0 0.0
    %4149 = vmatprep.subr.mxu0 0.0
    %4150 = vmatpush1.msra.mxu0 0.0
    %4151 = vmatprep.mubr.f32.mxu0 0.0
    %4152 = vmatmul.mubr.f32.gmra.mrb[0].mxu0 %v3907
    %v4153 = vpop.f32.mrb[0].mxu0
    %v4154 = vadd.f32 0.0, %v4153
    %v4155 = vpop.f32.mrb[0].mxu0
    %4156 = vdwg.mxu0
    %v4157 = vadd.f32 %v4086, %v4154
    %v4158 = vxor.u32 %v4157, 2147483648
    %v4159 = vmul.f32 %v4158, 1.442695
    %v4160 = vpow.pop %v4159
    %v4161 = vadd.f32 %v4160, 1.0
    %v4162 = vrcp.pop %v4161
    %v4163 = vmul.f32 1.0, %v4162
    %v4164 = vtanh.pop %v4157
    %4165 = vrot.lane.b32.xlu0 %v4163, 96
    %v4166 = vpop.permute.xlu0 %4165
    %4167 = vrot.lane.b32.xlu0 %v4164, 64
    %v4168 = vpop.permute.xlu0 %4167
    %4169 = vrot.lane.b32.xlu0 %v4163, 32
    %v4170 = vpop.permute.xlu0 %4169
    %v4171 = vmul.f32 %v4166, %v3905
    %v4172 = vmul.f32 %v4163, %v4168
    %v4173 = vadd.f32 %v4171, %v4172
    %v4174 = vtanh.pop %v4173
    %v4175 = vmul.f32 %v4170, %v4174
    %v4176 = vld [vmem:[%s4] sm:$0xff]
    %v4177 = vld [vmem:[%s4 + $0x8] sm:$0xff]
    %v4178 = vld [vmem:[%s4 + $0x10] sm:$0xff]
    %v4179 = vld [vmem:[%s4 + $0x18] sm:$0xff]
    %v4180 = vld [vmem:[%s4 + $0x20] sm:$0xff]
    %v4181 = vld [vmem:[%s4 + $0x28] sm:$0xff]
    %v4182 = vld [vmem:[%s4 + $0x30] sm:$0xff]
    %v4183 = vld [vmem:[%s4 + $0x38] sm:$0xff]
    %v4184 = vld [vmem:[%s4 + $0x40] sm:$0xff]
    %v4185 = vld [vmem:[%s4 + $0x48] sm:$0xff]
    %v4186 = vld [vmem:[%s4 + $0x50] sm:$0xff]
    %v4187 = vld [vmem:[%s4 + $0x58] sm:$0xff]
    %v4188 = vld [vmem:[%s4 + $0x60] sm:$0xff]
    %v4189 = vld [vmem:[%s4 + $0x68] sm:$0xff]
    %v4190 = vld [vmem:[%s4 + $0x70] sm:$0xff]
    %v4191 = vld [vmem:[%s4 + $0x78] sm:$0xff]
    %4192 = vmatprep.subr.mxu0 0.0
    %4193 = vmatpush1.msra.mxu0 %v312
    %4194 = vmatprep.subr.mxu0 0.0
    %4195 = vmatpush1.msra.mxu0 %v313
    %4196 = vmatprep.subr.mxu0 0.0
    %4197 = vmatpush1.msra.mxu0 %v314
    %4198 = vmatprep.subr.mxu0 0.0
    %4199 = vmatpush1.msra.mxu0 %v315
    %4200 = vmatprep.subr.mxu0 0.0
    %4201 = vmatpush1.msra.mxu0 %v316
    %4202 = vmatprep.subr.mxu0 0.0
    %4203 = vmatpush1.msra.mxu0 %v317
    %4204 = vmatprep.subr.mxu0 0.0
    %4205 = vmatpush1.msra.mxu0 %v318
    %4206 = vmatprep.subr.mxu0 0.0
    %4207 = vmatpush1.msra.mxu0 %v319
    %4208 = vmatprep.subr.mxu0 0.0
    %4209 = vmatpush1.msra.mxu0 %v320
    %4210 = vmatprep.subr.mxu0 0.0
    %4211 = vmatpush1.msra.mxu0 %v321
    %4212 = vmatprep.subr.mxu0 0.0
    %4213 = vmatpush1.msra.mxu0 %v322
    %4214 = vmatprep.subr.mxu0 0.0
    %4215 = vmatpush1.msra.mxu0 %v323
    %4216 = vmatprep.subr.mxu0 0.0
    %4217 = vmatpush1.msra.mxu0 %v324
    %4218 = vmatprep.subr.mxu0 0.0
    %4219 = vmatpush1.msra.mxu0 %v325
    %4220 = vmatprep.subr.mxu0 0.0
    %4221 = vmatpush1.msra.mxu0 %v326
    %4222 = vmatprep.subr.mxu0 0.0
    %4223 = vmatpush1.msra.mxu0 %v327
    %4224 = vmatprep.subr.mxu0 0.0
    %4225 = vmatpush1.msra.mxu0 0.0
    %4226 = vmatprep.subr.mxu0 0.0
    %4227 = vmatpush1.msra.mxu0 0.0
    %4228 = vmatprep.subr.mxu0 0.0
    %4229 = vmatpush1.msra.mxu0 0.0
    %4230 = vmatprep.subr.mxu0 0.0
    %4231 = vmatpush1.msra.mxu0 0.0
    %4232 = vmatprep.subr.mxu0 0.0
    %4233 = vmatpush1.msra.mxu0 0.0
    %4234 = vmatprep.subr.mxu0 0.0
    %4235 = vmatpush1.msra.mxu0 0.0
    %4236 = vmatprep.subr.mxu0 0.0
    %4237 = vmatpush1.msra.mxu0 0.0
    %4238 = vmatprep.subr.mxu0 0.0
    %4239 = vmatpush1.msra.mxu0 0.0
    %4240 = vmatprep.subr.mxu0 0.0
    %4241 = vmatpush1.msra.mxu0 0.0
    %4242 = vmatprep.subr.mxu0 0.0
    %4243 = vmatpush1.msra.mxu0 0.0
    %4244 = vmatprep.subr.mxu0 0.0
    %4245 = vmatpush1.msra.mxu0 0.0
    %4246 = vmatprep.subr.mxu0 0.0
    %4247 = vmatpush1.msra.mxu0 0.0
    %4248 = vmatprep.subr.mxu0 0.0
    %4249 = vmatpush1.msra.mxu0 0.0
    %4250 = vmatprep.subr.mxu0 0.0
    %4251 = vmatpush1.msra.mxu0 0.0
    %4252 = vmatprep.subr.mxu0 0.0
    %4253 = vmatpush1.msra.mxu0 0.0
    %4254 = vmatprep.subr.mxu0 0.0
    %4255 = vmatpush1.msra.mxu0 0.0
    %4256 = vmatprep.mubr.f32.mxu0 0.0
    %4257 = vmatmul.mubr.f32.gmra.mrb[0].mxu0 %v4082
    %v4258 = vpop.f32.mrb[0].mxu0
    %v4259 = vadd.f32 0.0, %v4258
    %v4260 = vpop.f32.mrb[0].mxu0
    %4261 = vdwg.mxu0
    %4262 = vmatprep.subr.mxu0 0.0
    %4263 = vmatpush1.msra.mxu0 %v4176
    %4264 = vmatprep.subr.mxu0 0.0
    %4265 = vmatpush1.msra.mxu0 %v4177
    %4266 = vmatprep.subr.mxu0 0.0
    %4267 = vmatpush1.msra.mxu0 %v4178
    %4268 = vmatprep.subr.mxu0 0.0
    %4269 = vmatpush1.msra.mxu0 %v4179
    %4270 = vmatprep.subr.mxu0 0.0
    %4271 = vmatpush1.msra.mxu0 %v4180
    %4272 = vmatprep.subr.mxu0 0.0
    %4273 = vmatpush1.msra.mxu0 %v4181
    %4274 = vmatprep.subr.mxu0 0.0
    %4275 = vmatpush1.msra.mxu0 %v4182
    %4276 = vmatprep.subr.mxu0 0.0
    %4277 = vmatpush1.msra.mxu0 %v4183
    %4278 = vmatprep.subr.mxu0 0.0
    %4279 = vmatpush1.msra.mxu0 %v4184
    %4280 = vmatprep.subr.mxu0 0.0
    %4281 = vmatpush1.msra.mxu0 %v4185
    %4282 = vmatprep.subr.mxu0 0.0
    %4283 = vmatpush1.msra.mxu0 %v4186
    %4284 = vmatprep.subr.mxu0 0.0
    %4285 = vmatpush1.msra.mxu0 %v4187
    %4286 = vmatprep.subr.mxu0 0.0
    %4287 = vmatpush1.msra.mxu0 %v4188
    %4288 = vmatprep.subr.mxu0 0.0
    %4289 = vmatpush1.msra.mxu0 %v4189
    %4290 = vmatprep.subr.mxu0 0.0
    %4291 = vmatpush1.msra.mxu0 %v4190
    %4292 = vmatprep.subr.mxu0 0.0
    %4293 = vmatpush1.msra.mxu0 %v4191
    %4294 = vmatprep.subr.mxu0 0.0
    %4295 = vmatpush1.msra.mxu0 0.0
    %4296 = vmatprep.subr.mxu0 0.0
    %4297 = vmatpush1.msra.mxu0 0.0
    %4298 = vmatprep.subr.mxu0 0.0
    %4299 = vmatpush1.msra.mxu0 0.0
    %4300 = vmatprep.subr.mxu0 0.0
    %4301 = vmatpush1.msra.mxu0 0.0
    %4302 = vmatprep.subr.mxu0 0.0
    %4303 = vmatpush1.msra.mxu0 0.0
    %4304 = vmatprep.subr.mxu0 0.0
    %4305 = vmatpush1.msra.mxu0 0.0
    %4306 = vmatprep.subr.mxu0 0.0
    %4307 = vmatpush1.msra.mxu0 0.0
    %4308 = vmatprep.subr.mxu0 0.0
    %4309 = vmatpush1.msra.mxu0 0.0
    %4310 = vmatprep.subr.mxu0 0.0
    %4311 = vmatpush1.msra.mxu0 0.0
    %4312 = vmatprep.subr.mxu0 0.0
    %4313 = vmatpush1.msra.mxu0 0.0
    %4314 = vmatprep.subr.mxu0 0.0
    %4315 = vmatpush1.msra.mxu0 0.0
    %4316 = vmatprep.subr.mxu0 0.0
    %4317 = vmatpush1.msra.mxu0 0.0
    %4318 = vmatprep.subr.mxu0 0.0
    %4319 = vmatpush1.msra.mxu0 0.0
    %4320 = vmatprep.subr.mxu0 0.0
    %4321 = vmatpush1.msra.mxu0 0.0
    %4322 = vmatprep.subr.mxu0 0.0
    %4323 = vmatpush1.msra.mxu0 0.0
    %4324 = vmatprep.subr.mxu0 0.0
    %4325 = vmatpush1.msra.mxu0 0.0
    %4326 = vmatprep.mubr.f32.mxu0 0.0
    %4327 = vmatmul.mubr.f32.gmra.mrb[0].mxu0 %v4175
    %v4328 = vpop.f32.mrb[0].mxu0
    %v4329 = vadd.f32 %v4259, %v4328
    %v4330 = vpop.f32.mrb[0].mxu0
    %4331 = vdwg.mxu0
    %v4332 = vadd.f32 %v4329, %v333
    %v4333 = vxor.u32 %v4332, 2147483648
    %v4334 = vmul.f32 %v4333, 1.442695
    %v4335 = vpow.pop %v4334
    %v4336 = vadd.f32 %v4335, 1.0
    %v4337 = vrcp.pop %v4336
    %v4338 = vmul.f32 1.0, %v4337
    %v4339 = vtanh.pop %v4332
    %4340 = vrot.lane.b32.xlu0 %v4338, 96
    %v4341 = vpop.permute.xlu0 %4340
    %4342 = vrot.lane.b32.xlu0 %v4339, 64
    %v4343 = vpop.permute.xlu0 %4342
    %4344 = vrot.lane.b32.xlu0 %v4338, 32
    %v4345 = vpop.permute.xlu0 %4344
    %v4346 = vmul.f32 %v4341, %v4080
    %v4347 = vmul.f32 %v4338, %v4343
    %v4348 = vadd.f32 %v4346, %v4347
    %v4349 = vtanh.pop %v4348
    %v4350 = vmul.f32 %v4345, %v4349
    %s4351 = scalar_lea.vmem %s7, 112
    %4352 = vst [vmem:[%s4351] sm:$0xff] %v4350
    %s4353 = scalar_lea.vmem [#allocation2], 120
    %v4354 = vld [vmem:[%s4353] sm:$0xff]
    %4355 = vmatprep.subr.mxu0 0.0
    %4356 = vmatpush1.msra.mxu0 %v296
    %4357 = vmatprep.subr.mxu0 0.0
    %4358 = vmatpush1.msra.mxu0 %v297
    %4359 = vmatprep.subr.mxu0 0.0
    %4360 = vmatpush1.msra.mxu0 %v298
    %4361 = vmatprep.subr.mxu0 0.0
    %4362 = vmatpush1.msra.mxu0 %v299
    %4363 = vmatprep.subr.mxu0 0.0
    %4364 = vmatpush1.msra.mxu0 %v300
    %4365 = vmatprep.subr.mxu0 0.0
    %4366 = vmatpush1.msra.mxu0 %v301
    %4367 = vmatprep.subr.mxu0 0.0
    %4368 = vmatpush1.msra.mxu0 %v302
    %4369 = vmatprep.subr.mxu0 0.0
    %4370 = vmatpush1.msra.mxu0 %v303
    %4371 = vmatprep.subr.mxu0 0.0
    %4372 = vmatpush1.msra.mxu0 %v304
    %4373 = vmatprep.subr.mxu0 0.0
    %4374 = vmatpush1.msra.mxu0 %v305
    %4375 = vmatprep.subr.mxu0 0.0
    %4376 = vmatpush1.msra.mxu0 %v306
    %4377 = vmatprep.subr.mxu0 0.0
    %4378 = vmatpush1.msra.mxu0 %v307
    %4379 = vmatprep.subr.mxu0 0.0
    %4380 = vmatpush1.msra.mxu0 %v308
    %4381 = vmatprep.subr.mxu0 0.0
    %4382 = vmatpush1.msra.mxu0 %v309
    %4383 = vmatprep.subr.mxu0 0.0
    %4384 = vmatpush1.msra.mxu0 %v310
    %4385 = vmatprep.subr.mxu0 0.0
    %4386 = vmatpush1.msra.mxu0 %v311
    %4387 = vmatprep.subr.mxu0 0.0
    %4388 = vmatpush1.msra.mxu0 0.0
    %4389 = vmatprep.subr.mxu0 0.0
    %4390 = vmatpush1.msra.mxu0 0.0
    %4391 = vmatprep.subr.mxu0 0.0
    %4392 = vmatpush1.msra.mxu0 0.0
    %4393 = vmatprep.subr.mxu0 0.0
    %4394 = vmatpush1.msra.mxu0 0.0
    %4395 = vmatprep.subr.mxu0 0.0
    %4396 = vmatpush1.msra.mxu0 0.0
    %4397 = vmatprep.subr.mxu0 0.0
    %4398 = vmatpush1.msra.mxu0 0.0
    %4399 = vmatprep.subr.mxu0 0.0
    %4400 = vmatpush1.msra.mxu0 0.0
    %4401 = vmatprep.subr.mxu0 0.0
    %4402 = vmatpush1.msra.mxu0 0.0
    %4403 = vmatprep.subr.mxu0 0.0
    %4404 = vmatpush1.msra.mxu0 0.0
    %4405 = vmatprep.subr.mxu0 0.0
    %4406 = vmatpush1.msra.mxu0 0.0
    %4407 = vmatprep.subr.mxu0 0.0
    %4408 = vmatpush1.msra.mxu0 0.0
    %4409 = vmatprep.subr.mxu0 0.0
    %4410 = vmatpush1.msra.mxu0 0.0
    %4411 = vmatprep.subr.mxu0 0.0
    %4412 = vmatpush1.msra.mxu0 0.0
    %4413 = vmatprep.subr.mxu0 0.0
    %4414 = vmatpush1.msra.mxu0 0.0
    %4415 = vmatprep.subr.mxu0 0.0
    %4416 = vmatpush1.msra.mxu0 0.0
    %4417 = vmatprep.subr.mxu0 0.0
    %4418 = vmatpush1.msra.mxu0 0.0
    %4419 = vmatprep.mubr.f32.mxu0 0.0
    %4420 = vmatmul.mubr.f32.gmra.mrb[0].mxu0 %v4175
    %v4421 = vpop.f32.mrb[0].mxu0
    %v4422 = vadd.f32 0.0, %v4421
    %v4423 = vpop.f32.mrb[0].mxu0
    %4424 = vdwg.mxu0
    %v4425 = vadd.f32 %v4354, %v4422
    %v4426 = vxor.u32 %v4425, 2147483648
    %v4427 = vmul.f32 %v4426, 1.442695
    %v4428 = vpow.pop %v4427
    %v4429 = vadd.f32 %v4428, 1.0
    %v4430 = vrcp.pop %v4429
    %v4431 = vmul.f32 1.0, %v4430
    %v4432 = vtanh.pop %v4425
    %4433 = vrot.lane.b32.xlu0 %v4431, 96
    %v4434 = vpop.permute.xlu0 %4433
    %4435 = vrot.lane.b32.xlu0 %v4432, 64
    %v4436 = vpop.permute.xlu0 %4435
    %4437 = vrot.lane.b32.xlu0 %v4431, 32
    %v4438 = vpop.permute.xlu0 %4437
    %v4439 = vmul.f32 %v4434, %v4173
    %v4440 = vmul.f32 %v4431, %v4436
    %v4441 = vadd.f32 %v4439, %v4440
    %v4442 = vtanh.pop %v4441
    %v4443 = vmul.f32 %v4438, %v4442
    %v4444 = vld [vmem:[%s4] sm:$0xff]
    %v4445 = vld [vmem:[%s4 + $0x8] sm:$0xff]
    %v4446 = vld [vmem:[%s4 + $0x10] sm:$0xff]
    %v4447 = vld [vmem:[%s4 + $0x18] sm:$0xff]
    %v4448 = vld [vmem:[%s4 + $0x20] sm:$0xff]
    %v4449 = vld [vmem:[%s4 + $0x28] sm:$0xff]
    %v4450 = vld [vmem:[%s4 + $0x30] sm:$0xff]
    %v4451 = vld [vmem:[%s4 + $0x38] sm:$0xff]
    %v4452 = vld [vmem:[%s4 + $0x40] sm:$0xff]
    %v4453 = vld [vmem:[%s4 + $0x48] sm:$0xff]
    %v4454 = vld [vmem:[%s4 + $0x50] sm:$0xff]
    %v4455 = vld [vmem:[%s4 + $0x58] sm:$0xff]
    %v4456 = vld [vmem:[%s4 + $0x60] sm:$0xff]
    %v4457 = vld [vmem:[%s4 + $0x68] sm:$0xff]
    %v4458 = vld [vmem:[%s4 + $0x70] sm:$0xff]
    %v4459 = vld [vmem:[%s4 + $0x78] sm:$0xff]
    %4460 = vmatprep.subr.mxu0 0.0
    %4461 = vmatpush1.msra.mxu0 %v312
    %4462 = vmatprep.subr.mxu0 0.0
    %4463 = vmatpush1.msra.mxu0 %v313
    %4464 = vmatprep.subr.mxu0 0.0
    %4465 = vmatpush1.msra.mxu0 %v314
    %4466 = vmatprep.subr.mxu0 0.0
    %4467 = vmatpush1.msra.mxu0 %v315
    %4468 = vmatprep.subr.mxu0 0.0
    %4469 = vmatpush1.msra.mxu0 %v316
    %4470 = vmatprep.subr.mxu0 0.0
    %4471 = vmatpush1.msra.mxu0 %v317
    %4472 = vmatprep.subr.mxu0 0.0
    %4473 = vmatpush1.msra.mxu0 %v318
    %4474 = vmatprep.subr.mxu0 0.0
    %4475 = vmatpush1.msra.mxu0 %v319
    %4476 = vmatprep.subr.mxu0 0.0
    %4477 = vmatpush1.msra.mxu0 %v320
    %4478 = vmatprep.subr.mxu0 0.0
    %4479 = vmatpush1.msra.mxu0 %v321
    %4480 = vmatprep.subr.mxu0 0.0
    %4481 = vmatpush1.msra.mxu0 %v322
    %4482 = vmatprep.subr.mxu0 0.0
    %4483 = vmatpush1.msra.mxu0 %v323
    %4484 = vmatprep.subr.mxu0 0.0
    %4485 = vmatpush1.msra.mxu0 %v324
    %4486 = vmatprep.subr.mxu0 0.0
    %4487 = vmatpush1.msra.mxu0 %v325
    %4488 = vmatprep.subr.mxu0 0.0
    %4489 = vmatpush1.msra.mxu0 %v326
    %4490 = vmatprep.subr.mxu0 0.0
    %4491 = vmatpush1.msra.mxu0 %v327
    %4492 = vmatprep.subr.mxu0 0.0
    %4493 = vmatpush1.msra.mxu0 0.0
    %4494 = vmatprep.subr.mxu0 0.0
    %4495 = vmatpush1.msra.mxu0 0.0
    %4496 = vmatprep.subr.mxu0 0.0
    %4497 = vmatpush1.msra.mxu0 0.0
    %4498 = vmatprep.subr.mxu0 0.0
    %4499 = vmatpush1.msra.mxu0 0.0
    %4500 = vmatprep.subr.mxu0 0.0
    %4501 = vmatpush1.msra.mxu0 0.0
    %4502 = vmatprep.subr.mxu0 0.0
    %4503 = vmatpush1.msra.mxu0 0.0
    %4504 = vmatprep.subr.mxu0 0.0
    %4505 = vmatpush1.msra.mxu0 0.0
    %4506 = vmatprep.subr.mxu0 0.0
    %4507 = vmatpush1.msra.mxu0 0.0
    %4508 = vmatprep.subr.mxu0 0.0
    %4509 = vmatpush1.msra.mxu0 0.0
    %4510 = vmatprep.subr.mxu0 0.0
    %4511 = vmatpush1.msra.mxu0 0.0
    %4512 = vmatprep.subr.mxu0 0.0
    %4513 = vmatpush1.msra.mxu0 0.0
    %4514 = vmatprep.subr.mxu0 0.0
    %4515 = vmatpush1.msra.mxu0 0.0
    %4516 = vmatprep.subr.mxu0 0.0
    %4517 = vmatpush1.msra.mxu0 0.0
    %4518 = vmatprep.subr.mxu0 0.0
    %4519 = vmatpush1.msra.mxu0 0.0
    %4520 = vmatprep.subr.mxu0 0.0
    %4521 = vmatpush1.msra.mxu0 0.0
    %4522 = vmatprep.subr.mxu0 0.0
    %4523 = vmatpush1.msra.mxu0 0.0
    %4524 = vmatprep.mubr.f32.mxu0 0.0
    %4525 = vmatmul.mubr.f32.gmra.mrb[0].mxu0 %v4350
    %v4526 = vpop.f32.mrb[0].mxu0
    %v4527 = vadd.f32 0.0, %v4526
    %v4528 = vpop.f32.mrb[0].mxu0
    %4529 = vdwg.mxu0
    %4530 = vmatprep.subr.mxu0 0.0
    %4531 = vmatpush1.msra.mxu0 %v4444
    %4532 = vmatprep.subr.mxu0 0.0
    %4533 = vmatpush1.msra.mxu0 %v4445
    %4534 = vmatprep.subr.mxu0 0.0
    %4535 = vmatpush1.msra.mxu0 %v4446
    %4536 = vmatprep.subr.mxu0 0.0
    %4537 = vmatpush1.msra.mxu0 %v4447
    %4538 = vmatprep.subr.mxu0 0.0
    %4539 = vmatpush1.msra.mxu0 %v4448
    %4540 = vmatprep.subr.mxu0 0.0
    %4541 = vmatpush1.msra.mxu0 %v4449
    %4542 = vmatprep.subr.mxu0 0.0
    %4543 = vmatpush1.msra.mxu0 %v4450
    %4544 = vmatprep.subr.mxu0 0.0
    %4545 = vmatpush1.msra.mxu0 %v4451
    %4546 = vmatprep.subr.mxu0 0.0
    %4547 = vmatpush1.msra.mxu0 %v4452
    %4548 = vmatprep.subr.mxu0 0.0
    %4549 = vmatpush1.msra.mxu0 %v4453
    %4550 = vmatprep.subr.mxu0 0.0
    %4551 = vmatpush1.msra.mxu0 %v4454
    %4552 = vmatprep.subr.mxu0 0.0
    %4553 = vmatpush1.msra.mxu0 %v4455
    %4554 = vmatprep.subr.mxu0 0.0
    %4555 = vmatpush1.msra.mxu0 %v4456
    %4556 = vmatprep.subr.mxu0 0.0
    %4557 = vmatpush1.msra.mxu0 %v4457
    %4558 = vmatprep.subr.mxu0 0.0
    %4559 = vmatpush1.msra.mxu0 %v4458
    %4560 = vmatprep.subr.mxu0 0.0
    %4561 = vmatpush1.msra.mxu0 %v4459
    %4562 = vmatprep.subr.mxu0 0.0
    %4563 = vmatpush1.msra.mxu0 0.0
    %4564 = vmatprep.subr.mxu0 0.0
    %4565 = vmatpush1.msra.mxu0 0.0
    %4566 = vmatprep.subr.mxu0 0.0
    %4567 = vmatpush1.msra.mxu0 0.0
    %4568 = vmatprep.subr.mxu0 0.0
    %4569 = vmatpush1.msra.mxu0 0.0
    %4570 = vmatprep.subr.mxu0 0.0
    %4571 = vmatpush1.msra.mxu0 0.0
    %4572 = vmatprep.subr.mxu0 0.0
    %4573 = vmatpush1.msra.mxu0 0.0
    %4574 = vmatprep.subr.mxu0 0.0
    %4575 = vmatpush1.msra.mxu0 0.0
    %4576 = vmatprep.subr.mxu0 0.0
    %4577 = vmatpush1.msra.mxu0 0.0
    %4578 = vmatprep.subr.mxu0 0.0
    %4579 = vmatpush1.msra.mxu0 0.0
    %4580 = vmatprep.subr.mxu0 0.0
    %4581 = vmatpush1.msra.mxu0 0.0
    %4582 = vmatprep.subr.mxu0 0.0
    %4583 = vmatpush1.msra.mxu0 0.0
    %4584 = vmatprep.subr.mxu0 0.0
    %4585 = vmatpush1.msra.mxu0 0.0
    %4586 = vmatprep.subr.mxu0 0.0
    %4587 = vmatpush1.msra.mxu0 0.0
    %4588 = vmatprep.subr.mxu0 0.0
    %4589 = vmatpush1.msra.mxu0 0.0
    %4590 = vmatprep.subr.mxu0 0.0
    %4591 = vmatpush1.msra.mxu0 0.0
    %4592 = vmatprep.subr.mxu0 0.0
    %4593 = vmatpush1.msra.mxu0 0.0
    %4594 = vmatprep.mubr.f32.mxu0 0.0
    %4595 = vmatmul.mubr.f32.gmra.mrb[0].mxu0 %v4443
    %v4596 = vpop.f32.mrb[0].mxu0
    %v4597 = vadd.f32 %v4527, %v4596
    %v4598 = vpop.f32.mrb[0].mxu0
    %4599 = vdwg.mxu0
    %v4600 = vadd.f32 %v4597, %v333
    %v4601 = vxor.u32 %v4600, 2147483648
    %v4602 = vmul.f32 %v4601, 1.442695
    %v4603 = vpow.pop %v4602
    %v4604 = vadd.f32 %v4603, 1.0
    %v4605 = vrcp.pop %v4604
    %v4606 = vmul.f32 1.0, %v4605
    %v4607 = vtanh.pop %v4600
    %4608 = vrot.lane.b32.xlu0 %v4606, 96
    %v4609 = vpop.permute.xlu0 %4608
    %4610 = vrot.lane.b32.xlu0 %v4607, 64
    %v4611 = vpop.permute.xlu0 %4610
    %4612 = vrot.lane.b32.xlu0 %v4606, 32
    %v4613 = vpop.permute.xlu0 %4612
    %v4614 = vmul.f32 %v4609, %v4348
    %v4615 = vmul.f32 %v4606, %v4611
    %v4616 = vadd.f32 %v4614, %v4615
    %v4617 = vtanh.pop %v4616
    %v4618 = vmul.f32 %v4613, %v4617
    %s4619 = scalar_lea.vmem %s7, 120
    %4620 = vst [vmem:[%s4619] sm:$0xff] %v4618
    %s4621 = scalar_lea.vmem [#allocation2], 128
    %v4622 = vld [vmem:[%s4621] sm:$0xff]
    %4623 = vmatprep.subr.mxu0 0.0
    %4624 = vmatpush1.msra.mxu0 %v296
    %4625 = vmatprep.subr.mxu0 0.0
    %4626 = vmatpush1.msra.mxu0 %v297
    %4627 = vmatprep.subr.mxu0 0.0
    %4628 = vmatpush1.msra.mxu0 %v298
    %4629 = vmatprep.subr.mxu0 0.0
    %4630 = vmatpush1.msra.mxu0 %v299
    %4631 = vmatprep.subr.mxu0 0.0
    %4632 = vmatpush1.msra.mxu0 %v300
    %4633 = vmatprep.subr.mxu0 0.0
    %4634 = vmatpush1.msra.mxu0 %v301
    %4635 = vmatprep.subr.mxu0 0.0
    %4636 = vmatpush1.msra.mxu0 %v302
    %4637 = vmatprep.subr.mxu0 0.0
    %4638 = vmatpush1.msra.mxu0 %v303
    %4639 = vmatprep.subr.mxu0 0.0
    %4640 = vmatpush1.msra.mxu0 %v304
    %4641 = vmatprep.subr.mxu0 0.0
    %4642 = vmatpush1.msra.mxu0 %v305
    %4643 = vmatprep.subr.mxu0 0.0
    %4644 = vmatpush1.msra.mxu0 %v306
    %4645 = vmatprep.subr.mxu0 0.0
    %4646 = vmatpush1.msra.mxu0 %v307
    %4647 = vmatprep.subr.mxu0 0.0
    %4648 = vmatpush1.msra.mxu0 %v308
    %4649 = vmatprep.subr.mxu0 0.0
    %4650 = vmatpush1.msra.mxu0 %v309
    %4651 = vmatprep.subr.mxu0 0.0
    %4652 = vmatpush1.msra.mxu0 %v310
    %4653 = vmatprep.subr.mxu0 0.0
    %4654 = vmatpush1.msra.mxu0 %v311
    %4655 = vmatprep.subr.mxu0 0.0
    %4656 = vmatpush1.msra.mxu0 0.0
    %4657 = vmatprep.subr.mxu0 0.0
    %4658 = vmatpush1.msra.mxu0 0.0
    %4659 = vmatprep.subr.mxu0 0.0
    %4660 = vmatpush1.msra.mxu0 0.0
    %4661 = vmatprep.subr.mxu0 0.0
    %4662 = vmatpush1.msra.mxu0 0.0
    %4663 = vmatprep.subr.mxu0 0.0
    %4664 = vmatpush1.msra.mxu0 0.0
    %4665 = vmatprep.subr.mxu0 0.0
    %4666 = vmatpush1.msra.mxu0 0.0
    %4667 = vmatprep.subr.mxu0 0.0
    %4668 = vmatpush1.msra.mxu0 0.0
    %4669 = vmatprep.subr.mxu0 0.0
    %4670 = vmatpush1.msra.mxu0 0.0
    %4671 = vmatprep.subr.mxu0 0.0
    %4672 = vmatpush1.msra.mxu0 0.0
    %4673 = vmatprep.subr.mxu0 0.0
    %4674 = vmatpush1.msra.mxu0 0.0
    %4675 = vmatprep.subr.mxu0 0.0
    %4676 = vmatpush1.msra.mxu0 0.0
    %4677 = vmatprep.subr.mxu0 0.0
    %4678 = vmatpush1.msra.mxu0 0.0
    %4679 = vmatprep.subr.mxu0 0.0
    %4680 = vmatpush1.msra.mxu0 0.0
    %4681 = vmatprep.subr.mxu0 0.0
    %4682 = vmatpush1.msra.mxu0 0.0
    %4683 = vmatprep.subr.mxu0 0.0
    %4684 = vmatpush1.msra.mxu0 0.0
    %4685 = vmatprep.subr.mxu0 0.0
    %4686 = vmatpush1.msra.mxu0 0.0
    %4687 = vmatprep.mubr.f32.mxu0 0.0
    %4688 = vmatmul.mubr.f32.gmra.mrb[0].mxu0 %v4443
    %v4689 = vpop.f32.mrb[0].mxu0
    %v4690 = vadd.f32 0.0, %v4689
    %v4691 = vpop.f32.mrb[0].mxu0
    %4692 = vdwg.mxu0
    %v4693 = vadd.f32 %v4622, %v4690
    %v4694 = vxor.u32 %v4693, 2147483648
    %v4695 = vmul.f32 %v4694, 1.442695
    %v4696 = vpow.pop %v4695
    %v4697 = vadd.f32 %v4696, 1.0
    %v4698 = vrcp.pop %v4697
    %v4699 = vmul.f32 1.0, %v4698
    %v4700 = vtanh.pop %v4693
    %4701 = vrot.lane.b32.xlu0 %v4699, 96
    %v4702 = vpop.permute.xlu0 %4701
    %4703 = vrot.lane.b32.xlu0 %v4700, 64
    %v4704 = vpop.permute.xlu0 %4703
    %4705 = vrot.lane.b32.xlu0 %v4699, 32
    %v4706 = vpop.permute.xlu0 %4705
    %v4707 = vmul.f32 %v4702, %v4441
    %v4708 = vmul.f32 %v4699, %v4704
    %v4709 = vadd.f32 %v4707, %v4708
    %v4710 = vtanh.pop %v4709
    %v4711 = vmul.f32 %v4706, %v4710
    %v4712 = vld [vmem:[%s4] sm:$0xff]
    %v4713 = vld [vmem:[%s4 + $0x8] sm:$0xff]
    %v4714 = vld [vmem:[%s4 + $0x10] sm:$0xff]
    %v4715 = vld [vmem:[%s4 + $0x18] sm:$0xff]
    %v4716 = vld [vmem:[%s4 + $0x20] sm:$0xff]
    %v4717 = vld [vmem:[%s4 + $0x28] sm:$0xff]
    %v4718 = vld [vmem:[%s4 + $0x30] sm:$0xff]
    %v4719 = vld [vmem:[%s4 + $0x38] sm:$0xff]
    %v4720 = vld [vmem:[%s4 + $0x40] sm:$0xff]
    %v4721 = vld [vmem:[%s4 + $0x48] sm:$0xff]
    %v4722 = vld [vmem:[%s4 + $0x50] sm:$0xff]
    %v4723 = vld [vmem:[%s4 + $0x58] sm:$0xff]
    %v4724 = vld [vmem:[%s4 + $0x60] sm:$0xff]
    %v4725 = vld [vmem:[%s4 + $0x68] sm:$0xff]
    %v4726 = vld [vmem:[%s4 + $0x70] sm:$0xff]
    %v4727 = vld [vmem:[%s4 + $0x78] sm:$0xff]
    %4728 = vmatprep.subr.mxu0 0.0
    %4729 = vmatpush1.msra.mxu0 %v312
    %4730 = vmatprep.subr.mxu0 0.0
    %4731 = vmatpush1.msra.mxu0 %v313
    %4732 = vmatprep.subr.mxu0 0.0
    %4733 = vmatpush1.msra.mxu0 %v314
    %4734 = vmatprep.subr.mxu0 0.0
    %4735 = vmatpush1.msra.mxu0 %v315
    %4736 = vmatprep.subr.mxu0 0.0
    %4737 = vmatpush1.msra.mxu0 %v316
    %4738 = vmatprep.subr.mxu0 0.0
    %4739 = vmatpush1.msra.mxu0 %v317
    %4740 = vmatprep.subr.mxu0 0.0
    %4741 = vmatpush1.msra.mxu0 %v318
    %4742 = vmatprep.subr.mxu0 0.0
    %4743 = vmatpush1.msra.mxu0 %v319
    %4744 = vmatprep.subr.mxu0 0.0
    %4745 = vmatpush1.msra.mxu0 %v320
    %4746 = vmatprep.subr.mxu0 0.0
    %4747 = vmatpush1.msra.mxu0 %v321
    %4748 = vmatprep.subr.mxu0 0.0
    %4749 = vmatpush1.msra.mxu0 %v322
    %4750 = vmatprep.subr.mxu0 0.0
    %4751 = vmatpush1.msra.mxu0 %v323
    %4752 = vmatprep.subr.mxu0 0.0
    %4753 = vmatpush1.msra.mxu0 %v324
    %4754 = vmatprep.subr.mxu0 0.0
    %4755 = vmatpush1.msra.mxu0 %v325
    %4756 = vmatprep.subr.mxu0 0.0
    %4757 = vmatpush1.msra.mxu0 %v326
    %4758 = vmatprep.subr.mxu0 0.0
    %4759 = vmatpush1.msra.mxu0 %v327
    %4760 = vmatprep.subr.mxu0 0.0
    %4761 = vmatpush1.msra.mxu0 0.0
    %4762 = vmatprep.subr.mxu0 0.0
    %4763 = vmatpush1.msra.mxu0 0.0
    %4764 = vmatprep.subr.mxu0 0.0
    %4765 = vmatpush1.msra.mxu0 0.0
    %4766 = vmatprep.subr.mxu0 0.0
    %4767 = vmatpush1.msra.mxu0 0.0
    %4768 = vmatprep.subr.mxu0 0.0
    %4769 = vmatpush1.msra.mxu0 0.0
    %4770 = vmatprep.subr.mxu0 0.0
    %4771 = vmatpush1.msra.mxu0 0.0
    %4772 = vmatprep.subr.mxu0 0.0
    %4773 = vmatpush1.msra.mxu0 0.0
    %4774 = vmatprep.subr.mxu0 0.0
    %4775 = vmatpush1.msra.mxu0 0.0
    %4776 = vmatprep.subr.mxu0 0.0
    %4777 = vmatpush1.msra.mxu0 0.0
    %4778 = vmatprep.subr.mxu0 0.0
    %4779 = vmatpush1.msra.mxu0 0.0
    %4780 = vmatprep.subr.mxu0 0.0
    %4781 = vmatpush1.msra.mxu0 0.0
    %4782 = vmatprep.subr.mxu0 0.0
    %4783 = vmatpush1.msra.mxu0 0.0
    %4784 = vmatprep.subr.mxu0 0.0
    %4785 = vmatpush1.msra.mxu0 0.0
    %4786 = vmatprep.subr.mxu0 0.0
    %4787 = vmatpush1.msra.mxu0 0.0
    %4788 = vmatprep.subr.mxu0 0.0
    %4789 = vmatpush1.msra.mxu0 0.0
    %4790 = vmatprep.subr.mxu0 0.0
    %4791 = vmatpush1.msra.mxu0 0.0
    %4792 = vmatprep.mubr.f32.mxu0 0.0
    %4793 = vmatmul.mubr.f32.gmra.mrb[0].mxu0 %v4618
    %v4794 = vpop.f32.mrb[0].mxu0
    %v4795 = vadd.f32 0.0, %v4794
    %v4796 = vpop.f32.mrb[0].mxu0
    %4797 = vdwg.mxu0
    %4798 = vmatprep.subr.mxu0 0.0
    %4799 = vmatpush1.msra.mxu0 %v4712
    %4800 = vmatprep.subr.mxu0 0.0
    %4801 = vmatpush1.msra.mxu0 %v4713
    %4802 = vmatprep.subr.mxu0 0.0
    %4803 = vmatpush1.msra.mxu0 %v4714
    %4804 = vmatprep.subr.mxu0 0.0
    %4805 = vmatpush1.msra.mxu0 %v4715
    %4806 = vmatprep.subr.mxu0 0.0
    %4807 = vmatpush1.msra.mxu0 %v4716
    %4808 = vmatprep.subr.mxu0 0.0
    %4809 = vmatpush1.msra.mxu0 %v4717
    %4810 = vmatprep.subr.mxu0 0.0
    %4811 = vmatpush1.msra.mxu0 %v4718
    %4812 = vmatprep.subr.mxu0 0.0
    %4813 = vmatpush1.msra.mxu0 %v4719
    %4814 = vmatprep.subr.mxu0 0.0
    %4815 = vmatpush1.msra.mxu0 %v4720
    %4816 = vmatprep.subr.mxu0 0.0
    %4817 = vmatpush1.msra.mxu0 %v4721
    %4818 = vmatprep.subr.mxu0 0.0
    %4819 = vmatpush1.msra.mxu0 %v4722
    %4820 = vmatprep.subr.mxu0 0.0
    %4821 = vmatpush1.msra.mxu0 %v4723
    %4822 = vmatprep.subr.mxu0 0.0
    %4823 = vmatpush1.msra.mxu0 %v4724
    %4824 = vmatprep.subr.mxu0 0.0
    %4825 = vmatpush1.msra.mxu0 %v4725
    %4826 = vmatprep.subr.mxu0 0.0
    %4827 = vmatpush1.msra.mxu0 %v4726
    %4828 = vmatprep.subr.mxu0 0.0
    %4829 = vmatpush1.msra.mxu0 %v4727
    %4830 = vmatprep.subr.mxu0 0.0
    %4831 = vmatpush1.msra.mxu0 0.0
    %4832 = vmatprep.subr.mxu0 0.0
    %4833 = vmatpush1.msra.mxu0 0.0
    %4834 = vmatprep.subr.mxu0 0.0
    %4835 = vmatpush1.msra.mxu0 0.0
    %4836 = vmatprep.subr.mxu0 0.0
    %4837 = vmatpush1.msra.mxu0 0.0
    %4838 = vmatprep.subr.mxu0 0.0
    %4839 = vmatpush1.msra.mxu0 0.0
    %4840 = vmatprep.subr.mxu0 0.0
    %4841 = vmatpush1.msra.mxu0 0.0
    %4842 = vmatprep.subr.mxu0 0.0
    %4843 = vmatpush1.msra.mxu0 0.0
    %4844 = vmatprep.subr.mxu0 0.0
    %4845 = vmatpush1.msra.mxu0 0.0
    %4846 = vmatprep.subr.mxu0 0.0
    %4847 = vmatpush1.msra.mxu0 0.0
    %4848 = vmatprep.subr.mxu0 0.0
    %4849 = vmatpush1.msra.mxu0 0.0
    %4850 = vmatprep.subr.mxu0 0.0
    %4851 = vmatpush1.msra.mxu0 0.0
    %4852 = vmatprep.subr.mxu0 0.0
    %4853 = vmatpush1.msra.mxu0 0.0
    %4854 = vmatprep.subr.mxu0 0.0
    %4855 = vmatpush1.msra.mxu0 0.0
    %4856 = vmatprep.subr.mxu0 0.0
    %4857 = vmatpush1.msra.mxu0 0.0
    %4858 = vmatprep.subr.mxu0 0.0
    %4859 = vmatpush1.msra.mxu0 0.0
    %4860 = vmatprep.subr.mxu0 0.0
    %4861 = vmatpush1.msra.mxu0 0.0
    %4862 = vmatprep.mubr.f32.mxu0 0.0
    %4863 = vmatmul.mubr.f32.gmra.mrb[0].mxu0 %v4711
    %v4864 = vpop.f32.mrb[0].mxu0
    %v4865 = vadd.f32 %v4795, %v4864
    %v4866 = vpop.f32.mrb[0].mxu0
    %4867 = vdwg.mxu0
    %v4868 = vadd.f32 %v4865, %v333
    %v4869 = vxor.u32 %v4868, 2147483648
    %v4870 = vmul.f32 %v4869, 1.442695
    %v4871 = vpow.pop %v4870
    %v4872 = vadd.f32 %v4871, 1.0
    %v4873 = vrcp.pop %v4872
    %v4874 = vmul.f32 1.0, %v4873
    %v4875 = vtanh.pop %v4868
    %4876 = vrot.lane.b32.xlu0 %v4874, 96
    %v4877 = vpop.permute.xlu0 %4876
    %4878 = vrot.lane.b32.xlu0 %v4875, 64
    %v4879 = vpop.permute.xlu0 %4878
    %4880 = vrot.lane.b32.xlu0 %v4874, 32
    %v4881 = vpop.permute.xlu0 %4880
    %v4882 = vmul.f32 %v4877, %v4616
    %v4883 = vmul.f32 %v4874, %v4879
    %v4884 = vadd.f32 %v4882, %v4883
    %v4885 = vtanh.pop %v4884
    %v4886 = vmul.f32 %v4881, %v4885
    %s4887 = scalar_lea.vmem %s7, 128
    %4888 = vst [vmem:[%s4887] sm:$0xff] %v4886
    %s4889 = scalar_lea.vmem [#allocation2], 136
    %v4890 = vld [vmem:[%s4889] sm:$0xff]
    %4891 = vmatprep.subr.mxu0 0.0
    %4892 = vmatpush1.msra.mxu0 %v296
    %4893 = vmatprep.subr.mxu0 0.0
    %4894 = vmatpush1.msra.mxu0 %v297
    %4895 = vmatprep.subr.mxu0 0.0
    %4896 = vmatpush1.msra.mxu0 %v298
    %4897 = vmatprep.subr.mxu0 0.0
    %4898 = vmatpush1.msra.mxu0 %v299
    %4899 = vmatprep.subr.mxu0 0.0
    %4900 = vmatpush1.msra.mxu0 %v300
    %4901 = vmatprep.subr.mxu0 0.0
    %4902 = vmatpush1.msra.mxu0 %v301
    %4903 = vmatprep.subr.mxu0 0.0
    %4904 = vmatpush1.msra.mxu0 %v302
    %4905 = vmatprep.subr.mxu0 0.0
    %4906 = vmatpush1.msra.mxu0 %v303
    %4907 = vmatprep.subr.mxu0 0.0
    %4908 = vmatpush1.msra.mxu0 %v304
    %4909 = vmatprep.subr.mxu0 0.0
    %4910 = vmatpush1.msra.mxu0 %v305
    %4911 = vmatprep.subr.mxu0 0.0
    %4912 = vmatpush1.msra.mxu0 %v306
    %4913 = vmatprep.subr.mxu0 0.0
    %4914 = vmatpush1.msra.mxu0 %v307
    %4915 = vmatprep.subr.mxu0 0.0
    %4916 = vmatpush1.msra.mxu0 %v308
    %4917 = vmatprep.subr.mxu0 0.0
    %4918 = vmatpush1.msra.mxu0 %v309
    %4919 = vmatprep.subr.mxu0 0.0
    %4920 = vmatpush1.msra.mxu0 %v310
    %4921 = vmatprep.subr.mxu0 0.0
    %4922 = vmatpush1.msra.mxu0 %v311
    %4923 = vmatprep.subr.mxu0 0.0
    %4924 = vmatpush1.msra.mxu0 0.0
    %4925 = vmatprep.subr.mxu0 0.0
    %4926 = vmatpush1.msra.mxu0 0.0
    %4927 = vmatprep.subr.mxu0 0.0
    %4928 = vmatpush1.msra.mxu0 0.0
    %4929 = vmatprep.subr.mxu0 0.0
    %4930 = vmatpush1.msra.mxu0 0.0
    %4931 = vmatprep.subr.mxu0 0.0
    %4932 = vmatpush1.msra.mxu0 0.0
    %4933 = vmatprep.subr.mxu0 0.0
    %4934 = vmatpush1.msra.mxu0 0.0
    %4935 = vmatprep.subr.mxu0 0.0
    %4936 = vmatpush1.msra.mxu0 0.0
    %4937 = vmatprep.subr.mxu0 0.0
    %4938 = vmatpush1.msra.mxu0 0.0
    %4939 = vmatprep.subr.mxu0 0.0
    %4940 = vmatpush1.msra.mxu0 0.0
    %4941 = vmatprep.subr.mxu0 0.0
    %4942 = vmatpush1.msra.mxu0 0.0
    %4943 = vmatprep.subr.mxu0 0.0
    %4944 = vmatpush1.msra.mxu0 0.0
    %4945 = vmatprep.subr.mxu0 0.0
    %4946 = vmatpush1.msra.mxu0 0.0
    %4947 = vmatprep.subr.mxu0 0.0
    %4948 = vmatpush1.msra.mxu0 0.0
    %4949 = vmatprep.subr.mxu0 0.0
    %4950 = vmatpush1.msra.mxu0 0.0
    %4951 = vmatprep.subr.mxu0 0.0
    %4952 = vmatpush1.msra.mxu0 0.0
    %4953 = vmatprep.subr.mxu0 0.0
    %4954 = vmatpush1.msra.mxu0 0.0
    %4955 = vmatprep.mubr.f32.mxu0 0.0
    %4956 = vmatmul.mubr.f32.gmra.mrb[0].mxu0 %v4711
    %v4957 = vpop.f32.mrb[0].mxu0
    %v4958 = vadd.f32 0.0, %v4957
    %v4959 = vpop.f32.mrb[0].mxu0
    %4960 = vdwg.mxu0
    %v4961 = vadd.f32 %v4890, %v4958
    %v4962 = vxor.u32 %v4961, 2147483648
    %v4963 = vmul.f32 %v4962, 1.442695
    %v4964 = vpow.pop %v4963
    %v4965 = vadd.f32 %v4964, 1.0
    %v4966 = vrcp.pop %v4965
    %v4967 = vmul.f32 1.0, %v4966
    %v4968 = vtanh.pop %v4961
    %4969 = vrot.lane.b32.xlu0 %v4967, 96
    %v4970 = vpop.permute.xlu0 %4969
    %4971 = vrot.lane.b32.xlu0 %v4968, 64
    %v4972 = vpop.permute.xlu0 %4971
    %4973 = vrot.lane.b32.xlu0 %v4967, 32
    %v4974 = vpop.permute.xlu0 %4973
    %v4975 = vmul.f32 %v4970, %v4709
    %v4976 = vmul.f32 %v4967, %v4972
    %v4977 = vadd.f32 %v4975, %v4976
    %v4978 = vtanh.pop %v4977
    %v4979 = vmul.f32 %v4974, %v4978
    %v4980 = vld [vmem:[%s4] sm:$0xff]
    %v4981 = vld [vmem:[%s4 + $0x8] sm:$0xff]
    %v4982 = vld [vmem:[%s4 + $0x10] sm:$0xff]
    %v4983 = vld [vmem:[%s4 + $0x18] sm:$0xff]
    %v4984 = vld [vmem:[%s4 + $0x20] sm:$0xff]
    %v4985 = vld [vmem:[%s4 + $0x28] sm:$0xff]
    %v4986 = vld [vmem:[%s4 + $0x30] sm:$0xff]
    %v4987 = vld [vmem:[%s4 + $0x38] sm:$0xff]
    %v4988 = vld [vmem:[%s4 + $0x40] sm:$0xff]
    %v4989 = vld [vmem:[%s4 + $0x48] sm:$0xff]
    %v4990 = vld [vmem:[%s4 + $0x50] sm:$0xff]
    %v4991 = vld [vmem:[%s4 + $0x58] sm:$0xff]
    %v4992 = vld [vmem:[%s4 + $0x60] sm:$0xff]
    %v4993 = vld [vmem:[%s4 + $0x68] sm:$0xff]
    %v4994 = vld [vmem:[%s4 + $0x70] sm:$0xff]
    %v4995 = vld [vmem:[%s4 + $0x78] sm:$0xff]
    %4996 = vmatprep.subr.mxu0 0.0
    %4997 = vmatpush1.msra.mxu0 %v312
    %4998 = vmatprep.subr.mxu0 0.0
    %4999 = vmatpush1.msra.mxu0 %v313
    %5000 = vmatprep.subr.mxu0 0.0
    %5001 = vmatpush1.msra.mxu0 %v314
    %5002 = vmatprep.subr.mxu0 0.0
    %5003 = vmatpush1.msra.mxu0 %v315
    %5004 = vmatprep.subr.mxu0 0.0
    %5005 = vmatpush1.msra.mxu0 %v316
    %5006 = vmatprep.subr.mxu0 0.0
    %5007 = vmatpush1.msra.mxu0 %v317
    %5008 = vmatprep.subr.mxu0 0.0
    %5009 = vmatpush1.msra.mxu0 %v318
    %5010 = vmatprep.subr.mxu0 0.0
    %5011 = vmatpush1.msra.mxu0 %v319
    %5012 = vmatprep.subr.mxu0 0.0
    %5013 = vmatpush1.msra.mxu0 %v320
    %5014 = vmatprep.subr.mxu0 0.0
    %5015 = vmatpush1.msra.mxu0 %v321
    %5016 = vmatprep.subr.mxu0 0.0
    %5017 = vmatpush1.msra.mxu0 %v322
    %5018 = vmatprep.subr.mxu0 0.0
    %5019 = vmatpush1.msra.mxu0 %v323
    %5020 = vmatprep.subr.mxu0 0.0
    %5021 = vmatpush1.msra.mxu0 %v324
    %5022 = vmatprep.subr.mxu0 0.0
    %5023 = vmatpush1.msra.mxu0 %v325
    %5024 = vmatprep.subr.mxu0 0.0
    %5025 = vmatpush1.msra.mxu0 %v326
    %5026 = vmatprep.subr.mxu0 0.0
    %5027 = vmatpush1.msra.mxu0 %v327
    %5028 = vmatprep.subr.mxu0 0.0
    %5029 = vmatpush1.msra.mxu0 0.0
    %5030 = vmatprep.subr.mxu0 0.0
    %5031 = vmatpush1.msra.mxu0 0.0
    %5032 = vmatprep.subr.mxu0 0.0
    %5033 = vmatpush1.msra.mxu0 0.0
    %5034 = vmatprep.subr.mxu0 0.0
    %5035 = vmatpush1.msra.mxu0 0.0
    %5036 = vmatprep.subr.mxu0 0.0
    %5037 = vmatpush1.msra.mxu0 0.0
    %5038 = vmatprep.subr.mxu0 0.0
    %5039 = vmatpush1.msra.mxu0 0.0
    %5040 = vmatprep.subr.mxu0 0.0
    %5041 = vmatpush1.msra.mxu0 0.0
    %5042 = vmatprep.subr.mxu0 0.0
    %5043 = vmatpush1.msra.mxu0 0.0
    %5044 = vmatprep.subr.mxu0 0.0
    %5045 = vmatpush1.msra.mxu0 0.0
    %5046 = vmatprep.subr.mxu0 0.0
    %5047 = vmatpush1.msra.mxu0 0.0
    %5048 = vmatprep.subr.mxu0 0.0
    %5049 = vmatpush1.msra.mxu0 0.0
    %5050 = vmatprep.subr.mxu0 0.0
    %5051 = vmatpush1.msra.mxu0 0.0
    %5052 = vmatprep.subr.mxu0 0.0
    %5053 = vmatpush1.msra.mxu0 0.0
    %5054 = vmatprep.subr.mxu0 0.0
    %5055 = vmatpush1.msra.mxu0 0.0
    %5056 = vmatprep.subr.mxu0 0.0
    %5057 = vmatpush1.msra.mxu0 0.0
    %5058 = vmatprep.subr.mxu0 0.0
    %5059 = vmatpush1.msra.mxu0 0.0
    %5060 = vmatprep.mubr.f32.mxu0 0.0
    %5061 = vmatmul.mubr.f32.gmra.mrb[0].mxu0 %v4886
    %v5062 = vpop.f32.mrb[0].mxu0
    %v5063 = vadd.f32 0.0, %v5062
    %v5064 = vpop.f32.mrb[0].mxu0
    %5065 = vdwg.mxu0
    %5066 = vmatprep.subr.mxu0 0.0
    %5067 = vmatpush1.msra.mxu0 %v4980
    %5068 = vmatprep.subr.mxu0 0.0
    %5069 = vmatpush1.msra.mxu0 %v4981
    %5070 = vmatprep.subr.mxu0 0.0
    %5071 = vmatpush1.msra.mxu0 %v4982
    %5072 = vmatprep.subr.mxu0 0.0
    %5073 = vmatpush1.msra.mxu0 %v4983
    %5074 = vmatprep.subr.mxu0 0.0
    %5075 = vmatpush1.msra.mxu0 %v4984
    %5076 = vmatprep.subr.mxu0 0.0
    %5077 = vmatpush1.msra.mxu0 %v4985
    %5078 = vmatprep.subr.mxu0 0.0
    %5079 = vmatpush1.msra.mxu0 %v4986
    %5080 = vmatprep.subr.mxu0 0.0
    %5081 = vmatpush1.msra.mxu0 %v4987
    %5082 = vmatprep.subr.mxu0 0.0
    %5083 = vmatpush1.msra.mxu0 %v4988
    %5084 = vmatprep.subr.mxu0 0.0
    %5085 = vmatpush1.msra.mxu0 %v4989
    %5086 = vmatprep.subr.mxu0 0.0
    %5087 = vmatpush1.msra.mxu0 %v4990
    %5088 = vmatprep.subr.mxu0 0.0
    %5089 = vmatpush1.msra.mxu0 %v4991
    %5090 = vmatprep.subr.mxu0 0.0
    %5091 = vmatpush1.msra.mxu0 %v4992
    %5092 = vmatprep.subr.mxu0 0.0
    %5093 = vmatpush1.msra.mxu0 %v4993
    %5094 = vmatprep.subr.mxu0 0.0
    %5095 = vmatpush1.msra.mxu0 %v4994
    %5096 = vmatprep.subr.mxu0 0.0
    %5097 = vmatpush1.msra.mxu0 %v4995
    %5098 = vmatprep.subr.mxu0 0.0
    %5099 = vmatpush1.msra.mxu0 0.0
    %5100 = vmatprep.subr.mxu0 0.0
    %5101 = vmatpush1.msra.mxu0 0.0
    %5102 = vmatprep.subr.mxu0 0.0
    %5103 = vmatpush1.msra.mxu0 0.0
    %5104 = vmatprep.subr.mxu0 0.0
    %5105 = vmatpush1.msra.mxu0 0.0
    %5106 = vmatprep.subr.mxu0 0.0
    %5107 = vmatpush1.msra.mxu0 0.0
    %5108 = vmatprep.subr.mxu0 0.0
    %5109 = vmatpush1.msra.mxu0 0.0
    %5110 = vmatprep.subr.mxu0 0.0
    %5111 = vmatpush1.msra.mxu0 0.0
    %5112 = vmatprep.subr.mxu0 0.0
    %5113 = vmatpush1.msra.mxu0 0.0
    %5114 = vmatprep.subr.mxu0 0.0
    %5115 = vmatpush1.msra.mxu0 0.0
    %5116 = vmatprep.subr.mxu0 0.0
    %5117 = vmatpush1.msra.mxu0 0.0
    %5118 = vmatprep.subr.mxu0 0.0
    %5119 = vmatpush1.msra.mxu0 0.0
    %5120 = vmatprep.subr.mxu0 0.0
    %5121 = vmatpush1.msra.mxu0 0.0
    %5122 = vmatprep.subr.mxu0 0.0
    %5123 = vmatpush1.msra.mxu0 0.0
    %5124 = vmatprep.subr.mxu0 0.0
    %5125 = vmatpush1.msra.mxu0 0.0
    %5126 = vmatprep.subr.mxu0 0.0
    %5127 = vmatpush1.msra.mxu0 0.0
    %5128 = vmatprep.subr.mxu0 0.0
    %5129 = vmatpush1.msra.mxu0 0.0
    %5130 = vmatprep.mubr.f32.mxu0 0.0
    %5131 = vmatmul.mubr.f32.gmra.mrb[0].mxu0 %v4979
    %v5132 = vpop.f32.mrb[0].mxu0
    %v5133 = vadd.f32 %v5063, %v5132
    %v5134 = vpop.f32.mrb[0].mxu0
    %5135 = vdwg.mxu0
    %v5136 = vadd.f32 %v5133, %v333
    %v5137 = vxor.u32 %v5136, 2147483648
    %v5138 = vmul.f32 %v5137, 1.442695
    %v5139 = vpow.pop %v5138
    %v5140 = vadd.f32 %v5139, 1.0
    %v5141 = vrcp.pop %v5140
    %v5142 = vmul.f32 1.0, %v5141
    %v5143 = vtanh.pop %v5136
    %5144 = vrot.lane.b32.xlu0 %v5142, 96
    %v5145 = vpop.permute.xlu0 %5144
    %5146 = vrot.lane.b32.xlu0 %v5143, 64
    %v5147 = vpop.permute.xlu0 %5146
    %5148 = vrot.lane.b32.xlu0 %v5142, 32
    %v5149 = vpop.permute.xlu0 %5148
    %v5150 = vmul.f32 %v5145, %v4884
    %v5151 = vmul.f32 %v5142, %v5147
    %v5152 = vadd.f32 %v5150, %v5151
    %v5153 = vtanh.pop %v5152
    %v5154 = vmul.f32 %v5149, %v5153
    %s5155 = scalar_lea.vmem %s7, 136
    %5156 = vst [vmem:[%s5155] sm:$0xff] %v5154
    %s5157 = scalar_lea.vmem [#allocation2], 144
    %v5158 = vld [vmem:[%s5157] sm:$0xff]
    %5159 = vmatprep.subr.mxu0 0.0
    %5160 = vmatpush1.msra.mxu0 %v296
    %5161 = vmatprep.subr.mxu0 0.0
    %5162 = vmatpush1.msra.mxu0 %v297
    %5163 = vmatprep.subr.mxu0 0.0
    %5164 = vmatpush1.msra.mxu0 %v298
    %5165 = vmatprep.subr.mxu0 0.0
    %5166 = vmatpush1.msra.mxu0 %v299
    %5167 = vmatprep.subr.mxu0 0.0
    %5168 = vmatpush1.msra.mxu0 %v300
    %5169 = vmatprep.subr.mxu0 0.0
    %5170 = vmatpush1.msra.mxu0 %v301
    %5171 = vmatprep.subr.mxu0 0.0
    %5172 = vmatpush1.msra.mxu0 %v302
    %5173 = vmatprep.subr.mxu0 0.0
    %5174 = vmatpush1.msra.mxu0 %v303
    %5175 = vmatprep.subr.mxu0 0.0
    %5176 = vmatpush1.msra.mxu0 %v304
    %5177 = vmatprep.subr.mxu0 0.0
    %5178 = vmatpush1.msra.mxu0 %v305
    %5179 = vmatprep.subr.mxu0 0.0
    %5180 = vmatpush1.msra.mxu0 %v306
    %5181 = vmatprep.subr.mxu0 0.0
    %5182 = vmatpush1.msra.mxu0 %v307
    %5183 = vmatprep.subr.mxu0 0.0
    %5184 = vmatpush1.msra.mxu0 %v308
    %5185 = vmatprep.subr.mxu0 0.0
    %5186 = vmatpush1.msra.mxu0 %v309
    %5187 = vmatprep.subr.mxu0 0.0
    %5188 = vmatpush1.msra.mxu0 %v310
    %5189 = vmatprep.subr.mxu0 0.0
    %5190 = vmatpush1.msra.mxu0 %v311
    %5191 = vmatprep.subr.mxu0 0.0
    %5192 = vmatpush1.msra.mxu0 0.0
    %5193 = vmatprep.subr.mxu0 0.0
    %5194 = vmatpush1.msra.mxu0 0.0
    %5195 = vmatprep.subr.mxu0 0.0
    %5196 = vmatpush1.msra.mxu0 0.0
    %5197 = vmatprep.subr.mxu0 0.0
    %5198 = vmatpush1.msra.mxu0 0.0
    %5199 = vmatprep.subr.mxu0 0.0
    %5200 = vmatpush1.msra.mxu0 0.0
    %5201 = vmatprep.subr.mxu0 0.0
    %5202 = vmatpush1.msra.mxu0 0.0
    %5203 = vmatprep.subr.mxu0 0.0
    %5204 = vmatpush1.msra.mxu0 0.0
    %5205 = vmatprep.subr.mxu0 0.0
    %5206 = vmatpush1.msra.mxu0 0.0
    %5207 = vmatprep.subr.mxu0 0.0
    %5208 = vmatpush1.msra.mxu0 0.0
    %5209 = vmatprep.subr.mxu0 0.0
    %5210 = vmatpush1.msra.mxu0 0.0
    %5211 = vmatprep.subr.mxu0 0.0
    %5212 = vmatpush1.msra.mxu0 0.0
    %5213 = vmatprep.subr.mxu0 0.0
    %5214 = vmatpush1.msra.mxu0 0.0
    %5215 = vmatprep.subr.mxu0 0.0
    %5216 = vmatpush1.msra.mxu0 0.0
    %5217 = vmatprep.subr.mxu0 0.0
    %5218 = vmatpush1.msra.mxu0 0.0
    %5219 = vmatprep.subr.mxu0 0.0
    %5220 = vmatpush1.msra.mxu0 0.0
    %5221 = vmatprep.subr.mxu0 0.0
    %5222 = vmatpush1.msra.mxu0 0.0
    %5223 = vmatprep.mubr.f32.mxu0 0.0
    %5224 = vmatmul.mubr.f32.gmra.mrb[0].mxu0 %v4979
    %v5225 = vpop.f32.mrb[0].mxu0
    %v5226 = vadd.f32 0.0, %v5225
    %v5227 = vpop.f32.mrb[0].mxu0
    %5228 = vdwg.mxu0
    %v5229 = vadd.f32 %v5158, %v5226
    %v5230 = vxor.u32 %v5229, 2147483648
    %v5231 = vmul.f32 %v5230, 1.442695
    %v5232 = vpow.pop %v5231
    %v5233 = vadd.f32 %v5232, 1.0
    %v5234 = vrcp.pop %v5233
    %v5235 = vmul.f32 1.0, %v5234
    %v5236 = vtanh.pop %v5229
    %5237 = vrot.lane.b32.xlu0 %v5235, 96
    %v5238 = vpop.permute.xlu0 %5237
    %5239 = vrot.lane.b32.xlu0 %v5236, 64
    %v5240 = vpop.permute.xlu0 %5239
    %5241 = vrot.lane.b32.xlu0 %v5235, 32
    %v5242 = vpop.permute.xlu0 %5241
    %v5243 = vmul.f32 %v5238, %v4977
    %v5244 = vmul.f32 %v5235, %v5240
    %v5245 = vadd.f32 %v5243, %v5244
    %v5246 = vtanh.pop %v5245
    %v5247 = vmul.f32 %v5242, %v5246
    %v5248 = vld [vmem:[%s4] sm:$0xff]
    %v5249 = vld [vmem:[%s4 + $0x8] sm:$0xff]
    %v5250 = vld [vmem:[%s4 + $0x10] sm:$0xff]
    %v5251 = vld [vmem:[%s4 + $0x18] sm:$0xff]
    %v5252 = vld [vmem:[%s4 + $0x20] sm:$0xff]
    %v5253 = vld [vmem:[%s4 + $0x28] sm:$0xff]
    %v5254 = vld [vmem:[%s4 + $0x30] sm:$0xff]
    %v5255 = vld [vmem:[%s4 + $0x38] sm:$0xff]
    %v5256 = vld [vmem:[%s4 + $0x40] sm:$0xff]
    %v5257 = vld [vmem:[%s4 + $0x48] sm:$0xff]
    %v5258 = vld [vmem:[%s4 + $0x50] sm:$0xff]
    %v5259 = vld [vmem:[%s4 + $0x58] sm:$0xff]
    %v5260 = vld [vmem:[%s4 + $0x60] sm:$0xff]
    %v5261 = vld [vmem:[%s4 + $0x68] sm:$0xff]
    %v5262 = vld [vmem:[%s4 + $0x70] sm:$0xff]
    %v5263 = vld [vmem:[%s4 + $0x78] sm:$0xff]
    %5264 = vmatprep.subr.mxu0 0.0
    %5265 = vmatpush1.msra.mxu0 %v312
    %5266 = vmatprep.subr.mxu0 0.0
    %5267 = vmatpush1.msra.mxu0 %v313
    %5268 = vmatprep.subr.mxu0 0.0
    %5269 = vmatpush1.msra.mxu0 %v314
    %5270 = vmatprep.subr.mxu0 0.0
    %5271 = vmatpush1.msra.mxu0 %v315
    %5272 = vmatprep.subr.mxu0 0.0
    %5273 = vmatpush1.msra.mxu0 %v316
    %5274 = vmatprep.subr.mxu0 0.0
    %5275 = vmatpush1.msra.mxu0 %v317
    %5276 = vmatprep.subr.mxu0 0.0
    %5277 = vmatpush1.msra.mxu0 %v318
    %5278 = vmatprep.subr.mxu0 0.0
    %5279 = vmatpush1.msra.mxu0 %v319
    %5280 = vmatprep.subr.mxu0 0.0
    %5281 = vmatpush1.msra.mxu0 %v320
    %5282 = vmatprep.subr.mxu0 0.0
    %5283 = vmatpush1.msra.mxu0 %v321
    %5284 = vmatprep.subr.mxu0 0.0
    %5285 = vmatpush1.msra.mxu0 %v322
    %5286 = vmatprep.subr.mxu0 0.0
    %5287 = vmatpush1.msra.mxu0 %v323
    %5288 = vmatprep.subr.mxu0 0.0
    %5289 = vmatpush1.msra.mxu0 %v324
    %5290 = vmatprep.subr.mxu0 0.0
    %5291 = vmatpush1.msra.mxu0 %v325
    %5292 = vmatprep.subr.mxu0 0.0
    %5293 = vmatpush1.msra.mxu0 %v326
    %5294 = vmatprep.subr.mxu0 0.0
    %5295 = vmatpush1.msra.mxu0 %v327
    %5296 = vmatprep.subr.mxu0 0.0
    %5297 = vmatpush1.msra.mxu0 0.0
    %5298 = vmatprep.subr.mxu0 0.0
    %5299 = vmatpush1.msra.mxu0 0.0
    %5300 = vmatprep.subr.mxu0 0.0
    %5301 = vmatpush1.msra.mxu0 0.0
    %5302 = vmatprep.subr.mxu0 0.0
    %5303 = vmatpush1.msra.mxu0 0.0
    %5304 = vmatprep.subr.mxu0 0.0
    %5305 = vmatpush1.msra.mxu0 0.0
    %5306 = vmatprep.subr.mxu0 0.0
    %5307 = vmatpush1.msra.mxu0 0.0
    %5308 = vmatprep.subr.mxu0 0.0
    %5309 = vmatpush1.msra.mxu0 0.0
    %5310 = vmatprep.subr.mxu0 0.0
    %5311 = vmatpush1.msra.mxu0 0.0
    %5312 = vmatprep.subr.mxu0 0.0
    %5313 = vmatpush1.msra.mxu0 0.0
    %5314 = vmatprep.subr.mxu0 0.0
    %5315 = vmatpush1.msra.mxu0 0.0
    %5316 = vmatprep.subr.mxu0 0.0
    %5317 = vmatpush1.msra.mxu0 0.0
    %5318 = vmatprep.subr.mxu0 0.0
    %5319 = vmatpush1.msra.mxu0 0.0
    %5320 = vmatprep.subr.mxu0 0.0
    %5321 = vmatpush1.msra.mxu0 0.0
    %5322 = vmatprep.subr.mxu0 0.0
    %5323 = vmatpush1.msra.mxu0 0.0
    %5324 = vmatprep.subr.mxu0 0.0
    %5325 = vmatpush1.msra.mxu0 0.0
    %5326 = vmatprep.subr.mxu0 0.0
    %5327 = vmatpush1.msra.mxu0 0.0
    %5328 = vmatprep.mubr.f32.mxu0 0.0
    %5329 = vmatmul.mubr.f32.gmra.mrb[0].mxu0 %v5154
    %v5330 = vpop.f32.mrb[0].mxu0
    %v5331 = vadd.f32 0.0, %v5330
    %v5332 = vpop.f32.mrb[0].mxu0
    %5333 = vdwg.mxu0
    %5334 = vmatprep.subr.mxu0 0.0
    %5335 = vmatpush1.msra.mxu0 %v5248
    %5336 = vmatprep.subr.mxu0 0.0
    %5337 = vmatpush1.msra.mxu0 %v5249
    %5338 = vmatprep.subr.mxu0 0.0
    %5339 = vmatpush1.msra.mxu0 %v5250
    %5340 = vmatprep.subr.mxu0 0.0
    %5341 = vmatpush1.msra.mxu0 %v5251
    %5342 = vmatprep.subr.mxu0 0.0
    %5343 = vmatpush1.msra.mxu0 %v5252
    %5344 = vmatprep.subr.mxu0 0.0
    %5345 = vmatpush1.msra.mxu0 %v5253
    %5346 = vmatprep.subr.mxu0 0.0
    %5347 = vmatpush1.msra.mxu0 %v5254
    %5348 = vmatprep.subr.mxu0 0.0
    %5349 = vmatpush1.msra.mxu0 %v5255
    %5350 = vmatprep.subr.mxu0 0.0
    %5351 = vmatpush1.msra.mxu0 %v5256
    %5352 = vmatprep.subr.mxu0 0.0
    %5353 = vmatpush1.msra.mxu0 %v5257
    %5354 = vmatprep.subr.mxu0 0.0
    %5355 = vmatpush1.msra.mxu0 %v5258
    %5356 = vmatprep.subr.mxu0 0.0
    %5357 = vmatpush1.msra.mxu0 %v5259
    %5358 = vmatprep.subr.mxu0 0.0
    %5359 = vmatpush1.msra.mxu0 %v5260
    %5360 = vmatprep.subr.mxu0 0.0
    %5361 = vmatpush1.msra.mxu0 %v5261
    %5362 = vmatprep.subr.mxu0 0.0
    %5363 = vmatpush1.msra.mxu0 %v5262
    %5364 = vmatprep.subr.mxu0 0.0
    %5365 = vmatpush1.msra.mxu0 %v5263
    %5366 = vmatprep.subr.mxu0 0.0
    %5367 = vmatpush1.msra.mxu0 0.0
    %5368 = vmatprep.subr.mxu0 0.0
    %5369 = vmatpush1.msra.mxu0 0.0
    %5370 = vmatprep.subr.mxu0 0.0
    %5371 = vmatpush1.msra.mxu0 0.0
    %5372 = vmatprep.subr.mxu0 0.0
    %5373 = vmatpush1.msra.mxu0 0.0
    %5374 = vmatprep.subr.mxu0 0.0
    %5375 = vmatpush1.msra.mxu0 0.0
    %5376 = vmatprep.subr.mxu0 0.0
    %5377 = vmatpush1.msra.mxu0 0.0
    %5378 = vmatprep.subr.mxu0 0.0
    %5379 = vmatpush1.msra.mxu0 0.0
    %5380 = vmatprep.subr.mxu0 0.0
    %5381 = vmatpush1.msra.mxu0 0.0
    %5382 = vmatprep.subr.mxu0 0.0
    %5383 = vmatpush1.msra.mxu0 0.0
    %5384 = vmatprep.subr.mxu0 0.0
    %5385 = vmatpush1.msra.mxu0 0.0
    %5386 = vmatprep.subr.mxu0 0.0
    %5387 = vmatpush1.msra.mxu0 0.0
    %5388 = vmatprep.subr.mxu0 0.0
    %5389 = vmatpush1.msra.mxu0 0.0
    %5390 = vmatprep.subr.mxu0 0.0
    %5391 = vmatpush1.msra.mxu0 0.0
    %5392 = vmatprep.subr.mxu0 0.0
    %5393 = vmatpush1.msra.mxu0 0.0
    %5394 = vmatprep.subr.mxu0 0.0
    %5395 = vmatpush1.msra.mxu0 0.0
    %5396 = vmatprep.subr.mxu0 0.0
    %5397 = vmatpush1.msra.mxu0 0.0
    %5398 = vmatprep.mubr.f32.mxu0 0.0
    %5399 = vmatmul.mubr.f32.gmra.mrb[0].mxu0 %v5247
    %v5400 = vpop.f32.mrb[0].mxu0
    %v5401 = vadd.f32 %v5331, %v5400
    %v5402 = vpop.f32.mrb[0].mxu0
    %5403 = vdwg.mxu0
    %v5404 = vadd.f32 %v5401, %v333
    %v5405 = vxor.u32 %v5404, 2147483648
    %v5406 = vmul.f32 %v5405, 1.442695
    %v5407 = vpow.pop %v5406
    %v5408 = vadd.f32 %v5407, 1.0
    %v5409 = vrcp.pop %v5408
    %v5410 = vmul.f32 1.0, %v5409
    %v5411 = vtanh.pop %v5404
    %5412 = vrot.lane.b32.xlu0 %v5410, 96
    %v5413 = vpop.permute.xlu0 %5412
    %5414 = vrot.lane.b32.xlu0 %v5411, 64
    %v5415 = vpop.permute.xlu0 %5414
    %5416 = vrot.lane.b32.xlu0 %v5410, 32
    %v5417 = vpop.permute.xlu0 %5416
    %v5418 = vmul.f32 %v5413, %v5152
    %v5419 = vmul.f32 %v5410, %v5415
    %v5420 = vadd.f32 %v5418, %v5419
    %v5421 = vtanh.pop %v5420
    %v5422 = vmul.f32 %v5417, %v5421
    %s5423 = scalar_lea.vmem %s7, 144
    %5424 = vst [vmem:[%s5423] sm:$0xff] %v5422
    %s5425 = scalar_lea.vmem [#allocation2], 152
    %v5426 = vld [vmem:[%s5425] sm:$0xff]
    %5427 = vmatprep.subr.mxu0 0.0
    %5428 = vmatpush1.msra.mxu0 %v296
    %5429 = vmatprep.subr.mxu0 0.0
    %5430 = vmatpush1.msra.mxu0 %v297
    %5431 = vmatprep.subr.mxu0 0.0
    %5432 = vmatpush1.msra.mxu0 %v298
    %5433 = vmatprep.subr.mxu0 0.0
    %5434 = vmatpush1.msra.mxu0 %v299
    %5435 = vmatprep.subr.mxu0 0.0
    %5436 = vmatpush1.msra.mxu0 %v300
    %5437 = vmatprep.subr.mxu0 0.0
    %5438 = vmatpush1.msra.mxu0 %v301
    %5439 = vmatprep.subr.mxu0 0.0
    %5440 = vmatpush1.msra.mxu0 %v302
    %5441 = vmatprep.subr.mxu0 0.0
    %5442 = vmatpush1.msra.mxu0 %v303
    %5443 = vmatprep.subr.mxu0 0.0
    %5444 = vmatpush1.msra.mxu0 %v304
    %5445 = vmatprep.subr.mxu0 0.0
    %5446 = vmatpush1.msra.mxu0 %v305
    %5447 = vmatprep.subr.mxu0 0.0
    %5448 = vmatpush1.msra.mxu0 %v306
    %5449 = vmatprep.subr.mxu0 0.0
    %5450 = vmatpush1.msra.mxu0 %v307
    %5451 = vmatprep.subr.mxu0 0.0
    %5452 = vmatpush1.msra.mxu0 %v308
    %5453 = vmatprep.subr.mxu0 0.0
    %5454 = vmatpush1.msra.mxu0 %v309
    %5455 = vmatprep.subr.mxu0 0.0
    %5456 = vmatpush1.msra.mxu0 %v310
    %5457 = vmatprep.subr.mxu0 0.0
    %5458 = vmatpush1.msra.mxu0 %v311
    %5459 = vmatprep.subr.mxu0 0.0
    %5460 = vmatpush1.msra.mxu0 0.0
    %5461 = vmatprep.subr.mxu0 0.0
    %5462 = vmatpush1.msra.mxu0 0.0
    %5463 = vmatprep.subr.mxu0 0.0
    %5464 = vmatpush1.msra.mxu0 0.0
    %5465 = vmatprep.subr.mxu0 0.0
    %5466 = vmatpush1.msra.mxu0 0.0
    %5467 = vmatprep.subr.mxu0 0.0
    %5468 = vmatpush1.msra.mxu0 0.0
    %5469 = vmatprep.subr.mxu0 0.0
    %5470 = vmatpush1.msra.mxu0 0.0
    %5471 = vmatprep.subr.mxu0 0.0
    %5472 = vmatpush1.msra.mxu0 0.0
    %5473 = vmatprep.subr.mxu0 0.0
    %5474 = vmatpush1.msra.mxu0 0.0
    %5475 = vmatprep.subr.mxu0 0.0
    %5476 = vmatpush1.msra.mxu0 0.0
    %5477 = vmatprep.subr.mxu0 0.0
    %5478 = vmatpush1.msra.mxu0 0.0
    %5479 = vmatprep.subr.mxu0 0.0
    %5480 = vmatpush1.msra.mxu0 0.0
    %5481 = vmatprep.subr.mxu0 0.0
    %5482 = vmatpush1.msra.mxu0 0.0
    %5483 = vmatprep.subr.mxu0 0.0
    %5484 = vmatpush1.msra.mxu0 0.0
    %5485 = vmatprep.subr.mxu0 0.0
    %5486 = vmatpush1.msra.mxu0 0.0
    %5487 = vmatprep.subr.mxu0 0.0
    %5488 = vmatpush1.msra.mxu0 0.0
    %5489 = vmatprep.subr.mxu0 0.0
    %5490 = vmatpush1.msra.mxu0 0.0
    %5491 = vmatprep.mubr.f32.mxu0 0.0
    %5492 = vmatmul.mubr.f32.gmra.mrb[0].mxu0 %v5247
    %v5493 = vpop.f32.mrb[0].mxu0
    %v5494 = vadd.f32 0.0, %v5493
    %v5495 = vpop.f32.mrb[0].mxu0
    %5496 = vdwg.mxu0
    %v5497 = vadd.f32 %v5426, %v5494
    %v5498 = vxor.u32 %v5497, 2147483648
    %v5499 = vmul.f32 %v5498, 1.442695
    %v5500 = vpow.pop %v5499
    %v5501 = vadd.f32 %v5500, 1.0
    %v5502 = vrcp.pop %v5501
    %v5503 = vmul.f32 1.0, %v5502
    %v5504 = vtanh.pop %v5497
    %5505 = vrot.lane.b32.xlu0 %v5503, 96
    %v5506 = vpop.permute.xlu0 %5505
    %5507 = vrot.lane.b32.xlu0 %v5504, 64
    %v5508 = vpop.permute.xlu0 %5507
    %5509 = vrot.lane.b32.xlu0 %v5503, 32
    %v5510 = vpop.permute.xlu0 %5509
    %v5511 = vmul.f32 %v5506, %v5245
    %v5512 = vmul.f32 %v5503, %v5508
    %v5513 = vadd.f32 %v5511, %v5512
    %v5514 = vtanh.pop %v5513
    %v5515 = vmul.f32 %v5510, %v5514
    %v5516 = vld [vmem:[%s4] sm:$0xff]
    %v5517 = vld [vmem:[%s4 + $0x8] sm:$0xff]
    %v5518 = vld [vmem:[%s4 + $0x10] sm:$0xff]
    %v5519 = vld [vmem:[%s4 + $0x18] sm:$0xff]
    %v5520 = vld [vmem:[%s4 + $0x20] sm:$0xff]
    %v5521 = vld [vmem:[%s4 + $0x28] sm:$0xff]
    %v5522 = vld [vmem:[%s4 + $0x30] sm:$0xff]
    %v5523 = vld [vmem:[%s4 + $0x38] sm:$0xff]
    %v5524 = vld [vmem:[%s4 + $0x40] sm:$0xff]
    %v5525 = vld [vmem:[%s4 + $0x48] sm:$0xff]
    %v5526 = vld [vmem:[%s4 + $0x50] sm:$0xff]
    %v5527 = vld [vmem:[%s4 + $0x58] sm:$0xff]
    %v5528 = vld [vmem:[%s4 + $0x60] sm:$0xff]
    %v5529 = vld [vmem:[%s4 + $0x68] sm:$0xff]
    %v5530 = vld [vmem:[%s4 + $0x70] sm:$0xff]
    %v5531 = vld [vmem:[%s4 + $0x78] sm:$0xff]
    %5532 = vmatprep.subr.mxu0 0.0
    %5533 = vmatpush1.msra.mxu0 %v312
    %5534 = vmatprep.subr.mxu0 0.0
    %5535 = vmatpush1.msra.mxu0 %v313
    %5536 = vmatprep.subr.mxu0 0.0
    %5537 = vmatpush1.msra.mxu0 %v314
    %5538 = vmatprep.subr.mxu0 0.0
    %5539 = vmatpush1.msra.mxu0 %v315
    %5540 = vmatprep.subr.mxu0 0.0
    %5541 = vmatpush1.msra.mxu0 %v316
    %5542 = vmatprep.subr.mxu0 0.0
    %5543 = vmatpush1.msra.mxu0 %v317
    %5544 = vmatprep.subr.mxu0 0.0
    %5545 = vmatpush1.msra.mxu0 %v318
    %5546 = vmatprep.subr.mxu0 0.0
    %5547 = vmatpush1.msra.mxu0 %v319
    %5548 = vmatprep.subr.mxu0 0.0
    %5549 = vmatpush1.msra.mxu0 %v320
    %5550 = vmatprep.subr.mxu0 0.0
    %5551 = vmatpush1.msra.mxu0 %v321
    %5552 = vmatprep.subr.mxu0 0.0
    %5553 = vmatpush1.msra.mxu0 %v322
    %5554 = vmatprep.subr.mxu0 0.0
    %5555 = vmatpush1.msra.mxu0 %v323
    %5556 = vmatprep.subr.mxu0 0.0
    %5557 = vmatpush1.msra.mxu0 %v324
    %5558 = vmatprep.subr.mxu0 0.0
    %5559 = vmatpush1.msra.mxu0 %v325
    %5560 = vmatprep.subr.mxu0 0.0
    %5561 = vmatpush1.msra.mxu0 %v326
    %5562 = vmatprep.subr.mxu0 0.0
    %5563 = vmatpush1.msra.mxu0 %v327
    %5564 = vmatprep.subr.mxu0 0.0
    %5565 = vmatpush1.msra.mxu0 0.0
    %5566 = vmatprep.subr.mxu0 0.0
    %5567 = vmatpush1.msra.mxu0 0.0
    %5568 = vmatprep.subr.mxu0 0.0
    %5569 = vmatpush1.msra.mxu0 0.0
    %5570 = vmatprep.subr.mxu0 0.0
    %5571 = vmatpush1.msra.mxu0 0.0
    %5572 = vmatprep.subr.mxu0 0.0
    %5573 = vmatpush1.msra.mxu0 0.0
    %5574 = vmatprep.subr.mxu0 0.0
    %5575 = vmatpush1.msra.mxu0 0.0
    %5576 = vmatprep.subr.mxu0 0.0
    %5577 = vmatpush1.msra.mxu0 0.0
    %5578 = vmatprep.subr.mxu0 0.0
    %5579 = vmatpush1.msra.mxu0 0.0
    %5580 = vmatprep.subr.mxu0 0.0
    %5581 = vmatpush1.msra.mxu0 0.0
    %5582 = vmatprep.subr.mxu0 0.0
    %5583 = vmatpush1.msra.mxu0 0.0
    %5584 = vmatprep.subr.mxu0 0.0
    %5585 = vmatpush1.msra.mxu0 0.0
    %5586 = vmatprep.subr.mxu0 0.0
    %5587 = vmatpush1.msra.mxu0 0.0
    %5588 = vmatprep.subr.mxu0 0.0
    %5589 = vmatpush1.msra.mxu0 0.0
    %5590 = vmatprep.subr.mxu0 0.0
    %5591 = vmatpush1.msra.mxu0 0.0
    %5592 = vmatprep.subr.mxu0 0.0
    %5593 = vmatpush1.msra.mxu0 0.0
    %5594 = vmatprep.subr.mxu0 0.0
    %5595 = vmatpush1.msra.mxu0 0.0
    %5596 = vmatprep.mubr.f32.mxu0 0.0
    %5597 = vmatmul.mubr.f32.gmra.mrb[0].mxu0 %v5422
    %v5598 = vpop.f32.mrb[0].mxu0
    %v5599 = vadd.f32 0.0, %v5598
    %v5600 = vpop.f32.mrb[0].mxu0
    %5601 = vdwg.mxu0
    %5602 = vmatprep.subr.mxu0 0.0
    %5603 = vmatpush1.msra.mxu0 %v5516
    %5604 = vmatprep.subr.mxu0 0.0
    %5605 = vmatpush1.msra.mxu0 %v5517
    %5606 = vmatprep.subr.mxu0 0.0
    %5607 = vmatpush1.msra.mxu0 %v5518
    %5608 = vmatprep.subr.mxu0 0.0
    %5609 = vmatpush1.msra.mxu0 %v5519
    %5610 = vmatprep.subr.mxu0 0.0
    %5611 = vmatpush1.msra.mxu0 %v5520
    %5612 = vmatprep.subr.mxu0 0.0
    %5613 = vmatpush1.msra.mxu0 %v5521
    %5614 = vmatprep.subr.mxu0 0.0
    %5615 = vmatpush1.msra.mxu0 %v5522
    %5616 = vmatprep.subr.mxu0 0.0
    %5617 = vmatpush1.msra.mxu0 %v5523
    %5618 = vmatprep.subr.mxu0 0.0
    %5619 = vmatpush1.msra.mxu0 %v5524
    %5620 = vmatprep.subr.mxu0 0.0
    %5621 = vmatpush1.msra.mxu0 %v5525
    %5622 = vmatprep.subr.mxu0 0.0
    %5623 = vmatpush1.msra.mxu0 %v5526
    %5624 = vmatprep.subr.mxu0 0.0
    %5625 = vmatpush1.msra.mxu0 %v5527
    %5626 = vmatprep.subr.mxu0 0.0
    %5627 = vmatpush1.msra.mxu0 %v5528
    %5628 = vmatprep.subr.mxu0 0.0
    %5629 = vmatpush1.msra.mxu0 %v5529
    %5630 = vmatprep.subr.mxu0 0.0
    %5631 = vmatpush1.msra.mxu0 %v5530
    %5632 = vmatprep.subr.mxu0 0.0
    %5633 = vmatpush1.msra.mxu0 %v5531
    %5634 = vmatprep.subr.mxu0 0.0
    %5635 = vmatpush1.msra.mxu0 0.0
    %5636 = vmatprep.subr.mxu0 0.0
    %5637 = vmatpush1.msra.mxu0 0.0
    %5638 = vmatprep.subr.mxu0 0.0
    %5639 = vmatpush1.msra.mxu0 0.0
    %5640 = vmatprep.subr.mxu0 0.0
    %5641 = vmatpush1.msra.mxu0 0.0
    %5642 = vmatprep.subr.mxu0 0.0
    %5643 = vmatpush1.msra.mxu0 0.0
    %5644 = vmatprep.subr.mxu0 0.0
    %5645 = vmatpush1.msra.mxu0 0.0
    %5646 = vmatprep.subr.mxu0 0.0
    %5647 = vmatpush1.msra.mxu0 0.0
    %5648 = vmatprep.subr.mxu0 0.0
    %5649 = vmatpush1.msra.mxu0 0.0
    %5650 = vmatprep.subr.mxu0 0.0
    %5651 = vmatpush1.msra.mxu0 0.0
    %5652 = vmatprep.subr.mxu0 0.0
    %5653 = vmatpush1.msra.mxu0 0.0
    %5654 = vmatprep.subr.mxu0 0.0
    %5655 = vmatpush1.msra.mxu0 0.0
    %5656 = vmatprep.subr.mxu0 0.0
    %5657 = vmatpush1.msra.mxu0 0.0
    %5658 = vmatprep.subr.mxu0 0.0
    %5659 = vmatpush1.msra.mxu0 0.0
    %5660 = vmatprep.subr.mxu0 0.0
    %5661 = vmatpush1.msra.mxu0 0.0
    %5662 = vmatprep.subr.mxu0 0.0
    %5663 = vmatpush1.msra.mxu0 0.0
    %5664 = vmatprep.subr.mxu0 0.0
    %5665 = vmatpush1.msra.mxu0 0.0
    %5666 = vmatprep.mubr.f32.mxu0 0.0
    %5667 = vmatmul.mubr.f32.gmra.mrb[0].mxu0 %v5515
    %v5668 = vpop.f32.mrb[0].mxu0
    %v5669 = vadd.f32 %v5599, %v5668
    %v5670 = vpop.f32.mrb[0].mxu0
    %5671 = vdwg.mxu0
    %v5672 = vadd.f32 %v5669, %v333
    %v5673 = vxor.u32 %v5672, 2147483648
    %v5674 = vmul.f32 %v5673, 1.442695
    %v5675 = vpow.pop %v5674
    %v5676 = vadd.f32 %v5675, 1.0
    %v5677 = vrcp.pop %v5676
    %v5678 = vmul.f32 1.0, %v5677
    %v5679 = vtanh.pop %v5672
    %5680 = vrot.lane.b32.xlu0 %v5678, 96
    %v5681 = vpop.permute.xlu0 %5680
    %5682 = vrot.lane.b32.xlu0 %v5679, 64
    %v5683 = vpop.permute.xlu0 %5682
    %5684 = vrot.lane.b32.xlu0 %v5678, 32
    %v5685 = vpop.permute.xlu0 %5684
    %v5686 = vmul.f32 %v5681, %v5420
    %v5687 = vmul.f32 %v5678, %v5683
    %v5688 = vadd.f32 %v5686, %v5687
    %v5689 = vtanh.pop %v5688
    %v5690 = vmul.f32 %v5685, %v5689
    %s5691 = scalar_lea.vmem %s7, 152
    %5692 = vst [vmem:[%s5691] sm:$0xff] %v5690
    %s5693 = scalar_lea.vmem [#allocation2], 160
    %v5694 = vld [vmem:[%s5693] sm:$0xff]
    %5695 = vmatprep.subr.mxu0 0.0
    %5696 = vmatpush1.msra.mxu0 %v296
    %5697 = vmatprep.subr.mxu0 0.0
    %5698 = vmatpush1.msra.mxu0 %v297
    %5699 = vmatprep.subr.mxu0 0.0
    %5700 = vmatpush1.msra.mxu0 %v298
    %5701 = vmatprep.subr.mxu0 0.0
    %5702 = vmatpush1.msra.mxu0 %v299
    %5703 = vmatprep.subr.mxu0 0.0
    %5704 = vmatpush1.msra.mxu0 %v300
    %5705 = vmatprep.subr.mxu0 0.0
    %5706 = vmatpush1.msra.mxu0 %v301
    %5707 = vmatprep.subr.mxu0 0.0
    %5708 = vmatpush1.msra.mxu0 %v302
    %5709 = vmatprep.subr.mxu0 0.0
    %5710 = vmatpush1.msra.mxu0 %v303
    %5711 = vmatprep.subr.mxu0 0.0
    %5712 = vmatpush1.msra.mxu0 %v304
    %5713 = vmatprep.subr.mxu0 0.0
    %5714 = vmatpush1.msra.mxu0 %v305
    %5715 = vmatprep.subr.mxu0 0.0
    %5716 = vmatpush1.msra.mxu0 %v306
    %5717 = vmatprep.subr.mxu0 0.0
    %5718 = vmatpush1.msra.mxu0 %v307
    %5719 = vmatprep.subr.mxu0 0.0
    %5720 = vmatpush1.msra.mxu0 %v308
    %5721 = vmatprep.subr.mxu0 0.0
    %5722 = vmatpush1.msra.mxu0 %v309
    %5723 = vmatprep.subr.mxu0 0.0
    %5724 = vmatpush1.msra.mxu0 %v310
    %5725 = vmatprep.subr.mxu0 0.0
    %5726 = vmatpush1.msra.mxu0 %v311
    %5727 = vmatprep.subr.mxu0 0.0
    %5728 = vmatpush1.msra.mxu0 0.0
    %5729 = vmatprep.subr.mxu0 0.0
    %5730 = vmatpush1.msra.mxu0 0.0
    %5731 = vmatprep.subr.mxu0 0.0
    %5732 = vmatpush1.msra.mxu0 0.0
    %5733 = vmatprep.subr.mxu0 0.0
    %5734 = vmatpush1.msra.mxu0 0.0
    %5735 = vmatprep.subr.mxu0 0.0
    %5736 = vmatpush1.msra.mxu0 0.0
    %5737 = vmatprep.subr.mxu0 0.0
    %5738 = vmatpush1.msra.mxu0 0.0
    %5739 = vmatprep.subr.mxu0 0.0
    %5740 = vmatpush1.msra.mxu0 0.0
    %5741 = vmatprep.subr.mxu0 0.0
    %5742 = vmatpush1.msra.mxu0 0.0
    %5743 = vmatprep.subr.mxu0 0.0
    %5744 = vmatpush1.msra.mxu0 0.0
    %5745 = vmatprep.subr.mxu0 0.0
    %5746 = vmatpush1.msra.mxu0 0.0
    %5747 = vmatprep.subr.mxu0 0.0
    %5748 = vmatpush1.msra.mxu0 0.0
    %5749 = vmatprep.subr.mxu0 0.0
    %5750 = vmatpush1.msra.mxu0 0.0
    %5751 = vmatprep.subr.mxu0 0.0
    %5752 = vmatpush1.msra.mxu0 0.0
    %5753 = vmatprep.subr.mxu0 0.0
    %5754 = vmatpush1.msra.mxu0 0.0
    %5755 = vmatprep.subr.mxu0 0.0
    %5756 = vmatpush1.msra.mxu0 0.0
    %5757 = vmatprep.subr.mxu0 0.0
    %5758 = vmatpush1.msra.mxu0 0.0
    %5759 = vmatprep.mubr.f32.mxu0 0.0
    %5760 = vmatmul.mubr.f32.gmra.mrb[0].mxu0 %v5515
    %v5761 = vpop.f32.mrb[0].mxu0
    %v5762 = vadd.f32 0.0, %v5761
    %v5763 = vpop.f32.mrb[0].mxu0
    %5764 = vdwg.mxu0
    %v5765 = vadd.f32 %v5694, %v5762
    %v5766 = vxor.u32 %v5765, 2147483648
    %v5767 = vmul.f32 %v5766, 1.442695
    %v5768 = vpow.pop %v5767
    %v5769 = vadd.f32 %v5768, 1.0
    %v5770 = vrcp.pop %v5769
    %v5771 = vmul.f32 1.0, %v5770
    %v5772 = vtanh.pop %v5765
    %5773 = vrot.lane.b32.xlu0 %v5771, 96
    %v5774 = vpop.permute.xlu0 %5773
    %5775 = vrot.lane.b32.xlu0 %v5772, 64
    %v5776 = vpop.permute.xlu0 %5775
    %5777 = vrot.lane.b32.xlu0 %v5771, 32
    %v5778 = vpop.permute.xlu0 %5777
    %v5779 = vmul.f32 %v5774, %v5513
    %v5780 = vmul.f32 %v5771, %v5776
    %v5781 = vadd.f32 %v5779, %v5780
    %v5782 = vtanh.pop %v5781
    %v5783 = vmul.f32 %v5778, %v5782
    %v5784 = vld [vmem:[%s4] sm:$0xff]
    %v5785 = vld [vmem:[%s4 + $0x8] sm:$0xff]
    %v5786 = vld [vmem:[%s4 + $0x10] sm:$0xff]
    %v5787 = vld [vmem:[%s4 + $0x18] sm:$0xff]
    %v5788 = vld [vmem:[%s4 + $0x20] sm:$0xff]
    %v5789 = vld [vmem:[%s4 + $0x28] sm:$0xff]
    %v5790 = vld [vmem:[%s4 + $0x30] sm:$0xff]
    %v5791 = vld [vmem:[%s4 + $0x38] sm:$0xff]
    %v5792 = vld [vmem:[%s4 + $0x40] sm:$0xff]
    %v5793 = vld [vmem:[%s4 + $0x48] sm:$0xff]
    %v5794 = vld [vmem:[%s4 + $0x50] sm:$0xff]
    %v5795 = vld [vmem:[%s4 + $0x58] sm:$0xff]
    %v5796 = vld [vmem:[%s4 + $0x60] sm:$0xff]
    %v5797 = vld [vmem:[%s4 + $0x68] sm:$0xff]
    %v5798 = vld [vmem:[%s4 + $0x70] sm:$0xff]
    %v5799 = vld [vmem:[%s4 + $0x78] sm:$0xff]
    %5800 = vmatprep.subr.mxu0 0.0
    %5801 = vmatpush1.msra.mxu0 %v312
    %5802 = vmatprep.subr.mxu0 0.0
    %5803 = vmatpush1.msra.mxu0 %v313
    %5804 = vmatprep.subr.mxu0 0.0
    %5805 = vmatpush1.msra.mxu0 %v314
    %5806 = vmatprep.subr.mxu0 0.0
    %5807 = vmatpush1.msra.mxu0 %v315
    %5808 = vmatprep.subr.mxu0 0.0
    %5809 = vmatpush1.msra.mxu0 %v316
    %5810 = vmatprep.subr.mxu0 0.0
    %5811 = vmatpush1.msra.mxu0 %v317
    %5812 = vmatprep.subr.mxu0 0.0
    %5813 = vmatpush1.msra.mxu0 %v318
    %5814 = vmatprep.subr.mxu0 0.0
    %5815 = vmatpush1.msra.mxu0 %v319
    %5816 = vmatprep.subr.mxu0 0.0
    %5817 = vmatpush1.msra.mxu0 %v320
    %5818 = vmatprep.subr.mxu0 0.0
    %5819 = vmatpush1.msra.mxu0 %v321
    %5820 = vmatprep.subr.mxu0 0.0
    %5821 = vmatpush1.msra.mxu0 %v322
    %5822 = vmatprep.subr.mxu0 0.0
    %5823 = vmatpush1.msra.mxu0 %v323
    %5824 = vmatprep.subr.mxu0 0.0
    %5825 = vmatpush1.msra.mxu0 %v324
    %5826 = vmatprep.subr.mxu0 0.0
    %5827 = vmatpush1.msra.mxu0 %v325
    %5828 = vmatprep.subr.mxu0 0.0
    %5829 = vmatpush1.msra.mxu0 %v326
    %5830 = vmatprep.subr.mxu0 0.0
    %5831 = vmatpush1.msra.mxu0 %v327
    %5832 = vmatprep.subr.mxu0 0.0
    %5833 = vmatpush1.msra.mxu0 0.0
    %5834 = vmatprep.subr.mxu0 0.0
    %5835 = vmatpush1.msra.mxu0 0.0
    %5836 = vmatprep.subr.mxu0 0.0
    %5837 = vmatpush1.msra.mxu0 0.0
    %5838 = vmatprep.subr.mxu0 0.0
    %5839 = vmatpush1.msra.mxu0 0.0
    %5840 = vmatprep.subr.mxu0 0.0
    %5841 = vmatpush1.msra.mxu0 0.0
    %5842 = vmatprep.subr.mxu0 0.0
    %5843 = vmatpush1.msra.mxu0 0.0
    %5844 = vmatprep.subr.mxu0 0.0
    %5845 = vmatpush1.msra.mxu0 0.0
    %5846 = vmatprep.subr.mxu0 0.0
    %5847 = vmatpush1.msra.mxu0 0.0
    %5848 = vmatprep.subr.mxu0 0.0
    %5849 = vmatpush1.msra.mxu0 0.0
    %5850 = vmatprep.subr.mxu0 0.0
    %5851 = vmatpush1.msra.mxu0 0.0
    %5852 = vmatprep.subr.mxu0 0.0
    %5853 = vmatpush1.msra.mxu0 0.0
    %5854 = vmatprep.subr.mxu0 0.0
    %5855 = vmatpush1.msra.mxu0 0.0
    %5856 = vmatprep.subr.mxu0 0.0
    %5857 = vmatpush1.msra.mxu0 0.0
    %5858 = vmatprep.subr.mxu0 0.0
    %5859 = vmatpush1.msra.mxu0 0.0
    %5860 = vmatprep.subr.mxu0 0.0
    %5861 = vmatpush1.msra.mxu0 0.0
    %5862 = vmatprep.subr.mxu0 0.0
    %5863 = vmatpush1.msra.mxu0 0.0
    %5864 = vmatprep.mubr.f32.mxu0 0.0
    %5865 = vmatmul.mubr.f32.gmra.mrb[0].mxu0 %v5690
    %v5866 = vpop.f32.mrb[0].mxu0
    %v5867 = vadd.f32 0.0, %v5866
    %v5868 = vpop.f32.mrb[0].mxu0
    %5869 = vdwg.mxu0
    %5870 = vmatprep.subr.mxu0 0.0
    %5871 = vmatpush1.msra.mxu0 %v5784
    %5872 = vmatprep.subr.mxu0 0.0
    %5873 = vmatpush1.msra.mxu0 %v5785
    %5874 = vmatprep.subr.mxu0 0.0
    %5875 = vmatpush1.msra.mxu0 %v5786
    %5876 = vmatprep.subr.mxu0 0.0
    %5877 = vmatpush1.msra.mxu0 %v5787
    %5878 = vmatprep.subr.mxu0 0.0
    %5879 = vmatpush1.msra.mxu0 %v5788
    %5880 = vmatprep.subr.mxu0 0.0
    %5881 = vmatpush1.msra.mxu0 %v5789
    %5882 = vmatprep.subr.mxu0 0.0
    %5883 = vmatpush1.msra.mxu0 %v5790
    %5884 = vmatprep.subr.mxu0 0.0
    %5885 = vmatpush1.msra.mxu0 %v5791
    %5886 = vmatprep.subr.mxu0 0.0
    %5887 = vmatpush1.msra.mxu0 %v5792
    %5888 = vmatprep.subr.mxu0 0.0
    %5889 = vmatpush1.msra.mxu0 %v5793
    %5890 = vmatprep.subr.mxu0 0.0
    %5891 = vmatpush1.msra.mxu0 %v5794
    %5892 = vmatprep.subr.mxu0 0.0
    %5893 = vmatpush1.msra.mxu0 %v5795
    %5894 = vmatprep.subr.mxu0 0.0
    %5895 = vmatpush1.msra.mxu0 %v5796
    %5896 = vmatprep.subr.mxu0 0.0
    %5897 = vmatpush1.msra.mxu0 %v5797
    %5898 = vmatprep.subr.mxu0 0.0
    %5899 = vmatpush1.msra.mxu0 %v5798
    %5900 = vmatprep.subr.mxu0 0.0
    %5901 = vmatpush1.msra.mxu0 %v5799
    %5902 = vmatprep.subr.mxu0 0.0
    %5903 = vmatpush1.msra.mxu0 0.0
    %5904 = vmatprep.subr.mxu0 0.0
    %5905 = vmatpush1.msra.mxu0 0.0
    %5906 = vmatprep.subr.mxu0 0.0
    %5907 = vmatpush1.msra.mxu0 0.0
    %5908 = vmatprep.subr.mxu0 0.0
    %5909 = vmatpush1.msra.mxu0 0.0
    %5910 = vmatprep.subr.mxu0 0.0
    %5911 = vmatpush1.msra.mxu0 0.0
    %5912 = vmatprep.subr.mxu0 0.0
    %5913 = vmatpush1.msra.mxu0 0.0
    %5914 = vmatprep.subr.mxu0 0.0
    %5915 = vmatpush1.msra.mxu0 0.0
    %5916 = vmatprep.subr.mxu0 0.0
    %5917 = vmatpush1.msra.mxu0 0.0
    %5918 = vmatprep.subr.mxu0 0.0
    %5919 = vmatpush1.msra.mxu0 0.0
    %5920 = vmatprep.subr.mxu0 0.0
    %5921 = vmatpush1.msra.mxu0 0.0
    %5922 = vmatprep.subr.mxu0 0.0
    %5923 = vmatpush1.msra.mxu0 0.0
    %5924 = vmatprep.subr.mxu0 0.0
    %5925 = vmatpush1.msra.mxu0 0.0
    %5926 = vmatprep.subr.mxu0 0.0
    %5927 = vmatpush1.msra.mxu0 0.0
    %5928 = vmatprep.subr.mxu0 0.0
    %5929 = vmatpush1.msra.mxu0 0.0
    %5930 = vmatprep.subr.mxu0 0.0
    %5931 = vmatpush1.msra.mxu0 0.0
    %5932 = vmatprep.subr.mxu0 0.0
    %5933 = vmatpush1.msra.mxu0 0.0
    %5934 = vmatprep.mubr.f32.mxu0 0.0
    %5935 = vmatmul.mubr.f32.gmra.mrb[0].mxu0 %v5783
    %v5936 = vpop.f32.mrb[0].mxu0
    %v5937 = vadd.f32 %v5867, %v5936
    %v5938 = vpop.f32.mrb[0].mxu0
    %5939 = vdwg.mxu0
    %v5940 = vadd.f32 %v5937, %v333
    %v5941 = vxor.u32 %v5940, 2147483648
    %v5942 = vmul.f32 %v5941, 1.442695
    %v5943 = vpow.pop %v5942
    %v5944 = vadd.f32 %v5943, 1.0
    %v5945 = vrcp.pop %v5944
    %v5946 = vmul.f32 1.0, %v5945
    %v5947 = vtanh.pop %v5940
    %5948 = vrot.lane.b32.xlu0 %v5946, 96
    %v5949 = vpop.permute.xlu0 %5948
    %5950 = vrot.lane.b32.xlu0 %v5947, 64
    %v5951 = vpop.permute.xlu0 %5950
    %5952 = vrot.lane.b32.xlu0 %v5946, 32
    %v5953 = vpop.permute.xlu0 %5952
    %v5954 = vmul.f32 %v5949, %v5688
    %v5955 = vmul.f32 %v5946, %v5951
    %v5956 = vadd.f32 %v5954, %v5955
    %v5957 = vtanh.pop %v5956
    %v5958 = vmul.f32 %v5953, %v5957
    %s5959 = scalar_lea.vmem %s7, 160
    %5960 = vst [vmem:[%s5959] sm:$0xff] %v5958
    %s5961 = scalar_lea.vmem [#allocation2], 168
    %v5962 = vld [vmem:[%s5961] sm:$0xff]
    %5963 = vmatprep.subr.mxu0 0.0
    %5964 = vmatpush1.msra.mxu0 %v296
    %5965 = vmatprep.subr.mxu0 0.0
    %5966 = vmatpush1.msra.mxu0 %v297
    %5967 = vmatprep.subr.mxu0 0.0
    %5968 = vmatpush1.msra.mxu0 %v298
    %5969 = vmatprep.subr.mxu0 0.0
    %5970 = vmatpush1.msra.mxu0 %v299
    %5971 = vmatprep.subr.mxu0 0.0
    %5972 = vmatpush1.msra.mxu0 %v300
    %5973 = vmatprep.subr.mxu0 0.0
    %5974 = vmatpush1.msra.mxu0 %v301
    %5975 = vmatprep.subr.mxu0 0.0
    %5976 = vmatpush1.msra.mxu0 %v302
    %5977 = vmatprep.subr.mxu0 0.0
    %5978 = vmatpush1.msra.mxu0 %v303
    %5979 = vmatprep.subr.mxu0 0.0
    %5980 = vmatpush1.msra.mxu0 %v304
    %5981 = vmatprep.subr.mxu0 0.0
    %5982 = vmatpush1.msra.mxu0 %v305
    %5983 = vmatprep.subr.mxu0 0.0
    %5984 = vmatpush1.msra.mxu0 %v306
    %5985 = vmatprep.subr.mxu0 0.0
    %5986 = vmatpush1.msra.mxu0 %v307
    %5987 = vmatprep.subr.mxu0 0.0
    %5988 = vmatpush1.msra.mxu0 %v308
    %5989 = vmatprep.subr.mxu0 0.0
    %5990 = vmatpush1.msra.mxu0 %v309
    %5991 = vmatprep.subr.mxu0 0.0
    %5992 = vmatpush1.msra.mxu0 %v310
    %5993 = vmatprep.subr.mxu0 0.0
    %5994 = vmatpush1.msra.mxu0 %v311
    %5995 = vmatprep.subr.mxu0 0.0
    %5996 = vmatpush1.msra.mxu0 0.0
    %5997 = vmatprep.subr.mxu0 0.0
    %5998 = vmatpush1.msra.mxu0 0.0
    %5999 = vmatprep.subr.mxu0 0.0
    %6000 = vmatpush1.msra.mxu0 0.0
    %6001 = vmatprep.subr.mxu0 0.0
    %6002 = vmatpush1.msra.mxu0 0.0
    %6003 = vmatprep.subr.mxu0 0.0
    %6004 = vmatpush1.msra.mxu0 0.0
    %6005 = vmatprep.subr.mxu0 0.0
    %6006 = vmatpush1.msra.mxu0 0.0
    %6007 = vmatprep.subr.mxu0 0.0
    %6008 = vmatpush1.msra.mxu0 0.0
    %6009 = vmatprep.subr.mxu0 0.0
    %6010 = vmatpush1.msra.mxu0 0.0
    %6011 = vmatprep.subr.mxu0 0.0
    %6012 = vmatpush1.msra.mxu0 0.0
    %6013 = vmatprep.subr.mxu0 0.0
    %6014 = vmatpush1.msra.mxu0 0.0
    %6015 = vmatprep.subr.mxu0 0.0
    %6016 = vmatpush1.msra.mxu0 0.0
    %6017 = vmatprep.subr.mxu0 0.0
    %6018 = vmatpush1.msra.mxu0 0.0
    %6019 = vmatprep.subr.mxu0 0.0
    %6020 = vmatpush1.msra.mxu0 0.0
    %6021 = vmatprep.subr.mxu0 0.0
    %6022 = vmatpush1.msra.mxu0 0.0
    %6023 = vmatprep.subr.mxu0 0.0
    %6024 = vmatpush1.msra.mxu0 0.0
    %6025 = vmatprep.subr.mxu0 0.0
    %6026 = vmatpush1.msra.mxu0 0.0
    %6027 = vmatprep.mubr.f32.mxu0 0.0
    %6028 = vmatmul.mubr.f32.gmra.mrb[0].mxu0 %v5783
    %v6029 = vpop.f32.mrb[0].mxu0
    %v6030 = vadd.f32 0.0, %v6029
    %v6031 = vpop.f32.mrb[0].mxu0
    %6032 = vdwg.mxu0
    %v6033 = vadd.f32 %v5962, %v6030
    %v6034 = vxor.u32 %v6033, 2147483648
    %v6035 = vmul.f32 %v6034, 1.442695
    %v6036 = vpow.pop %v6035
    %v6037 = vadd.f32 %v6036, 1.0
    %v6038 = vrcp.pop %v6037
    %v6039 = vmul.f32 1.0, %v6038
    %v6040 = vtanh.pop %v6033
    %6041 = vrot.lane.b32.xlu0 %v6039, 96
    %v6042 = vpop.permute.xlu0 %6041
    %6043 = vrot.lane.b32.xlu0 %v6040, 64
    %v6044 = vpop.permute.xlu0 %6043
    %6045 = vrot.lane.b32.xlu0 %v6039, 32
    %v6046 = vpop.permute.xlu0 %6045
    %v6047 = vmul.f32 %v6042, %v5781
    %v6048 = vmul.f32 %v6039, %v6044
    %v6049 = vadd.f32 %v6047, %v6048
    %v6050 = vtanh.pop %v6049
    %v6051 = vmul.f32 %v6046, %v6050
    %v6052 = vld [vmem:[%s4] sm:$0xff]
    %v6053 = vld [vmem:[%s4 + $0x8] sm:$0xff]
    %v6054 = vld [vmem:[%s4 + $0x10] sm:$0xff]
    %v6055 = vld [vmem:[%s4 + $0x18] sm:$0xff]
    %v6056 = vld [vmem:[%s4 + $0x20] sm:$0xff]
    %v6057 = vld [vmem:[%s4 + $0x28] sm:$0xff]
    %v6058 = vld [vmem:[%s4 + $0x30] sm:$0xff]
    %v6059 = vld [vmem:[%s4 + $0x38] sm:$0xff]
    %v6060 = vld [vmem:[%s4 + $0x40] sm:$0xff]
    %v6061 = vld [vmem:[%s4 + $0x48] sm:$0xff]
    %v6062 = vld [vmem:[%s4 + $0x50] sm:$0xff]
    %v6063 = vld [vmem:[%s4 + $0x58] sm:$0xff]
    %v6064 = vld [vmem:[%s4 + $0x60] sm:$0xff]
    %v6065 = vld [vmem:[%s4 + $0x68] sm:$0xff]
    %v6066 = vld [vmem:[%s4 + $0x70] sm:$0xff]
    %v6067 = vld [vmem:[%s4 + $0x78] sm:$0xff]
    %6068 = vmatprep.subr.mxu0 0.0
    %6069 = vmatpush1.msra.mxu0 %v312
    %6070 = vmatprep.subr.mxu0 0.0
    %6071 = vmatpush1.msra.mxu0 %v313
    %6072 = vmatprep.subr.mxu0 0.0
    %6073 = vmatpush1.msra.mxu0 %v314
    %6074 = vmatprep.subr.mxu0 0.0
    %6075 = vmatpush1.msra.mxu0 %v315
    %6076 = vmatprep.subr.mxu0 0.0
    %6077 = vmatpush1.msra.mxu0 %v316
    %6078 = vmatprep.subr.mxu0 0.0
    %6079 = vmatpush1.msra.mxu0 %v317
    %6080 = vmatprep.subr.mxu0 0.0
    %6081 = vmatpush1.msra.mxu0 %v318
    %6082 = vmatprep.subr.mxu0 0.0
    %6083 = vmatpush1.msra.mxu0 %v319
    %6084 = vmatprep.subr.mxu0 0.0
    %6085 = vmatpush1.msra.mxu0 %v320
    %6086 = vmatprep.subr.mxu0 0.0
    %6087 = vmatpush1.msra.mxu0 %v321
    %6088 = vmatprep.subr.mxu0 0.0
    %6089 = vmatpush1.msra.mxu0 %v322
    %6090 = vmatprep.subr.mxu0 0.0
    %6091 = vmatpush1.msra.mxu0 %v323
    %6092 = vmatprep.subr.mxu0 0.0
    %6093 = vmatpush1.msra.mxu0 %v324
    %6094 = vmatprep.subr.mxu0 0.0
    %6095 = vmatpush1.msra.mxu0 %v325
    %6096 = vmatprep.subr.mxu0 0.0
    %6097 = vmatpush1.msra.mxu0 %v326
    %6098 = vmatprep.subr.mxu0 0.0
    %6099 = vmatpush1.msra.mxu0 %v327
    %6100 = vmatprep.subr.mxu0 0.0
    %6101 = vmatpush1.msra.mxu0 0.0
    %6102 = vmatprep.subr.mxu0 0.0
    %6103 = vmatpush1.msra.mxu0 0.0
    %6104 = vmatprep.subr.mxu0 0.0
    %6105 = vmatpush1.msra.mxu0 0.0
    %6106 = vmatprep.subr.mxu0 0.0
    %6107 = vmatpush1.msra.mxu0 0.0
    %6108 = vmatprep.subr.mxu0 0.0
    %6109 = vmatpush1.msra.mxu0 0.0
    %6110 = vmatprep.subr.mxu0 0.0
    %6111 = vmatpush1.msra.mxu0 0.0
    %6112 = vmatprep.subr.mxu0 0.0
    %6113 = vmatpush1.msra.mxu0 0.0
    %6114 = vmatprep.subr.mxu0 0.0
    %6115 = vmatpush1.msra.mxu0 0.0
    %6116 = vmatprep.subr.mxu0 0.0
    %6117 = vmatpush1.msra.mxu0 0.0
    %6118 = vmatprep.subr.mxu0 0.0
    %6119 = vmatpush1.msra.mxu0 0.0
    %6120 = vmatprep.subr.mxu0 0.0
    %6121 = vmatpush1.msra.mxu0 0.0
    %6122 = vmatprep.subr.mxu0 0.0
    %6123 = vmatpush1.msra.mxu0 0.0
    %6124 = vmatprep.subr.mxu0 0.0
    %6125 = vmatpush1.msra.mxu0 0.0
    %6126 = vmatprep.subr.mxu0 0.0
    %6127 = vmatpush1.msra.mxu0 0.0
    %6128 = vmatprep.subr.mxu0 0.0
    %6129 = vmatpush1.msra.mxu0 0.0
    %6130 = vmatprep.subr.mxu0 0.0
    %6131 = vmatpush1.msra.mxu0 0.0
    %6132 = vmatprep.mubr.f32.mxu0 0.0
    %6133 = vmatmul.mubr.f32.gmra.mrb[0].mxu0 %v5958
    %v6134 = vpop.f32.mrb[0].mxu0
    %v6135 = vadd.f32 0.0, %v6134
    %v6136 = vpop.f32.mrb[0].mxu0
    %6137 = vdwg.mxu0
    %6138 = vmatprep.subr.mxu0 0.0
    %6139 = vmatpush1.msra.mxu0 %v6052
    %6140 = vmatprep.subr.mxu0 0.0
    %6141 = vmatpush1.msra.mxu0 %v6053
    %6142 = vmatprep.subr.mxu0 0.0
    %6143 = vmatpush1.msra.mxu0 %v6054
    %6144 = vmatprep.subr.mxu0 0.0
    %6145 = vmatpush1.msra.mxu0 %v6055
    %6146 = vmatprep.subr.mxu0 0.0
    %6147 = vmatpush1.msra.mxu0 %v6056
    %6148 = vmatprep.subr.mxu0 0.0
    %6149 = vmatpush1.msra.mxu0 %v6057
    %6150 = vmatprep.subr.mxu0 0.0
    %6151 = vmatpush1.msra.mxu0 %v6058
    %6152 = vmatprep.subr.mxu0 0.0
    %6153 = vmatpush1.msra.mxu0 %v6059
    %6154 = vmatprep.subr.mxu0 0.0
    %6155 = vmatpush1.msra.mxu0 %v6060
    %6156 = vmatprep.subr.mxu0 0.0
    %6157 = vmatpush1.msra.mxu0 %v6061
    %6158 = vmatprep.subr.mxu0 0.0
    %6159 = vmatpush1.msra.mxu0 %v6062
    %6160 = vmatprep.subr.mxu0 0.0
    %6161 = vmatpush1.msra.mxu0 %v6063
    %6162 = vmatprep.subr.mxu0 0.0
    %6163 = vmatpush1.msra.mxu0 %v6064
    %6164 = vmatprep.subr.mxu0 0.0
    %6165 = vmatpush1.msra.mxu0 %v6065
    %6166 = vmatprep.subr.mxu0 0.0
    %6167 = vmatpush1.msra.mxu0 %v6066
    %6168 = vmatprep.subr.mxu0 0.0
    %6169 = vmatpush1.msra.mxu0 %v6067
    %6170 = vmatprep.subr.mxu0 0.0
    %6171 = vmatpush1.msra.mxu0 0.0
    %6172 = vmatprep.subr.mxu0 0.0
    %6173 = vmatpush1.msra.mxu0 0.0
    %6174 = vmatprep.subr.mxu0 0.0
    %6175 = vmatpush1.msra.mxu0 0.0
    %6176 = vmatprep.subr.mxu0 0.0
    %6177 = vmatpush1.msra.mxu0 0.0
    %6178 = vmatprep.subr.mxu0 0.0
    %6179 = vmatpush1.msra.mxu0 0.0
    %6180 = vmatprep.subr.mxu0 0.0
    %6181 = vmatpush1.msra.mxu0 0.0
    %6182 = vmatprep.subr.mxu0 0.0
    %6183 = vmatpush1.msra.mxu0 0.0
    %6184 = vmatprep.subr.mxu0 0.0
    %6185 = vmatpush1.msra.mxu0 0.0
    %6186 = vmatprep.subr.mxu0 0.0
    %6187 = vmatpush1.msra.mxu0 0.0
    %6188 = vmatprep.subr.mxu0 0.0
    %6189 = vmatpush1.msra.mxu0 0.0
    %6190 = vmatprep.subr.mxu0 0.0
    %6191 = vmatpush1.msra.mxu0 0.0
    %6192 = vmatprep.subr.mxu0 0.0
    %6193 = vmatpush1.msra.mxu0 0.0
    %6194 = vmatprep.subr.mxu0 0.0
    %6195 = vmatpush1.msra.mxu0 0.0
    %6196 = vmatprep.subr.mxu0 0.0
    %6197 = vmatpush1.msra.mxu0 0.0
    %6198 = vmatprep.subr.mxu0 0.0
    %6199 = vmatpush1.msra.mxu0 0.0
    %6200 = vmatprep.subr.mxu0 0.0
    %6201 = vmatpush1.msra.mxu0 0.0
    %6202 = vmatprep.mubr.f32.mxu0 0.0
    %6203 = vmatmul.mubr.f32.gmra.mrb[0].mxu0 %v6051
    %v6204 = vpop.f32.mrb[0].mxu0
    %v6205 = vadd.f32 %v6135, %v6204
    %v6206 = vpop.f32.mrb[0].mxu0
    %6207 = vdwg.mxu0
    %v6208 = vadd.f32 %v6205, %v333
    %v6209 = vxor.u32 %v6208, 2147483648
    %v6210 = vmul.f32 %v6209, 1.442695
    %v6211 = vpow.pop %v6210
    %v6212 = vadd.f32 %v6211, 1.0
    %v6213 = vrcp.pop %v6212
    %v6214 = vmul.f32 1.0, %v6213
    %v6215 = vtanh.pop %v6208
    %6216 = vrot.lane.b32.xlu0 %v6214, 96
    %v6217 = vpop.permute.xlu0 %6216
    %6218 = vrot.lane.b32.xlu0 %v6215, 64
    %v6219 = vpop.permute.xlu0 %6218
    %6220 = vrot.lane.b32.xlu0 %v6214, 32
    %v6221 = vpop.permute.xlu0 %6220
    %v6222 = vmul.f32 %v6217, %v5956
    %v6223 = vmul.f32 %v6214, %v6219
    %v6224 = vadd.f32 %v6222, %v6223
    %v6225 = vtanh.pop %v6224
    %v6226 = vmul.f32 %v6221, %v6225
    %s6227 = scalar_lea.vmem %s7, 168
    %6228 = vst [vmem:[%s6227] sm:$0xff] %v6226
    %s6229 = scalar_lea.vmem [#allocation2], 176
    %v6230 = vld [vmem:[%s6229] sm:$0xff]
    %6231 = vmatprep.subr.mxu0 0.0
    %6232 = vmatpush1.msra.mxu0 %v296
    %6233 = vmatprep.subr.mxu0 0.0
    %6234 = vmatpush1.msra.mxu0 %v297
    %6235 = vmatprep.subr.mxu0 0.0
    %6236 = vmatpush1.msra.mxu0 %v298
    %6237 = vmatprep.subr.mxu0 0.0
    %6238 = vmatpush1.msra.mxu0 %v299
    %6239 = vmatprep.subr.mxu0 0.0
    %6240 = vmatpush1.msra.mxu0 %v300
    %6241 = vmatprep.subr.mxu0 0.0
    %6242 = vmatpush1.msra.mxu0 %v301
    %6243 = vmatprep.subr.mxu0 0.0
    %6244 = vmatpush1.msra.mxu0 %v302
    %6245 = vmatprep.subr.mxu0 0.0
    %6246 = vmatpush1.msra.mxu0 %v303
    %6247 = vmatprep.subr.mxu0 0.0
    %6248 = vmatpush1.msra.mxu0 %v304
    %6249 = vmatprep.subr.mxu0 0.0
    %6250 = vmatpush1.msra.mxu0 %v305
    %6251 = vmatprep.subr.mxu0 0.0
    %6252 = vmatpush1.msra.mxu0 %v306
    %6253 = vmatprep.subr.mxu0 0.0
    %6254 = vmatpush1.msra.mxu0 %v307
    %6255 = vmatprep.subr.mxu0 0.0
    %6256 = vmatpush1.msra.mxu0 %v308
    %6257 = vmatprep.subr.mxu0 0.0
    %6258 = vmatpush1.msra.mxu0 %v309
    %6259 = vmatprep.subr.mxu0 0.0
    %6260 = vmatpush1.msra.mxu0 %v310
    %6261 = vmatprep.subr.mxu0 0.0
    %6262 = vmatpush1.msra.mxu0 %v311
    %6263 = vmatprep.subr.mxu0 0.0
    %6264 = vmatpush1.msra.mxu0 0.0
    %6265 = vmatprep.subr.mxu0 0.0
    %6266 = vmatpush1.msra.mxu0 0.0
    %6267 = vmatprep.subr.mxu0 0.0
    %6268 = vmatpush1.msra.mxu0 0.0
    %6269 = vmatprep.subr.mxu0 0.0
    %6270 = vmatpush1.msra.mxu0 0.0
    %6271 = vmatprep.subr.mxu0 0.0
    %6272 = vmatpush1.msra.mxu0 0.0
    %6273 = vmatprep.subr.mxu0 0.0
    %6274 = vmatpush1.msra.mxu0 0.0
    %6275 = vmatprep.subr.mxu0 0.0
    %6276 = vmatpush1.msra.mxu0 0.0
    %6277 = vmatprep.subr.mxu0 0.0
    %6278 = vmatpush1.msra.mxu0 0.0
    %6279 = vmatprep.subr.mxu0 0.0
    %6280 = vmatpush1.msra.mxu0 0.0
    %6281 = vmatprep.subr.mxu0 0.0
    %6282 = vmatpush1.msra.mxu0 0.0
    %6283 = vmatprep.subr.mxu0 0.0
    %6284 = vmatpush1.msra.mxu0 0.0
    %6285 = vmatprep.subr.mxu0 0.0
    %6286 = vmatpush1.msra.mxu0 0.0
    %6287 = vmatprep.subr.mxu0 0.0
    %6288 = vmatpush1.msra.mxu0 0.0
    %6289 = vmatprep.subr.mxu0 0.0
    %6290 = vmatpush1.msra.mxu0 0.0
    %6291 = vmatprep.subr.mxu0 0.0
    %6292 = vmatpush1.msra.mxu0 0.0
    %6293 = vmatprep.subr.mxu0 0.0
    %6294 = vmatpush1.msra.mxu0 0.0
    %6295 = vmatprep.mubr.f32.mxu0 0.0
    %6296 = vmatmul.mubr.f32.gmra.mrb[0].mxu0 %v6051
    %v6297 = vpop.f32.mrb[0].mxu0
    %v6298 = vadd.f32 0.0, %v6297
    %v6299 = vpop.f32.mrb[0].mxu0
    %6300 = vdwg.mxu0
    %v6301 = vadd.f32 %v6230, %v6298
    %v6302 = vxor.u32 %v6301, 2147483648
    %v6303 = vmul.f32 %v6302, 1.442695
    %v6304 = vpow.pop %v6303
    %v6305 = vadd.f32 %v6304, 1.0
    %v6306 = vrcp.pop %v6305
    %v6307 = vmul.f32 1.0, %v6306
    %v6308 = vtanh.pop %v6301
    %6309 = vrot.lane.b32.xlu0 %v6307, 96
    %v6310 = vpop.permute.xlu0 %6309
    %6311 = vrot.lane.b32.xlu0 %v6308, 64
    %v6312 = vpop.permute.xlu0 %6311
    %6313 = vrot.lane.b32.xlu0 %v6307, 32
    %v6314 = vpop.permute.xlu0 %6313
    %v6315 = vmul.f32 %v6310, %v6049
    %v6316 = vmul.f32 %v6307, %v6312
    %v6317 = vadd.f32 %v6315, %v6316
    %v6318 = vtanh.pop %v6317
    %v6319 = vmul.f32 %v6314, %v6318
    %v6320 = vld [vmem:[%s4] sm:$0xff]
    %v6321 = vld [vmem:[%s4 + $0x8] sm:$0xff]
    %v6322 = vld [vmem:[%s4 + $0x10] sm:$0xff]
    %v6323 = vld [vmem:[%s4 + $0x18] sm:$0xff]
    %v6324 = vld [vmem:[%s4 + $0x20] sm:$0xff]
    %v6325 = vld [vmem:[%s4 + $0x28] sm:$0xff]
    %v6326 = vld [vmem:[%s4 + $0x30] sm:$0xff]
    %v6327 = vld [vmem:[%s4 + $0x38] sm:$0xff]
    %v6328 = vld [vmem:[%s4 + $0x40] sm:$0xff]
    %v6329 = vld [vmem:[%s4 + $0x48] sm:$0xff]
    %v6330 = vld [vmem:[%s4 + $0x50] sm:$0xff]
    %v6331 = vld [vmem:[%s4 + $0x58] sm:$0xff]
    %v6332 = vld [vmem:[%s4 + $0x60] sm:$0xff]
    %v6333 = vld [vmem:[%s4 + $0x68] sm:$0xff]
    %v6334 = vld [vmem:[%s4 + $0x70] sm:$0xff]
    %v6335 = vld [vmem:[%s4 + $0x78] sm:$0xff]
    %6336 = vmatprep.subr.mxu0 0.0
    %6337 = vmatpush1.msra.mxu0 %v312
    %6338 = vmatprep.subr.mxu0 0.0
    %6339 = vmatpush1.msra.mxu0 %v313
    %6340 = vmatprep.subr.mxu0 0.0
    %6341 = vmatpush1.msra.mxu0 %v314
    %6342 = vmatprep.subr.mxu0 0.0
    %6343 = vmatpush1.msra.mxu0 %v315
    %6344 = vmatprep.subr.mxu0 0.0
    %6345 = vmatpush1.msra.mxu0 %v316
    %6346 = vmatprep.subr.mxu0 0.0
    %6347 = vmatpush1.msra.mxu0 %v317
    %6348 = vmatprep.subr.mxu0 0.0
    %6349 = vmatpush1.msra.mxu0 %v318
    %6350 = vmatprep.subr.mxu0 0.0
    %6351 = vmatpush1.msra.mxu0 %v319
    %6352 = vmatprep.subr.mxu0 0.0
    %6353 = vmatpush1.msra.mxu0 %v320
    %6354 = vmatprep.subr.mxu0 0.0
    %6355 = vmatpush1.msra.mxu0 %v321
    %6356 = vmatprep.subr.mxu0 0.0
    %6357 = vmatpush1.msra.mxu0 %v322
    %6358 = vmatprep.subr.mxu0 0.0
    %6359 = vmatpush1.msra.mxu0 %v323
    %6360 = vmatprep.subr.mxu0 0.0
    %6361 = vmatpush1.msra.mxu0 %v324
    %6362 = vmatprep.subr.mxu0 0.0
    %6363 = vmatpush1.msra.mxu0 %v325
    %6364 = vmatprep.subr.mxu0 0.0
    %6365 = vmatpush1.msra.mxu0 %v326
    %6366 = vmatprep.subr.mxu0 0.0
    %6367 = vmatpush1.msra.mxu0 %v327
    %6368 = vmatprep.subr.mxu0 0.0
    %6369 = vmatpush1.msra.mxu0 0.0
    %6370 = vmatprep.subr.mxu0 0.0
    %6371 = vmatpush1.msra.mxu0 0.0
    %6372 = vmatprep.subr.mxu0 0.0
    %6373 = vmatpush1.msra.mxu0 0.0
    %6374 = vmatprep.subr.mxu0 0.0
    %6375 = vmatpush1.msra.mxu0 0.0
    %6376 = vmatprep.subr.mxu0 0.0
    %6377 = vmatpush1.msra.mxu0 0.0
    %6378 = vmatprep.subr.mxu0 0.0
    %6379 = vmatpush1.msra.mxu0 0.0
    %6380 = vmatprep.subr.mxu0 0.0
    %6381 = vmatpush1.msra.mxu0 0.0
    %6382 = vmatprep.subr.mxu0 0.0
    %6383 = vmatpush1.msra.mxu0 0.0
    %6384 = vmatprep.subr.mxu0 0.0
    %6385 = vmatpush1.msra.mxu0 0.0
    %6386 = vmatprep.subr.mxu0 0.0
    %6387 = vmatpush1.msra.mxu0 0.0
    %6388 = vmatprep.subr.mxu0 0.0
    %6389 = vmatpush1.msra.mxu0 0.0
    %6390 = vmatprep.subr.mxu0 0.0
    %6391 = vmatpush1.msra.mxu0 0.0
    %6392 = vmatprep.subr.mxu0 0.0
    %6393 = vmatpush1.msra.mxu0 0.0
    %6394 = vmatprep.subr.mxu0 0.0
    %6395 = vmatpush1.msra.mxu0 0.0
    %6396 = vmatprep.subr.mxu0 0.0
    %6397 = vmatpush1.msra.mxu0 0.0
    %6398 = vmatprep.subr.mxu0 0.0
    %6399 = vmatpush1.msra.mxu0 0.0
    %6400 = vmatprep.mubr.f32.mxu0 0.0
    %6401 = vmatmul.mubr.f32.gmra.mrb[0].mxu0 %v6226
    %v6402 = vpop.f32.mrb[0].mxu0
    %v6403 = vadd.f32 0.0, %v6402
    %v6404 = vpop.f32.mrb[0].mxu0
    %6405 = vdwg.mxu0
    %6406 = vmatprep.subr.mxu0 0.0
    %6407 = vmatpush1.msra.mxu0 %v6320
    %6408 = vmatprep.subr.mxu0 0.0
    %6409 = vmatpush1.msra.mxu0 %v6321
    %6410 = vmatprep.subr.mxu0 0.0
    %6411 = vmatpush1.msra.mxu0 %v6322
    %6412 = vmatprep.subr.mxu0 0.0
    %6413 = vmatpush1.msra.mxu0 %v6323
    %6414 = vmatprep.subr.mxu0 0.0
    %6415 = vmatpush1.msra.mxu0 %v6324
    %6416 = vmatprep.subr.mxu0 0.0
    %6417 = vmatpush1.msra.mxu0 %v6325
    %6418 = vmatprep.subr.mxu0 0.0
    %6419 = vmatpush1.msra.mxu0 %v6326
    %6420 = vmatprep.subr.mxu0 0.0
    %6421 = vmatpush1.msra.mxu0 %v6327
    %6422 = vmatprep.subr.mxu0 0.0
    %6423 = vmatpush1.msra.mxu0 %v6328
    %6424 = vmatprep.subr.mxu0 0.0
    %6425 = vmatpush1.msra.mxu0 %v6329
    %6426 = vmatprep.subr.mxu0 0.0
    %6427 = vmatpush1.msra.mxu0 %v6330
    %6428 = vmatprep.subr.mxu0 0.0
    %6429 = vmatpush1.msra.mxu0 %v6331
    %6430 = vmatprep.subr.mxu0 0.0
    %6431 = vmatpush1.msra.mxu0 %v6332
    %6432 = vmatprep.subr.mxu0 0.0
    %6433 = vmatpush1.msra.mxu0 %v6333
    %6434 = vmatprep.subr.mxu0 0.0
    %6435 = vmatpush1.msra.mxu0 %v6334
    %6436 = vmatprep.subr.mxu0 0.0
    %6437 = vmatpush1.msra.mxu0 %v6335
    %6438 = vmatprep.subr.mxu0 0.0
    %6439 = vmatpush1.msra.mxu0 0.0
    %6440 = vmatprep.subr.mxu0 0.0
    %6441 = vmatpush1.msra.mxu0 0.0
    %6442 = vmatprep.subr.mxu0 0.0
    %6443 = vmatpush1.msra.mxu0 0.0
    %6444 = vmatprep.subr.mxu0 0.0
    %6445 = vmatpush1.msra.mxu0 0.0
    %6446 = vmatprep.subr.mxu0 0.0
    %6447 = vmatpush1.msra.mxu0 0.0
    %6448 = vmatprep.subr.mxu0 0.0
    %6449 = vmatpush1.msra.mxu0 0.0
    %6450 = vmatprep.subr.mxu0 0.0
    %6451 = vmatpush1.msra.mxu0 0.0
    %6452 = vmatprep.subr.mxu0 0.0
    %6453 = vmatpush1.msra.mxu0 0.0
    %6454 = vmatprep.subr.mxu0 0.0
    %6455 = vmatpush1.msra.mxu0 0.0
    %6456 = vmatprep.subr.mxu0 0.0
    %6457 = vmatpush1.msra.mxu0 0.0
    %6458 = vmatprep.subr.mxu0 0.0
    %6459 = vmatpush1.msra.mxu0 0.0
    %6460 = vmatprep.subr.mxu0 0.0
    %6461 = vmatpush1.msra.mxu0 0.0
    %6462 = vmatprep.subr.mxu0 0.0
    %6463 = vmatpush1.msra.mxu0 0.0
    %6464 = vmatprep.subr.mxu0 0.0
    %6465 = vmatpush1.msra.mxu0 0.0
    %6466 = vmatprep.subr.mxu0 0.0
    %6467 = vmatpush1.msra.mxu0 0.0
    %6468 = vmatprep.subr.mxu0 0.0
    %6469 = vmatpush1.msra.mxu0 0.0
    %6470 = vmatprep.mubr.f32.mxu0 0.0
    %6471 = vmatmul.mubr.f32.gmra.mrb[0].mxu0 %v6319
    %v6472 = vpop.f32.mrb[0].mxu0
    %v6473 = vadd.f32 %v6403, %v6472
    %v6474 = vpop.f32.mrb[0].mxu0
    %6475 = vdwg.mxu0
    %v6476 = vadd.f32 %v6473, %v333
    %v6477 = vxor.u32 %v6476, 2147483648
    %v6478 = vmul.f32 %v6477, 1.442695
    %v6479 = vpow.pop %v6478
    %v6480 = vadd.f32 %v6479, 1.0
    %v6481 = vrcp.pop %v6480
    %v6482 = vmul.f32 1.0, %v6481
    %v6483 = vtanh.pop %v6476
    %6484 = vrot.lane.b32.xlu0 %v6482, 96
    %v6485 = vpop.permute.xlu0 %6484
    %6486 = vrot.lane.b32.xlu0 %v6483, 64
    %v6487 = vpop.permute.xlu0 %6486
    %6488 = vrot.lane.b32.xlu0 %v6482, 32
    %v6489 = vpop.permute.xlu0 %6488
    %v6490 = vmul.f32 %v6485, %v6224
    %v6491 = vmul.f32 %v6482, %v6487
    %v6492 = vadd.f32 %v6490, %v6491
    %v6493 = vtanh.pop %v6492
    %v6494 = vmul.f32 %v6489, %v6493
    %s6495 = scalar_lea.vmem %s7, 176
    %6496 = vst [vmem:[%s6495] sm:$0xff] %v6494
    %s6497 = scalar_lea.vmem [#allocation2], 184
    %v6498 = vld [vmem:[%s6497] sm:$0xff]
    %6499 = vmatprep.subr.mxu0 0.0
    %6500 = vmatpush1.msra.mxu0 %v296
    %6501 = vmatprep.subr.mxu0 0.0
    %6502 = vmatpush1.msra.mxu0 %v297
    %6503 = vmatprep.subr.mxu0 0.0
    %6504 = vmatpush1.msra.mxu0 %v298
    %6505 = vmatprep.subr.mxu0 0.0
    %6506 = vmatpush1.msra.mxu0 %v299
    %6507 = vmatprep.subr.mxu0 0.0
    %6508 = vmatpush1.msra.mxu0 %v300
    %6509 = vmatprep.subr.mxu0 0.0
    %6510 = vmatpush1.msra.mxu0 %v301
    %6511 = vmatprep.subr.mxu0 0.0
    %6512 = vmatpush1.msra.mxu0 %v302
    %6513 = vmatprep.subr.mxu0 0.0
    %6514 = vmatpush1.msra.mxu0 %v303
    %6515 = vmatprep.subr.mxu0 0.0
    %6516 = vmatpush1.msra.mxu0 %v304
    %6517 = vmatprep.subr.mxu0 0.0
    %6518 = vmatpush1.msra.mxu0 %v305
    %6519 = vmatprep.subr.mxu0 0.0
    %6520 = vmatpush1.msra.mxu0 %v306
    %6521 = vmatprep.subr.mxu0 0.0
    %6522 = vmatpush1.msra.mxu0 %v307
    %6523 = vmatprep.subr.mxu0 0.0
    %6524 = vmatpush1.msra.mxu0 %v308
    %6525 = vmatprep.subr.mxu0 0.0
    %6526 = vmatpush1.msra.mxu0 %v309
    %6527 = vmatprep.subr.mxu0 0.0
    %6528 = vmatpush1.msra.mxu0 %v310
    %6529 = vmatprep.subr.mxu0 0.0
    %6530 = vmatpush1.msra.mxu0 %v311
    %6531 = vmatprep.subr.mxu0 0.0
    %6532 = vmatpush1.msra.mxu0 0.0
    %6533 = vmatprep.subr.mxu0 0.0
    %6534 = vmatpush1.msra.mxu0 0.0
    %6535 = vmatprep.subr.mxu0 0.0
    %6536 = vmatpush1.msra.mxu0 0.0
    %6537 = vmatprep.subr.mxu0 0.0
    %6538 = vmatpush1.msra.mxu0 0.0
    %6539 = vmatprep.subr.mxu0 0.0
    %6540 = vmatpush1.msra.mxu0 0.0
    %6541 = vmatprep.subr.mxu0 0.0
    %6542 = vmatpush1.msra.mxu0 0.0
    %6543 = vmatprep.subr.mxu0 0.0
    %6544 = vmatpush1.msra.mxu0 0.0
    %6545 = vmatprep.subr.mxu0 0.0
    %6546 = vmatpush1.msra.mxu0 0.0
    %6547 = vmatprep.subr.mxu0 0.0
    %6548 = vmatpush1.msra.mxu0 0.0
    %6549 = vmatprep.subr.mxu0 0.0
    %6550 = vmatpush1.msra.mxu0 0.0
    %6551 = vmatprep.subr.mxu0 0.0
    %6552 = vmatpush1.msra.mxu0 0.0
    %6553 = vmatprep.subr.mxu0 0.0
    %6554 = vmatpush1.msra.mxu0 0.0
    %6555 = vmatprep.subr.mxu0 0.0
    %6556 = vmatpush1.msra.mxu0 0.0
    %6557 = vmatprep.subr.mxu0 0.0
    %6558 = vmatpush1.msra.mxu0 0.0
    %6559 = vmatprep.subr.mxu0 0.0
    %6560 = vmatpush1.msra.mxu0 0.0
    %6561 = vmatprep.subr.mxu0 0.0
    %6562 = vmatpush1.msra.mxu0 0.0
    %6563 = vmatprep.mubr.f32.mxu0 0.0
    %6564 = vmatmul.mubr.f32.gmra.mrb[0].mxu0 %v6319
    %v6565 = vpop.f32.mrb[0].mxu0
    %v6566 = vadd.f32 0.0, %v6565
    %v6567 = vpop.f32.mrb[0].mxu0
    %6568 = vdwg.mxu0
    %v6569 = vadd.f32 %v6498, %v6566
    %v6570 = vxor.u32 %v6569, 2147483648
    %v6571 = vmul.f32 %v6570, 1.442695
    %v6572 = vpow.pop %v6571
    %v6573 = vadd.f32 %v6572, 1.0
    %v6574 = vrcp.pop %v6573
    %v6575 = vmul.f32 1.0, %v6574
    %v6576 = vtanh.pop %v6569
    %6577 = vrot.lane.b32.xlu0 %v6575, 96
    %v6578 = vpop.permute.xlu0 %6577
    %6579 = vrot.lane.b32.xlu0 %v6576, 64
    %v6580 = vpop.permute.xlu0 %6579
    %6581 = vrot.lane.b32.xlu0 %v6575, 32
    %v6582 = vpop.permute.xlu0 %6581
    %v6583 = vmul.f32 %v6578, %v6317
    %v6584 = vmul.f32 %v6575, %v6580
    %v6585 = vadd.f32 %v6583, %v6584
    %v6586 = vtanh.pop %v6585
    %v6587 = vmul.f32 %v6582, %v6586
    %v6588 = vld [vmem:[%s4] sm:$0xff]
    %v6589 = vld [vmem:[%s4 + $0x8] sm:$0xff]
    %v6590 = vld [vmem:[%s4 + $0x10] sm:$0xff]
    %v6591 = vld [vmem:[%s4 + $0x18] sm:$0xff]
    %v6592 = vld [vmem:[%s4 + $0x20] sm:$0xff]
    %v6593 = vld [vmem:[%s4 + $0x28] sm:$0xff]
    %v6594 = vld [vmem:[%s4 + $0x30] sm:$0xff]
    %v6595 = vld [vmem:[%s4 + $0x38] sm:$0xff]
    %v6596 = vld [vmem:[%s4 + $0x40] sm:$0xff]
    %v6597 = vld [vmem:[%s4 + $0x48] sm:$0xff]
    %v6598 = vld [vmem:[%s4 + $0x50] sm:$0xff]
    %v6599 = vld [vmem:[%s4 + $0x58] sm:$0xff]
    %v6600 = vld [vmem:[%s4 + $0x60] sm:$0xff]
    %v6601 = vld [vmem:[%s4 + $0x68] sm:$0xff]
    %v6602 = vld [vmem:[%s4 + $0x70] sm:$0xff]
    %v6603 = vld [vmem:[%s4 + $0x78] sm:$0xff]
    %6604 = vmatprep.subr.mxu0 0.0
    %6605 = vmatpush1.msra.mxu0 %v312
    %6606 = vmatprep.subr.mxu0 0.0
    %6607 = vmatpush1.msra.mxu0 %v313
    %6608 = vmatprep.subr.mxu0 0.0
    %6609 = vmatpush1.msra.mxu0 %v314
    %6610 = vmatprep.subr.mxu0 0.0
    %6611 = vmatpush1.msra.mxu0 %v315
    %6612 = vmatprep.subr.mxu0 0.0
    %6613 = vmatpush1.msra.mxu0 %v316
    %6614 = vmatprep.subr.mxu0 0.0
    %6615 = vmatpush1.msra.mxu0 %v317
    %6616 = vmatprep.subr.mxu0 0.0
    %6617 = vmatpush1.msra.mxu0 %v318
    %6618 = vmatprep.subr.mxu0 0.0
    %6619 = vmatpush1.msra.mxu0 %v319
    %6620 = vmatprep.subr.mxu0 0.0
    %6621 = vmatpush1.msra.mxu0 %v320
    %6622 = vmatprep.subr.mxu0 0.0
    %6623 = vmatpush1.msra.mxu0 %v321
    %6624 = vmatprep.subr.mxu0 0.0
    %6625 = vmatpush1.msra.mxu0 %v322
    %6626 = vmatprep.subr.mxu0 0.0
    %6627 = vmatpush1.msra.mxu0 %v323
    %6628 = vmatprep.subr.mxu0 0.0
    %6629 = vmatpush1.msra.mxu0 %v324
    %6630 = vmatprep.subr.mxu0 0.0
    %6631 = vmatpush1.msra.mxu0 %v325
    %6632 = vmatprep.subr.mxu0 0.0
    %6633 = vmatpush1.msra.mxu0 %v326
    %6634 = vmatprep.subr.mxu0 0.0
    %6635 = vmatpush1.msra.mxu0 %v327
    %6636 = vmatprep.subr.mxu0 0.0
    %6637 = vmatpush1.msra.mxu0 0.0
    %6638 = vmatprep.subr.mxu0 0.0
    %6639 = vmatpush1.msra.mxu0 0.0
    %6640 = vmatprep.subr.mxu0 0.0
    %6641 = vmatpush1.msra.mxu0 0.0
    %6642 = vmatprep.subr.mxu0 0.0
    %6643 = vmatpush1.msra.mxu0 0.0
    %6644 = vmatprep.subr.mxu0 0.0
    %6645 = vmatpush1.msra.mxu0 0.0
    %6646 = vmatprep.subr.mxu0 0.0
    %6647 = vmatpush1.msra.mxu0 0.0
    %6648 = vmatprep.subr.mxu0 0.0
    %6649 = vmatpush1.msra.mxu0 0.0
    %6650 = vmatprep.subr.mxu0 0.0
    %6651 = vmatpush1.msra.mxu0 0.0
    %6652 = vmatprep.subr.mxu0 0.0
    %6653 = vmatpush1.msra.mxu0 0.0
    %6654 = vmatprep.subr.mxu0 0.0
    %6655 = vmatpush1.msra.mxu0 0.0
    %6656 = vmatprep.subr.mxu0 0.0
    %6657 = vmatpush1.msra.mxu0 0.0
    %6658 = vmatprep.subr.mxu0 0.0
    %6659 = vmatpush1.msra.mxu0 0.0
    %6660 = vmatprep.subr.mxu0 0.0
    %6661 = vmatpush1.msra.mxu0 0.0
    %6662 = vmatprep.subr.mxu0 0.0
    %6663 = vmatpush1.msra.mxu0 0.0
    %6664 = vmatprep.subr.mxu0 0.0
    %6665 = vmatpush1.msra.mxu0 0.0
    %6666 = vmatprep.subr.mxu0 0.0
    %6667 = vmatpush1.msra.mxu0 0.0
    %6668 = vmatprep.mubr.f32.mxu0 0.0
    %6669 = vmatmul.mubr.f32.gmra.mrb[0].mxu0 %v6494
    %v6670 = vpop.f32.mrb[0].mxu0
    %v6671 = vadd.f32 0.0, %v6670
    %v6672 = vpop.f32.mrb[0].mxu0
    %6673 = vdwg.mxu0
    %6674 = vmatprep.subr.mxu0 0.0
    %6675 = vmatpush1.msra.mxu0 %v6588
    %6676 = vmatprep.subr.mxu0 0.0
    %6677 = vmatpush1.msra.mxu0 %v6589
    %6678 = vmatprep.subr.mxu0 0.0
    %6679 = vmatpush1.msra.mxu0 %v6590
    %6680 = vmatprep.subr.mxu0 0.0
    %6681 = vmatpush1.msra.mxu0 %v6591
    %6682 = vmatprep.subr.mxu0 0.0
    %6683 = vmatpush1.msra.mxu0 %v6592
    %6684 = vmatprep.subr.mxu0 0.0
    %6685 = vmatpush1.msra.mxu0 %v6593
    %6686 = vmatprep.subr.mxu0 0.0
    %6687 = vmatpush1.msra.mxu0 %v6594
    %6688 = vmatprep.subr.mxu0 0.0
    %6689 = vmatpush1.msra.mxu0 %v6595
    %6690 = vmatprep.subr.mxu0 0.0
    %6691 = vmatpush1.msra.mxu0 %v6596
    %6692 = vmatprep.subr.mxu0 0.0
    %6693 = vmatpush1.msra.mxu0 %v6597
    %6694 = vmatprep.subr.mxu0 0.0
    %6695 = vmatpush1.msra.mxu0 %v6598
    %6696 = vmatprep.subr.mxu0 0.0
    %6697 = vmatpush1.msra.mxu0 %v6599
    %6698 = vmatprep.subr.mxu0 0.0
    %6699 = vmatpush1.msra.mxu0 %v6600
    %6700 = vmatprep.subr.mxu0 0.0
    %6701 = vmatpush1.msra.mxu0 %v6601
    %6702 = vmatprep.subr.mxu0 0.0
    %6703 = vmatpush1.msra.mxu0 %v6602
    %6704 = vmatprep.subr.mxu0 0.0
    %6705 = vmatpush1.msra.mxu0 %v6603
    %6706 = vmatprep.subr.mxu0 0.0
    %6707 = vmatpush1.msra.mxu0 0.0
    %6708 = vmatprep.subr.mxu0 0.0
    %6709 = vmatpush1.msra.mxu0 0.0
    %6710 = vmatprep.subr.mxu0 0.0
    %6711 = vmatpush1.msra.mxu0 0.0
    %6712 = vmatprep.subr.mxu0 0.0
    %6713 = vmatpush1.msra.mxu0 0.0
    %6714 = vmatprep.subr.mxu0 0.0
    %6715 = vmatpush1.msra.mxu0 0.0
    %6716 = vmatprep.subr.mxu0 0.0
    %6717 = vmatpush1.msra.mxu0 0.0
    %6718 = vmatprep.subr.mxu0 0.0
    %6719 = vmatpush1.msra.mxu0 0.0
    %6720 = vmatprep.subr.mxu0 0.0
    %6721 = vmatpush1.msra.mxu0 0.0
    %6722 = vmatprep.subr.mxu0 0.0
    %6723 = vmatpush1.msra.mxu0 0.0
    %6724 = vmatprep.subr.mxu0 0.0
    %6725 = vmatpush1.msra.mxu0 0.0
    %6726 = vmatprep.subr.mxu0 0.0
    %6727 = vmatpush1.msra.mxu0 0.0
    %6728 = vmatprep.subr.mxu0 0.0
    %6729 = vmatpush1.msra.mxu0 0.0
    %6730 = vmatprep.subr.mxu0 0.0
    %6731 = vmatpush1.msra.mxu0 0.0
    %6732 = vmatprep.subr.mxu0 0.0
    %6733 = vmatpush1.msra.mxu0 0.0
    %6734 = vmatprep.subr.mxu0 0.0
    %6735 = vmatpush1.msra.mxu0 0.0
    %6736 = vmatprep.subr.mxu0 0.0
    %6737 = vmatpush1.msra.mxu0 0.0
    %6738 = vmatprep.mubr.f32.mxu0 0.0
    %6739 = vmatmul.mubr.f32.gmra.mrb[0].mxu0 %v6587
    %v6740 = vpop.f32.mrb[0].mxu0
    %v6741 = vadd.f32 %v6671, %v6740
    %v6742 = vpop.f32.mrb[0].mxu0
    %6743 = vdwg.mxu0
    %v6744 = vadd.f32 %v6741, %v333
    %v6745 = vxor.u32 %v6744, 2147483648
    %v6746 = vmul.f32 %v6745, 1.442695
    %v6747 = vpow.pop %v6746
    %v6748 = vadd.f32 %v6747, 1.0
    %v6749 = vrcp.pop %v6748
    %v6750 = vmul.f32 1.0, %v6749
    %v6751 = vtanh.pop %v6744
    %6752 = vrot.lane.b32.xlu0 %v6750, 96
    %v6753 = vpop.permute.xlu0 %6752
    %6754 = vrot.lane.b32.xlu0 %v6751, 64
    %v6755 = vpop.permute.xlu0 %6754
    %6756 = vrot.lane.b32.xlu0 %v6750, 32
    %v6757 = vpop.permute.xlu0 %6756
    %v6758 = vmul.f32 %v6753, %v6492
    %v6759 = vmul.f32 %v6750, %v6755
    %v6760 = vadd.f32 %v6758, %v6759
    %v6761 = vtanh.pop %v6760
    %v6762 = vmul.f32 %v6757, %v6761
    %s6763 = scalar_lea.vmem %s7, 184
    %6764 = vst [vmem:[%s6763] sm:$0xff] %v6762
    // Predicated region
    $region34: #{_rnn_forward_impl.1} parent=1 // pred_check
      _
    $region35: #{_rnn_forward_impl.1} parent=1 // pred_check_branch
      %6766 = sbr.rel (0) target = $region37
    $region36: #{_rnn_forward_impl.1} parent=1 // pred_region
      _
    $region37: #{_rnn_forward_impl.1} parent=1 // pred_fallthru
      _
    // Predicated region
    $region38: #{_rnn_forward_impl.1} parent=1 // pred_check
      _
    $region39: #{_rnn_forward_impl.1} parent=1 // pred_check_branch
      %6768 = sbr.rel (0) target = $region41
    $region40: #{_rnn_forward_impl.1} parent=1 // pred_region
      _
    $region41: #{_rnn_forward_impl.1} parent=1 // pred_fallthru
      _
    %6769 = vsyncpa [#allocation4], 1

</llo_original>
